<compile_context>
chip_gen: v5e
topology: v5e:2x2
jax: 0.10.0
libtpu: 0.0.40
codegen_flags: <defaults>
</compile_context>

<pallas_src>
import functools
import math

import jax
import jax.numpy as jnp
from jax.experimental import pallas as pl
from jax.experimental.pallas import tpu as pltpu

# Layer sizes from the PyTorch module __init__.
LAYER_DIMS = [2, 64, 512, 1024, 512, 64, 1]


def _round_up(a, m):
    return (a + m - 1) // m * m


def _mlp_kernel(x_ref,
                w1, b1, w2, b2, w3, b3, w4, b4, w5, b5, w6, b6,
                o_ref, *, compute_dtype):
    """Fused forward on transposed (features, batch_tile) tiles.

    Bias-add / ReLU stay f32 (v5e has no bf16 VALU); inter-layer activations
    are stored in `compute_dtype` to halve VMEM / vreg pressure.
    """
    xt = x_ref[...].astype(jnp.float32)                     # (2, bt)

    # fc1 (K=2): two VPU FMAs instead of a degenerate MXU matmul.
    w1v = w1[...]                                           # (64, 2) f32
    h = w1v[:, 0:1] * xt[0:1, :] + w1v[:, 1:2] * xt[1:2, :] + b1[...]
    h = jnp.maximum(h, 0.0).astype(compute_dtype)           # (64, bt)

    def linear_relu(h_lo, w_ref, b_ref):
        w = w_ref[...]                                      # (out, in) compute_dtype
        y = jnp.dot(w, h_lo, preferred_element_type=jnp.float32) + b_ref[...]
        return jnp.maximum(y, 0.0).astype(compute_dtype)    # bf16 inter-layer act

    h = linear_relu(h, w2, b2)                              # (512,  bt)
    h = linear_relu(h, w3, b3)                              # (1024, bt)
    h = linear_relu(h, w4, b4)                              # (512,  bt)
    h = linear_relu(h, w5, b5)                              # (64,   bt)

    # fc6 (N=1): VPU multiply + sublane reduce -> lane-dense (1, bt) row.
    y = jnp.sum(h.astype(jnp.float32) * w6[...], axis=0, keepdims=True) + b6[...]
    o_ref[...] = y.astype(o_ref.dtype)


def prepare_kernel_params(params, compute_dtype=jnp.bfloat16):
    """Convert (W(in,out), b(1,out)) f32 pairs into the kernel's layout.

    Kernel activations are (features, batch), so MXU-layer weights are stored
    as (out, in) in `compute_dtype`; fc1 / fc6 stay f32 (VPU layers).  Biases
    become (out, 1) columns.
    """
    (w1, b1), (w2, b2), (w3, b3), (w4, b4), (w5, b5), (w6, b6) = params
    return [
        (w1.T.astype(jnp.float32),   b1.reshape(-1, 1).astype(jnp.float32)),   # (64, 2)
        (w2.T.astype(compute_dtype), b2.reshape(-1, 1).astype(jnp.float32)),   # (512, 64)
        (w3.T.astype(compute_dtype), b3.reshape(-1, 1).astype(jnp.float32)),   # (1024, 512)
        (w4.T.astype(compute_dtype), b4.reshape(-1, 1).astype(jnp.float32)),   # (512, 1024)
        (w5.T.astype(compute_dtype), b5.reshape(-1, 1).astype(jnp.float32)),   # (64, 512)
        (w6.astype(jnp.float32),     b6.reshape(1, 1).astype(jnp.float32)),    # (64, 1)
    ]


def _device_kind():
    try:
        return jax.devices()[0].device_kind.lower()
    except Exception:
        return ""


def pick_batch_tile(B):
    """Per-generation batch_tile (multiple of 128)."""
    dk = _device_kind()
    if "v6" in dk:
        tile = 512            # fill the 2x256x256 MXU N-dim, amortize ~0.35us/step
    elif "7" in dk:           # v7x
        tile = 512
    elif "v5" in dk:
        tile = 256            # 128-wide MXU already full at N=128; halve step cost
    else:
        tile = 256
    b_pad = _round_up(max(B, 1), 128)
    tile = min(tile, b_pad)
    # On 2-TC chips keep >= 2 grid steps so ("parallel",) can shard across TCs.
    if "7" in dk and b_pad > 128:
        tile = min(tile, max(128, _round_up(pl.cdiv(B, 2), 128)))
    return tile


def _forward_impl(x, kparams, *, batch_tile, compute_dtype):
    B, F = x.shape
    assert F == LAYER_DIMS[0]
    if batch_tile is None:
        batch_tile = pick_batch_tile(B)
    assert batch_tile % 128 == 0, "batch_tile must be a multiple of 128 (lane width)"

    # Pad the batch to a multiple of the tile; padded lanes are sliced off below.
    b_pad = _round_up(B, batch_tile)
    xt = jnp.transpose(x.astype(jnp.float32))               # (2, B): batch on lanes
    if b_pad != B:
        xt = jnp.pad(xt, ((0, 0), (0, b_pad - B)))

    in_specs = [pl.BlockSpec((F, batch_tile), lambda i: (0, i))]
    flat_params = []
    for (w, b) in kparams:
        # Constant index_map -> fetched once, kept resident; Buffered(1) drops
        # the useless second pipeline buffer for these constant blocks.
        in_specs.append(pl.BlockSpec(w.shape, lambda i: (0, 0),
                                     pipeline_mode=pl.Buffered(1)))
        in_specs.append(pl.BlockSpec(b.shape, lambda i: (0, 0),
                                     pipeline_mode=pl.Buffered(1)))
        flat_params.extend([w, b])

    out_specs = pl.BlockSpec((1, batch_tile), lambda i: (0, i))  # lane-dense output row

    # VMEM budget from the real buffer sizes (x2 slack for compiler temps),
    # clamped to stay well inside v7x's 64 MiB/TC.
    const_bytes = 0
    for (w, b) in kparams:
        const_bytes += (_round_up(w.shape[0], 8) * _round_up(w.shape[1], 128)
                        * w.dtype.itemsize)
        const_bytes += _round_up(b.shape[0], 8) * 128 * b.dtype.itemsize
    act_bytes = batch_tile * sum(LAYER_DIMS) * 4             # generous f32 bound
    io_bytes = 2 * batch_tile * (F + 8) * 4 * 2              # double-buffered in/out tiles
    vmem_limit = int(min(56 << 20, max(24 << 20,
                                       2 * (const_bytes + act_bytes + io_bytes))))

    flops = 2 * b_pad * sum(di * do for di, do in zip(LAYER_DIMS[:-1], LAYER_DIMS[1:]))
    bytes_accessed = int(
        sum(int(w.size) * w.dtype.itemsize + int(b.size) * b.dtype.itemsize
            for (w, b) in kparams)
        + int(xt.size) * 4 + b_pad * 4)
    cost = pl.CostEstimate(flops=int(flops), transcendentals=0,
                           bytes_accessed=bytes_accessed)

    out_t = pl.pallas_call(
        functools.partial(_mlp_kernel, compute_dtype=compute_dtype),
        out_shape=jax.ShapeDtypeStruct((1, b_pad), jnp.float32),
        grid_spec=pltpu.PrefetchScalarGridSpec(
            num_scalar_prefetch=0,
            grid=(b_pad // batch_tile,),
            in_specs=in_specs,
            out_specs=out_specs,
        ),
        compiler_params=pltpu.CompilerParams(
            dimension_semantics=("parallel",),    # shard batch tiles over TCs (v7x)
            vmem_limit_bytes=vmem_limit,
        ),
        cost_estimate=cost,
    )(xt, *flat_params)

    # (1, b_pad) -> (B, 1); wrapper-side layout plumbing only.
    return out_t.reshape(b_pad, 1)[:B]


def make_residual_forward(params, *, compute_dtype=jnp.bfloat16, batch_tile=None):
    """Prepare weights ONCE (transpose + cast to kernel layout) and return a
    jitted forward, so the ~4-8 MB weight relayout is off the per-call path."""
    kparams = prepare_kernel_params(params, compute_dtype)

    @jax.jit
    def fwd(x):
        return _forward_impl(x, kparams, batch_tile=batch_tile,
                             compute_dtype=compute_dtype)

    return fwd


def init_params(key):
    """Deterministic init mimicking PyTorch Linear default U(-1/sqrt(fan_in), ...)."""
    params = []
    for fan_in, fan_out in zip(LAYER_DIMS[:-1], LAYER_DIMS[1:]):
        key, kw, kb = jax.random.split(key, 3)
        bound = 1.0 / math.sqrt(fan_in)
        w = jax.random.uniform(kw, (fan_in, fan_out), jnp.float32, -bound, bound)
        b = jax.random.uniform(kb, (1, fan_out), jnp.float32, -bound, bound)
        params.append((w, b))
    return params


def reference_forward(x, params, compute_dtype=jnp.bfloat16):
    """Plain-XLA forward matching the kernel's precision recipe:
    f32 fc1/fc6 (elementwise), bf16 MXU inputs + f32 accumulation for fc2..fc5,
    bf16 inter-layer activations."""
    (w1, b1), (w2, b2), (w3, b3), (w4, b4), (w5, b5), (w6, b6) = params
    h = jnp.maximum(x[:, 0:1] * w1[0:1, :] + x[:, 1:2] * w1[1:2, :] + b1, 0.0)
    h = h.astype(compute_dtype)
    for (w, b) in ((w2, b2), (w3, b3), (w4, b4), (w5, b5)):
        y = jnp.dot(h, w.astype(compute_dtype),
                    preferred_element_type=jnp.float32) + b
        h = jnp.maximum(y, 0.0).astype(compute_dtype)
    return jnp.sum(h.astype(jnp.float32) * w6[:, 0][None, :],
                   axis=-1, keepdims=True) + b6


if __name__ == "__main__":
    key = jax.random.PRNGKey(0)
    key, kx = jax.random.split(key)

    # Deliberately not a multiple of 128: exercises the padding path.
    B = 200
    x = jax.random.normal(kx, (B, LAYER_DIMS[0]), jnp.float32)
    params = init_params(key)

    forward = make_residual_forward(params)
    out = jax.block_until_ready(forward(x))

    ref = reference_forward(x, params)
    assert out.shape == (B, 1)
    max_err = float(jnp.max(jnp.abs(out - ref)))
    assert jnp.allclose(out, ref, atol=2e-3, rtol=2e-3), (
        f"mismatch vs JAX reference: max abs err {max_err}")

    print("KERNEL_OK")
</pallas_src>

<mosaic_0001>
module attributes {stable_mosaic.version = 11 : i64} {
  func.func @_mlp_kernel(%arg0: i32, %arg1: memref<2x256xf32, #tpu.memory_space<vmem>>, %arg2: memref<64x2xf32, #tpu.memory_space<vmem>>, %arg3: memref<64x1xf32, #tpu.memory_space<vmem>>, %arg4: memref<512x64xbf16, #tpu.memory_space<vmem>>, %arg5: memref<512x1xf32, #tpu.memory_space<vmem>>, %arg6: memref<1024x512xbf16, #tpu.memory_space<vmem>>, %arg7: memref<1024x1xf32, #tpu.memory_space<vmem>>, %arg8: memref<512x1024xbf16, #tpu.memory_space<vmem>>, %arg9: memref<512x1xf32, #tpu.memory_space<vmem>>, %arg10: memref<64x512xbf16, #tpu.memory_space<vmem>>, %arg11: memref<64x1xf32, #tpu.memory_space<vmem>>, %arg12: memref<64x1xf32, #tpu.memory_space<vmem>>, %arg13: memref<1x1xf32, #tpu.memory_space<vmem>>, %arg14: memref<1x256xf32, #tpu.memory_space<vmem>>) attributes {dimension_semantics = [#tpu.dimension_semantics<parallel>], iteration_bounds = array<i64: 1>, scalar_prefetch = 0 : i64, scratch_operands = 0 : i64, tpu.core_type = #tpu.core_type<tc>, window_params = [{transform_indices = @transform_0, window_bounds = array<i64: 2, 256>}, {pipeline_mode = #tpu.pipeline_mode<synchronous>, transform_indices = @transform_1, window_bounds = array<i64: 64, 2>}, {pipeline_mode = #tpu.pipeline_mode<synchronous>, transform_indices = @transform_2, window_bounds = array<i64: 64, 1>}, {pipeline_mode = #tpu.pipeline_mode<synchronous>, transform_indices = @transform_3, window_bounds = array<i64: 512, 64>}, {pipeline_mode = #tpu.pipeline_mode<synchronous>, transform_indices = @transform_4, window_bounds = array<i64: 512, 1>}, {pipeline_mode = #tpu.pipeline_mode<synchronous>, transform_indices = @transform_5, window_bounds = array<i64: 1024, 512>}, {pipeline_mode = #tpu.pipeline_mode<synchronous>, transform_indices = @transform_6, window_bounds = array<i64: 1024, 1>}, {pipeline_mode = #tpu.pipeline_mode<synchronous>, transform_indices = @transform_7, window_bounds = array<i64: 512, 1024>}, {pipeline_mode = #tpu.pipeline_mode<synchronous>, transform_indices = @transform_8, window_bounds = array<i64: 512, 1>}, {pipeline_mode = #tpu.pipeline_mode<synchronous>, transform_indices = @transform_9, window_bounds = array<i64: 64, 512>}, {pipeline_mode = #tpu.pipeline_mode<synchronous>, transform_indices = @transform_10, window_bounds = array<i64: 64, 1>}, {pipeline_mode = #tpu.pipeline_mode<synchronous>, transform_indices = @transform_11, window_bounds = array<i64: 64, 1>}, {pipeline_mode = #tpu.pipeline_mode<synchronous>, transform_indices = @transform_12, window_bounds = array<i64: 1, 1>}, {transform_indices = @transform_13, window_bounds = array<i64: 1, 256>}]} {
    %c0 = arith.constant 0 : index
    %c0_0 = arith.constant 0 : index
    %0 = vector.load %arg1[%c0, %c0_0] : memref<2x256xf32, #tpu.memory_space<vmem>>, vector<2x256xf32>
    %c0_1 = arith.constant 0 : index
    %c0_2 = arith.constant 0 : index
    %1 = vector.load %arg2[%c0_1, %c0_2] : memref<64x2xf32, #tpu.memory_space<vmem>>, vector<64x2xf32>
    %2 = vector.extract_strided_slice %1 {offsets = [0, 0], sizes = [64, 1], strides = [1, 1]} : vector<64x2xf32> to vector<64x1xf32>
    %3 = vector.extract_strided_slice %0 {offsets = [0, 0], sizes = [1, 256], strides = [1, 1]} : vector<2x256xf32> to vector<1x256xf32>
    %4 = vector.broadcast %2 : vector<64x1xf32> to vector<64x256xf32>
    %5 = vector.broadcast %3 : vector<1x256xf32> to vector<64x256xf32>
    %6 = arith.mulf %4, %5 : vector<64x256xf32>
    %7 = vector.extract_strided_slice %1 {offsets = [0, 1], sizes = [64, 1], strides = [1, 1]} : vector<64x2xf32> to vector<64x1xf32>
    %8 = vector.extract_strided_slice %0 {offsets = [1, 0], sizes = [1, 256], strides = [1, 1]} : vector<2x256xf32> to vector<1x256xf32>
    %9 = vector.broadcast %7 : vector<64x1xf32> to vector<64x256xf32>
    %10 = vector.broadcast %8 : vector<1x256xf32> to vector<64x256xf32>
    %11 = arith.mulf %9, %10 : vector<64x256xf32>
    %12 = arith.addf %6, %11 : vector<64x256xf32>
    %c0_3 = arith.constant 0 : index
    %c0_4 = arith.constant 0 : index
    %13 = vector.load %arg3[%c0_3, %c0_4] : memref<64x1xf32, #tpu.memory_space<vmem>>, vector<64x1xf32>
    %14 = vector.broadcast %13 : vector<64x1xf32> to vector<64x256xf32>
    %15 = arith.addf %12, %14 : vector<64x256xf32>
    %cst = arith.constant 0.000000e+00 : f32
    %16 = vector.broadcast %cst : f32 to vector<64x256xf32>
    %17 = arith.maximumf %15, %16 : vector<64x256xf32>
    %18 = arith.truncf %17 : vector<64x256xf32> to vector<64x256xbf16>
    %c0_5 = arith.constant 0 : index
    %c0_6 = arith.constant 0 : index
    %19 = vector.load %arg4[%c0_5, %c0_6] : memref<512x64xbf16, #tpu.memory_space<vmem>>, vector<512x64xbf16>
    %cst_7 = arith.constant dense<0.000000e+00> : vector<512x256xf32>
    %20 = tpu.matmul %19, %18, %cst_7 {dimension_numbers = #tpu.dot_dimension_numbers<[1], [0], [0], [1], [0, 0, 1, 1], [], []>} : vector<512x64xbf16>, vector<64x256xbf16>, vector<512x256xf32> -> vector<512x256xf32>
    %c0_8 = arith.constant 0 : index
    %c0_9 = arith.constant 0 : index
    %21 = vector.load %arg5[%c0_8, %c0_9] : memref<512x1xf32, #tpu.memory_space<vmem>>, vector<512x1xf32>
    %22 = vector.broadcast %21 : vector<512x1xf32> to vector<512x256xf32>
    %23 = arith.addf %20, %22 : vector<512x256xf32>
    %cst_10 = arith.constant 0.000000e+00 : f32
    %24 = vector.broadcast %cst_10 : f32 to vector<512x256xf32>
    %25 = arith.maximumf %23, %24 : vector<512x256xf32>
    %26 = arith.truncf %25 : vector<512x256xf32> to vector<512x256xbf16>
    %c0_11 = arith.constant 0 : index
    %c0_12 = arith.constant 0 : index
    %27 = vector.load %arg6[%c0_11, %c0_12] : memref<1024x512xbf16, #tpu.memory_space<vmem>>, vector<1024x512xbf16>
    %cst_13 = arith.constant dense<0.000000e+00> : vector<1024x256xf32>
    %28 = tpu.matmul %27, %26, %cst_13 {dimension_numbers = #tpu.dot_dimension_numbers<[1], [0], [0], [1], [0, 0, 1, 1], [], []>} : vector<1024x512xbf16>, vector<512x256xbf16>, vector<1024x256xf32> -> vector<1024x256xf32>
    %c0_14 = arith.constant 0 : index
    %c0_15 = arith.constant 0 : index
    %29 = vector.load %arg7[%c0_14, %c0_15] : memref<1024x1xf32, #tpu.memory_space<vmem>>, vector<1024x1xf32>
    %30 = vector.broadcast %29 : vector<1024x1xf32> to vector<1024x256xf32>
    %31 = arith.addf %28, %30 : vector<1024x256xf32>
    %cst_16 = arith.constant 0.000000e+00 : f32
    %32 = vector.broadcast %cst_16 : f32 to vector<1024x256xf32>
    %33 = arith.maximumf %31, %32 : vector<1024x256xf32>
    %34 = arith.truncf %33 : vector<1024x256xf32> to vector<1024x256xbf16>
    %c0_17 = arith.constant 0 : index
    %c0_18 = arith.constant 0 : index
    %35 = vector.load %arg8[%c0_17, %c0_18] : memref<512x1024xbf16, #tpu.memory_space<vmem>>, vector<512x1024xbf16>
    %cst_19 = arith.constant dense<0.000000e+00> : vector<512x256xf32>
    %36 = tpu.matmul %35, %34, %cst_19 {dimension_numbers = #tpu.dot_dimension_numbers<[1], [0], [0], [1], [0, 0, 1, 1], [], []>} : vector<512x1024xbf16>, vector<1024x256xbf16>, vector<512x256xf32> -> vector<512x256xf32>
    %c0_20 = arith.constant 0 : index
    %c0_21 = arith.constant 0 : index
    %37 = vector.load %arg9[%c0_20, %c0_21] : memref<512x1xf32, #tpu.memory_space<vmem>>, vector<512x1xf32>
    %38 = vector.broadcast %37 : vector<512x1xf32> to vector<512x256xf32>
    %39 = arith.addf %36, %38 : vector<512x256xf32>
    %cst_22 = arith.constant 0.000000e+00 : f32
    %40 = vector.broadcast %cst_22 : f32 to vector<512x256xf32>
    %41 = arith.maximumf %39, %40 : vector<512x256xf32>
    %42 = arith.truncf %41 : vector<512x256xf32> to vector<512x256xbf16>
    %c0_23 = arith.constant 0 : index
    %c0_24 = arith.constant 0 : index
    %43 = vector.load %arg10[%c0_23, %c0_24] : memref<64x512xbf16, #tpu.memory_space<vmem>>, vector<64x512xbf16>
    %cst_25 = arith.constant dense<0.000000e+00> : vector<64x256xf32>
    %44 = tpu.matmul %43, %42, %cst_25 {dimension_numbers = #tpu.dot_dimension_numbers<[1], [0], [0], [1], [0, 0, 1, 1], [], []>} : vector<64x512xbf16>, vector<512x256xbf16>, vector<64x256xf32> -> vector<64x256xf32>
    %c0_26 = arith.constant 0 : index
    %c0_27 = arith.constant 0 : index
    %45 = vector.load %arg11[%c0_26, %c0_27] : memref<64x1xf32, #tpu.memory_space<vmem>>, vector<64x1xf32>
    %46 = vector.broadcast %45 : vector<64x1xf32> to vector<64x256xf32>
    %47 = arith.addf %44, %46 : vector<64x256xf32>
    %cst_28 = arith.constant 0.000000e+00 : f32
    %48 = vector.broadcast %cst_28 : f32 to vector<64x256xf32>
    %49 = arith.maximumf %47, %48 : vector<64x256xf32>
    %50 = arith.truncf %49 : vector<64x256xf32> to vector<64x256xbf16>
    %51 = arith.extf %50 : vector<64x256xbf16> to vector<64x256xf32>
    %c0_29 = arith.constant 0 : index
    %c0_30 = arith.constant 0 : index
    %52 = vector.load %arg12[%c0_29, %c0_30] : memref<64x1xf32, #tpu.memory_space<vmem>>, vector<64x1xf32>
    %53 = vector.broadcast %52 : vector<64x1xf32> to vector<64x256xf32>
    %54 = arith.mulf %51, %53 : vector<64x256xf32>
    %cst_31 = arith.constant dense<0.000000e+00> : vector<256xf32>
    %55 = vector.multi_reduction <add>, %54, %cst_31 [0] : vector<64x256xf32> to vector<256xf32>
    %56 = vector.shape_cast %55 : vector<256xf32> to vector<1x256xf32>
    %c0_32 = arith.constant 0 : index
    %c0_33 = arith.constant 0 : index
    %57 = vector.load %arg13[%c0_32, %c0_33] : memref<1x1xf32, #tpu.memory_space<vmem>>, vector<1x1xf32>
    %58 = vector.broadcast %57 : vector<1x1xf32> to vector<1x256xf32>
    %59 = arith.addf %56, %58 : vector<1x256xf32>
    %c0_34 = arith.constant 0 : index
    %c0_35 = arith.constant 0 : index
    %60 = vector.load %arg14[%c0_34, %c0_35] : memref<1x256xf32, #tpu.memory_space<vmem>>, vector<1x256xf32>
    tpu.vector_store %arg14[%c0_34, %c0_35], %59 {strides = array<i32>} : memref<1x256xf32, #tpu.memory_space<vmem>>, vector<1x256xf32>,
    return
  }
  func.func @transform_0(%arg0: i32) -> (i32, i32) {
    %c0_i32 = arith.constant 0 : i32
    %c0_i32_0 = arith.constant 0 : i32
    return %c0_i32, %arg0 : i32, i32
  }
  func.func @transform_1(%arg0: i32) -> (i32, i32) {
    %c0_i32 = arith.constant 0 : i32
    %c0_i32_0 = arith.constant 0 : i32
    %c0_i32_1 = arith.constant 0 : i32
    return %c0_i32, %c0_i32_0 : i32, i32
  }
  func.func @transform_2(%arg0: i32) -> (i32, i32) {
    %c0_i32 = arith.constant 0 : i32
    %c0_i32_0 = arith.constant 0 : i32
    %c0_i32_1 = arith.constant 0 : i32
    return %c0_i32, %c0_i32_0 : i32, i32
  }
  func.func @transform_3(%arg0: i32) -> (i32, i32) {
    %c0_i32 = arith.constant 0 : i32
    %c0_i32_0 = arith.constant 0 : i32
    %c0_i32_1 = arith.constant 0 : i32
    return %c0_i32, %c0_i32_0 : i32, i32
  }
  func.func @transform_4(%arg0: i32) -> (i32, i32) {
    %c0_i32 = arith.constant 0 : i32
    %c0_i32_0 = arith.constant 0 : i32
    %c0_i32_1 = arith.constant 0 : i32
    return %c0_i32, %c0_i32_0 : i32, i32
  }
  func.func @transform_5(%arg0: i32) -> (i32, i32) {
    %c0_i32 = arith.constant 0 : i32
    %c0_i32_0 = arith.constant 0 : i32
    %c0_i32_1 = arith.constant 0 : i32
    return %c0_i32, %c0_i32_0 : i32, i32
  }
  func.func @transform_6(%arg0: i32) -> (i32, i32) {
    %c0_i32 = arith.constant 0 : i32
    %c0_i32_0 = arith.constant 0 : i32
    %c0_i32_1 = arith.constant 0 : i32
    return %c0_i32, %c0_i32_0 : i32, i32
  }
  func.func @transform_7(%arg0: i32) -> (i32, i32) {
    %c0_i32 = arith.constant 0 : i32
    %c0_i32_0 = arith.constant 0 : i32
    %c0_i32_1 = arith.constant 0 : i32
    return %c0_i32, %c0_i32_0 : i32, i32
  }
  func.func @transform_8(%arg0: i32) -> (i32, i32) {
    %c0_i32 = arith.constant 0 : i32
    %c0_i32_0 = arith.constant 0 : i32
    %c0_i32_1 = arith.constant 0 : i32
    return %c0_i32, %c0_i32_0 : i32, i32
  }
  func.func @transform_9(%arg0: i32) -> (i32, i32) {
    %c0_i32 = arith.constant 0 : i32
    %c0_i32_0 = arith.constant 0 : i32
    %c0_i32_1 = arith.constant 0 : i32
    return %c0_i32, %c0_i32_0 : i32, i32
  }
  func.func @transform_10(%arg0: i32) -> (i32, i32) {
    %c0_i32 = arith.constant 0 : i32
    %c0_i32_0 = arith.constant 0 : i32
    %c0_i32_1 = arith.constant 0 : i32
    return %c0_i32, %c0_i32_0 : i32, i32
  }
  func.func @transform_11(%arg0: i32) -> (i32, i32) {
    %c0_i32 = arith.constant 0 : i32
    %c0_i32_0 = arith.constant 0 : i32
    %c0_i32_1 = arith.constant 0 : i32
    return %c0_i32, %c0_i32_0 : i32, i32
  }
  func.func @transform_12(%arg0: i32) -> (i32, i32) {
    %c0_i32 = arith.constant 0 : i32
    %c0_i32_0 = arith.constant 0 : i32
    %c0_i32_1 = arith.constant 0 : i32
    return %c0_i32, %c0_i32_0 : i32, i32
  }
  func.func @transform_13(%arg0: i32) -> (i32, i32) {
    %c0_i32 = arith.constant 0 : i32
    %c0_i32_0 = arith.constant 0 : i32
    return %c0_i32, %arg0 : i32, i32
  }
}

</mosaic_0001>

<llo_original>
// kernel: fwd.1
$region0: #{fwd.1}
  #allocation0 [shape = 'u32[]', space=smem, size = 0x4, offset = 0x4, fixed_abs, tag = 'smem constant byte address 0x4 - core index']
  #allocation1 [shape = 'u32[72,128]{1,0:T(1,128)}', space=vmem, size = 0x9000, scoped, tag = 'internal scratch']
  #allocation2 [shape = 'f32[1,1]{1,0:T(1,128)S(1)}', space=vmem, size = 0x200, scoped, tag = 'scoped memory for fwd.1']
  %s0 = inlined_call_operand.vmem [shape: f32[2,256], index: 0, kind: input, shape index: {}]
  %s1 = inlined_call_operand.hbm [shape: f32[64,2], index: 1, kind: input, shape index: {}]
  %s2 = inlined_call_operand.hbm [shape: f32[64,1], index: 2, kind: input, shape index: {}]
  %s3 = inlined_call_operand.hbm [shape: bf16[512,64], index: 3, kind: input, shape index: {}]
  %s4 = inlined_call_operand.hbm [shape: f32[512,1], index: 4, kind: input, shape index: {}]
  %s5 = inlined_call_operand.hbm [shape: bf16[1024,512], index: 5, kind: input, shape index: {}]
  %s6 = inlined_call_operand.hbm [shape: f32[1024,1], index: 6, kind: input, shape index: {}]
  %s7 = inlined_call_operand.hbm [shape: bf16[512,1024], index: 7, kind: input, shape index: {}]
  %s8 = inlined_call_operand.hbm [shape: f32[512,1], index: 8, kind: input, shape index: {}]
  %s9 = inlined_call_operand.hbm [shape: bf16[64,512], index: 9, kind: input, shape index: {}]
  %s10 = inlined_call_operand.hbm [shape: f32[64,1], index: 10, kind: input, shape index: {}]
  %s11 = inlined_call_operand.hbm [shape: f32[64,1], index: 11, kind: input, shape index: {}]
  %s12 = inlined_call_operand.<no memory space> [shape: f32[1,1], index: 12, kind: input, shape index: {}]
  %s13 = inlined_call_operand.vmem [shape: f32[1,256], index: 13, kind: output, shape index: {}]
  %s14 = sld [smem:[#allocation0]]
  $region106: #{fwd.1} parent=0
    _
  %s16 = ssub.s32 1, %s14
  %s17 = scalar_select 0, %s16, %s14
  %v18 = vstv %s12
  %19 = vst [vmem:[#allocation2] sm:$0x1] %v18
  $region1: #{fwd.1} parent=0
    #allocation3 [shape = 'u8[32768]{0}', space=vmem, size = 0x8000, scoped, tag = 'input window, operand 1, single buffered']
    #allocation4 [shape = 's32[1]{0}', space=sflag, size = 0x4, scoped, tag = 'scoped memory for fwd.1']
    #allocation5 [shape = 'u8[32768]{0}', space=vmem, size = 0x8000, scoped, tag = 'input window, operand 2, single buffered']
    #allocation6 [shape = 's32[1]{0}', space=sflag, size = 0x4, scoped, tag = 'scoped memory for fwd.1']
    #allocation7 [shape = 'u8[131072]{0}', space=vmem, size = 0x20000, scoped, tag = 'input window, operand 3, single buffered']
    #allocation8 [shape = 'u8[262144]{0}', space=vmem, size = 0x40000, scoped, tag = 'input window, operand 4, single buffered']
    #allocation9 [shape = 's32[1]{0}', space=sflag, size = 0x4, scoped, tag = 'scoped memory for fwd.1']
    #allocation10 [shape = 'u8[1048576]{0}', space=vmem, size = 0x100000, scoped, tag = 'input window, operand 5, single buffered']
    #allocation11 [shape = 'u8[524288]{0}', space=vmem, size = 0x80000, scoped, tag = 'input window, operand 6, single buffered']
    #allocation12 [shape = 's32[1]{0}', space=sflag, size = 0x4, scoped, tag = 'scoped memory for fwd.1']
    #allocation13 [shape = 'u8[1048576]{0}', space=vmem, size = 0x100000, scoped, tag = 'input window, operand 7, single buffered']
    #allocation14 [shape = 'u8[262144]{0}', space=vmem, size = 0x40000, scoped, tag = 'input window, operand 8, single buffered']
    #allocation15 [shape = 's32[1]{0}', space=sflag, size = 0x4, scoped, tag = 'scoped memory for fwd.1']
    #allocation16 [shape = 'u8[65536]{0}', space=vmem, size = 0x10000, scoped, tag = 'input window, operand 9, single buffered']
    #allocation17 [shape = 'u8[32768]{0}', space=vmem, size = 0x8000, scoped, tag = 'input window, operand 10, single buffered']
    #allocation18 [shape = 's32[1]{0}', space=sflag, size = 0x4, scoped, tag = 'scoped memory for fwd.1']
    #allocation19 [shape = 'u8[32768]{0}', space=vmem, size = 0x8000, scoped, tag = 'input window, operand 11, single buffered']
    %20 = vsyncpa [#allocation4], 0
    %21 = vsyncpa [#allocation6], 0
    %22 = vsyncpa [#allocation9], 0
    %23 = vsyncpa [#allocation12], 0
    %24 = vsyncpa [#allocation15], 0
    %25 = vsyncpa [#allocation18], 0
    // Predicated region
    $region2: #{fwd.1} parent=1 // pred_check
      _
    $region3: #{fwd.1} parent=1 // pred_check_branch
      %27 = sbr.rel (0) target = $region5
    $region4: #{fwd.1} parent=1 // pred_region
      _
    $region5: #{fwd.1} parent=1 // pred_fallthru
      _
    // Predicated region
    $region6: #{fwd.1} parent=1 // pred_check
      _
    $region7: #{fwd.1} parent=1 // pred_check_branch
      %29 = sbr.rel (0) target = $region9
    $region8: #{fwd.1} parent=1 // pred_region
      %31 = vsyncadd [#allocation4], 0
      %s32 = sshll.u32 %s1, 4
      %s33 = int_to_ptr.hbm [resolvable:$true] %s32
      %s34 = sshll.u32 [#allocation3], 4
      %s35 = int_to_ptr.vmem [resolvable:$true] %s34
      %40 = dma.hbm_to_vmem [thread:$0]  %s33, 1024, %s35, [#allocation4], 128, 128, 8
    $region9: #{fwd.1} parent=1 // pred_fallthru
      _
    // Predicated region
    $region10: #{fwd.1} parent=1 // pred_check
      _
    $region11: #{fwd.1} parent=1 // pred_check_branch
      %42 = sbr.rel (0) target = $region13
    $region12: #{fwd.1} parent=1 // pred_region
      %44 = vsyncadd [#allocation6], 0
      %s45 = sshll.u32 %s2, 4
      %s46 = int_to_ptr.hbm [resolvable:$true] %s45
      %s47 = sshll.u32 [#allocation5], 4
      %s48 = int_to_ptr.vmem [resolvable:$true] %s47
      %53 = dma.hbm_to_vmem [thread:$0]  %s46, 1024, %s48, [#allocation6], 128, 128, 8
    $region13: #{fwd.1} parent=1 // pred_fallthru
      _
    // Predicated region
    $region14: #{fwd.1} parent=1 // pred_check
      _
    $region15: #{fwd.1} parent=1 // pred_check_branch
      %55 = sbr.rel (0) target = $region17
    $region16: #{fwd.1} parent=1 // pred_region
      %57 = vsyncadd [#allocation6], 0
      %s58 = sshll.u32 %s3, 4
      %s59 = int_to_ptr.hbm [resolvable:$true] %s58
      %s60 = sshll.u32 [#allocation7], 4
      %s61 = int_to_ptr.vmem [resolvable:$true] %s60
      %66 = dma.hbm_to_vmem [thread:$0]  %s59, 4096, %s61, [#allocation6], 64, 64, 4
    $region17: #{fwd.1} parent=1 // pred_fallthru
      _
    // Predicated region
    $region18: #{fwd.1} parent=1 // pred_check
      _
    $region19: #{fwd.1} parent=1 // pred_check_branch
      %68 = sbr.rel (0) target = $region21
    $region20: #{fwd.1} parent=1 // pred_region
      %70 = vsyncadd [#allocation9], 0
      %s71 = sshll.u32 %s4, 4
      %s72 = int_to_ptr.hbm [resolvable:$true] %s71
      %s73 = sshll.u32 [#allocation8], 4
      %s74 = int_to_ptr.vmem [resolvable:$true] %s73
      %79 = dma.hbm_to_vmem [thread:$0]  %s72, 8192, %s74, [#allocation9], 128, 128, 8
    $region21: #{fwd.1} parent=1 // pred_fallthru
      _
    // Predicated region
    $region22: #{fwd.1} parent=1 // pred_check
      _
    $region23: #{fwd.1} parent=1 // pred_check_branch
      %81 = sbr.rel (0) target = $region25
    $region24: #{fwd.1} parent=1 // pred_region
      %83 = vsyncadd [#allocation9], 0
      %s84 = sshll.u32 %s5, 4
      %s85 = int_to_ptr.hbm [resolvable:$true] %s84
      %s86 = sshll.u32 [#allocation10], 4
      %s87 = int_to_ptr.vmem [resolvable:$true] %s86
      %92 = dma.hbm_to_vmem [thread:$0]  %s85, 32768, %s87, [#allocation9], 256, 256, 16
    $region25: #{fwd.1} parent=1 // pred_fallthru
      _
    // Predicated region
    $region26: #{fwd.1} parent=1 // pred_check
      _
    $region27: #{fwd.1} parent=1 // pred_check_branch
      %94 = sbr.rel (0) target = $region29
    $region28: #{fwd.1} parent=1 // pred_region
      %96 = vsyncadd [#allocation12], 0
      %s97 = sshll.u32 %s6, 4
      %s98 = int_to_ptr.hbm [resolvable:$true] %s97
      %s99 = sshll.u32 [#allocation11], 4
      %s100 = int_to_ptr.vmem [resolvable:$true] %s99
      %105 = dma.hbm_to_vmem [thread:$0]  %s98, 16384, %s100, [#allocation12], 128, 128, 8
    $region29: #{fwd.1} parent=1 // pred_fallthru
      _
    // Predicated region
    $region30: #{fwd.1} parent=1 // pred_check
      _
    $region31: #{fwd.1} parent=1 // pred_check_branch
      %107 = sbr.rel (0) target = $region33
    $region32: #{fwd.1} parent=1 // pred_region
      %109 = vsyncadd [#allocation12], 0
      %s110 = sshll.u32 %s7, 4
      %s111 = int_to_ptr.hbm [resolvable:$true] %s110
      %s112 = sshll.u32 [#allocation13], 4
      %s113 = int_to_ptr.vmem [resolvable:$true] %s112
      %118 = dma.hbm_to_vmem [thread:$0]  %s111, 32768, %s113, [#allocation12], 512, 512, 32
    $region33: #{fwd.1} parent=1 // pred_fallthru
      _
    // Predicated region
    $region34: #{fwd.1} parent=1 // pred_check
      _
    $region35: #{fwd.1} parent=1 // pred_check_branch
      %120 = sbr.rel (0) target = $region37
    $region36: #{fwd.1} parent=1 // pred_region
      %122 = vsyncadd [#allocation15], 0
      %s123 = sshll.u32 %s8, 4
      %s124 = int_to_ptr.hbm [resolvable:$true] %s123
      %s125 = sshll.u32 [#allocation14], 4
      %s126 = int_to_ptr.vmem [resolvable:$true] %s125
      %131 = dma.hbm_to_vmem [thread:$0]  %s124, 8192, %s126, [#allocation15], 128, 128, 8
    $region37: #{fwd.1} parent=1 // pred_fallthru
      _
    // Predicated region
    $region38: #{fwd.1} parent=1 // pred_check
      _
    $region39: #{fwd.1} parent=1 // pred_check_branch
      %133 = sbr.rel (0) target = $region41
    $region40: #{fwd.1} parent=1 // pred_region
      %135 = vsyncadd [#allocation15], 0
      %s136 = sshll.u32 %s9, 4
      %s137 = int_to_ptr.hbm [resolvable:$true] %s136
      %s138 = sshll.u32 [#allocation16], 4
      %s139 = int_to_ptr.vmem [resolvable:$true] %s138
      %144 = dma.hbm_to_vmem [thread:$0]  %s137, 2048, %s139, [#allocation15], 256, 256, 16
    $region41: #{fwd.1} parent=1 // pred_fallthru
      _
    // Predicated region
    $region42: #{fwd.1} parent=1 // pred_check
      _
    $region43: #{fwd.1} parent=1 // pred_check_branch
      %146 = sbr.rel (0) target = $region45
    $region44: #{fwd.1} parent=1 // pred_region
      %148 = vsyncadd [#allocation18], 0
      %s149 = sshll.u32 %s10, 4
      %s150 = int_to_ptr.hbm [resolvable:$true] %s149
      %s151 = sshll.u32 [#allocation17], 4
      %s152 = int_to_ptr.vmem [resolvable:$true] %s151
      %157 = dma.hbm_to_vmem [thread:$0]  %s150, 1024, %s152, [#allocation18], 128, 128, 8
    $region45: #{fwd.1} parent=1 // pred_fallthru
      _
    // Predicated region
    $region46: #{fwd.1} parent=1 // pred_check
      _
    $region47: #{fwd.1} parent=1 // pred_check_branch
      %159 = sbr.rel (0) target = $region49
    $region48: #{fwd.1} parent=1 // pred_region
      %161 = vsyncadd [#allocation18], 0
      %s162 = sshll.u32 %s11, 4
      %s163 = int_to_ptr.hbm [resolvable:$true] %s162
      %s164 = sshll.u32 [#allocation19], 4
      %s165 = int_to_ptr.vmem [resolvable:$true] %s164
      %170 = dma.hbm_to_vmem [thread:$0]  %s163, 1024, %s165, [#allocation18], 128, 128, 8
    $region49: #{fwd.1} parent=1 // pred_fallthru
      _
    // Predicated region
    $region50: #{fwd.1} parent=1 // pred_check
      _
    $region51: #{fwd.1} parent=1 // pred_check_branch
      %172 = sbr.rel (0) target = $region53
    $region52: #{fwd.1} parent=1 // pred_region
      _
    $region53: #{fwd.1} parent=1 // pred_fallthru
      _
    // Predicated region
    $region54: #{fwd.1} parent=1 // pred_check
      _
    $region55: #{fwd.1} parent=1 // pred_check_branch
      %174 = sbr.rel (0) target = $region57
    $region56: #{fwd.1} parent=1 // pred_region
      %176 = dma.done [#allocation4], 1024
    $region57: #{fwd.1} parent=1 // pred_fallthru
      _
    // Predicated region
    $region58: #{fwd.1} parent=1 // pred_check
      _
    $region59: #{fwd.1} parent=1 // pred_check_branch
      %178 = sbr.rel (0) target = $region61
    $region60: #{fwd.1} parent=1 // pred_region
      %180 = dma.done [#allocation6], 1024
    $region61: #{fwd.1} parent=1 // pred_fallthru
      _
    // Predicated region
    $region62: #{fwd.1} parent=1 // pred_check
      _
    $region63: #{fwd.1} parent=1 // pred_check_branch
      %182 = sbr.rel (0) target = $region65
    $region64: #{fwd.1} parent=1 // pred_region
      %184 = dma.done [#allocation6], 4096
    $region65: #{fwd.1} parent=1 // pred_fallthru
      _
    // Predicated region
    $region66: #{fwd.1} parent=1 // pred_check
      _
    $region67: #{fwd.1} parent=1 // pred_check_branch
      %186 = sbr.rel (0) target = $region69
    $region68: #{fwd.1} parent=1 // pred_region
      %188 = dma.done [#allocation9], 8192
    $region69: #{fwd.1} parent=1 // pred_fallthru
      _
    // Predicated region
    $region70: #{fwd.1} parent=1 // pred_check
      _
    $region71: #{fwd.1} parent=1 // pred_check_branch
      %190 = sbr.rel (0) target = $region73
    $region72: #{fwd.1} parent=1 // pred_region
      %192 = dma.done [#allocation9], 32768
    $region73: #{fwd.1} parent=1 // pred_fallthru
      _
    // Predicated region
    $region74: #{fwd.1} parent=1 // pred_check
      _
    $region75: #{fwd.1} parent=1 // pred_check_branch
      %194 = sbr.rel (0) target = $region77
    $region76: #{fwd.1} parent=1 // pred_region
      %196 = dma.done [#allocation12], 16384
    $region77: #{fwd.1} parent=1 // pred_fallthru
      _
    // Predicated region
    $region78: #{fwd.1} parent=1 // pred_check
      _
    $region79: #{fwd.1} parent=1 // pred_check_branch
      %198 = sbr.rel (0) target = $region81
    $region80: #{fwd.1} parent=1 // pred_region
      %200 = dma.done [#allocation12], 32768
    $region81: #{fwd.1} parent=1 // pred_fallthru
      _
    // Predicated region
    $region82: #{fwd.1} parent=1 // pred_check
      _
    $region83: #{fwd.1} parent=1 // pred_check_branch
      %202 = sbr.rel (0) target = $region85
    $region84: #{fwd.1} parent=1 // pred_region
      %204 = dma.done [#allocation15], 8192
    $region85: #{fwd.1} parent=1 // pred_fallthru
      _
    // Predicated region
    $region86: #{fwd.1} parent=1 // pred_check
      _
    $region87: #{fwd.1} parent=1 // pred_check_branch
      %206 = sbr.rel (0) target = $region89
    $region88: #{fwd.1} parent=1 // pred_region
      %208 = dma.done [#allocation15], 2048
    $region89: #{fwd.1} parent=1 // pred_fallthru
      _
    // Predicated region
    $region90: #{fwd.1} parent=1 // pred_check
      _
    $region91: #{fwd.1} parent=1 // pred_check_branch
      %210 = sbr.rel (0) target = $region93
    $region92: #{fwd.1} parent=1 // pred_region
      %212 = dma.done [#allocation18], 1024
    $region93: #{fwd.1} parent=1 // pred_fallthru
      _
    // Predicated region
    $region94: #{fwd.1} parent=1 // pred_check
      _
    $region95: #{fwd.1} parent=1 // pred_check_branch
      %214 = sbr.rel (0) target = $region97
    $region96: #{fwd.1} parent=1 // pred_region
      %216 = dma.done [#allocation18], 1024
    $region97: #{fwd.1} parent=1 // pred_fallthru
      _
    %v218 = vld [vmem:[%s0] sm:$0xf]
    %v219 = vld [vmem:[#allocation3] sm:$0xff]
    %v220 = vld [vmem:[#allocation3 + $0x8] sm:$0xff]
    %v221 = vld [vmem:[#allocation3 + $0x10] sm:$0xff]
    %v222 = vld [vmem:[#allocation3 + $0x18] sm:$0xff]
    %v223 = vld [vmem:[#allocation3 + $0x20] sm:$0xff]
    %v224 = vld [vmem:[#allocation3 + $0x28] sm:$0xff]
    %v225 = vld [vmem:[#allocation3 + $0x30] sm:$0xff]
    %v226 = vld [vmem:[#allocation3 + $0x38] sm:$0xff]
    %228 = vset.pattern.permute.xlu0 0
    %229 = vperm.xlu0 %228, %v219
    %v230 = vpop.permute.xlu0 %229
    %233 = vset.pattern.permute.xlu0 0
    %234 = vperm.xlu0 %233, %v220
    %v235 = vpop.permute.xlu0 %234
    %238 = vset.pattern.permute.xlu0 0
    %239 = vperm.xlu0 %238, %v221
    %v240 = vpop.permute.xlu0 %239
    %243 = vset.pattern.permute.xlu0 0
    %244 = vperm.xlu0 %243, %v222
    %v245 = vpop.permute.xlu0 %244
    %248 = vset.pattern.permute.xlu0 0
    %249 = vperm.xlu0 %248, %v223
    %v250 = vpop.permute.xlu0 %249
    %253 = vset.pattern.permute.xlu0 0
    %254 = vperm.xlu0 %253, %v224
    %v255 = vpop.permute.xlu0 %254
    %258 = vset.pattern.permute.xlu0 0
    %259 = vperm.xlu0 %258, %v225
    %v260 = vpop.permute.xlu0 %259
    %263 = vset.pattern.permute.xlu0 0
    %264 = vperm.xlu0 %263, %v226
    %v265 = vpop.permute.xlu0 %264
    %v268 = vperm.slane %v218, 0
    %v269 = vperm.slane %v218, 2
    %v272 = vperm.slane %v268, 0
    %v273 = vperm.slane %v269, 0
    %v274 = vmul.f32 %v230, %v272
    %v275 = vmul.f32 %v230, %v273
    %v276 = vmul.f32 %v235, %v272
    %v277 = vmul.f32 %v235, %v273
    %v278 = vmul.f32 %v240, %v272
    %v279 = vmul.f32 %v240, %v273
    %v280 = vmul.f32 %v245, %v272
    %v281 = vmul.f32 %v245, %v273
    %v282 = vmul.f32 %v250, %v272
    %v283 = vmul.f32 %v250, %v273
    %v284 = vmul.f32 %v255, %v272
    %v285 = vmul.f32 %v255, %v273
    %v286 = vmul.f32 %v260, %v272
    %v287 = vmul.f32 %v260, %v273
    %v288 = vmul.f32 %v265, %v272
    %v289 = vmul.f32 %v265, %v273
    %290 = vset.pattern.permute.xlu0 1
    %291 = vperm.xlu0 %290, %v219
    %v292 = vpop.permute.xlu0 %291
    %294 = vset.pattern.permute.xlu0 1
    %295 = vperm.xlu0 %294, %v220
    %v296 = vpop.permute.xlu0 %295
    %298 = vset.pattern.permute.xlu0 1
    %299 = vperm.xlu0 %298, %v221
    %v300 = vpop.permute.xlu0 %299
    %302 = vset.pattern.permute.xlu0 1
    %303 = vperm.xlu0 %302, %v222
    %v304 = vpop.permute.xlu0 %303
    %306 = vset.pattern.permute.xlu0 1
    %307 = vperm.xlu0 %306, %v223
    %v308 = vpop.permute.xlu0 %307
    %310 = vset.pattern.permute.xlu0 1
    %311 = vperm.xlu0 %310, %v224
    %v312 = vpop.permute.xlu0 %311
    %314 = vset.pattern.permute.xlu0 1
    %315 = vperm.xlu0 %314, %v225
    %v316 = vpop.permute.xlu0 %315
    %318 = vset.pattern.permute.xlu0 1
    %319 = vperm.xlu0 %318, %v226
    %v320 = vpop.permute.xlu0 %319
    %v322 = vperm.slane %v218, 1
    %v323 = vperm.slane %v218, 3
    %v326 = vperm.slane %v322, 1
    %v327 = vperm.slane %v323, 1
    %v328 = vmul.f32 %v292, %v326
    %v329 = vmul.f32 %v292, %v327
    %v330 = vmul.f32 %v296, %v326
    %v331 = vmul.f32 %v296, %v327
    %v332 = vmul.f32 %v300, %v326
    %v333 = vmul.f32 %v300, %v327
    %v334 = vmul.f32 %v304, %v326
    %v335 = vmul.f32 %v304, %v327
    %v336 = vmul.f32 %v308, %v326
    %v337 = vmul.f32 %v308, %v327
    %v338 = vmul.f32 %v312, %v326
    %v339 = vmul.f32 %v312, %v327
    %v340 = vmul.f32 %v316, %v326
    %v341 = vmul.f32 %v316, %v327
    %v342 = vmul.f32 %v320, %v326
    %v343 = vmul.f32 %v320, %v327
    %v344 = vadd.f32 %v274, %v328
    %v345 = vadd.f32 %v275, %v329
    %v346 = vadd.f32 %v276, %v330
    %v347 = vadd.f32 %v277, %v331
    %v348 = vadd.f32 %v278, %v332
    %v349 = vadd.f32 %v279, %v333
    %v350 = vadd.f32 %v280, %v334
    %v351 = vadd.f32 %v281, %v335
    %v352 = vadd.f32 %v282, %v336
    %v353 = vadd.f32 %v283, %v337
    %v354 = vadd.f32 %v284, %v338
    %v355 = vadd.f32 %v285, %v339
    %v356 = vadd.f32 %v286, %v340
    %v357 = vadd.f32 %v287, %v341
    %v358 = vadd.f32 %v288, %v342
    %v359 = vadd.f32 %v289, %v343
    %v360 = vld [vmem:[#allocation5] sm:$0xff]
    %v361 = vld [vmem:[#allocation5 + $0x8] sm:$0xff]
    %v362 = vld [vmem:[#allocation5 + $0x10] sm:$0xff]
    %v363 = vld [vmem:[#allocation5 + $0x18] sm:$0xff]
    %v364 = vld [vmem:[#allocation5 + $0x20] sm:$0xff]
    %v365 = vld [vmem:[#allocation5 + $0x28] sm:$0xff]
    %v366 = vld [vmem:[#allocation5 + $0x30] sm:$0xff]
    %v367 = vld [vmem:[#allocation5 + $0x38] sm:$0xff]
    %369 = vset.pattern.permute.xlu0 0
    %370 = vperm.xlu0 %369, %v360
    %v371 = vpop.permute.xlu0 %370
    %374 = vset.pattern.permute.xlu0 0
    %375 = vperm.xlu0 %374, %v361
    %v376 = vpop.permute.xlu0 %375
    %379 = vset.pattern.permute.xlu0 0
    %380 = vperm.xlu0 %379, %v362
    %v381 = vpop.permute.xlu0 %380
    %384 = vset.pattern.permute.xlu0 0
    %385 = vperm.xlu0 %384, %v363
    %v386 = vpop.permute.xlu0 %385
    %389 = vset.pattern.permute.xlu0 0
    %390 = vperm.xlu0 %389, %v364
    %v391 = vpop.permute.xlu0 %390
    %394 = vset.pattern.permute.xlu0 0
    %395 = vperm.xlu0 %394, %v365
    %v396 = vpop.permute.xlu0 %395
    %399 = vset.pattern.permute.xlu0 0
    %400 = vperm.xlu0 %399, %v366
    %v401 = vpop.permute.xlu0 %400
    %404 = vset.pattern.permute.xlu0 0
    %405 = vperm.xlu0 %404, %v367
    %v406 = vpop.permute.xlu0 %405
    %v408 = vadd.f32 %v344, %v371
    %v409 = vadd.f32 %v345, %v371
    %v410 = vadd.f32 %v346, %v376
    %v411 = vadd.f32 %v347, %v376
    %v412 = vadd.f32 %v348, %v381
    %v413 = vadd.f32 %v349, %v381
    %v414 = vadd.f32 %v350, %v386
    %v415 = vadd.f32 %v351, %v386
    %v416 = vadd.f32 %v352, %v391
    %v417 = vadd.f32 %v353, %v391
    %v418 = vadd.f32 %v354, %v396
    %v419 = vadd.f32 %v355, %v396
    %v420 = vadd.f32 %v356, %v401
    %v421 = vadd.f32 %v357, %v401
    %v422 = vadd.f32 %v358, %v406
    %v423 = vadd.f32 %v359, %v406
    %v424 = vmax.f32 %v408, 0.0
    %v425 = vmax.f32 %v409, 0.0
    %v426 = vmax.f32 %v410, 0.0
    %v427 = vmax.f32 %v411, 0.0
    %v428 = vmax.f32 %v412, 0.0
    %v429 = vmax.f32 %v413, 0.0
    %v430 = vmax.f32 %v414, 0.0
    %v431 = vmax.f32 %v415, 0.0
    %v432 = vmax.f32 %v416, 0.0
    %v433 = vmax.f32 %v417, 0.0
    %v434 = vmax.f32 %v418, 0.0
    %v435 = vmax.f32 %v419, 0.0
    %v436 = vmax.f32 %v420, 0.0
    %v437 = vmax.f32 %v421, 0.0
    %v438 = vmax.f32 %v422, 0.0
    %v439 = vmax.f32 %v423, 0.0
    %v440 = vpack.c.bf16 %v426, %v424
    %v441 = vpack.c.bf16 %v427, %v425
    %v442 = vpack.c.bf16 %v430, %v428
    %v443 = vpack.c.bf16 %v431, %v429
    %v444 = vpack.c.bf16 %v434, %v432
    %v445 = vpack.c.bf16 %v435, %v433
    %v446 = vpack.c.bf16 %v438, %v436
    %v447 = vpack.c.bf16 %v439, %v437
    %v448 = vld [vmem:[#allocation7] sm:$0xf]
    %v449 = vld [vmem:[#allocation7 + $0x4] sm:$0xf]
    %v450 = vld [vmem:[#allocation7 + $0x8] sm:$0xf]
    %v451 = vld [vmem:[#allocation7 + $0xc] sm:$0xf]
    %v452 = vld [vmem:[#allocation7 + $0x10] sm:$0xf]
    %v453 = vld [vmem:[#allocation7 + $0x14] sm:$0xf]
    %v454 = vld [vmem:[#allocation7 + $0x18] sm:$0xf]
    %v455 = vld [vmem:[#allocation7 + $0x1c] sm:$0xf]
    %v456 = vld [vmem:[#allocation7 + $0x20] sm:$0xf]
    %v457 = vld [vmem:[#allocation7 + $0x24] sm:$0xf]
    %v458 = vld [vmem:[#allocation7 + $0x28] sm:$0xf]
    %v459 = vld [vmem:[#allocation7 + $0x2c] sm:$0xf]
    %v460 = vld [vmem:[#allocation7 + $0x30] sm:$0xf]
    %v461 = vld [vmem:[#allocation7 + $0x34] sm:$0xf]
    %v462 = vld [vmem:[#allocation7 + $0x38] sm:$0xf]
    %v463 = vld [vmem:[#allocation7 + $0x3c] sm:$0xf]
    %v464 = vld [vmem:[#allocation7 + $0x40] sm:$0xf]
    %v465 = vld [vmem:[#allocation7 + $0x44] sm:$0xf]
    %v466 = vld [vmem:[#allocation7 + $0x48] sm:$0xf]
    %v467 = vld [vmem:[#allocation7 + $0x4c] sm:$0xf]
    %v468 = vld [vmem:[#allocation7 + $0x50] sm:$0xf]
    %v469 = vld [vmem:[#allocation7 + $0x54] sm:$0xf]
    %v470 = vld [vmem:[#allocation7 + $0x58] sm:$0xf]
    %v471 = vld [vmem:[#allocation7 + $0x5c] sm:$0xf]
    %v472 = vld [vmem:[#allocation7 + $0x60] sm:$0xf]
    %v473 = vld [vmem:[#allocation7 + $0x64] sm:$0xf]
    %v474 = vld [vmem:[#allocation7 + $0x68] sm:$0xf]
    %v475 = vld [vmem:[#allocation7 + $0x6c] sm:$0xf]
    %v476 = vld [vmem:[#allocation7 + $0x70] sm:$0xf]
    %v477 = vld [vmem:[#allocation7 + $0x74] sm:$0xf]
    %v478 = vld [vmem:[#allocation7 + $0x78] sm:$0xf]
    %v479 = vld [vmem:[#allocation7 + $0x7c] sm:$0xf]
    %v480 = vld [vmem:[#allocation7 + $0x80] sm:$0xf]
    %v481 = vld [vmem:[#allocation7 + $0x84] sm:$0xf]
    %v482 = vld [vmem:[#allocation7 + $0x88] sm:$0xf]
    %v483 = vld [vmem:[#allocation7 + $0x8c] sm:$0xf]
    %v484 = vld [vmem:[#allocation7 + $0x90] sm:$0xf]
    %v485 = vld [vmem:[#allocation7 + $0x94] sm:$0xf]
    %v486 = vld [vmem:[#allocation7 + $0x98] sm:$0xf]
    %v487 = vld [vmem:[#allocation7 + $0x9c] sm:$0xf]
    %v488 = vld [vmem:[#allocation7 + $0xa0] sm:$0xf]
    %v489 = vld [vmem:[#allocation7 + $0xa4] sm:$0xf]
    %v490 = vld [vmem:[#allocation7 + $0xa8] sm:$0xf]
    %v491 = vld [vmem:[#allocation7 + $0xac] sm:$0xf]
    %v492 = vld [vmem:[#allocation7 + $0xb0] sm:$0xf]
    %v493 = vld [vmem:[#allocation7 + $0xb4] sm:$0xf]
    %v494 = vld [vmem:[#allocation7 + $0xb8] sm:$0xf]
    %v495 = vld [vmem:[#allocation7 + $0xbc] sm:$0xf]
    %v496 = vld [vmem:[#allocation7 + $0xc0] sm:$0xf]
    %v497 = vld [vmem:[#allocation7 + $0xc4] sm:$0xf]
    %v498 = vld [vmem:[#allocation7 + $0xc8] sm:$0xf]
    %v499 = vld [vmem:[#allocation7 + $0xcc] sm:$0xf]
    %v500 = vld [vmem:[#allocation7 + $0xd0] sm:$0xf]
    %v501 = vld [vmem:[#allocation7 + $0xd4] sm:$0xf]
    %v502 = vld [vmem:[#allocation7 + $0xd8] sm:$0xf]
    %v503 = vld [vmem:[#allocation7 + $0xdc] sm:$0xf]
    %v504 = vld [vmem:[#allocation7 + $0xe0] sm:$0xf]
    %v505 = vld [vmem:[#allocation7 + $0xe4] sm:$0xf]
    %v506 = vld [vmem:[#allocation7 + $0xe8] sm:$0xf]
    %v507 = vld [vmem:[#allocation7 + $0xec] sm:$0xf]
    %v508 = vld [vmem:[#allocation7 + $0xf0] sm:$0xf]
    %v509 = vld [vmem:[#allocation7 + $0xf4] sm:$0xf]
    %v510 = vld [vmem:[#allocation7 + $0xf8] sm:$0xf]
    %v511 = vld [vmem:[#allocation7 + $0xfc] sm:$0xf]
    %v512 = vld [vmem:[#allocation8] sm:$0xff]
    %v513 = vld [vmem:[#allocation8 + $0x8] sm:$0xff]
    %v514 = vld [vmem:[#allocation8 + $0x10] sm:$0xff]
    %v515 = vld [vmem:[#allocation8 + $0x18] sm:$0xff]
    %v516 = vld [vmem:[#allocation8 + $0x20] sm:$0xff]
    %v517 = vld [vmem:[#allocation8 + $0x28] sm:$0xff]
    %v518 = vld [vmem:[#allocation8 + $0x30] sm:$0xff]
    %v519 = vld [vmem:[#allocation8 + $0x38] sm:$0xff]
    %v520 = vld [vmem:[#allocation8 + $0x40] sm:$0xff]
    %v521 = vld [vmem:[#allocation8 + $0x48] sm:$0xff]
    %v522 = vld [vmem:[#allocation8 + $0x50] sm:$0xff]
    %v523 = vld [vmem:[#allocation8 + $0x58] sm:$0xff]
    %v524 = vld [vmem:[#allocation8 + $0x60] sm:$0xff]
    %v525 = vld [vmem:[#allocation8 + $0x68] sm:$0xff]
    %v526 = vld [vmem:[#allocation8 + $0x70] sm:$0xff]
    %v527 = vld [vmem:[#allocation8 + $0x78] sm:$0xff]
    %v528 = vld [vmem:[#allocation8 + $0x80] sm:$0xff]
    %v529 = vld [vmem:[#allocation8 + $0x88] sm:$0xff]
    %v530 = vld [vmem:[#allocation8 + $0x90] sm:$0xff]
    %v531 = vld [vmem:[#allocation8 + $0x98] sm:$0xff]
    %v532 = vld [vmem:[#allocation8 + $0xa0] sm:$0xff]
    %v533 = vld [vmem:[#allocation8 + $0xa8] sm:$0xff]
    %v534 = vld [vmem:[#allocation8 + $0xb0] sm:$0xff]
    %v535 = vld [vmem:[#allocation8 + $0xb8] sm:$0xff]
    %v536 = vld [vmem:[#allocation8 + $0xc0] sm:$0xff]
    %v537 = vld [vmem:[#allocation8 + $0xc8] sm:$0xff]
    %v538 = vld [vmem:[#allocation8 + $0xd0] sm:$0xff]
    %v539 = vld [vmem:[#allocation8 + $0xd8] sm:$0xff]
    %v540 = vld [vmem:[#allocation8 + $0xe0] sm:$0xff]
    %v541 = vld [vmem:[#allocation8 + $0xe8] sm:$0xff]
    %v542 = vld [vmem:[#allocation8 + $0xf0] sm:$0xff]
    %v543 = vld [vmem:[#allocation8 + $0xf8] sm:$0xff]
    %v544 = vld [vmem:[#allocation8 + $0x100] sm:$0xff]
    %v545 = vld [vmem:[#allocation8 + $0x108] sm:$0xff]
    %v546 = vld [vmem:[#allocation8 + $0x110] sm:$0xff]
    %v547 = vld [vmem:[#allocation8 + $0x118] sm:$0xff]
    %v548 = vld [vmem:[#allocation8 + $0x120] sm:$0xff]
    %v549 = vld [vmem:[#allocation8 + $0x128] sm:$0xff]
    %v550 = vld [vmem:[#allocation8 + $0x130] sm:$0xff]
    %v551 = vld [vmem:[#allocation8 + $0x138] sm:$0xff]
    %v552 = vld [vmem:[#allocation8 + $0x140] sm:$0xff]
    %v553 = vld [vmem:[#allocation8 + $0x148] sm:$0xff]
    %v554 = vld [vmem:[#allocation8 + $0x150] sm:$0xff]
    %v555 = vld [vmem:[#allocation8 + $0x158] sm:$0xff]
    %v556 = vld [vmem:[#allocation8 + $0x160] sm:$0xff]
    %v557 = vld [vmem:[#allocation8 + $0x168] sm:$0xff]
    %v558 = vld [vmem:[#allocation8 + $0x170] sm:$0xff]
    %v559 = vld [vmem:[#allocation8 + $0x178] sm:$0xff]
    %v560 = vld [vmem:[#allocation8 + $0x180] sm:$0xff]
    %v561 = vld [vmem:[#allocation8 + $0x188] sm:$0xff]
    %v562 = vld [vmem:[#allocation8 + $0x190] sm:$0xff]
    %v563 = vld [vmem:[#allocation8 + $0x198] sm:$0xff]
    %v564 = vld [vmem:[#allocation8 + $0x1a0] sm:$0xff]
    %v565 = vld [vmem:[#allocation8 + $0x1a8] sm:$0xff]
    %v566 = vld [vmem:[#allocation8 + $0x1b0] sm:$0xff]
    %v567 = vld [vmem:[#allocation8 + $0x1b8] sm:$0xff]
    %v568 = vld [vmem:[#allocation8 + $0x1c0] sm:$0xff]
    %v569 = vld [vmem:[#allocation8 + $0x1c8] sm:$0xff]
    %v570 = vld [vmem:[#allocation8 + $0x1d0] sm:$0xff]
    %v571 = vld [vmem:[#allocation8 + $0x1d8] sm:$0xff]
    %v572 = vld [vmem:[#allocation8 + $0x1e0] sm:$0xff]
    %v573 = vld [vmem:[#allocation8 + $0x1e8] sm:$0xff]
    %v574 = vld [vmem:[#allocation8 + $0x1f0] sm:$0xff]
    %v575 = vld [vmem:[#allocation8 + $0x1f8] sm:$0xff]
    %577 = vset.pattern.permute.xlu0 0
    %578 = vperm.xlu0 %577, %v512
    %v579 = vpop.permute.xlu0 %578
    %582 = vset.pattern.permute.xlu0 0
    %583 = vperm.xlu0 %582, %v513
    %v584 = vpop.permute.xlu0 %583
    %587 = vset.pattern.permute.xlu0 0
    %588 = vperm.xlu0 %587, %v514
    %v589 = vpop.permute.xlu0 %588
    %592 = vset.pattern.permute.xlu0 0
    %593 = vperm.xlu0 %592, %v515
    %v594 = vpop.permute.xlu0 %593
    %597 = vset.pattern.permute.xlu0 0
    %598 = vperm.xlu0 %597, %v516
    %v599 = vpop.permute.xlu0 %598
    %602 = vset.pattern.permute.xlu0 0
    %603 = vperm.xlu0 %602, %v517
    %v604 = vpop.permute.xlu0 %603
    %607 = vset.pattern.permute.xlu0 0
    %608 = vperm.xlu0 %607, %v518
    %v609 = vpop.permute.xlu0 %608
    %612 = vset.pattern.permute.xlu0 0
    %613 = vperm.xlu0 %612, %v519
    %v614 = vpop.permute.xlu0 %613
    %617 = vset.pattern.permute.xlu0 0
    %618 = vperm.xlu0 %617, %v520
    %v619 = vpop.permute.xlu0 %618
    %622 = vset.pattern.permute.xlu0 0
    %623 = vperm.xlu0 %622, %v521
    %v624 = vpop.permute.xlu0 %623
    %627 = vset.pattern.permute.xlu0 0
    %628 = vperm.xlu0 %627, %v522
    %v629 = vpop.permute.xlu0 %628
    %632 = vset.pattern.permute.xlu0 0
    %633 = vperm.xlu0 %632, %v523
    %v634 = vpop.permute.xlu0 %633
    %637 = vset.pattern.permute.xlu0 0
    %638 = vperm.xlu0 %637, %v524
    %v639 = vpop.permute.xlu0 %638
    %642 = vset.pattern.permute.xlu0 0
    %643 = vperm.xlu0 %642, %v525
    %v644 = vpop.permute.xlu0 %643
    %647 = vset.pattern.permute.xlu0 0
    %648 = vperm.xlu0 %647, %v526
    %v649 = vpop.permute.xlu0 %648
    %652 = vset.pattern.permute.xlu0 0
    %653 = vperm.xlu0 %652, %v527
    %v654 = vpop.permute.xlu0 %653
    %657 = vset.pattern.permute.xlu0 0
    %658 = vperm.xlu0 %657, %v528
    %v659 = vpop.permute.xlu0 %658
    %662 = vset.pattern.permute.xlu0 0
    %663 = vperm.xlu0 %662, %v529
    %v664 = vpop.permute.xlu0 %663
    %667 = vset.pattern.permute.xlu0 0
    %668 = vperm.xlu0 %667, %v530
    %v669 = vpop.permute.xlu0 %668
    %672 = vset.pattern.permute.xlu0 0
    %673 = vperm.xlu0 %672, %v531
    %v674 = vpop.permute.xlu0 %673
    %677 = vset.pattern.permute.xlu0 0
    %678 = vperm.xlu0 %677, %v532
    %v679 = vpop.permute.xlu0 %678
    %682 = vset.pattern.permute.xlu0 0
    %683 = vperm.xlu0 %682, %v533
    %v684 = vpop.permute.xlu0 %683
    %687 = vset.pattern.permute.xlu0 0
    %688 = vperm.xlu0 %687, %v534
    %v689 = vpop.permute.xlu0 %688
    %692 = vset.pattern.permute.xlu0 0
    %693 = vperm.xlu0 %692, %v535
    %v694 = vpop.permute.xlu0 %693
    %697 = vset.pattern.permute.xlu0 0
    %698 = vperm.xlu0 %697, %v536
    %v699 = vpop.permute.xlu0 %698
    %702 = vset.pattern.permute.xlu0 0
    %703 = vperm.xlu0 %702, %v537
    %v704 = vpop.permute.xlu0 %703
    %707 = vset.pattern.permute.xlu0 0
    %708 = vperm.xlu0 %707, %v538
    %v709 = vpop.permute.xlu0 %708
    %712 = vset.pattern.permute.xlu0 0
    %713 = vperm.xlu0 %712, %v539
    %v714 = vpop.permute.xlu0 %713
    %717 = vset.pattern.permute.xlu0 0
    %718 = vperm.xlu0 %717, %v540
    %v719 = vpop.permute.xlu0 %718
    %722 = vset.pattern.permute.xlu0 0
    %723 = vperm.xlu0 %722, %v541
    %v724 = vpop.permute.xlu0 %723
    %727 = vset.pattern.permute.xlu0 0
    %728 = vperm.xlu0 %727, %v542
    %v729 = vpop.permute.xlu0 %728
    %732 = vset.pattern.permute.xlu0 0
    %733 = vperm.xlu0 %732, %v543
    %v734 = vpop.permute.xlu0 %733
    %737 = vset.pattern.permute.xlu0 0
    %738 = vperm.xlu0 %737, %v544
    %v739 = vpop.permute.xlu0 %738
    %742 = vset.pattern.permute.xlu0 0
    %743 = vperm.xlu0 %742, %v545
    %v744 = vpop.permute.xlu0 %743
    %747 = vset.pattern.permute.xlu0 0
    %748 = vperm.xlu0 %747, %v546
    %v749 = vpop.permute.xlu0 %748
    %752 = vset.pattern.permute.xlu0 0
    %753 = vperm.xlu0 %752, %v547
    %v754 = vpop.permute.xlu0 %753
    %757 = vset.pattern.permute.xlu0 0
    %758 = vperm.xlu0 %757, %v548
    %v759 = vpop.permute.xlu0 %758
    %762 = vset.pattern.permute.xlu0 0
    %763 = vperm.xlu0 %762, %v549
    %v764 = vpop.permute.xlu0 %763
    %767 = vset.pattern.permute.xlu0 0
    %768 = vperm.xlu0 %767, %v550
    %v769 = vpop.permute.xlu0 %768
    %772 = vset.pattern.permute.xlu0 0
    %773 = vperm.xlu0 %772, %v551
    %v774 = vpop.permute.xlu0 %773
    %777 = vset.pattern.permute.xlu0 0
    %778 = vperm.xlu0 %777, %v552
    %v779 = vpop.permute.xlu0 %778
    %782 = vset.pattern.permute.xlu0 0
    %783 = vperm.xlu0 %782, %v553
    %v784 = vpop.permute.xlu0 %783
    %787 = vset.pattern.permute.xlu0 0
    %788 = vperm.xlu0 %787, %v554
    %v789 = vpop.permute.xlu0 %788
    %792 = vset.pattern.permute.xlu0 0
    %793 = vperm.xlu0 %792, %v555
    %v794 = vpop.permute.xlu0 %793
    %797 = vset.pattern.permute.xlu0 0
    %798 = vperm.xlu0 %797, %v556
    %v799 = vpop.permute.xlu0 %798
    %802 = vset.pattern.permute.xlu0 0
    %803 = vperm.xlu0 %802, %v557
    %v804 = vpop.permute.xlu0 %803
    %807 = vset.pattern.permute.xlu0 0
    %808 = vperm.xlu0 %807, %v558
    %v809 = vpop.permute.xlu0 %808
    %812 = vset.pattern.permute.xlu0 0
    %813 = vperm.xlu0 %812, %v559
    %v814 = vpop.permute.xlu0 %813
    %817 = vset.pattern.permute.xlu0 0
    %818 = vperm.xlu0 %817, %v560
    %v819 = vpop.permute.xlu0 %818
    %822 = vset.pattern.permute.xlu0 0
    %823 = vperm.xlu0 %822, %v561
    %v824 = vpop.permute.xlu0 %823
    %827 = vset.pattern.permute.xlu0 0
    %828 = vperm.xlu0 %827, %v562
    %v829 = vpop.permute.xlu0 %828
    %832 = vset.pattern.permute.xlu0 0
    %833 = vperm.xlu0 %832, %v563
    %v834 = vpop.permute.xlu0 %833
    %837 = vset.pattern.permute.xlu0 0
    %838 = vperm.xlu0 %837, %v564
    %v839 = vpop.permute.xlu0 %838
    %842 = vset.pattern.permute.xlu0 0
    %843 = vperm.xlu0 %842, %v565
    %v844 = vpop.permute.xlu0 %843
    %847 = vset.pattern.permute.xlu0 0
    %848 = vperm.xlu0 %847, %v566
    %v849 = vpop.permute.xlu0 %848
    %852 = vset.pattern.permute.xlu0 0
    %853 = vperm.xlu0 %852, %v567
    %v854 = vpop.permute.xlu0 %853
    %857 = vset.pattern.permute.xlu0 0
    %858 = vperm.xlu0 %857, %v568
    %v859 = vpop.permute.xlu0 %858
    %862 = vset.pattern.permute.xlu0 0
    %863 = vperm.xlu0 %862, %v569
    %v864 = vpop.permute.xlu0 %863
    %867 = vset.pattern.permute.xlu0 0
    %868 = vperm.xlu0 %867, %v570
    %v869 = vpop.permute.xlu0 %868
    %872 = vset.pattern.permute.xlu0 0
    %873 = vperm.xlu0 %872, %v571
    %v874 = vpop.permute.xlu0 %873
    %877 = vset.pattern.permute.xlu0 0
    %878 = vperm.xlu0 %877, %v572
    %v879 = vpop.permute.xlu0 %878
    %882 = vset.pattern.permute.xlu0 0
    %883 = vperm.xlu0 %882, %v573
    %v884 = vpop.permute.xlu0 %883
    %887 = vset.pattern.permute.xlu0 0
    %888 = vperm.xlu0 %887, %v574
    %v889 = vpop.permute.xlu0 %888
    %892 = vset.pattern.permute.xlu0 0
    %893 = vperm.xlu0 %892, %v575
    %v894 = vpop.permute.xlu0 %893
    %v960 = vunpack.c.l.b16 %v448
    %v961 = vunpack.c.l.b16 %v449
    %v962 = vunpack.c.l.b16 %v450
    %v963 = vunpack.c.l.b16 %v451
    %v964 = vunpack.c.l.b16 %v452
    %v965 = vunpack.c.l.b16 %v453
    %v966 = vunpack.c.l.b16 %v454
    %v967 = vunpack.c.l.b16 %v455
    %v968 = vunpack.c.l.b16 %v456
    %v969 = vunpack.c.l.b16 %v457
    %v970 = vunpack.c.l.b16 %v458
    %v971 = vunpack.c.l.b16 %v459
    %v972 = vunpack.c.l.b16 %v460
    %v973 = vunpack.c.l.b16 %v461
    %v974 = vunpack.c.l.b16 %v462
    %v975 = vunpack.c.l.b16 %v463
    %v976 = vunpack.c.l.b16 %v464
    %v977 = vunpack.c.l.b16 %v465
    %v978 = vunpack.c.l.b16 %v466
    %v979 = vunpack.c.l.b16 %v467
    %v980 = vunpack.c.l.b16 %v468
    %v981 = vunpack.c.l.b16 %v469
    %v982 = vunpack.c.l.b16 %v470
    %v983 = vunpack.c.l.b16 %v471
    %v984 = vunpack.c.l.b16 %v472
    %v985 = vunpack.c.l.b16 %v473
    %v986 = vunpack.c.l.b16 %v474
    %v987 = vunpack.c.l.b16 %v475
    %v988 = vunpack.c.l.b16 %v476
    %v989 = vunpack.c.l.b16 %v477
    %v990 = vunpack.c.l.b16 %v478
    %v991 = vunpack.c.l.b16 %v479
    %v992 = vunpack.c.l.b16 %v480
    %v993 = vunpack.c.l.b16 %v481
    %v994 = vunpack.c.l.b16 %v482
    %v995 = vunpack.c.l.b16 %v483
    %v996 = vunpack.c.l.b16 %v484
    %v997 = vunpack.c.l.b16 %v485
    %v998 = vunpack.c.l.b16 %v486
    %v999 = vunpack.c.l.b16 %v487
    %v1000 = vunpack.c.l.b16 %v488
    %v1001 = vunpack.c.l.b16 %v489
    %v1002 = vunpack.c.l.b16 %v490
    %v1003 = vunpack.c.l.b16 %v491
    %v1004 = vunpack.c.l.b16 %v492
    %v1005 = vunpack.c.l.b16 %v493
    %v1006 = vunpack.c.l.b16 %v494
    %v1007 = vunpack.c.l.b16 %v495
    %v1008 = vunpack.c.l.b16 %v496
    %v1009 = vunpack.c.l.b16 %v497
    %v1010 = vunpack.c.l.b16 %v498
    %v1011 = vunpack.c.l.b16 %v499
    %v1012 = vunpack.c.l.b16 %v500
    %v1013 = vunpack.c.l.b16 %v501
    %v1014 = vunpack.c.l.b16 %v502
    %v1015 = vunpack.c.l.b16 %v503
    %v1016 = vunpack.c.l.b16 %v504
    %v1017 = vunpack.c.l.b16 %v505
    %v1018 = vunpack.c.l.b16 %v506
    %v1019 = vunpack.c.l.b16 %v507
    %v1020 = vunpack.c.l.b16 %v508
    %v1021 = vunpack.c.l.b16 %v509
    %v1022 = vunpack.c.l.b16 %v510
    %v1023 = vunpack.c.l.b16 %v511
    %v1024 = vpack.c.b16 %v961, %v960
    %v1025 = vpack.c.b16 %v963, %v962
    %v1026 = vpack.c.b16 %v965, %v964
    %v1027 = vpack.c.b16 %v967, %v966
    %v1028 = vpack.c.b16 %v969, %v968
    %v1029 = vpack.c.b16 %v971, %v970
    %v1030 = vpack.c.b16 %v973, %v972
    %v1031 = vpack.c.b16 %v975, %v974
    %v1032 = vpack.c.b16 %v977, %v976
    %v1033 = vpack.c.b16 %v979, %v978
    %v1034 = vpack.c.b16 %v981, %v980
    %v1035 = vpack.c.b16 %v983, %v982
    %v1036 = vpack.c.b16 %v985, %v984
    %v1037 = vpack.c.b16 %v987, %v986
    %v1038 = vpack.c.b16 %v989, %v988
    %v1039 = vpack.c.b16 %v991, %v990
    %v1040 = vpack.c.b16 %v993, %v992
    %v1041 = vpack.c.b16 %v995, %v994
    %v1042 = vpack.c.b16 %v997, %v996
    %v1043 = vpack.c.b16 %v999, %v998
    %v1044 = vpack.c.b16 %v1001, %v1000
    %v1045 = vpack.c.b16 %v1003, %v1002
    %v1046 = vpack.c.b16 %v1005, %v1004
    %v1047 = vpack.c.b16 %v1007, %v1006
    %v1048 = vpack.c.b16 %v1009, %v1008
    %v1049 = vpack.c.b16 %v1011, %v1010
    %v1050 = vpack.c.b16 %v1013, %v1012
    %v1051 = vpack.c.b16 %v1015, %v1014
    %v1052 = vpack.c.b16 %v1017, %v1016
    %v1053 = vpack.c.b16 %v1019, %v1018
    %v1054 = vpack.c.b16 %v1021, %v1020
    %v1055 = vpack.c.b16 %v1023, %v1022
    %vm1056 = vcmask 523264
    %v1058 = vsel %vm1056, %v1024, 0
    %v1061 = vsel %vm1056, %v1025, 0
    %v1064 = vsel %vm1056, %v1026, 0
    %v1067 = vsel %vm1056, %v1027, 0
    %v1070 = vsel %vm1056, %v1028, 0
    %v1073 = vsel %vm1056, %v1029, 0
    %v1076 = vsel %vm1056, %v1030, 0
    %v1079 = vsel %vm1056, %v1031, 0
    %v1082 = vsel %vm1056, %v1032, 0
    %v1085 = vsel %vm1056, %v1033, 0
    %v1088 = vsel %vm1056, %v1034, 0
    %v1091 = vsel %vm1056, %v1035, 0
    %v1094 = vsel %vm1056, %v1036, 0
    %v1097 = vsel %vm1056, %v1037, 0
    %v1100 = vsel %vm1056, %v1038, 0
    %v1103 = vsel %vm1056, %v1039, 0
    %v1106 = vsel %vm1056, %v1040, 0
    %v1109 = vsel %vm1056, %v1041, 0
    %v1112 = vsel %vm1056, %v1042, 0
    %v1115 = vsel %vm1056, %v1043, 0
    %v1118 = vsel %vm1056, %v1044, 0
    %v1121 = vsel %vm1056, %v1045, 0
    %v1124 = vsel %vm1056, %v1046, 0
    %v1127 = vsel %vm1056, %v1047, 0
    %v1130 = vsel %vm1056, %v1048, 0
    %v1133 = vsel %vm1056, %v1049, 0
    %v1136 = vsel %vm1056, %v1050, 0
    %v1139 = vsel %vm1056, %v1051, 0
    %v1142 = vsel %vm1056, %v1052, 0
    %v1145 = vsel %vm1056, %v1053, 0
    %v1148 = vsel %vm1056, %v1054, 0
    %v1151 = vsel %vm1056, %v1055, 0
    %1153 = vmatpush.bf16.msra.mxu0 0
    %1154 = vmatpush.bf16.msra.mxu0 0
    %1155 = vmatpush.bf16.msra.mxu0 0
    %1156 = vmatpush.bf16.msra.mxu0 0
    %1157 = vmatpush.bf16.msra.mxu0 %v446
    %1158 = vmatpush.bf16.msra.mxu0 %v444
    %1159 = vmatpush.bf16.msra.mxu0 %v442
    %1160 = vmatpush.bf16.msra.mxu0 %v440
    %1161 = vmatmul.bf16.gmra.mxu0 %v1058
    %v1162 = vpop.f32.mrf.mxu0
    %v1163 = vadd.f32 %v579, %v1162
    %v1164 = vpop.f32.mrf.mxu0
    %v1165 = vadd.f32 %v584, %v1164
    %1166 = vmatmul.bf16.gmra.mxu0 %v1061
    %v1167 = vpop.f32.mrf.mxu0
    %v1168 = vadd.f32 %v589, %v1167
    %v1169 = vpop.f32.mrf.mxu0
    %v1170 = vadd.f32 %v594, %v1169
    %1171 = vmatmul.bf16.gmra.mxu0 %v1064
    %v1172 = vpop.f32.mrf.mxu0
    %v1173 = vadd.f32 %v599, %v1172
    %v1174 = vpop.f32.mrf.mxu0
    %v1175 = vadd.f32 %v604, %v1174
    %1176 = vmatmul.bf16.gmra.mxu0 %v1067
    %v1177 = vpop.f32.mrf.mxu0
    %v1178 = vadd.f32 %v609, %v1177
    %v1179 = vpop.f32.mrf.mxu0
    %v1180 = vadd.f32 %v614, %v1179
    %1181 = vmatmul.bf16.gmra.mxu0 %v1070
    %v1182 = vpop.f32.mrf.mxu0
    %v1183 = vadd.f32 %v619, %v1182
    %v1184 = vpop.f32.mrf.mxu0
    %v1185 = vadd.f32 %v624, %v1184
    %1186 = vmatmul.bf16.gmra.mxu0 %v1073
    %v1187 = vpop.f32.mrf.mxu0
    %v1188 = vadd.f32 %v629, %v1187
    %v1189 = vpop.f32.mrf.mxu0
    %v1190 = vadd.f32 %v634, %v1189
    %1191 = vmatmul.bf16.gmra.mxu0 %v1076
    %v1192 = vpop.f32.mrf.mxu0
    %v1193 = vadd.f32 %v639, %v1192
    %v1194 = vpop.f32.mrf.mxu0
    %v1195 = vadd.f32 %v644, %v1194
    %1196 = vmatmul.bf16.gmra.mxu0 %v1079
    %v1197 = vpop.f32.mrf.mxu0
    %v1198 = vadd.f32 %v649, %v1197
    %v1199 = vpop.f32.mrf.mxu0
    %v1200 = vadd.f32 %v654, %v1199
    %1201 = vmatmul.bf16.gmra.mxu0 %v1082
    %v1202 = vpop.f32.mrf.mxu0
    %v1203 = vadd.f32 %v659, %v1202
    %v1204 = vpop.f32.mrf.mxu0
    %v1205 = vadd.f32 %v664, %v1204
    %1206 = vmatmul.bf16.gmra.mxu0 %v1085
    %v1207 = vpop.f32.mrf.mxu0
    %v1208 = vadd.f32 %v669, %v1207
    %v1209 = vpop.f32.mrf.mxu0
    %v1210 = vadd.f32 %v674, %v1209
    %1211 = vmatmul.bf16.gmra.mxu0 %v1088
    %v1212 = vpop.f32.mrf.mxu0
    %v1213 = vadd.f32 %v679, %v1212
    %v1214 = vpop.f32.mrf.mxu0
    %v1215 = vadd.f32 %v684, %v1214
    %1216 = vmatmul.bf16.gmra.mxu0 %v1091
    %v1217 = vpop.f32.mrf.mxu0
    %v1218 = vadd.f32 %v689, %v1217
    %v1219 = vpop.f32.mrf.mxu0
    %v1220 = vadd.f32 %v694, %v1219
    %1221 = vmatmul.bf16.gmra.mxu0 %v1094
    %v1222 = vpop.f32.mrf.mxu0
    %v1223 = vadd.f32 %v699, %v1222
    %v1224 = vpop.f32.mrf.mxu0
    %v1225 = vadd.f32 %v704, %v1224
    %1226 = vmatmul.bf16.gmra.mxu0 %v1097
    %v1227 = vpop.f32.mrf.mxu0
    %v1228 = vadd.f32 %v709, %v1227
    %v1229 = vpop.f32.mrf.mxu0
    %v1230 = vadd.f32 %v714, %v1229
    %1231 = vmatmul.bf16.gmra.mxu0 %v1100
    %v1232 = vpop.f32.mrf.mxu0
    %v1233 = vadd.f32 %v719, %v1232
    %v1234 = vpop.f32.mrf.mxu0
    %v1235 = vadd.f32 %v724, %v1234
    %1236 = vmatmul.bf16.gmra.mxu0 %v1103
    %v1237 = vpop.f32.mrf.mxu0
    %v1238 = vadd.f32 %v729, %v1237
    %v1239 = vpop.f32.mrf.mxu0
    %v1240 = vadd.f32 %v734, %v1239
    %1241 = vmatmul.bf16.gmra.mxu0 %v1106
    %v1242 = vpop.f32.mrf.mxu0
    %v1243 = vadd.f32 %v739, %v1242
    %v1244 = vpop.f32.mrf.mxu0
    %v1245 = vadd.f32 %v744, %v1244
    %1246 = vmatmul.bf16.gmra.mxu0 %v1109
    %v1247 = vpop.f32.mrf.mxu0
    %v1248 = vadd.f32 %v749, %v1247
    %v1249 = vpop.f32.mrf.mxu0
    %v1250 = vadd.f32 %v754, %v1249
    %1251 = vmatmul.bf16.gmra.mxu0 %v1112
    %v1252 = vpop.f32.mrf.mxu0
    %v1253 = vadd.f32 %v759, %v1252
    %v1254 = vpop.f32.mrf.mxu0
    %v1255 = vadd.f32 %v764, %v1254
    %1256 = vmatmul.bf16.gmra.mxu0 %v1115
    %v1257 = vpop.f32.mrf.mxu0
    %v1258 = vadd.f32 %v769, %v1257
    %v1259 = vpop.f32.mrf.mxu0
    %v1260 = vadd.f32 %v774, %v1259
    %1261 = vmatmul.bf16.gmra.mxu0 %v1118
    %v1262 = vpop.f32.mrf.mxu0
    %v1263 = vadd.f32 %v779, %v1262
    %v1264 = vpop.f32.mrf.mxu0
    %v1265 = vadd.f32 %v784, %v1264
    %1266 = vmatmul.bf16.gmra.mxu0 %v1121
    %v1267 = vpop.f32.mrf.mxu0
    %v1268 = vadd.f32 %v789, %v1267
    %v1269 = vpop.f32.mrf.mxu0
    %v1270 = vadd.f32 %v794, %v1269
    %1271 = vmatmul.bf16.gmra.mxu0 %v1124
    %v1272 = vpop.f32.mrf.mxu0
    %v1273 = vadd.f32 %v799, %v1272
    %v1274 = vpop.f32.mrf.mxu0
    %v1275 = vadd.f32 %v804, %v1274
    %1276 = vmatmul.bf16.gmra.mxu0 %v1127
    %v1277 = vpop.f32.mrf.mxu0
    %v1278 = vadd.f32 %v809, %v1277
    %v1279 = vpop.f32.mrf.mxu0
    %v1280 = vadd.f32 %v814, %v1279
    %1281 = vmatmul.bf16.gmra.mxu0 %v1130
    %v1282 = vpop.f32.mrf.mxu0
    %v1283 = vadd.f32 %v819, %v1282
    %v1284 = vpop.f32.mrf.mxu0
    %v1285 = vadd.f32 %v824, %v1284
    %1286 = vmatmul.bf16.gmra.mxu0 %v1133
    %v1287 = vpop.f32.mrf.mxu0
    %v1288 = vadd.f32 %v829, %v1287
    %v1289 = vpop.f32.mrf.mxu0
    %v1290 = vadd.f32 %v834, %v1289
    %1291 = vmatmul.bf16.gmra.mxu0 %v1136
    %v1292 = vpop.f32.mrf.mxu0
    %v1293 = vadd.f32 %v839, %v1292
    %v1294 = vpop.f32.mrf.mxu0
    %v1295 = vadd.f32 %v844, %v1294
    %1296 = vmatmul.bf16.gmra.mxu0 %v1139
    %v1297 = vpop.f32.mrf.mxu0
    %v1298 = vadd.f32 %v849, %v1297
    %v1299 = vpop.f32.mrf.mxu0
    %v1300 = vadd.f32 %v854, %v1299
    %1301 = vmatmul.bf16.gmra.mxu0 %v1142
    %v1302 = vpop.f32.mrf.mxu0
    %v1303 = vadd.f32 %v859, %v1302
    %v1304 = vpop.f32.mrf.mxu0
    %v1305 = vadd.f32 %v864, %v1304
    %1306 = vmatmul.bf16.gmra.mxu0 %v1145
    %v1307 = vpop.f32.mrf.mxu0
    %v1308 = vadd.f32 %v869, %v1307
    %v1309 = vpop.f32.mrf.mxu0
    %v1310 = vadd.f32 %v874, %v1309
    %1311 = vmatmul.bf16.gmra.mxu0 %v1148
    %v1312 = vpop.f32.mrf.mxu0
    %v1313 = vadd.f32 %v879, %v1312
    %v1314 = vpop.f32.mrf.mxu0
    %v1315 = vadd.f32 %v884, %v1314
    %1316 = vmatmul.bf16.gmra.mxu0 %v1151
    %v1317 = vpop.f32.mrf.mxu0
    %v1318 = vadd.f32 %v889, %v1317
    %v1319 = vpop.f32.mrf.mxu0
    %v1320 = vadd.f32 %v894, %v1319
    %1321 = vdwg.mxu0
    %1322 = vmatpush.bf16.msra.mxu0 0
    %1323 = vmatpush.bf16.msra.mxu0 0
    %1324 = vmatpush.bf16.msra.mxu0 0
    %1325 = vmatpush.bf16.msra.mxu0 0
    %1326 = vmatpush.bf16.msra.mxu0 %v447
    %1327 = vmatpush.bf16.msra.mxu0 %v445
    %1328 = vmatpush.bf16.msra.mxu0 %v443
    %1329 = vmatpush.bf16.msra.mxu0 %v441
    %1330 = vmatmul.bf16.gmra.mxu0 %v1058
    %v1331 = vpop.f32.mrf.mxu0
    %v1332 = vadd.f32 %v579, %v1331
    %v1333 = vpop.f32.mrf.mxu0
    %v1334 = vadd.f32 %v584, %v1333
    %1335 = vmatmul.bf16.gmra.mxu0 %v1061
    %v1336 = vpop.f32.mrf.mxu0
    %v1337 = vadd.f32 %v589, %v1336
    %v1338 = vpop.f32.mrf.mxu0
    %v1339 = vadd.f32 %v594, %v1338
    %1340 = vmatmul.bf16.gmra.mxu0 %v1064
    %v1341 = vpop.f32.mrf.mxu0
    %v1342 = vadd.f32 %v599, %v1341
    %v1343 = vpop.f32.mrf.mxu0
    %v1344 = vadd.f32 %v604, %v1343
    %1345 = vmatmul.bf16.gmra.mxu0 %v1067
    %v1346 = vpop.f32.mrf.mxu0
    %v1347 = vadd.f32 %v609, %v1346
    %v1348 = vpop.f32.mrf.mxu0
    %v1349 = vadd.f32 %v614, %v1348
    %1350 = vmatmul.bf16.gmra.mxu0 %v1070
    %v1351 = vpop.f32.mrf.mxu0
    %v1352 = vadd.f32 %v619, %v1351
    %v1353 = vpop.f32.mrf.mxu0
    %v1354 = vadd.f32 %v624, %v1353
    %1355 = vmatmul.bf16.gmra.mxu0 %v1073
    %v1356 = vpop.f32.mrf.mxu0
    %v1357 = vadd.f32 %v629, %v1356
    %v1358 = vpop.f32.mrf.mxu0
    %v1359 = vadd.f32 %v634, %v1358
    %1360 = vmatmul.bf16.gmra.mxu0 %v1076
    %v1361 = vpop.f32.mrf.mxu0
    %v1362 = vadd.f32 %v639, %v1361
    %v1363 = vpop.f32.mrf.mxu0
    %v1364 = vadd.f32 %v644, %v1363
    %1365 = vmatmul.bf16.gmra.mxu0 %v1079
    %v1366 = vpop.f32.mrf.mxu0
    %v1367 = vadd.f32 %v649, %v1366
    %v1368 = vpop.f32.mrf.mxu0
    %v1369 = vadd.f32 %v654, %v1368
    %1370 = vmatmul.bf16.gmra.mxu0 %v1082
    %v1371 = vpop.f32.mrf.mxu0
    %v1372 = vadd.f32 %v659, %v1371
    %v1373 = vpop.f32.mrf.mxu0
    %v1374 = vadd.f32 %v664, %v1373
    %1375 = vmatmul.bf16.gmra.mxu0 %v1085
    %v1376 = vpop.f32.mrf.mxu0
    %v1377 = vadd.f32 %v669, %v1376
    %v1378 = vpop.f32.mrf.mxu0
    %v1379 = vadd.f32 %v674, %v1378
    %1380 = vmatmul.bf16.gmra.mxu0 %v1088
    %v1381 = vpop.f32.mrf.mxu0
    %v1382 = vadd.f32 %v679, %v1381
    %v1383 = vpop.f32.mrf.mxu0
    %v1384 = vadd.f32 %v684, %v1383
    %1385 = vmatmul.bf16.gmra.mxu0 %v1091
    %v1386 = vpop.f32.mrf.mxu0
    %v1387 = vadd.f32 %v689, %v1386
    %v1388 = vpop.f32.mrf.mxu0
    %v1389 = vadd.f32 %v694, %v1388
    %1390 = vmatmul.bf16.gmra.mxu0 %v1094
    %v1391 = vpop.f32.mrf.mxu0
    %v1392 = vadd.f32 %v699, %v1391
    %v1393 = vpop.f32.mrf.mxu0
    %v1394 = vadd.f32 %v704, %v1393
    %1395 = vmatmul.bf16.gmra.mxu0 %v1097
    %v1396 = vpop.f32.mrf.mxu0
    %v1397 = vadd.f32 %v709, %v1396
    %v1398 = vpop.f32.mrf.mxu0
    %v1399 = vadd.f32 %v714, %v1398
    %1400 = vmatmul.bf16.gmra.mxu0 %v1100
    %v1401 = vpop.f32.mrf.mxu0
    %v1402 = vadd.f32 %v719, %v1401
    %v1403 = vpop.f32.mrf.mxu0
    %v1404 = vadd.f32 %v724, %v1403
    %1405 = vmatmul.bf16.gmra.mxu0 %v1103
    %v1406 = vpop.f32.mrf.mxu0
    %v1407 = vadd.f32 %v729, %v1406
    %v1408 = vpop.f32.mrf.mxu0
    %v1409 = vadd.f32 %v734, %v1408
    %1410 = vmatmul.bf16.gmra.mxu0 %v1106
    %v1411 = vpop.f32.mrf.mxu0
    %v1412 = vadd.f32 %v739, %v1411
    %v1413 = vpop.f32.mrf.mxu0
    %v1414 = vadd.f32 %v744, %v1413
    %1415 = vmatmul.bf16.gmra.mxu0 %v1109
    %v1416 = vpop.f32.mrf.mxu0
    %v1417 = vadd.f32 %v749, %v1416
    %v1418 = vpop.f32.mrf.mxu0
    %v1419 = vadd.f32 %v754, %v1418
    %1420 = vmatmul.bf16.gmra.mxu0 %v1112
    %v1421 = vpop.f32.mrf.mxu0
    %v1422 = vadd.f32 %v759, %v1421
    %v1423 = vpop.f32.mrf.mxu0
    %v1424 = vadd.f32 %v764, %v1423
    %1425 = vmatmul.bf16.gmra.mxu0 %v1115
    %v1426 = vpop.f32.mrf.mxu0
    %v1427 = vadd.f32 %v769, %v1426
    %v1428 = vpop.f32.mrf.mxu0
    %v1429 = vadd.f32 %v774, %v1428
    %1430 = vmatmul.bf16.gmra.mxu0 %v1118
    %v1431 = vpop.f32.mrf.mxu0
    %v1432 = vadd.f32 %v779, %v1431
    %v1433 = vpop.f32.mrf.mxu0
    %v1434 = vadd.f32 %v784, %v1433
    %1435 = vmatmul.bf16.gmra.mxu0 %v1121
    %v1436 = vpop.f32.mrf.mxu0
    %v1437 = vadd.f32 %v789, %v1436
    %v1438 = vpop.f32.mrf.mxu0
    %v1439 = vadd.f32 %v794, %v1438
    %1440 = vmatmul.bf16.gmra.mxu0 %v1124
    %v1441 = vpop.f32.mrf.mxu0
    %v1442 = vadd.f32 %v799, %v1441
    %v1443 = vpop.f32.mrf.mxu0
    %v1444 = vadd.f32 %v804, %v1443
    %1445 = vmatmul.bf16.gmra.mxu0 %v1127
    %v1446 = vpop.f32.mrf.mxu0
    %v1447 = vadd.f32 %v809, %v1446
    %v1448 = vpop.f32.mrf.mxu0
    %v1449 = vadd.f32 %v814, %v1448
    %1450 = vmatmul.bf16.gmra.mxu0 %v1130
    %v1451 = vpop.f32.mrf.mxu0
    %v1452 = vadd.f32 %v819, %v1451
    %v1453 = vpop.f32.mrf.mxu0
    %v1454 = vadd.f32 %v824, %v1453
    %1455 = vmatmul.bf16.gmra.mxu0 %v1133
    %v1456 = vpop.f32.mrf.mxu0
    %v1457 = vadd.f32 %v829, %v1456
    %v1458 = vpop.f32.mrf.mxu0
    %v1459 = vadd.f32 %v834, %v1458
    %1460 = vmatmul.bf16.gmra.mxu0 %v1136
    %v1461 = vpop.f32.mrf.mxu0
    %v1462 = vadd.f32 %v839, %v1461
    %v1463 = vpop.f32.mrf.mxu0
    %v1464 = vadd.f32 %v844, %v1463
    %1465 = vmatmul.bf16.gmra.mxu0 %v1139
    %v1466 = vpop.f32.mrf.mxu0
    %v1467 = vadd.f32 %v849, %v1466
    %v1468 = vpop.f32.mrf.mxu0
    %v1469 = vadd.f32 %v854, %v1468
    %1470 = vmatmul.bf16.gmra.mxu0 %v1142
    %v1471 = vpop.f32.mrf.mxu0
    %v1472 = vadd.f32 %v859, %v1471
    %v1473 = vpop.f32.mrf.mxu0
    %v1474 = vadd.f32 %v864, %v1473
    %1475 = vmatmul.bf16.gmra.mxu0 %v1145
    %v1476 = vpop.f32.mrf.mxu0
    %v1477 = vadd.f32 %v869, %v1476
    %v1478 = vpop.f32.mrf.mxu0
    %v1479 = vadd.f32 %v874, %v1478
    %1480 = vmatmul.bf16.gmra.mxu0 %v1148
    %v1481 = vpop.f32.mrf.mxu0
    %v1482 = vadd.f32 %v879, %v1481
    %v1483 = vpop.f32.mrf.mxu0
    %v1484 = vadd.f32 %v884, %v1483
    %1485 = vmatmul.bf16.gmra.mxu0 %v1151
    %v1486 = vpop.f32.mrf.mxu0
    %v1487 = vadd.f32 %v889, %v1486
    %v1488 = vpop.f32.mrf.mxu0
    %v1489 = vadd.f32 %v894, %v1488
    %1490 = vdwg.mxu0
    %v1491 = vmax.f32 %v1163, 0.0
    %v1492 = vmax.f32 %v1332, 0.0
    %v1493 = vmax.f32 %v1165, 0.0
    %v1494 = vmax.f32 %v1334, 0.0
    %v1495 = vmax.f32 %v1168, 0.0
    %v1496 = vmax.f32 %v1337, 0.0
    %v1497 = vmax.f32 %v1170, 0.0
    %v1498 = vmax.f32 %v1339, 0.0
    %v1499 = vmax.f32 %v1173, 0.0
    %v1500 = vmax.f32 %v1342, 0.0
    %v1501 = vmax.f32 %v1175, 0.0
    %v1502 = vmax.f32 %v1344, 0.0
    %v1503 = vmax.f32 %v1178, 0.0
    %v1504 = vmax.f32 %v1347, 0.0
    %v1505 = vmax.f32 %v1180, 0.0
    %v1506 = vmax.f32 %v1349, 0.0
    %v1507 = vmax.f32 %v1183, 0.0
    %v1508 = vmax.f32 %v1352, 0.0
    %v1509 = vmax.f32 %v1185, 0.0
    %v1510 = vmax.f32 %v1354, 0.0
    %v1511 = vmax.f32 %v1188, 0.0
    %v1512 = vmax.f32 %v1357, 0.0
    %v1513 = vmax.f32 %v1190, 0.0
    %v1514 = vmax.f32 %v1359, 0.0
    %v1515 = vmax.f32 %v1193, 0.0
    %v1516 = vmax.f32 %v1362, 0.0
    %v1517 = vmax.f32 %v1195, 0.0
    %v1518 = vmax.f32 %v1364, 0.0
    %v1519 = vmax.f32 %v1198, 0.0
    %v1520 = vmax.f32 %v1367, 0.0
    %v1521 = vmax.f32 %v1200, 0.0
    %v1522 = vmax.f32 %v1369, 0.0
    %v1523 = vmax.f32 %v1203, 0.0
    %v1524 = vmax.f32 %v1372, 0.0
    %v1525 = vmax.f32 %v1205, 0.0
    %v1526 = vmax.f32 %v1374, 0.0
    %v1527 = vmax.f32 %v1208, 0.0
    %v1528 = vmax.f32 %v1377, 0.0
    %v1529 = vmax.f32 %v1210, 0.0
    %v1530 = vmax.f32 %v1379, 0.0
    %v1531 = vmax.f32 %v1213, 0.0
    %v1532 = vmax.f32 %v1382, 0.0
    %v1533 = vmax.f32 %v1215, 0.0
    %v1534 = vmax.f32 %v1384, 0.0
    %v1535 = vmax.f32 %v1218, 0.0
    %v1536 = vmax.f32 %v1387, 0.0
    %v1537 = vmax.f32 %v1220, 0.0
    %v1538 = vmax.f32 %v1389, 0.0
    %v1539 = vmax.f32 %v1223, 0.0
    %v1540 = vmax.f32 %v1392, 0.0
    %v1541 = vmax.f32 %v1225, 0.0
    %v1542 = vmax.f32 %v1394, 0.0
    %v1543 = vmax.f32 %v1228, 0.0
    %v1544 = vmax.f32 %v1397, 0.0
    %v1545 = vmax.f32 %v1230, 0.0
    %v1546 = vmax.f32 %v1399, 0.0
    %v1547 = vmax.f32 %v1233, 0.0
    %v1548 = vmax.f32 %v1402, 0.0
    %v1549 = vmax.f32 %v1235, 0.0
    %v1550 = vmax.f32 %v1404, 0.0
    %v1551 = vmax.f32 %v1238, 0.0
    %v1552 = vmax.f32 %v1407, 0.0
    %v1553 = vmax.f32 %v1240, 0.0
    %v1554 = vmax.f32 %v1409, 0.0
    %v1555 = vmax.f32 %v1243, 0.0
    %v1556 = vmax.f32 %v1412, 0.0
    %v1557 = vmax.f32 %v1245, 0.0
    %v1558 = vmax.f32 %v1414, 0.0
    %v1559 = vmax.f32 %v1248, 0.0
    %v1560 = vmax.f32 %v1417, 0.0
    %v1561 = vmax.f32 %v1250, 0.0
    %v1562 = vmax.f32 %v1419, 0.0
    %v1563 = vmax.f32 %v1253, 0.0
    %v1564 = vmax.f32 %v1422, 0.0
    %v1565 = vmax.f32 %v1255, 0.0
    %v1566 = vmax.f32 %v1424, 0.0
    %v1567 = vmax.f32 %v1258, 0.0
    %v1568 = vmax.f32 %v1427, 0.0
    %v1569 = vmax.f32 %v1260, 0.0
    %v1570 = vmax.f32 %v1429, 0.0
    %v1571 = vmax.f32 %v1263, 0.0
    %v1572 = vmax.f32 %v1432, 0.0
    %v1573 = vmax.f32 %v1265, 0.0
    %v1574 = vmax.f32 %v1434, 0.0
    %v1575 = vmax.f32 %v1268, 0.0
    %v1576 = vmax.f32 %v1437, 0.0
    %v1577 = vmax.f32 %v1270, 0.0
    %v1578 = vmax.f32 %v1439, 0.0
    %v1579 = vmax.f32 %v1273, 0.0
    %v1580 = vmax.f32 %v1442, 0.0
    %v1581 = vmax.f32 %v1275, 0.0
    %v1582 = vmax.f32 %v1444, 0.0
    %v1583 = vmax.f32 %v1278, 0.0
    %v1584 = vmax.f32 %v1447, 0.0
    %v1585 = vmax.f32 %v1280, 0.0
    %v1586 = vmax.f32 %v1449, 0.0
    %v1587 = vmax.f32 %v1283, 0.0
    %v1588 = vmax.f32 %v1452, 0.0
    %v1589 = vmax.f32 %v1285, 0.0
    %v1590 = vmax.f32 %v1454, 0.0
    %v1591 = vmax.f32 %v1288, 0.0
    %v1592 = vmax.f32 %v1457, 0.0
    %v1593 = vmax.f32 %v1290, 0.0
    %v1594 = vmax.f32 %v1459, 0.0
    %v1595 = vmax.f32 %v1293, 0.0
    %v1596 = vmax.f32 %v1462, 0.0
    %v1597 = vmax.f32 %v1295, 0.0
    %v1598 = vmax.f32 %v1464, 0.0
    %v1599 = vmax.f32 %v1298, 0.0
    %v1600 = vmax.f32 %v1467, 0.0
    %v1601 = vmax.f32 %v1300, 0.0
    %v1602 = vmax.f32 %v1469, 0.0
    %v1603 = vmax.f32 %v1303, 0.0
    %v1604 = vmax.f32 %v1472, 0.0
    %v1605 = vmax.f32 %v1305, 0.0
    %v1606 = vmax.f32 %v1474, 0.0
    %v1607 = vmax.f32 %v1308, 0.0
    %v1608 = vmax.f32 %v1477, 0.0
    %v1609 = vmax.f32 %v1310, 0.0
    %v1610 = vmax.f32 %v1479, 0.0
    %v1611 = vmax.f32 %v1313, 0.0
    %v1612 = vmax.f32 %v1482, 0.0
    %v1613 = vmax.f32 %v1315, 0.0
    %v1614 = vmax.f32 %v1484, 0.0
    %v1615 = vmax.f32 %v1318, 0.0
    %v1616 = vmax.f32 %v1487, 0.0
    %v1617 = vmax.f32 %v1320, 0.0
    %v1618 = vmax.f32 %v1489, 0.0
    %v1619 = vpack.c.bf16 %v1493, %v1491
    %v1620 = vpack.c.bf16 %v1494, %v1492
    %v1621 = vpack.c.bf16 %v1497, %v1495
    %v1622 = vpack.c.bf16 %v1498, %v1496
    %v1623 = vpack.c.bf16 %v1501, %v1499
    %v1624 = vpack.c.bf16 %v1502, %v1500
    %v1625 = vpack.c.bf16 %v1505, %v1503
    %v1626 = vpack.c.bf16 %v1506, %v1504
    %v1627 = vpack.c.bf16 %v1509, %v1507
    %v1628 = vpack.c.bf16 %v1510, %v1508
    %v1629 = vpack.c.bf16 %v1513, %v1511
    %v1630 = vpack.c.bf16 %v1514, %v1512
    %v1631 = vpack.c.bf16 %v1517, %v1515
    %v1632 = vpack.c.bf16 %v1518, %v1516
    %v1633 = vpack.c.bf16 %v1521, %v1519
    %v1634 = vpack.c.bf16 %v1522, %v1520
    %v1635 = vpack.c.bf16 %v1525, %v1523
    %v1636 = vpack.c.bf16 %v1526, %v1524
    %v1637 = vpack.c.bf16 %v1529, %v1527
    %v1638 = vpack.c.bf16 %v1530, %v1528
    %v1639 = vpack.c.bf16 %v1533, %v1531
    %v1640 = vpack.c.bf16 %v1534, %v1532
    %v1641 = vpack.c.bf16 %v1537, %v1535
    %v1642 = vpack.c.bf16 %v1538, %v1536
    %v1643 = vpack.c.bf16 %v1541, %v1539
    %v1644 = vpack.c.bf16 %v1542, %v1540
    %v1645 = vpack.c.bf16 %v1545, %v1543
    %v1646 = vpack.c.bf16 %v1546, %v1544
    %v1647 = vpack.c.bf16 %v1549, %v1547
    %v1648 = vpack.c.bf16 %v1550, %v1548
    %v1649 = vpack.c.bf16 %v1553, %v1551
    %v1650 = vpack.c.bf16 %v1554, %v1552
    %v1651 = vpack.c.bf16 %v1557, %v1555
    %v1652 = vpack.c.bf16 %v1558, %v1556
    %v1653 = vpack.c.bf16 %v1561, %v1559
    %v1654 = vpack.c.bf16 %v1562, %v1560
    %v1655 = vpack.c.bf16 %v1565, %v1563
    %v1656 = vpack.c.bf16 %v1566, %v1564
    %v1657 = vpack.c.bf16 %v1569, %v1567
    %v1658 = vpack.c.bf16 %v1570, %v1568
    %v1659 = vpack.c.bf16 %v1573, %v1571
    %v1660 = vpack.c.bf16 %v1574, %v1572
    %v1661 = vpack.c.bf16 %v1577, %v1575
    %v1662 = vpack.c.bf16 %v1578, %v1576
    %v1663 = vpack.c.bf16 %v1581, %v1579
    %v1664 = vpack.c.bf16 %v1582, %v1580
    %v1665 = vpack.c.bf16 %v1585, %v1583
    %v1666 = vpack.c.bf16 %v1586, %v1584
    %v1667 = vpack.c.bf16 %v1589, %v1587
    %v1668 = vpack.c.bf16 %v1590, %v1588
    %v1669 = vpack.c.bf16 %v1593, %v1591
    %v1670 = vpack.c.bf16 %v1594, %v1592
    %v1671 = vpack.c.bf16 %v1597, %v1595
    %v1672 = vpack.c.bf16 %v1598, %v1596
    %v1673 = vpack.c.bf16 %v1601, %v1599
    %v1674 = vpack.c.bf16 %v1602, %v1600
    %v1675 = vpack.c.bf16 %v1605, %v1603
    %v1676 = vpack.c.bf16 %v1606, %v1604
    %v1677 = vpack.c.bf16 %v1609, %v1607
    %v1678 = vpack.c.bf16 %v1610, %v1608
    %v1679 = vpack.c.bf16 %v1613, %v1611
    %v1680 = vpack.c.bf16 %v1614, %v1612
    %v1681 = vpack.c.bf16 %v1617, %v1615
    %v1682 = vpack.c.bf16 %v1618, %v1616
    %v1683 = vld [vmem:[#allocation10] sm:$0xff]
    %v1684 = vld [vmem:[#allocation10 + $0x8] sm:$0xff]
    %v1685 = vld [vmem:[#allocation10 + $0x10] sm:$0xff]
    %v1686 = vld [vmem:[#allocation10 + $0x18] sm:$0xff]
    %v1687 = vld [vmem:[#allocation10 + $0x20] sm:$0xff]
    %v1688 = vld [vmem:[#allocation10 + $0x28] sm:$0xff]
    %v1689 = vld [vmem:[#allocation10 + $0x30] sm:$0xff]
    %v1690 = vld [vmem:[#allocation10 + $0x38] sm:$0xff]
    %v1691 = vld [vmem:[#allocation10 + $0x40] sm:$0xff]
    %v1692 = vld [vmem:[#allocation10 + $0x48] sm:$0xff]
    %v1693 = vld [vmem:[#allocation10 + $0x50] sm:$0xff]
    %v1694 = vld [vmem:[#allocation10 + $0x58] sm:$0xff]
    %v1695 = vld [vmem:[#allocation10 + $0x60] sm:$0xff]
    %v1696 = vld [vmem:[#allocation10 + $0x68] sm:$0xff]
    %v1697 = vld [vmem:[#allocation10 + $0x70] sm:$0xff]
    %v1698 = vld [vmem:[#allocation10 + $0x78] sm:$0xff]
    %v1699 = vld [vmem:[#allocation10 + $0x80] sm:$0xff]
    %v1700 = vld [vmem:[#allocation10 + $0x88] sm:$0xff]
    %v1701 = vld [vmem:[#allocation10 + $0x90] sm:$0xff]
    %v1702 = vld [vmem:[#allocation10 + $0x98] sm:$0xff]
    %v1703 = vld [vmem:[#allocation10 + $0xa0] sm:$0xff]
    %v1704 = vld [vmem:[#allocation10 + $0xa8] sm:$0xff]
    %v1705 = vld [vmem:[#allocation10 + $0xb0] sm:$0xff]
    %v1706 = vld [vmem:[#allocation10 + $0xb8] sm:$0xff]
    %v1707 = vld [vmem:[#allocation10 + $0xc0] sm:$0xff]
    %v1708 = vld [vmem:[#allocation10 + $0xc8] sm:$0xff]
    %v1709 = vld [vmem:[#allocation10 + $0xd0] sm:$0xff]
    %v1710 = vld [vmem:[#allocation10 + $0xd8] sm:$0xff]
    %v1711 = vld [vmem:[#allocation10 + $0xe0] sm:$0xff]
    %v1712 = vld [vmem:[#allocation10 + $0xe8] sm:$0xff]
    %v1713 = vld [vmem:[#allocation10 + $0xf0] sm:$0xff]
    %v1714 = vld [vmem:[#allocation10 + $0xf8] sm:$0xff]
    %v1715 = vld [vmem:[#allocation10 + $0x100] sm:$0xff]
    %v1716 = vld [vmem:[#allocation10 + $0x108] sm:$0xff]
    %v1717 = vld [vmem:[#allocation10 + $0x110] sm:$0xff]
    %v1718 = vld [vmem:[#allocation10 + $0x118] sm:$0xff]
    %v1719 = vld [vmem:[#allocation10 + $0x120] sm:$0xff]
    %v1720 = vld [vmem:[#allocation10 + $0x128] sm:$0xff]
    %v1721 = vld [vmem:[#allocation10 + $0x130] sm:$0xff]
    %v1722 = vld [vmem:[#allocation10 + $0x138] sm:$0xff]
    %v1723 = vld [vmem:[#allocation10 + $0x140] sm:$0xff]
    %v1724 = vld [vmem:[#allocation10 + $0x148] sm:$0xff]
    %v1725 = vld [vmem:[#allocation10 + $0x150] sm:$0xff]
    %v1726 = vld [vmem:[#allocation10 + $0x158] sm:$0xff]
    %v1727 = vld [vmem:[#allocation10 + $0x160] sm:$0xff]
    %v1728 = vld [vmem:[#allocation10 + $0x168] sm:$0xff]
    %v1729 = vld [vmem:[#allocation10 + $0x170] sm:$0xff]
    %v1730 = vld [vmem:[#allocation10 + $0x178] sm:$0xff]
    %v1731 = vld [vmem:[#allocation10 + $0x180] sm:$0xff]
    %v1732 = vld [vmem:[#allocation10 + $0x188] sm:$0xff]
    %v1733 = vld [vmem:[#allocation10 + $0x190] sm:$0xff]
    %v1734 = vld [vmem:[#allocation10 + $0x198] sm:$0xff]
    %v1735 = vld [vmem:[#allocation10 + $0x1a0] sm:$0xff]
    %v1736 = vld [vmem:[#allocation10 + $0x1a8] sm:$0xff]
    %v1737 = vld [vmem:[#allocation10 + $0x1b0] sm:$0xff]
    %v1738 = vld [vmem:[#allocation10 + $0x1b8] sm:$0xff]
    %v1739 = vld [vmem:[#allocation10 + $0x1c0] sm:$0xff]
    %v1740 = vld [vmem:[#allocation10 + $0x1c8] sm:$0xff]
    %v1741 = vld [vmem:[#allocation10 + $0x1d0] sm:$0xff]
    %v1742 = vld [vmem:[#allocation10 + $0x1d8] sm:$0xff]
    %v1743 = vld [vmem:[#allocation10 + $0x1e0] sm:$0xff]
    %v1744 = vld [vmem:[#allocation10 + $0x1e8] sm:$0xff]
    %v1745 = vld [vmem:[#allocation10 + $0x1f0] sm:$0xff]
    %v1746 = vld [vmem:[#allocation10 + $0x1f8] sm:$0xff]
    %v1747 = vld [vmem:[#allocation10 + $0x200] sm:$0xff]
    %v1748 = vld [vmem:[#allocation10 + $0x208] sm:$0xff]
    %v1749 = vld [vmem:[#allocation10 + $0x210] sm:$0xff]
    %v1750 = vld [vmem:[#allocation10 + $0x218] sm:$0xff]
    %v1751 = vld [vmem:[#allocation10 + $0x220] sm:$0xff]
    %v1752 = vld [vmem:[#allocation10 + $0x228] sm:$0xff]
    %v1753 = vld [vmem:[#allocation10 + $0x230] sm:$0xff]
    %v1754 = vld [vmem:[#allocation10 + $0x238] sm:$0xff]
    %v1755 = vld [vmem:[#allocation10 + $0x240] sm:$0xff]
    %v1756 = vld [vmem:[#allocation10 + $0x248] sm:$0xff]
    %v1757 = vld [vmem:[#allocation10 + $0x250] sm:$0xff]
    %v1758 = vld [vmem:[#allocation10 + $0x258] sm:$0xff]
    %v1759 = vld [vmem:[#allocation10 + $0x260] sm:$0xff]
    %v1760 = vld [vmem:[#allocation10 + $0x268] sm:$0xff]
    %v1761 = vld [vmem:[#allocation10 + $0x270] sm:$0xff]
    %v1762 = vld [vmem:[#allocation10 + $0x278] sm:$0xff]
    %v1763 = vld [vmem:[#allocation10 + $0x280] sm:$0xff]
    %v1764 = vld [vmem:[#allocation10 + $0x288] sm:$0xff]
    %v1765 = vld [vmem:[#allocation10 + $0x290] sm:$0xff]
    %v1766 = vld [vmem:[#allocation10 + $0x298] sm:$0xff]
    %v1767 = vld [vmem:[#allocation10 + $0x2a0] sm:$0xff]
    %v1768 = vld [vmem:[#allocation10 + $0x2a8] sm:$0xff]
    %v1769 = vld [vmem:[#allocation10 + $0x2b0] sm:$0xff]
    %v1770 = vld [vmem:[#allocation10 + $0x2b8] sm:$0xff]
    %v1771 = vld [vmem:[#allocation10 + $0x2c0] sm:$0xff]
    %v1772 = vld [vmem:[#allocation10 + $0x2c8] sm:$0xff]
    %v1773 = vld [vmem:[#allocation10 + $0x2d0] sm:$0xff]
    %v1774 = vld [vmem:[#allocation10 + $0x2d8] sm:$0xff]
    %v1775 = vld [vmem:[#allocation10 + $0x2e0] sm:$0xff]
    %v1776 = vld [vmem:[#allocation10 + $0x2e8] sm:$0xff]
    %v1777 = vld [vmem:[#allocation10 + $0x2f0] sm:$0xff]
    %v1778 = vld [vmem:[#allocation10 + $0x2f8] sm:$0xff]
    %v1779 = vld [vmem:[#allocation10 + $0x300] sm:$0xff]
    %v1780 = vld [vmem:[#allocation10 + $0x308] sm:$0xff]
    %v1781 = vld [vmem:[#allocation10 + $0x310] sm:$0xff]
    %v1782 = vld [vmem:[#allocation10 + $0x318] sm:$0xff]
    %v1783 = vld [vmem:[#allocation10 + $0x320] sm:$0xff]
    %v1784 = vld [vmem:[#allocation10 + $0x328] sm:$0xff]
    %v1785 = vld [vmem:[#allocation10 + $0x330] sm:$0xff]
    %v1786 = vld [vmem:[#allocation10 + $0x338] sm:$0xff]
    %v1787 = vld [vmem:[#allocation10 + $0x340] sm:$0xff]
    %v1788 = vld [vmem:[#allocation10 + $0x348] sm:$0xff]
    %v1789 = vld [vmem:[#allocation10 + $0x350] sm:$0xff]
    %v1790 = vld [vmem:[#allocation10 + $0x358] sm:$0xff]
    %v1791 = vld [vmem:[#allocation10 + $0x360] sm:$0xff]
    %v1792 = vld [vmem:[#allocation10 + $0x368] sm:$0xff]
    %v1793 = vld [vmem:[#allocation10 + $0x370] sm:$0xff]
    %v1794 = vld [vmem:[#allocation10 + $0x378] sm:$0xff]
    %v1795 = vld [vmem:[#allocation10 + $0x380] sm:$0xff]
    %v1796 = vld [vmem:[#allocation10 + $0x388] sm:$0xff]
    %v1797 = vld [vmem:[#allocation10 + $0x390] sm:$0xff]
    %v1798 = vld [vmem:[#allocation10 + $0x398] sm:$0xff]
    %v1799 = vld [vmem:[#allocation10 + $0x3a0] sm:$0xff]
    %v1800 = vld [vmem:[#allocation10 + $0x3a8] sm:$0xff]
    %v1801 = vld [vmem:[#allocation10 + $0x3b0] sm:$0xff]
    %v1802 = vld [vmem:[#allocation10 + $0x3b8] sm:$0xff]
    %v1803 = vld [vmem:[#allocation10 + $0x3c0] sm:$0xff]
    %v1804 = vld [vmem:[#allocation10 + $0x3c8] sm:$0xff]
    %v1805 = vld [vmem:[#allocation10 + $0x3d0] sm:$0xff]
    %v1806 = vld [vmem:[#allocation10 + $0x3d8] sm:$0xff]
    %v1807 = vld [vmem:[#allocation10 + $0x3e0] sm:$0xff]
    %v1808 = vld [vmem:[#allocation10 + $0x3e8] sm:$0xff]
    %v1809 = vld [vmem:[#allocation10 + $0x3f0] sm:$0xff]
    %v1810 = vld [vmem:[#allocation10 + $0x3f8] sm:$0xff]
    %v1811 = vld [vmem:[#allocation10 + $0x400] sm:$0xff]
    %v1812 = vld [vmem:[#allocation10 + $0x408] sm:$0xff]
    %v1813 = vld [vmem:[#allocation10 + $0x410] sm:$0xff]
    %v1814 = vld [vmem:[#allocation10 + $0x418] sm:$0xff]
    %v1815 = vld [vmem:[#allocation10 + $0x420] sm:$0xff]
    %v1816 = vld [vmem:[#allocation10 + $0x428] sm:$0xff]
    %v1817 = vld [vmem:[#allocation10 + $0x430] sm:$0xff]
    %v1818 = vld [vmem:[#allocation10 + $0x438] sm:$0xff]
    %v1819 = vld [vmem:[#allocation10 + $0x440] sm:$0xff]
    %v1820 = vld [vmem:[#allocation10 + $0x448] sm:$0xff]
    %v1821 = vld [vmem:[#allocation10 + $0x450] sm:$0xff]
    %v1822 = vld [vmem:[#allocation10 + $0x458] sm:$0xff]
    %v1823 = vld [vmem:[#allocation10 + $0x460] sm:$0xff]
    %v1824 = vld [vmem:[#allocation10 + $0x468] sm:$0xff]
    %v1825 = vld [vmem:[#allocation10 + $0x470] sm:$0xff]
    %v1826 = vld [vmem:[#allocation10 + $0x478] sm:$0xff]
    %v1827 = vld [vmem:[#allocation10 + $0x480] sm:$0xff]
    %v1828 = vld [vmem:[#allocation10 + $0x488] sm:$0xff]
    %v1829 = vld [vmem:[#allocation10 + $0x490] sm:$0xff]
    %v1830 = vld [vmem:[#allocation10 + $0x498] sm:$0xff]
    %v1831 = vld [vmem:[#allocation10 + $0x4a0] sm:$0xff]
    %v1832 = vld [vmem:[#allocation10 + $0x4a8] sm:$0xff]
    %v1833 = vld [vmem:[#allocation10 + $0x4b0] sm:$0xff]
    %v1834 = vld [vmem:[#allocation10 + $0x4b8] sm:$0xff]
    %v1835 = vld [vmem:[#allocation10 + $0x4c0] sm:$0xff]
    %v1836 = vld [vmem:[#allocation10 + $0x4c8] sm:$0xff]
    %v1837 = vld [vmem:[#allocation10 + $0x4d0] sm:$0xff]
    %v1838 = vld [vmem:[#allocation10 + $0x4d8] sm:$0xff]
    %v1839 = vld [vmem:[#allocation10 + $0x4e0] sm:$0xff]
    %v1840 = vld [vmem:[#allocation10 + $0x4e8] sm:$0xff]
    %v1841 = vld [vmem:[#allocation10 + $0x4f0] sm:$0xff]
    %v1842 = vld [vmem:[#allocation10 + $0x4f8] sm:$0xff]
    %v1843 = vld [vmem:[#allocation10 + $0x500] sm:$0xff]
    %v1844 = vld [vmem:[#allocation10 + $0x508] sm:$0xff]
    %v1845 = vld [vmem:[#allocation10 + $0x510] sm:$0xff]
    %v1846 = vld [vmem:[#allocation10 + $0x518] sm:$0xff]
    %v1847 = vld [vmem:[#allocation10 + $0x520] sm:$0xff]
    %v1848 = vld [vmem:[#allocation10 + $0x528] sm:$0xff]
    %v1849 = vld [vmem:[#allocation10 + $0x530] sm:$0xff]
    %v1850 = vld [vmem:[#allocation10 + $0x538] sm:$0xff]
    %v1851 = vld [vmem:[#allocation10 + $0x540] sm:$0xff]
    %v1852 = vld [vmem:[#allocation10 + $0x548] sm:$0xff]
    %v1853 = vld [vmem:[#allocation10 + $0x550] sm:$0xff]
    %v1854 = vld [vmem:[#allocation10 + $0x558] sm:$0xff]
    %v1855 = vld [vmem:[#allocation10 + $0x560] sm:$0xff]
    %v1856 = vld [vmem:[#allocation10 + $0x568] sm:$0xff]
    %v1857 = vld [vmem:[#allocation10 + $0x570] sm:$0xff]
    %v1858 = vld [vmem:[#allocation10 + $0x578] sm:$0xff]
    %v1859 = vld [vmem:[#allocation10 + $0x580] sm:$0xff]
    %v1860 = vld [vmem:[#allocation10 + $0x588] sm:$0xff]
    %v1861 = vld [vmem:[#allocation10 + $0x590] sm:$0xff]
    %v1862 = vld [vmem:[#allocation10 + $0x598] sm:$0xff]
    %v1863 = vld [vmem:[#allocation10 + $0x5a0] sm:$0xff]
    %v1864 = vld [vmem:[#allocation10 + $0x5a8] sm:$0xff]
    %v1865 = vld [vmem:[#allocation10 + $0x5b0] sm:$0xff]
    %v1866 = vld [vmem:[#allocation10 + $0x5b8] sm:$0xff]
    %v1867 = vld [vmem:[#allocation10 + $0x5c0] sm:$0xff]
    %v1868 = vld [vmem:[#allocation10 + $0x5c8] sm:$0xff]
    %v1869 = vld [vmem:[#allocation10 + $0x5d0] sm:$0xff]
    %v1870 = vld [vmem:[#allocation10 + $0x5d8] sm:$0xff]
    %v1871 = vld [vmem:[#allocation10 + $0x5e0] sm:$0xff]
    %v1872 = vld [vmem:[#allocation10 + $0x5e8] sm:$0xff]
    %v1873 = vld [vmem:[#allocation10 + $0x5f0] sm:$0xff]
    %v1874 = vld [vmem:[#allocation10 + $0x5f8] sm:$0xff]
    %v1875 = vld [vmem:[#allocation10 + $0x600] sm:$0xff]
    %v1876 = vld [vmem:[#allocation10 + $0x608] sm:$0xff]
    %v1877 = vld [vmem:[#allocation10 + $0x610] sm:$0xff]
    %v1878 = vld [vmem:[#allocation10 + $0x618] sm:$0xff]
    %v1879 = vld [vmem:[#allocation10 + $0x620] sm:$0xff]
    %v1880 = vld [vmem:[#allocation10 + $0x628] sm:$0xff]
    %v1881 = vld [vmem:[#allocation10 + $0x630] sm:$0xff]
    %v1882 = vld [vmem:[#allocation10 + $0x638] sm:$0xff]
    %v1883 = vld [vmem:[#allocation10 + $0x640] sm:$0xff]
    %v1884 = vld [vmem:[#allocation10 + $0x648] sm:$0xff]
    %v1885 = vld [vmem:[#allocation10 + $0x650] sm:$0xff]
    %v1886 = vld [vmem:[#allocation10 + $0x658] sm:$0xff]
    %v1887 = vld [vmem:[#allocation10 + $0x660] sm:$0xff]
    %v1888 = vld [vmem:[#allocation10 + $0x668] sm:$0xff]
    %v1889 = vld [vmem:[#allocation10 + $0x670] sm:$0xff]
    %v1890 = vld [vmem:[#allocation10 + $0x678] sm:$0xff]
    %v1891 = vld [vmem:[#allocation10 + $0x680] sm:$0xff]
    %v1892 = vld [vmem:[#allocation10 + $0x688] sm:$0xff]
    %v1893 = vld [vmem:[#allocation10 + $0x690] sm:$0xff]
    %v1894 = vld [vmem:[#allocation10 + $0x698] sm:$0xff]
    %v1895 = vld [vmem:[#allocation10 + $0x6a0] sm:$0xff]
    %v1896 = vld [vmem:[#allocation10 + $0x6a8] sm:$0xff]
    %v1897 = vld [vmem:[#allocation10 + $0x6b0] sm:$0xff]
    %v1898 = vld [vmem:[#allocation10 + $0x6b8] sm:$0xff]
    %v1899 = vld [vmem:[#allocation10 + $0x6c0] sm:$0xff]
    %v1900 = vld [vmem:[#allocation10 + $0x6c8] sm:$0xff]
    %v1901 = vld [vmem:[#allocation10 + $0x6d0] sm:$0xff]
    %v1902 = vld [vmem:[#allocation10 + $0x6d8] sm:$0xff]
    %v1903 = vld [vmem:[#allocation10 + $0x6e0] sm:$0xff]
    %v1904 = vld [vmem:[#allocation10 + $0x6e8] sm:$0xff]
    %v1905 = vld [vmem:[#allocation10 + $0x6f0] sm:$0xff]
    %v1906 = vld [vmem:[#allocation10 + $0x6f8] sm:$0xff]
    %v1907 = vld [vmem:[#allocation10 + $0x700] sm:$0xff]
    %v1908 = vld [vmem:[#allocation10 + $0x708] sm:$0xff]
    %v1909 = vld [vmem:[#allocation10 + $0x710] sm:$0xff]
    %v1910 = vld [vmem:[#allocation10 + $0x718] sm:$0xff]
    %v1911 = vld [vmem:[#allocation10 + $0x720] sm:$0xff]
    %v1912 = vld [vmem:[#allocation10 + $0x728] sm:$0xff]
    %v1913 = vld [vmem:[#allocation10 + $0x730] sm:$0xff]
    %v1914 = vld [vmem:[#allocation10 + $0x738] sm:$0xff]
    %v1915 = vld [vmem:[#allocation10 + $0x740] sm:$0xff]
    %v1916 = vld [vmem:[#allocation10 + $0x748] sm:$0xff]
    %v1917 = vld [vmem:[#allocation10 + $0x750] sm:$0xff]
    %v1918 = vld [vmem:[#allocation10 + $0x758] sm:$0xff]
    %v1919 = vld [vmem:[#allocation10 + $0x760] sm:$0xff]
    %v1920 = vld [vmem:[#allocation10 + $0x768] sm:$0xff]
    %v1921 = vld [vmem:[#allocation10 + $0x770] sm:$0xff]
    %v1922 = vld [vmem:[#allocation10 + $0x778] sm:$0xff]
    %v1923 = vld [vmem:[#allocation10 + $0x780] sm:$0xff]
    %v1924 = vld [vmem:[#allocation10 + $0x788] sm:$0xff]
    %v1925 = vld [vmem:[#allocation10 + $0x790] sm:$0xff]
    %v1926 = vld [vmem:[#allocation10 + $0x798] sm:$0xff]
    %v1927 = vld [vmem:[#allocation10 + $0x7a0] sm:$0xff]
    %v1928 = vld [vmem:[#allocation10 + $0x7a8] sm:$0xff]
    %v1929 = vld [vmem:[#allocation10 + $0x7b0] sm:$0xff]
    %v1930 = vld [vmem:[#allocation10 + $0x7b8] sm:$0xff]
    %v1931 = vld [vmem:[#allocation10 + $0x7c0] sm:$0xff]
    %v1932 = vld [vmem:[#allocation10 + $0x7c8] sm:$0xff]
    %v1933 = vld [vmem:[#allocation10 + $0x7d0] sm:$0xff]
    %v1934 = vld [vmem:[#allocation10 + $0x7d8] sm:$0xff]
    %v1935 = vld [vmem:[#allocation10 + $0x7e0] sm:$0xff]
    %v1936 = vld [vmem:[#allocation10 + $0x7e8] sm:$0xff]
    %v1937 = vld [vmem:[#allocation10 + $0x7f0] sm:$0xff]
    %v1938 = vld [vmem:[#allocation10 + $0x7f8] sm:$0xff]
    %v1939 = vld [vmem:[#allocation11] sm:$0xff]
    %v1940 = vld [vmem:[#allocation11 + $0x8] sm:$0xff]
    %v1941 = vld [vmem:[#allocation11 + $0x10] sm:$0xff]
    %v1942 = vld [vmem:[#allocation11 + $0x18] sm:$0xff]
    %v1943 = vld [vmem:[#allocation11 + $0x20] sm:$0xff]
    %v1944 = vld [vmem:[#allocation11 + $0x28] sm:$0xff]
    %v1945 = vld [vmem:[#allocation11 + $0x30] sm:$0xff]
    %v1946 = vld [vmem:[#allocation11 + $0x38] sm:$0xff]
    %v1947 = vld [vmem:[#allocation11 + $0x40] sm:$0xff]
    %v1948 = vld [vmem:[#allocation11 + $0x48] sm:$0xff]
    %v1949 = vld [vmem:[#allocation11 + $0x50] sm:$0xff]
    %v1950 = vld [vmem:[#allocation11 + $0x58] sm:$0xff]
    %v1951 = vld [vmem:[#allocation11 + $0x60] sm:$0xff]
    %v1952 = vld [vmem:[#allocation11 + $0x68] sm:$0xff]
    %v1953 = vld [vmem:[#allocation11 + $0x70] sm:$0xff]
    %v1954 = vld [vmem:[#allocation11 + $0x78] sm:$0xff]
    %v1955 = vld [vmem:[#allocation11 + $0x80] sm:$0xff]
    %v1956 = vld [vmem:[#allocation11 + $0x88] sm:$0xff]
    %v1957 = vld [vmem:[#allocation11 + $0x90] sm:$0xff]
    %v1958 = vld [vmem:[#allocation11 + $0x98] sm:$0xff]
    %v1959 = vld [vmem:[#allocation11 + $0xa0] sm:$0xff]
    %v1960 = vld [vmem:[#allocation11 + $0xa8] sm:$0xff]
    %v1961 = vld [vmem:[#allocation11 + $0xb0] sm:$0xff]
    %v1962 = vld [vmem:[#allocation11 + $0xb8] sm:$0xff]
    %v1963 = vld [vmem:[#allocation11 + $0xc0] sm:$0xff]
    %v1964 = vld [vmem:[#allocation11 + $0xc8] sm:$0xff]
    %v1965 = vld [vmem:[#allocation11 + $0xd0] sm:$0xff]
    %v1966 = vld [vmem:[#allocation11 + $0xd8] sm:$0xff]
    %v1967 = vld [vmem:[#allocation11 + $0xe0] sm:$0xff]
    %v1968 = vld [vmem:[#allocation11 + $0xe8] sm:$0xff]
    %v1969 = vld [vmem:[#allocation11 + $0xf0] sm:$0xff]
    %v1970 = vld [vmem:[#allocation11 + $0xf8] sm:$0xff]
    %v1971 = vld [vmem:[#allocation11 + $0x100] sm:$0xff]
    %v1972 = vld [vmem:[#allocation11 + $0x108] sm:$0xff]
    %v1973 = vld [vmem:[#allocation11 + $0x110] sm:$0xff]
    %v1974 = vld [vmem:[#allocation11 + $0x118] sm:$0xff]
    %v1975 = vld [vmem:[#allocation11 + $0x120] sm:$0xff]
    %v1976 = vld [vmem:[#allocation11 + $0x128] sm:$0xff]
    %v1977 = vld [vmem:[#allocation11 + $0x130] sm:$0xff]
    %v1978 = vld [vmem:[#allocation11 + $0x138] sm:$0xff]
    %v1979 = vld [vmem:[#allocation11 + $0x140] sm:$0xff]
    %v1980 = vld [vmem:[#allocation11 + $0x148] sm:$0xff]
    %v1981 = vld [vmem:[#allocation11 + $0x150] sm:$0xff]
    %v1982 = vld [vmem:[#allocation11 + $0x158] sm:$0xff]
    %v1983 = vld [vmem:[#allocation11 + $0x160] sm:$0xff]
    %v1984 = vld [vmem:[#allocation11 + $0x168] sm:$0xff]
    %v1985 = vld [vmem:[#allocation11 + $0x170] sm:$0xff]
    %v1986 = vld [vmem:[#allocation11 + $0x178] sm:$0xff]
    %v1987 = vld [vmem:[#allocation11 + $0x180] sm:$0xff]
    %v1988 = vld [vmem:[#allocation11 + $0x188] sm:$0xff]
    %v1989 = vld [vmem:[#allocation11 + $0x190] sm:$0xff]
    %v1990 = vld [vmem:[#allocation11 + $0x198] sm:$0xff]
    %v1991 = vld [vmem:[#allocation11 + $0x1a0] sm:$0xff]
    %v1992 = vld [vmem:[#allocation11 + $0x1a8] sm:$0xff]
    %v1993 = vld [vmem:[#allocation11 + $0x1b0] sm:$0xff]
    %v1994 = vld [vmem:[#allocation11 + $0x1b8] sm:$0xff]
    %v1995 = vld [vmem:[#allocation11 + $0x1c0] sm:$0xff]
    %v1996 = vld [vmem:[#allocation11 + $0x1c8] sm:$0xff]
    %v1997 = vld [vmem:[#allocation11 + $0x1d0] sm:$0xff]
    %v1998 = vld [vmem:[#allocation11 + $0x1d8] sm:$0xff]
    %v1999 = vld [vmem:[#allocation11 + $0x1e0] sm:$0xff]
    %v2000 = vld [vmem:[#allocation11 + $0x1e8] sm:$0xff]
    %v2001 = vld [vmem:[#allocation11 + $0x1f0] sm:$0xff]
    %v2002 = vld [vmem:[#allocation11 + $0x1f8] sm:$0xff]
    %v2003 = vld [vmem:[#allocation11 + $0x200] sm:$0xff]
    %v2004 = vld [vmem:[#allocation11 + $0x208] sm:$0xff]
    %v2005 = vld [vmem:[#allocation11 + $0x210] sm:$0xff]
    %v2006 = vld [vmem:[#allocation11 + $0x218] sm:$0xff]
    %v2007 = vld [vmem:[#allocation11 + $0x220] sm:$0xff]
    %v2008 = vld [vmem:[#allocation11 + $0x228] sm:$0xff]
    %v2009 = vld [vmem:[#allocation11 + $0x230] sm:$0xff]
    %v2010 = vld [vmem:[#allocation11 + $0x238] sm:$0xff]
    %v2011 = vld [vmem:[#allocation11 + $0x240] sm:$0xff]
    %v2012 = vld [vmem:[#allocation11 + $0x248] sm:$0xff]
    %v2013 = vld [vmem:[#allocation11 + $0x250] sm:$0xff]
    %v2014 = vld [vmem:[#allocation11 + $0x258] sm:$0xff]
    %v2015 = vld [vmem:[#allocation11 + $0x260] sm:$0xff]
    %v2016 = vld [vmem:[#allocation11 + $0x268] sm:$0xff]
    %v2017 = vld [vmem:[#allocation11 + $0x270] sm:$0xff]
    %v2018 = vld [vmem:[#allocation11 + $0x278] sm:$0xff]
    %v2019 = vld [vmem:[#allocation11 + $0x280] sm:$0xff]
    %v2020 = vld [vmem:[#allocation11 + $0x288] sm:$0xff]
    %v2021 = vld [vmem:[#allocation11 + $0x290] sm:$0xff]
    %v2022 = vld [vmem:[#allocation11 + $0x298] sm:$0xff]
    %v2023 = vld [vmem:[#allocation11 + $0x2a0] sm:$0xff]
    %v2024 = vld [vmem:[#allocation11 + $0x2a8] sm:$0xff]
    %v2025 = vld [vmem:[#allocation11 + $0x2b0] sm:$0xff]
    %v2026 = vld [vmem:[#allocation11 + $0x2b8] sm:$0xff]
    %v2027 = vld [vmem:[#allocation11 + $0x2c0] sm:$0xff]
    %v2028 = vld [vmem:[#allocation11 + $0x2c8] sm:$0xff]
    %v2029 = vld [vmem:[#allocation11 + $0x2d0] sm:$0xff]
    %v2030 = vld [vmem:[#allocation11 + $0x2d8] sm:$0xff]
    %v2031 = vld [vmem:[#allocation11 + $0x2e0] sm:$0xff]
    %v2032 = vld [vmem:[#allocation11 + $0x2e8] sm:$0xff]
    %v2033 = vld [vmem:[#allocation11 + $0x2f0] sm:$0xff]
    %v2034 = vld [vmem:[#allocation11 + $0x2f8] sm:$0xff]
    %v2035 = vld [vmem:[#allocation11 + $0x300] sm:$0xff]
    %v2036 = vld [vmem:[#allocation11 + $0x308] sm:$0xff]
    %v2037 = vld [vmem:[#allocation11 + $0x310] sm:$0xff]
    %v2038 = vld [vmem:[#allocation11 + $0x318] sm:$0xff]
    %v2039 = vld [vmem:[#allocation11 + $0x320] sm:$0xff]
    %v2040 = vld [vmem:[#allocation11 + $0x328] sm:$0xff]
    %v2041 = vld [vmem:[#allocation11 + $0x330] sm:$0xff]
    %v2042 = vld [vmem:[#allocation11 + $0x338] sm:$0xff]
    %v2043 = vld [vmem:[#allocation11 + $0x340] sm:$0xff]
    %v2044 = vld [vmem:[#allocation11 + $0x348] sm:$0xff]
    %v2045 = vld [vmem:[#allocation11 + $0x350] sm:$0xff]
    %v2046 = vld [vmem:[#allocation11 + $0x358] sm:$0xff]
    %v2047 = vld [vmem:[#allocation11 + $0x360] sm:$0xff]
    %v2048 = vld [vmem:[#allocation11 + $0x368] sm:$0xff]
    %v2049 = vld [vmem:[#allocation11 + $0x370] sm:$0xff]
    %v2050 = vld [vmem:[#allocation11 + $0x378] sm:$0xff]
    %v2051 = vld [vmem:[#allocation11 + $0x380] sm:$0xff]
    %v2052 = vld [vmem:[#allocation11 + $0x388] sm:$0xff]
    %v2053 = vld [vmem:[#allocation11 + $0x390] sm:$0xff]
    %v2054 = vld [vmem:[#allocation11 + $0x398] sm:$0xff]
    %v2055 = vld [vmem:[#allocation11 + $0x3a0] sm:$0xff]
    %v2056 = vld [vmem:[#allocation11 + $0x3a8] sm:$0xff]
    %v2057 = vld [vmem:[#allocation11 + $0x3b0] sm:$0xff]
    %v2058 = vld [vmem:[#allocation11 + $0x3b8] sm:$0xff]
    %v2059 = vld [vmem:[#allocation11 + $0x3c0] sm:$0xff]
    %v2060 = vld [vmem:[#allocation11 + $0x3c8] sm:$0xff]
    %v2061 = vld [vmem:[#allocation11 + $0x3d0] sm:$0xff]
    %v2062 = vld [vmem:[#allocation11 + $0x3d8] sm:$0xff]
    %v2063 = vld [vmem:[#allocation11 + $0x3e0] sm:$0xff]
    %v2064 = vld [vmem:[#allocation11 + $0x3e8] sm:$0xff]
    %v2065 = vld [vmem:[#allocation11 + $0x3f0] sm:$0xff]
    %v2066 = vld [vmem:[#allocation11 + $0x3f8] sm:$0xff]
    %2068 = vset.pattern.permute.xlu0 0
    %2069 = vperm.xlu0 %2068, %v1939
    %v2070 = vpop.permute.xlu0 %2069
    %2073 = vset.pattern.permute.xlu0 0
    %2074 = vperm.xlu0 %2073, %v1940
    %v2075 = vpop.permute.xlu0 %2074
    %2078 = vset.pattern.permute.xlu0 0
    %2079 = vperm.xlu0 %2078, %v1941
    %v2080 = vpop.permute.xlu0 %2079
    %2083 = vset.pattern.permute.xlu0 0
    %2084 = vperm.xlu0 %2083, %v1942
    %v2085 = vpop.permute.xlu0 %2084
    %2088 = vset.pattern.permute.xlu0 0
    %2089 = vperm.xlu0 %2088, %v1943
    %v2090 = vpop.permute.xlu0 %2089
    %2093 = vset.pattern.permute.xlu0 0
    %2094 = vperm.xlu0 %2093, %v1944
    %v2095 = vpop.permute.xlu0 %2094
    %2098 = vset.pattern.permute.xlu0 0
    %2099 = vperm.xlu0 %2098, %v1945
    %v2100 = vpop.permute.xlu0 %2099
    %2103 = vset.pattern.permute.xlu0 0
    %2104 = vperm.xlu0 %2103, %v1946
    %v2105 = vpop.permute.xlu0 %2104
    %2108 = vset.pattern.permute.xlu0 0
    %2109 = vperm.xlu0 %2108, %v1947
    %v2110 = vpop.permute.xlu0 %2109
    %2113 = vset.pattern.permute.xlu0 0
    %2114 = vperm.xlu0 %2113, %v1948
    %v2115 = vpop.permute.xlu0 %2114
    %2118 = vset.pattern.permute.xlu0 0
    %2119 = vperm.xlu0 %2118, %v1949
    %v2120 = vpop.permute.xlu0 %2119
    %2123 = vset.pattern.permute.xlu0 0
    %2124 = vperm.xlu0 %2123, %v1950
    %v2125 = vpop.permute.xlu0 %2124
    %2128 = vset.pattern.permute.xlu0 0
    %2129 = vperm.xlu0 %2128, %v1951
    %v2130 = vpop.permute.xlu0 %2129
    %2133 = vset.pattern.permute.xlu0 0
    %2134 = vperm.xlu0 %2133, %v1952
    %v2135 = vpop.permute.xlu0 %2134
    %2138 = vset.pattern.permute.xlu0 0
    %2139 = vperm.xlu0 %2138, %v1953
    %v2140 = vpop.permute.xlu0 %2139
    %2143 = vset.pattern.permute.xlu0 0
    %2144 = vperm.xlu0 %2143, %v1954
    %v2145 = vpop.permute.xlu0 %2144
    %2148 = vset.pattern.permute.xlu0 0
    %2149 = vperm.xlu0 %2148, %v1955
    %v2150 = vpop.permute.xlu0 %2149
    %2153 = vset.pattern.permute.xlu0 0
    %2154 = vperm.xlu0 %2153, %v1956
    %v2155 = vpop.permute.xlu0 %2154
    %2158 = vset.pattern.permute.xlu0 0
    %2159 = vperm.xlu0 %2158, %v1957
    %v2160 = vpop.permute.xlu0 %2159
    %2163 = vset.pattern.permute.xlu0 0
    %2164 = vperm.xlu0 %2163, %v1958
    %v2165 = vpop.permute.xlu0 %2164
    %2168 = vset.pattern.permute.xlu0 0
    %2169 = vperm.xlu0 %2168, %v1959
    %v2170 = vpop.permute.xlu0 %2169
    %2173 = vset.pattern.permute.xlu0 0
    %2174 = vperm.xlu0 %2173, %v1960
    %v2175 = vpop.permute.xlu0 %2174
    %2178 = vset.pattern.permute.xlu0 0
    %2179 = vperm.xlu0 %2178, %v1961
    %v2180 = vpop.permute.xlu0 %2179
    %2183 = vset.pattern.permute.xlu0 0
    %2184 = vperm.xlu0 %2183, %v1962
    %v2185 = vpop.permute.xlu0 %2184
    %2188 = vset.pattern.permute.xlu0 0
    %2189 = vperm.xlu0 %2188, %v1963
    %v2190 = vpop.permute.xlu0 %2189
    %2193 = vset.pattern.permute.xlu0 0
    %2194 = vperm.xlu0 %2193, %v1964
    %v2195 = vpop.permute.xlu0 %2194
    %2198 = vset.pattern.permute.xlu0 0
    %2199 = vperm.xlu0 %2198, %v1965
    %v2200 = vpop.permute.xlu0 %2199
    %2203 = vset.pattern.permute.xlu0 0
    %2204 = vperm.xlu0 %2203, %v1966
    %v2205 = vpop.permute.xlu0 %2204
    %2208 = vset.pattern.permute.xlu0 0
    %2209 = vperm.xlu0 %2208, %v1967
    %v2210 = vpop.permute.xlu0 %2209
    %2213 = vset.pattern.permute.xlu0 0
    %2214 = vperm.xlu0 %2213, %v1968
    %v2215 = vpop.permute.xlu0 %2214
    %2218 = vset.pattern.permute.xlu0 0
    %2219 = vperm.xlu0 %2218, %v1969
    %v2220 = vpop.permute.xlu0 %2219
    %2223 = vset.pattern.permute.xlu0 0
    %2224 = vperm.xlu0 %2223, %v1970
    %v2225 = vpop.permute.xlu0 %2224
    %2228 = vset.pattern.permute.xlu0 0
    %2229 = vperm.xlu0 %2228, %v1971
    %v2230 = vpop.permute.xlu0 %2229
    %2233 = vset.pattern.permute.xlu0 0
    %2234 = vperm.xlu0 %2233, %v1972
    %v2235 = vpop.permute.xlu0 %2234
    %2238 = vset.pattern.permute.xlu0 0
    %2239 = vperm.xlu0 %2238, %v1973
    %v2240 = vpop.permute.xlu0 %2239
    %2243 = vset.pattern.permute.xlu0 0
    %2244 = vperm.xlu0 %2243, %v1974
    %v2245 = vpop.permute.xlu0 %2244
    %2248 = vset.pattern.permute.xlu0 0
    %2249 = vperm.xlu0 %2248, %v1975
    %v2250 = vpop.permute.xlu0 %2249
    %2253 = vset.pattern.permute.xlu0 0
    %2254 = vperm.xlu0 %2253, %v1976
    %v2255 = vpop.permute.xlu0 %2254
    %2258 = vset.pattern.permute.xlu0 0
    %2259 = vperm.xlu0 %2258, %v1977
    %v2260 = vpop.permute.xlu0 %2259
    %2263 = vset.pattern.permute.xlu0 0
    %2264 = vperm.xlu0 %2263, %v1978
    %v2265 = vpop.permute.xlu0 %2264
    %2268 = vset.pattern.permute.xlu0 0
    %2269 = vperm.xlu0 %2268, %v1979
    %v2270 = vpop.permute.xlu0 %2269
    %2273 = vset.pattern.permute.xlu0 0
    %2274 = vperm.xlu0 %2273, %v1980
    %v2275 = vpop.permute.xlu0 %2274
    %2278 = vset.pattern.permute.xlu0 0
    %2279 = vperm.xlu0 %2278, %v1981
    %v2280 = vpop.permute.xlu0 %2279
    %2283 = vset.pattern.permute.xlu0 0
    %2284 = vperm.xlu0 %2283, %v1982
    %v2285 = vpop.permute.xlu0 %2284
    %2288 = vset.pattern.permute.xlu0 0
    %2289 = vperm.xlu0 %2288, %v1983
    %v2290 = vpop.permute.xlu0 %2289
    %2293 = vset.pattern.permute.xlu0 0
    %2294 = vperm.xlu0 %2293, %v1984
    %v2295 = vpop.permute.xlu0 %2294
    %2298 = vset.pattern.permute.xlu0 0
    %2299 = vperm.xlu0 %2298, %v1985
    %v2300 = vpop.permute.xlu0 %2299
    %2303 = vset.pattern.permute.xlu0 0
    %2304 = vperm.xlu0 %2303, %v1986
    %v2305 = vpop.permute.xlu0 %2304
    %2308 = vset.pattern.permute.xlu0 0
    %2309 = vperm.xlu0 %2308, %v1987
    %v2310 = vpop.permute.xlu0 %2309
    %2313 = vset.pattern.permute.xlu0 0
    %2314 = vperm.xlu0 %2313, %v1988
    %v2315 = vpop.permute.xlu0 %2314
    %2318 = vset.pattern.permute.xlu0 0
    %2319 = vperm.xlu0 %2318, %v1989
    %v2320 = vpop.permute.xlu0 %2319
    %2323 = vset.pattern.permute.xlu0 0
    %2324 = vperm.xlu0 %2323, %v1990
    %v2325 = vpop.permute.xlu0 %2324
    %2328 = vset.pattern.permute.xlu0 0
    %2329 = vperm.xlu0 %2328, %v1991
    %v2330 = vpop.permute.xlu0 %2329
    %2333 = vset.pattern.permute.xlu0 0
    %2334 = vperm.xlu0 %2333, %v1992
    %v2335 = vpop.permute.xlu0 %2334
    %2338 = vset.pattern.permute.xlu0 0
    %2339 = vperm.xlu0 %2338, %v1993
    %v2340 = vpop.permute.xlu0 %2339
    %2343 = vset.pattern.permute.xlu0 0
    %2344 = vperm.xlu0 %2343, %v1994
    %v2345 = vpop.permute.xlu0 %2344
    %2348 = vset.pattern.permute.xlu0 0
    %2349 = vperm.xlu0 %2348, %v1995
    %v2350 = vpop.permute.xlu0 %2349
    %2353 = vset.pattern.permute.xlu0 0
    %2354 = vperm.xlu0 %2353, %v1996
    %v2355 = vpop.permute.xlu0 %2354
    %2358 = vset.pattern.permute.xlu0 0
    %2359 = vperm.xlu0 %2358, %v1997
    %v2360 = vpop.permute.xlu0 %2359
    %2363 = vset.pattern.permute.xlu0 0
    %2364 = vperm.xlu0 %2363, %v1998
    %v2365 = vpop.permute.xlu0 %2364
    %2368 = vset.pattern.permute.xlu0 0
    %2369 = vperm.xlu0 %2368, %v1999
    %v2370 = vpop.permute.xlu0 %2369
    %2373 = vset.pattern.permute.xlu0 0
    %2374 = vperm.xlu0 %2373, %v2000
    %v2375 = vpop.permute.xlu0 %2374
    %2378 = vset.pattern.permute.xlu0 0
    %2379 = vperm.xlu0 %2378, %v2001
    %v2380 = vpop.permute.xlu0 %2379
    %2383 = vset.pattern.permute.xlu0 0
    %2384 = vperm.xlu0 %2383, %v2002
    %v2385 = vpop.permute.xlu0 %2384
    %2388 = vset.pattern.permute.xlu0 0
    %2389 = vperm.xlu0 %2388, %v2003
    %v2390 = vpop.permute.xlu0 %2389
    %2393 = vset.pattern.permute.xlu0 0
    %2394 = vperm.xlu0 %2393, %v2004
    %v2395 = vpop.permute.xlu0 %2394
    %2398 = vset.pattern.permute.xlu0 0
    %2399 = vperm.xlu0 %2398, %v2005
    %v2400 = vpop.permute.xlu0 %2399
    %2403 = vset.pattern.permute.xlu0 0
    %2404 = vperm.xlu0 %2403, %v2006
    %v2405 = vpop.permute.xlu0 %2404
    %2408 = vset.pattern.permute.xlu0 0
    %2409 = vperm.xlu0 %2408, %v2007
    %v2410 = vpop.permute.xlu0 %2409
    %2413 = vset.pattern.permute.xlu0 0
    %2414 = vperm.xlu0 %2413, %v2008
    %v2415 = vpop.permute.xlu0 %2414
    %2418 = vset.pattern.permute.xlu0 0
    %2419 = vperm.xlu0 %2418, %v2009
    %v2420 = vpop.permute.xlu0 %2419
    %2423 = vset.pattern.permute.xlu0 0
    %2424 = vperm.xlu0 %2423, %v2010
    %v2425 = vpop.permute.xlu0 %2424
    %2428 = vset.pattern.permute.xlu0 0
    %2429 = vperm.xlu0 %2428, %v2011
    %v2430 = vpop.permute.xlu0 %2429
    %2433 = vset.pattern.permute.xlu0 0
    %2434 = vperm.xlu0 %2433, %v2012
    %v2435 = vpop.permute.xlu0 %2434
    %2438 = vset.pattern.permute.xlu0 0
    %2439 = vperm.xlu0 %2438, %v2013
    %v2440 = vpop.permute.xlu0 %2439
    %2443 = vset.pattern.permute.xlu0 0
    %2444 = vperm.xlu0 %2443, %v2014
    %v2445 = vpop.permute.xlu0 %2444
    %2448 = vset.pattern.permute.xlu0 0
    %2449 = vperm.xlu0 %2448, %v2015
    %v2450 = vpop.permute.xlu0 %2449
    %2453 = vset.pattern.permute.xlu0 0
    %2454 = vperm.xlu0 %2453, %v2016
    %v2455 = vpop.permute.xlu0 %2454
    %2458 = vset.pattern.permute.xlu0 0
    %2459 = vperm.xlu0 %2458, %v2017
    %v2460 = vpop.permute.xlu0 %2459
    %2463 = vset.pattern.permute.xlu0 0
    %2464 = vperm.xlu0 %2463, %v2018
    %v2465 = vpop.permute.xlu0 %2464
    %2468 = vset.pattern.permute.xlu0 0
    %2469 = vperm.xlu0 %2468, %v2019
    %v2470 = vpop.permute.xlu0 %2469
    %2473 = vset.pattern.permute.xlu0 0
    %2474 = vperm.xlu0 %2473, %v2020
    %v2475 = vpop.permute.xlu0 %2474
    %2478 = vset.pattern.permute.xlu0 0
    %2479 = vperm.xlu0 %2478, %v2021
    %v2480 = vpop.permute.xlu0 %2479
    %2483 = vset.pattern.permute.xlu0 0
    %2484 = vperm.xlu0 %2483, %v2022
    %v2485 = vpop.permute.xlu0 %2484
    %2488 = vset.pattern.permute.xlu0 0
    %2489 = vperm.xlu0 %2488, %v2023
    %v2490 = vpop.permute.xlu0 %2489
    %2493 = vset.pattern.permute.xlu0 0
    %2494 = vperm.xlu0 %2493, %v2024
    %v2495 = vpop.permute.xlu0 %2494
    %2498 = vset.pattern.permute.xlu0 0
    %2499 = vperm.xlu0 %2498, %v2025
    %v2500 = vpop.permute.xlu0 %2499
    %2503 = vset.pattern.permute.xlu0 0
    %2504 = vperm.xlu0 %2503, %v2026
    %v2505 = vpop.permute.xlu0 %2504
    %2508 = vset.pattern.permute.xlu0 0
    %2509 = vperm.xlu0 %2508, %v2027
    %v2510 = vpop.permute.xlu0 %2509
    %2513 = vset.pattern.permute.xlu0 0
    %2514 = vperm.xlu0 %2513, %v2028
    %v2515 = vpop.permute.xlu0 %2514
    %2518 = vset.pattern.permute.xlu0 0
    %2519 = vperm.xlu0 %2518, %v2029
    %v2520 = vpop.permute.xlu0 %2519
    %2523 = vset.pattern.permute.xlu0 0
    %2524 = vperm.xlu0 %2523, %v2030
    %v2525 = vpop.permute.xlu0 %2524
    %2528 = vset.pattern.permute.xlu0 0
    %2529 = vperm.xlu0 %2528, %v2031
    %v2530 = vpop.permute.xlu0 %2529
    %2533 = vset.pattern.permute.xlu0 0
    %2534 = vperm.xlu0 %2533, %v2032
    %v2535 = vpop.permute.xlu0 %2534
    %2538 = vset.pattern.permute.xlu0 0
    %2539 = vperm.xlu0 %2538, %v2033
    %v2540 = vpop.permute.xlu0 %2539
    %2543 = vset.pattern.permute.xlu0 0
    %2544 = vperm.xlu0 %2543, %v2034
    %v2545 = vpop.permute.xlu0 %2544
    %2548 = vset.pattern.permute.xlu0 0
    %2549 = vperm.xlu0 %2548, %v2035
    %v2550 = vpop.permute.xlu0 %2549
    %2553 = vset.pattern.permute.xlu0 0
    %2554 = vperm.xlu0 %2553, %v2036
    %v2555 = vpop.permute.xlu0 %2554
    %2558 = vset.pattern.permute.xlu0 0
    %2559 = vperm.xlu0 %2558, %v2037
    %v2560 = vpop.permute.xlu0 %2559
    %2563 = vset.pattern.permute.xlu0 0
    %2564 = vperm.xlu0 %2563, %v2038
    %v2565 = vpop.permute.xlu0 %2564
    %2568 = vset.pattern.permute.xlu0 0
    %2569 = vperm.xlu0 %2568, %v2039
    %v2570 = vpop.permute.xlu0 %2569
    %2573 = vset.pattern.permute.xlu0 0
    %2574 = vperm.xlu0 %2573, %v2040
    %v2575 = vpop.permute.xlu0 %2574
    %2578 = vset.pattern.permute.xlu0 0
    %2579 = vperm.xlu0 %2578, %v2041
    %v2580 = vpop.permute.xlu0 %2579
    %2583 = vset.pattern.permute.xlu0 0
    %2584 = vperm.xlu0 %2583, %v2042
    %v2585 = vpop.permute.xlu0 %2584
    %2588 = vset.pattern.permute.xlu0 0
    %2589 = vperm.xlu0 %2588, %v2043
    %v2590 = vpop.permute.xlu0 %2589
    %2593 = vset.pattern.permute.xlu0 0
    %2594 = vperm.xlu0 %2593, %v2044
    %v2595 = vpop.permute.xlu0 %2594
    %2598 = vset.pattern.permute.xlu0 0
    %2599 = vperm.xlu0 %2598, %v2045
    %v2600 = vpop.permute.xlu0 %2599
    %2603 = vset.pattern.permute.xlu0 0
    %2604 = vperm.xlu0 %2603, %v2046
    %v2605 = vpop.permute.xlu0 %2604
    %2608 = vset.pattern.permute.xlu0 0
    %2609 = vperm.xlu0 %2608, %v2047
    %v2610 = vpop.permute.xlu0 %2609
    %2613 = vset.pattern.permute.xlu0 0
    %2614 = vperm.xlu0 %2613, %v2048
    %v2615 = vpop.permute.xlu0 %2614
    %2618 = vset.pattern.permute.xlu0 0
    %2619 = vperm.xlu0 %2618, %v2049
    %v2620 = vpop.permute.xlu0 %2619
    %2623 = vset.pattern.permute.xlu0 0
    %2624 = vperm.xlu0 %2623, %v2050
    %v2625 = vpop.permute.xlu0 %2624
    %2628 = vset.pattern.permute.xlu0 0
    %2629 = vperm.xlu0 %2628, %v2051
    %v2630 = vpop.permute.xlu0 %2629
    %2633 = vset.pattern.permute.xlu0 0
    %2634 = vperm.xlu0 %2633, %v2052
    %v2635 = vpop.permute.xlu0 %2634
    %2638 = vset.pattern.permute.xlu0 0
    %2639 = vperm.xlu0 %2638, %v2053
    %v2640 = vpop.permute.xlu0 %2639
    %2643 = vset.pattern.permute.xlu0 0
    %2644 = vperm.xlu0 %2643, %v2054
    %v2645 = vpop.permute.xlu0 %2644
    %2648 = vset.pattern.permute.xlu0 0
    %2649 = vperm.xlu0 %2648, %v2055
    %v2650 = vpop.permute.xlu0 %2649
    %2653 = vset.pattern.permute.xlu0 0
    %2654 = vperm.xlu0 %2653, %v2056
    %v2655 = vpop.permute.xlu0 %2654
    %2658 = vset.pattern.permute.xlu0 0
    %2659 = vperm.xlu0 %2658, %v2057
    %v2660 = vpop.permute.xlu0 %2659
    %2663 = vset.pattern.permute.xlu0 0
    %2664 = vperm.xlu0 %2663, %v2058
    %v2665 = vpop.permute.xlu0 %2664
    %2668 = vset.pattern.permute.xlu0 0
    %2669 = vperm.xlu0 %2668, %v2059
    %v2670 = vpop.permute.xlu0 %2669
    %2673 = vset.pattern.permute.xlu0 0
    %2674 = vperm.xlu0 %2673, %v2060
    %v2675 = vpop.permute.xlu0 %2674
    %2678 = vset.pattern.permute.xlu0 0
    %2679 = vperm.xlu0 %2678, %v2061
    %v2680 = vpop.permute.xlu0 %2679
    %2683 = vset.pattern.permute.xlu0 0
    %2684 = vperm.xlu0 %2683, %v2062
    %v2685 = vpop.permute.xlu0 %2684
    %2688 = vset.pattern.permute.xlu0 0
    %2689 = vperm.xlu0 %2688, %v2063
    %v2690 = vpop.permute.xlu0 %2689
    %2693 = vset.pattern.permute.xlu0 0
    %2694 = vperm.xlu0 %2693, %v2064
    %v2695 = vpop.permute.xlu0 %2694
    %2698 = vset.pattern.permute.xlu0 0
    %2699 = vperm.xlu0 %2698, %v2065
    %v2700 = vpop.permute.xlu0 %2699
    %2703 = vset.pattern.permute.xlu0 0
    %2704 = vperm.xlu0 %2703, %v2066
    %v2705 = vpop.permute.xlu0 %2704
    %v2963 = vunpack.c.l.b16 %v1683
    %v2964 = vunpack.c.h.b16 %v1683
    %v2965 = vunpack.c.l.b16 %v1684
    %v2966 = vunpack.c.h.b16 %v1684
    %v2967 = vunpack.c.l.b16 %v1685
    %v2968 = vunpack.c.h.b16 %v1685
    %v2969 = vunpack.c.l.b16 %v1686
    %v2970 = vunpack.c.h.b16 %v1686
    %v2971 = vunpack.c.l.b16 %v1687
    %v2972 = vunpack.c.h.b16 %v1687
    %v2973 = vunpack.c.l.b16 %v1688
    %v2974 = vunpack.c.h.b16 %v1688
    %v2975 = vunpack.c.l.b16 %v1689
    %v2976 = vunpack.c.h.b16 %v1689
    %v2977 = vunpack.c.l.b16 %v1690
    %v2978 = vunpack.c.h.b16 %v1690
    %v2979 = vunpack.c.l.b16 %v1691
    %v2980 = vunpack.c.h.b16 %v1691
    %v2981 = vunpack.c.l.b16 %v1692
    %v2982 = vunpack.c.h.b16 %v1692
    %v2983 = vunpack.c.l.b16 %v1693
    %v2984 = vunpack.c.h.b16 %v1693
    %v2985 = vunpack.c.l.b16 %v1694
    %v2986 = vunpack.c.h.b16 %v1694
    %v2987 = vunpack.c.l.b16 %v1695
    %v2988 = vunpack.c.h.b16 %v1695
    %v2989 = vunpack.c.l.b16 %v1696
    %v2990 = vunpack.c.h.b16 %v1696
    %v2991 = vunpack.c.l.b16 %v1697
    %v2992 = vunpack.c.h.b16 %v1697
    %v2993 = vunpack.c.l.b16 %v1698
    %v2994 = vunpack.c.h.b16 %v1698
    %v2995 = vunpack.c.l.b16 %v1699
    %v2996 = vunpack.c.h.b16 %v1699
    %v2997 = vunpack.c.l.b16 %v1700
    %v2998 = vunpack.c.h.b16 %v1700
    %v2999 = vunpack.c.l.b16 %v1701
    %v3000 = vunpack.c.h.b16 %v1701
    %v3001 = vunpack.c.l.b16 %v1702
    %v3002 = vunpack.c.h.b16 %v1702
    %v3003 = vunpack.c.l.b16 %v1703
    %v3004 = vunpack.c.h.b16 %v1703
    %v3005 = vunpack.c.l.b16 %v1704
    %v3006 = vunpack.c.h.b16 %v1704
    %v3007 = vunpack.c.l.b16 %v1705
    %v3008 = vunpack.c.h.b16 %v1705
    %v3009 = vunpack.c.l.b16 %v1706
    %v3010 = vunpack.c.h.b16 %v1706
    %v3011 = vunpack.c.l.b16 %v1707
    %v3012 = vunpack.c.h.b16 %v1707
    %v3013 = vunpack.c.l.b16 %v1708
    %v3014 = vunpack.c.h.b16 %v1708
    %v3015 = vunpack.c.l.b16 %v1709
    %v3016 = vunpack.c.h.b16 %v1709
    %v3017 = vunpack.c.l.b16 %v1710
    %v3018 = vunpack.c.h.b16 %v1710
    %v3019 = vunpack.c.l.b16 %v1711
    %v3020 = vunpack.c.h.b16 %v1711
    %v3021 = vunpack.c.l.b16 %v1712
    %v3022 = vunpack.c.h.b16 %v1712
    %v3023 = vunpack.c.l.b16 %v1713
    %v3024 = vunpack.c.h.b16 %v1713
    %v3025 = vunpack.c.l.b16 %v1714
    %v3026 = vunpack.c.h.b16 %v1714
    %v3027 = vunpack.c.l.b16 %v1715
    %v3028 = vunpack.c.h.b16 %v1715
    %v3029 = vunpack.c.l.b16 %v1716
    %v3030 = vunpack.c.h.b16 %v1716
    %v3031 = vunpack.c.l.b16 %v1717
    %v3032 = vunpack.c.h.b16 %v1717
    %v3033 = vunpack.c.l.b16 %v1718
    %v3034 = vunpack.c.h.b16 %v1718
    %v3035 = vunpack.c.l.b16 %v1719
    %v3036 = vunpack.c.h.b16 %v1719
    %v3037 = vunpack.c.l.b16 %v1720
    %v3038 = vunpack.c.h.b16 %v1720
    %v3039 = vunpack.c.l.b16 %v1721
    %v3040 = vunpack.c.h.b16 %v1721
    %v3041 = vunpack.c.l.b16 %v1722
    %v3042 = vunpack.c.h.b16 %v1722
    %v3043 = vunpack.c.l.b16 %v1723
    %v3044 = vunpack.c.h.b16 %v1723
    %v3045 = vunpack.c.l.b16 %v1724
    %v3046 = vunpack.c.h.b16 %v1724
    %v3047 = vunpack.c.l.b16 %v1725
    %v3048 = vunpack.c.h.b16 %v1725
    %v3049 = vunpack.c.l.b16 %v1726
    %v3050 = vunpack.c.h.b16 %v1726
    %v3051 = vunpack.c.l.b16 %v1727
    %v3052 = vunpack.c.h.b16 %v1727
    %v3053 = vunpack.c.l.b16 %v1728
    %v3054 = vunpack.c.h.b16 %v1728
    %v3055 = vunpack.c.l.b16 %v1729
    %v3056 = vunpack.c.h.b16 %v1729
    %v3057 = vunpack.c.l.b16 %v1730
    %v3058 = vunpack.c.h.b16 %v1730
    %v3059 = vunpack.c.l.b16 %v1731
    %v3060 = vunpack.c.h.b16 %v1731
    %v3061 = vunpack.c.l.b16 %v1732
    %v3062 = vunpack.c.h.b16 %v1732
    %v3063 = vunpack.c.l.b16 %v1733
    %v3064 = vunpack.c.h.b16 %v1733
    %v3065 = vunpack.c.l.b16 %v1734
    %v3066 = vunpack.c.h.b16 %v1734
    %v3067 = vunpack.c.l.b16 %v1735
    %v3068 = vunpack.c.h.b16 %v1735
    %v3069 = vunpack.c.l.b16 %v1736
    %v3070 = vunpack.c.h.b16 %v1736
    %v3071 = vunpack.c.l.b16 %v1737
    %v3072 = vunpack.c.h.b16 %v1737
    %v3073 = vunpack.c.l.b16 %v1738
    %v3074 = vunpack.c.h.b16 %v1738
    %v3075 = vunpack.c.l.b16 %v1739
    %v3076 = vunpack.c.h.b16 %v1739
    %v3077 = vunpack.c.l.b16 %v1740
    %v3078 = vunpack.c.h.b16 %v1740
    %v3079 = vunpack.c.l.b16 %v1741
    %v3080 = vunpack.c.h.b16 %v1741
    %v3081 = vunpack.c.l.b16 %v1742
    %v3082 = vunpack.c.h.b16 %v1742
    %v3083 = vunpack.c.l.b16 %v1743
    %v3084 = vunpack.c.h.b16 %v1743
    %v3085 = vunpack.c.l.b16 %v1744
    %v3086 = vunpack.c.h.b16 %v1744
    %v3087 = vunpack.c.l.b16 %v1745
    %v3088 = vunpack.c.h.b16 %v1745
    %v3089 = vunpack.c.l.b16 %v1746
    %v3090 = vunpack.c.h.b16 %v1746
    %v3091 = vunpack.c.l.b16 %v1747
    %v3092 = vunpack.c.h.b16 %v1747
    %v3093 = vunpack.c.l.b16 %v1748
    %v3094 = vunpack.c.h.b16 %v1748
    %v3095 = vunpack.c.l.b16 %v1749
    %v3096 = vunpack.c.h.b16 %v1749
    %v3097 = vunpack.c.l.b16 %v1750
    %v3098 = vunpack.c.h.b16 %v1750
    %v3099 = vunpack.c.l.b16 %v1751
    %v3100 = vunpack.c.h.b16 %v1751
    %v3101 = vunpack.c.l.b16 %v1752
    %v3102 = vunpack.c.h.b16 %v1752
    %v3103 = vunpack.c.l.b16 %v1753
    %v3104 = vunpack.c.h.b16 %v1753
    %v3105 = vunpack.c.l.b16 %v1754
    %v3106 = vunpack.c.h.b16 %v1754
    %v3107 = vunpack.c.l.b16 %v1755
    %v3108 = vunpack.c.h.b16 %v1755
    %v3109 = vunpack.c.l.b16 %v1756
    %v3110 = vunpack.c.h.b16 %v1756
    %v3111 = vunpack.c.l.b16 %v1757
    %v3112 = vunpack.c.h.b16 %v1757
    %v3113 = vunpack.c.l.b16 %v1758
    %v3114 = vunpack.c.h.b16 %v1758
    %v3115 = vunpack.c.l.b16 %v1759
    %v3116 = vunpack.c.h.b16 %v1759
    %v3117 = vunpack.c.l.b16 %v1760
    %v3118 = vunpack.c.h.b16 %v1760
    %v3119 = vunpack.c.l.b16 %v1761
    %v3120 = vunpack.c.h.b16 %v1761
    %v3121 = vunpack.c.l.b16 %v1762
    %v3122 = vunpack.c.h.b16 %v1762
    %v3123 = vunpack.c.l.b16 %v1763
    %v3124 = vunpack.c.h.b16 %v1763
    %v3125 = vunpack.c.l.b16 %v1764
    %v3126 = vunpack.c.h.b16 %v1764
    %v3127 = vunpack.c.l.b16 %v1765
    %v3128 = vunpack.c.h.b16 %v1765
    %v3129 = vunpack.c.l.b16 %v1766
    %v3130 = vunpack.c.h.b16 %v1766
    %v3131 = vunpack.c.l.b16 %v1767
    %v3132 = vunpack.c.h.b16 %v1767
    %v3133 = vunpack.c.l.b16 %v1768
    %v3134 = vunpack.c.h.b16 %v1768
    %v3135 = vunpack.c.l.b16 %v1769
    %v3136 = vunpack.c.h.b16 %v1769
    %v3137 = vunpack.c.l.b16 %v1770
    %v3138 = vunpack.c.h.b16 %v1770
    %v3139 = vunpack.c.l.b16 %v1771
    %v3140 = vunpack.c.h.b16 %v1771
    %v3141 = vunpack.c.l.b16 %v1772
    %v3142 = vunpack.c.h.b16 %v1772
    %v3143 = vunpack.c.l.b16 %v1773
    %v3144 = vunpack.c.h.b16 %v1773
    %v3145 = vunpack.c.l.b16 %v1774
    %v3146 = vunpack.c.h.b16 %v1774
    %v3147 = vunpack.c.l.b16 %v1775
    %v3148 = vunpack.c.h.b16 %v1775
    %v3149 = vunpack.c.l.b16 %v1776
    %v3150 = vunpack.c.h.b16 %v1776
    %v3151 = vunpack.c.l.b16 %v1777
    %v3152 = vunpack.c.h.b16 %v1777
    %v3153 = vunpack.c.l.b16 %v1778
    %v3154 = vunpack.c.h.b16 %v1778
    %v3155 = vunpack.c.l.b16 %v1779
    %v3156 = vunpack.c.h.b16 %v1779
    %v3157 = vunpack.c.l.b16 %v1780
    %v3158 = vunpack.c.h.b16 %v1780
    %v3159 = vunpack.c.l.b16 %v1781
    %v3160 = vunpack.c.h.b16 %v1781
    %v3161 = vunpack.c.l.b16 %v1782
    %v3162 = vunpack.c.h.b16 %v1782
    %v3163 = vunpack.c.l.b16 %v1783
    %v3164 = vunpack.c.h.b16 %v1783
    %v3165 = vunpack.c.l.b16 %v1784
    %v3166 = vunpack.c.h.b16 %v1784
    %v3167 = vunpack.c.l.b16 %v1785
    %v3168 = vunpack.c.h.b16 %v1785
    %v3169 = vunpack.c.l.b16 %v1786
    %v3170 = vunpack.c.h.b16 %v1786
    %v3171 = vunpack.c.l.b16 %v1787
    %v3172 = vunpack.c.h.b16 %v1787
    %v3173 = vunpack.c.l.b16 %v1788
    %v3174 = vunpack.c.h.b16 %v1788
    %v3175 = vunpack.c.l.b16 %v1789
    %v3176 = vunpack.c.h.b16 %v1789
    %v3177 = vunpack.c.l.b16 %v1790
    %v3178 = vunpack.c.h.b16 %v1790
    %v3179 = vunpack.c.l.b16 %v1791
    %v3180 = vunpack.c.h.b16 %v1791
    %v3181 = vunpack.c.l.b16 %v1792
    %v3182 = vunpack.c.h.b16 %v1792
    %v3183 = vunpack.c.l.b16 %v1793
    %v3184 = vunpack.c.h.b16 %v1793
    %v3185 = vunpack.c.l.b16 %v1794
    %v3186 = vunpack.c.h.b16 %v1794
    %v3187 = vunpack.c.l.b16 %v1795
    %v3188 = vunpack.c.h.b16 %v1795
    %v3189 = vunpack.c.l.b16 %v1796
    %v3190 = vunpack.c.h.b16 %v1796
    %v3191 = vunpack.c.l.b16 %v1797
    %v3192 = vunpack.c.h.b16 %v1797
    %v3193 = vunpack.c.l.b16 %v1798
    %v3194 = vunpack.c.h.b16 %v1798
    %v3195 = vunpack.c.l.b16 %v1799
    %v3196 = vunpack.c.h.b16 %v1799
    %v3197 = vunpack.c.l.b16 %v1800
    %v3198 = vunpack.c.h.b16 %v1800
    %v3199 = vunpack.c.l.b16 %v1801
    %v3200 = vunpack.c.h.b16 %v1801
    %v3201 = vunpack.c.l.b16 %v1802
    %v3202 = vunpack.c.h.b16 %v1802
    %v3203 = vunpack.c.l.b16 %v1803
    %v3204 = vunpack.c.h.b16 %v1803
    %v3205 = vunpack.c.l.b16 %v1804
    %v3206 = vunpack.c.h.b16 %v1804
    %v3207 = vunpack.c.l.b16 %v1805
    %v3208 = vunpack.c.h.b16 %v1805
    %v3209 = vunpack.c.l.b16 %v1806
    %v3210 = vunpack.c.h.b16 %v1806
    %v3211 = vunpack.c.l.b16 %v1807
    %v3212 = vunpack.c.h.b16 %v1807
    %v3213 = vunpack.c.l.b16 %v1808
    %v3214 = vunpack.c.h.b16 %v1808
    %v3215 = vunpack.c.l.b16 %v1809
    %v3216 = vunpack.c.h.b16 %v1809
    %v3217 = vunpack.c.l.b16 %v1810
    %v3218 = vunpack.c.h.b16 %v1810
    %v3219 = vunpack.c.l.b16 %v1811
    %v3220 = vunpack.c.h.b16 %v1811
    %v3221 = vunpack.c.l.b16 %v1812
    %v3222 = vunpack.c.h.b16 %v1812
    %v3223 = vunpack.c.l.b16 %v1813
    %v3224 = vunpack.c.h.b16 %v1813
    %v3225 = vunpack.c.l.b16 %v1814
    %v3226 = vunpack.c.h.b16 %v1814
    %v3227 = vunpack.c.l.b16 %v1815
    %v3228 = vunpack.c.h.b16 %v1815
    %v3229 = vunpack.c.l.b16 %v1816
    %v3230 = vunpack.c.h.b16 %v1816
    %v3231 = vunpack.c.l.b16 %v1817
    %v3232 = vunpack.c.h.b16 %v1817
    %v3233 = vunpack.c.l.b16 %v1818
    %v3234 = vunpack.c.h.b16 %v1818
    %v3235 = vunpack.c.l.b16 %v1819
    %v3236 = vunpack.c.h.b16 %v1819
    %v3237 = vunpack.c.l.b16 %v1820
    %v3238 = vunpack.c.h.b16 %v1820
    %v3239 = vunpack.c.l.b16 %v1821
    %v3240 = vunpack.c.h.b16 %v1821
    %v3241 = vunpack.c.l.b16 %v1822
    %v3242 = vunpack.c.h.b16 %v1822
    %v3243 = vunpack.c.l.b16 %v1823
    %v3244 = vunpack.c.h.b16 %v1823
    %v3245 = vunpack.c.l.b16 %v1824
    %v3246 = vunpack.c.h.b16 %v1824
    %v3247 = vunpack.c.l.b16 %v1825
    %v3248 = vunpack.c.h.b16 %v1825
    %v3249 = vunpack.c.l.b16 %v1826
    %v3250 = vunpack.c.h.b16 %v1826
    %v3251 = vunpack.c.l.b16 %v1827
    %v3252 = vunpack.c.h.b16 %v1827
    %v3253 = vunpack.c.l.b16 %v1828
    %v3254 = vunpack.c.h.b16 %v1828
    %v3255 = vunpack.c.l.b16 %v1829
    %v3256 = vunpack.c.h.b16 %v1829
    %v3257 = vunpack.c.l.b16 %v1830
    %v3258 = vunpack.c.h.b16 %v1830
    %v3259 = vunpack.c.l.b16 %v1831
    %v3260 = vunpack.c.h.b16 %v1831
    %v3261 = vunpack.c.l.b16 %v1832
    %v3262 = vunpack.c.h.b16 %v1832
    %v3263 = vunpack.c.l.b16 %v1833
    %v3264 = vunpack.c.h.b16 %v1833
    %v3265 = vunpack.c.l.b16 %v1834
    %v3266 = vunpack.c.h.b16 %v1834
    %v3267 = vunpack.c.l.b16 %v1835
    %v3268 = vunpack.c.h.b16 %v1835
    %v3269 = vunpack.c.l.b16 %v1836
    %v3270 = vunpack.c.h.b16 %v1836
    %v3271 = vunpack.c.l.b16 %v1837
    %v3272 = vunpack.c.h.b16 %v1837
    %v3273 = vunpack.c.l.b16 %v1838
    %v3274 = vunpack.c.h.b16 %v1838
    %v3275 = vunpack.c.l.b16 %v1839
    %v3276 = vunpack.c.h.b16 %v1839
    %v3277 = vunpack.c.l.b16 %v1840
    %v3278 = vunpack.c.h.b16 %v1840
    %v3279 = vunpack.c.l.b16 %v1841
    %v3280 = vunpack.c.h.b16 %v1841
    %v3281 = vunpack.c.l.b16 %v1842
    %v3282 = vunpack.c.h.b16 %v1842
    %v3283 = vunpack.c.l.b16 %v1843
    %v3284 = vunpack.c.h.b16 %v1843
    %v3285 = vunpack.c.l.b16 %v1844
    %v3286 = vunpack.c.h.b16 %v1844
    %v3287 = vunpack.c.l.b16 %v1845
    %v3288 = vunpack.c.h.b16 %v1845
    %v3289 = vunpack.c.l.b16 %v1846
    %v3290 = vunpack.c.h.b16 %v1846
    %v3291 = vunpack.c.l.b16 %v1847
    %v3292 = vunpack.c.h.b16 %v1847
    %v3293 = vunpack.c.l.b16 %v1848
    %v3294 = vunpack.c.h.b16 %v1848
    %v3295 = vunpack.c.l.b16 %v1849
    %v3296 = vunpack.c.h.b16 %v1849
    %v3297 = vunpack.c.l.b16 %v1850
    %v3298 = vunpack.c.h.b16 %v1850
    %v3299 = vunpack.c.l.b16 %v1851
    %v3300 = vunpack.c.h.b16 %v1851
    %v3301 = vunpack.c.l.b16 %v1852
    %v3302 = vunpack.c.h.b16 %v1852
    %v3303 = vunpack.c.l.b16 %v1853
    %v3304 = vunpack.c.h.b16 %v1853
    %v3305 = vunpack.c.l.b16 %v1854
    %v3306 = vunpack.c.h.b16 %v1854
    %v3307 = vunpack.c.l.b16 %v1855
    %v3308 = vunpack.c.h.b16 %v1855
    %v3309 = vunpack.c.l.b16 %v1856
    %v3310 = vunpack.c.h.b16 %v1856
    %v3311 = vunpack.c.l.b16 %v1857
    %v3312 = vunpack.c.h.b16 %v1857
    %v3313 = vunpack.c.l.b16 %v1858
    %v3314 = vunpack.c.h.b16 %v1858
    %v3315 = vunpack.c.l.b16 %v1859
    %v3316 = vunpack.c.h.b16 %v1859
    %v3317 = vunpack.c.l.b16 %v1860
    %v3318 = vunpack.c.h.b16 %v1860
    %v3319 = vunpack.c.l.b16 %v1861
    %v3320 = vunpack.c.h.b16 %v1861
    %v3321 = vunpack.c.l.b16 %v1862
    %v3322 = vunpack.c.h.b16 %v1862
    %v3323 = vunpack.c.l.b16 %v1863
    %v3324 = vunpack.c.h.b16 %v1863
    %v3325 = vunpack.c.l.b16 %v1864
    %v3326 = vunpack.c.h.b16 %v1864
    %v3327 = vunpack.c.l.b16 %v1865
    %v3328 = vunpack.c.h.b16 %v1865
    %v3329 = vunpack.c.l.b16 %v1866
    %v3330 = vunpack.c.h.b16 %v1866
    %v3331 = vunpack.c.l.b16 %v1867
    %v3332 = vunpack.c.h.b16 %v1867
    %v3333 = vunpack.c.l.b16 %v1868
    %v3334 = vunpack.c.h.b16 %v1868
    %v3335 = vunpack.c.l.b16 %v1869
    %v3336 = vunpack.c.h.b16 %v1869
    %v3337 = vunpack.c.l.b16 %v1870
    %v3338 = vunpack.c.h.b16 %v1870
    %v3339 = vunpack.c.l.b16 %v1871
    %v3340 = vunpack.c.h.b16 %v1871
    %v3341 = vunpack.c.l.b16 %v1872
    %v3342 = vunpack.c.h.b16 %v1872
    %v3343 = vunpack.c.l.b16 %v1873
    %v3344 = vunpack.c.h.b16 %v1873
    %v3345 = vunpack.c.l.b16 %v1874
    %v3346 = vunpack.c.h.b16 %v1874
    %v3347 = vunpack.c.l.b16 %v1875
    %v3348 = vunpack.c.h.b16 %v1875
    %v3349 = vunpack.c.l.b16 %v1876
    %v3350 = vunpack.c.h.b16 %v1876
    %v3351 = vunpack.c.l.b16 %v1877
    %v3352 = vunpack.c.h.b16 %v1877
    %v3353 = vunpack.c.l.b16 %v1878
    %v3354 = vunpack.c.h.b16 %v1878
    %v3355 = vunpack.c.l.b16 %v1879
    %v3356 = vunpack.c.h.b16 %v1879
    %v3357 = vunpack.c.l.b16 %v1880
    %v3358 = vunpack.c.h.b16 %v1880
    %v3359 = vunpack.c.l.b16 %v1881
    %v3360 = vunpack.c.h.b16 %v1881
    %v3361 = vunpack.c.l.b16 %v1882
    %v3362 = vunpack.c.h.b16 %v1882
    %v3363 = vunpack.c.l.b16 %v1883
    %v3364 = vunpack.c.h.b16 %v1883
    %v3365 = vunpack.c.l.b16 %v1884
    %v3366 = vunpack.c.h.b16 %v1884
    %v3367 = vunpack.c.l.b16 %v1885
    %v3368 = vunpack.c.h.b16 %v1885
    %v3369 = vunpack.c.l.b16 %v1886
    %v3370 = vunpack.c.h.b16 %v1886
    %v3371 = vunpack.c.l.b16 %v1887
    %v3372 = vunpack.c.h.b16 %v1887
    %v3373 = vunpack.c.l.b16 %v1888
    %v3374 = vunpack.c.h.b16 %v1888
    %v3375 = vunpack.c.l.b16 %v1889
    %v3376 = vunpack.c.h.b16 %v1889
    %v3377 = vunpack.c.l.b16 %v1890
    %v3378 = vunpack.c.h.b16 %v1890
    %v3379 = vunpack.c.l.b16 %v1891
    %v3380 = vunpack.c.h.b16 %v1891
    %v3381 = vunpack.c.l.b16 %v1892
    %v3382 = vunpack.c.h.b16 %v1892
    %v3383 = vunpack.c.l.b16 %v1893
    %v3384 = vunpack.c.h.b16 %v1893
    %v3385 = vunpack.c.l.b16 %v1894
    %v3386 = vunpack.c.h.b16 %v1894
    %v3387 = vunpack.c.l.b16 %v1895
    %v3388 = vunpack.c.h.b16 %v1895
    %v3389 = vunpack.c.l.b16 %v1896
    %v3390 = vunpack.c.h.b16 %v1896
    %v3391 = vunpack.c.l.b16 %v1897
    %v3392 = vunpack.c.h.b16 %v1897
    %v3393 = vunpack.c.l.b16 %v1898
    %v3394 = vunpack.c.h.b16 %v1898
    %v3395 = vunpack.c.l.b16 %v1899
    %v3396 = vunpack.c.h.b16 %v1899
    %v3397 = vunpack.c.l.b16 %v1900
    %v3398 = vunpack.c.h.b16 %v1900
    %v3399 = vunpack.c.l.b16 %v1901
    %v3400 = vunpack.c.h.b16 %v1901
    %v3401 = vunpack.c.l.b16 %v1902
    %v3402 = vunpack.c.h.b16 %v1902
    %v3403 = vunpack.c.l.b16 %v1903
    %v3404 = vunpack.c.h.b16 %v1903
    %v3405 = vunpack.c.l.b16 %v1904
    %v3406 = vunpack.c.h.b16 %v1904
    %v3407 = vunpack.c.l.b16 %v1905
    %v3408 = vunpack.c.h.b16 %v1905
    %v3409 = vunpack.c.l.b16 %v1906
    %v3410 = vunpack.c.h.b16 %v1906
    %v3411 = vunpack.c.l.b16 %v1907
    %v3412 = vunpack.c.h.b16 %v1907
    %v3413 = vunpack.c.l.b16 %v1908
    %v3414 = vunpack.c.h.b16 %v1908
    %v3415 = vunpack.c.l.b16 %v1909
    %v3416 = vunpack.c.h.b16 %v1909
    %v3417 = vunpack.c.l.b16 %v1910
    %v3418 = vunpack.c.h.b16 %v1910
    %v3419 = vunpack.c.l.b16 %v1911
    %v3420 = vunpack.c.h.b16 %v1911
    %v3421 = vunpack.c.l.b16 %v1912
    %v3422 = vunpack.c.h.b16 %v1912
    %v3423 = vunpack.c.l.b16 %v1913
    %v3424 = vunpack.c.h.b16 %v1913
    %v3425 = vunpack.c.l.b16 %v1914
    %v3426 = vunpack.c.h.b16 %v1914
    %v3427 = vunpack.c.l.b16 %v1915
    %v3428 = vunpack.c.h.b16 %v1915
    %v3429 = vunpack.c.l.b16 %v1916
    %v3430 = vunpack.c.h.b16 %v1916
    %v3431 = vunpack.c.l.b16 %v1917
    %v3432 = vunpack.c.h.b16 %v1917
    %v3433 = vunpack.c.l.b16 %v1918
    %v3434 = vunpack.c.h.b16 %v1918
    %v3435 = vunpack.c.l.b16 %v1919
    %v3436 = vunpack.c.h.b16 %v1919
    %v3437 = vunpack.c.l.b16 %v1920
    %v3438 = vunpack.c.h.b16 %v1920
    %v3439 = vunpack.c.l.b16 %v1921
    %v3440 = vunpack.c.h.b16 %v1921
    %v3441 = vunpack.c.l.b16 %v1922
    %v3442 = vunpack.c.h.b16 %v1922
    %v3443 = vunpack.c.l.b16 %v1923
    %v3444 = vunpack.c.h.b16 %v1923
    %v3445 = vunpack.c.l.b16 %v1924
    %v3446 = vunpack.c.h.b16 %v1924
    %v3447 = vunpack.c.l.b16 %v1925
    %v3448 = vunpack.c.h.b16 %v1925
    %v3449 = vunpack.c.l.b16 %v1926
    %v3450 = vunpack.c.h.b16 %v1926
    %v3451 = vunpack.c.l.b16 %v1927
    %v3452 = vunpack.c.h.b16 %v1927
    %v3453 = vunpack.c.l.b16 %v1928
    %v3454 = vunpack.c.h.b16 %v1928
    %v3455 = vunpack.c.l.b16 %v1929
    %v3456 = vunpack.c.h.b16 %v1929
    %v3457 = vunpack.c.l.b16 %v1930
    %v3458 = vunpack.c.h.b16 %v1930
    %v3459 = vunpack.c.l.b16 %v1931
    %v3460 = vunpack.c.h.b16 %v1931
    %v3461 = vunpack.c.l.b16 %v1932
    %v3462 = vunpack.c.h.b16 %v1932
    %v3463 = vunpack.c.l.b16 %v1933
    %v3464 = vunpack.c.h.b16 %v1933
    %v3465 = vunpack.c.l.b16 %v1934
    %v3466 = vunpack.c.h.b16 %v1934
    %v3467 = vunpack.c.l.b16 %v1935
    %v3468 = vunpack.c.h.b16 %v1935
    %v3469 = vunpack.c.l.b16 %v1936
    %v3470 = vunpack.c.h.b16 %v1936
    %v3471 = vunpack.c.l.b16 %v1937
    %v3472 = vunpack.c.h.b16 %v1937
    %v3473 = vunpack.c.l.b16 %v1938
    %v3474 = vunpack.c.h.b16 %v1938
    %v3475 = vpack.c.b16 %v2967, %v2963
    %v3476 = vpack.c.b16 %v2968, %v2964
    %v3477 = vpack.c.b16 %v2969, %v2965
    %v3478 = vpack.c.b16 %v2970, %v2966
    %v3479 = vpack.c.b16 %v2975, %v2971
    %v3480 = vpack.c.b16 %v2976, %v2972
    %v3481 = vpack.c.b16 %v2977, %v2973
    %v3482 = vpack.c.b16 %v2978, %v2974
    %v3483 = vpack.c.b16 %v2983, %v2979
    %v3484 = vpack.c.b16 %v2984, %v2980
    %v3485 = vpack.c.b16 %v2985, %v2981
    %v3486 = vpack.c.b16 %v2986, %v2982
    %v3487 = vpack.c.b16 %v2991, %v2987
    %v3488 = vpack.c.b16 %v2992, %v2988
    %v3489 = vpack.c.b16 %v2993, %v2989
    %v3490 = vpack.c.b16 %v2994, %v2990
    %v3491 = vpack.c.b16 %v2999, %v2995
    %v3492 = vpack.c.b16 %v3000, %v2996
    %v3493 = vpack.c.b16 %v3001, %v2997
    %v3494 = vpack.c.b16 %v3002, %v2998
    %v3495 = vpack.c.b16 %v3007, %v3003
    %v3496 = vpack.c.b16 %v3008, %v3004
    %v3497 = vpack.c.b16 %v3009, %v3005
    %v3498 = vpack.c.b16 %v3010, %v3006
    %v3499 = vpack.c.b16 %v3015, %v3011
    %v3500 = vpack.c.b16 %v3016, %v3012
    %v3501 = vpack.c.b16 %v3017, %v3013
    %v3502 = vpack.c.b16 %v3018, %v3014
    %v3503 = vpack.c.b16 %v3023, %v3019
    %v3504 = vpack.c.b16 %v3024, %v3020
    %v3505 = vpack.c.b16 %v3025, %v3021
    %v3506 = vpack.c.b16 %v3026, %v3022
    %v3507 = vpack.c.b16 %v3031, %v3027
    %v3508 = vpack.c.b16 %v3032, %v3028
    %v3509 = vpack.c.b16 %v3033, %v3029
    %v3510 = vpack.c.b16 %v3034, %v3030
    %v3511 = vpack.c.b16 %v3039, %v3035
    %v3512 = vpack.c.b16 %v3040, %v3036
    %v3513 = vpack.c.b16 %v3041, %v3037
    %v3514 = vpack.c.b16 %v3042, %v3038
    %v3515 = vpack.c.b16 %v3047, %v3043
    %v3516 = vpack.c.b16 %v3048, %v3044
    %v3517 = vpack.c.b16 %v3049, %v3045
    %v3518 = vpack.c.b16 %v3050, %v3046
    %v3519 = vpack.c.b16 %v3055, %v3051
    %v3520 = vpack.c.b16 %v3056, %v3052
    %v3521 = vpack.c.b16 %v3057, %v3053
    %v3522 = vpack.c.b16 %v3058, %v3054
    %v3523 = vpack.c.b16 %v3063, %v3059
    %v3524 = vpack.c.b16 %v3064, %v3060
    %v3525 = vpack.c.b16 %v3065, %v3061
    %v3526 = vpack.c.b16 %v3066, %v3062
    %v3527 = vpack.c.b16 %v3071, %v3067
    %v3528 = vpack.c.b16 %v3072, %v3068
    %v3529 = vpack.c.b16 %v3073, %v3069
    %v3530 = vpack.c.b16 %v3074, %v3070
    %v3531 = vpack.c.b16 %v3079, %v3075
    %v3532 = vpack.c.b16 %v3080, %v3076
    %v3533 = vpack.c.b16 %v3081, %v3077
    %v3534 = vpack.c.b16 %v3082, %v3078
    %v3535 = vpack.c.b16 %v3087, %v3083
    %v3536 = vpack.c.b16 %v3088, %v3084
    %v3537 = vpack.c.b16 %v3089, %v3085
    %v3538 = vpack.c.b16 %v3090, %v3086
    %v3539 = vpack.c.b16 %v3095, %v3091
    %v3540 = vpack.c.b16 %v3096, %v3092
    %v3541 = vpack.c.b16 %v3097, %v3093
    %v3542 = vpack.c.b16 %v3098, %v3094
    %v3543 = vpack.c.b16 %v3103, %v3099
    %v3544 = vpack.c.b16 %v3104, %v3100
    %v3545 = vpack.c.b16 %v3105, %v3101
    %v3546 = vpack.c.b16 %v3106, %v3102
    %v3547 = vpack.c.b16 %v3111, %v3107
    %v3548 = vpack.c.b16 %v3112, %v3108
    %v3549 = vpack.c.b16 %v3113, %v3109
    %v3550 = vpack.c.b16 %v3114, %v3110
    %v3551 = vpack.c.b16 %v3119, %v3115
    %v3552 = vpack.c.b16 %v3120, %v3116
    %v3553 = vpack.c.b16 %v3121, %v3117
    %v3554 = vpack.c.b16 %v3122, %v3118
    %v3555 = vpack.c.b16 %v3127, %v3123
    %v3556 = vpack.c.b16 %v3128, %v3124
    %v3557 = vpack.c.b16 %v3129, %v3125
    %v3558 = vpack.c.b16 %v3130, %v3126
    %v3559 = vpack.c.b16 %v3135, %v3131
    %v3560 = vpack.c.b16 %v3136, %v3132
    %v3561 = vpack.c.b16 %v3137, %v3133
    %v3562 = vpack.c.b16 %v3138, %v3134
    %v3563 = vpack.c.b16 %v3143, %v3139
    %v3564 = vpack.c.b16 %v3144, %v3140
    %v3565 = vpack.c.b16 %v3145, %v3141
    %v3566 = vpack.c.b16 %v3146, %v3142
    %v3567 = vpack.c.b16 %v3151, %v3147
    %v3568 = vpack.c.b16 %v3152, %v3148
    %v3569 = vpack.c.b16 %v3153, %v3149
    %v3570 = vpack.c.b16 %v3154, %v3150
    %v3571 = vpack.c.b16 %v3159, %v3155
    %v3572 = vpack.c.b16 %v3160, %v3156
    %v3573 = vpack.c.b16 %v3161, %v3157
    %v3574 = vpack.c.b16 %v3162, %v3158
    %v3575 = vpack.c.b16 %v3167, %v3163
    %v3576 = vpack.c.b16 %v3168, %v3164
    %v3577 = vpack.c.b16 %v3169, %v3165
    %v3578 = vpack.c.b16 %v3170, %v3166
    %v3579 = vpack.c.b16 %v3175, %v3171
    %v3580 = vpack.c.b16 %v3176, %v3172
    %v3581 = vpack.c.b16 %v3177, %v3173
    %v3582 = vpack.c.b16 %v3178, %v3174
    %v3583 = vpack.c.b16 %v3183, %v3179
    %v3584 = vpack.c.b16 %v3184, %v3180
    %v3585 = vpack.c.b16 %v3185, %v3181
    %v3586 = vpack.c.b16 %v3186, %v3182
    %v3587 = vpack.c.b16 %v3191, %v3187
    %v3588 = vpack.c.b16 %v3192, %v3188
    %v3589 = vpack.c.b16 %v3193, %v3189
    %v3590 = vpack.c.b16 %v3194, %v3190
    %v3591 = vpack.c.b16 %v3199, %v3195
    %v3592 = vpack.c.b16 %v3200, %v3196
    %v3593 = vpack.c.b16 %v3201, %v3197
    %v3594 = vpack.c.b16 %v3202, %v3198
    %v3595 = vpack.c.b16 %v3207, %v3203
    %v3596 = vpack.c.b16 %v3208, %v3204
    %v3597 = vpack.c.b16 %v3209, %v3205
    %v3598 = vpack.c.b16 %v3210, %v3206
    %v3599 = vpack.c.b16 %v3215, %v3211
    %v3600 = vpack.c.b16 %v3216, %v3212
    %v3601 = vpack.c.b16 %v3217, %v3213
    %v3602 = vpack.c.b16 %v3218, %v3214
    %v3603 = vpack.c.b16 %v3223, %v3219
    %v3604 = vpack.c.b16 %v3224, %v3220
    %v3605 = vpack.c.b16 %v3225, %v3221
    %v3606 = vpack.c.b16 %v3226, %v3222
    %v3607 = vpack.c.b16 %v3231, %v3227
    %v3608 = vpack.c.b16 %v3232, %v3228
    %v3609 = vpack.c.b16 %v3233, %v3229
    %v3610 = vpack.c.b16 %v3234, %v3230
    %v3611 = vpack.c.b16 %v3239, %v3235
    %v3612 = vpack.c.b16 %v3240, %v3236
    %v3613 = vpack.c.b16 %v3241, %v3237
    %v3614 = vpack.c.b16 %v3242, %v3238
    %v3615 = vpack.c.b16 %v3247, %v3243
    %v3616 = vpack.c.b16 %v3248, %v3244
    %v3617 = vpack.c.b16 %v3249, %v3245
    %v3618 = vpack.c.b16 %v3250, %v3246
    %v3619 = vpack.c.b16 %v3255, %v3251
    %v3620 = vpack.c.b16 %v3256, %v3252
    %v3621 = vpack.c.b16 %v3257, %v3253
    %v3622 = vpack.c.b16 %v3258, %v3254
    %v3623 = vpack.c.b16 %v3263, %v3259
    %v3624 = vpack.c.b16 %v3264, %v3260
    %v3625 = vpack.c.b16 %v3265, %v3261
    %v3626 = vpack.c.b16 %v3266, %v3262
    %v3627 = vpack.c.b16 %v3271, %v3267
    %v3628 = vpack.c.b16 %v3272, %v3268
    %v3629 = vpack.c.b16 %v3273, %v3269
    %v3630 = vpack.c.b16 %v3274, %v3270
    %v3631 = vpack.c.b16 %v3279, %v3275
    %v3632 = vpack.c.b16 %v3280, %v3276
    %v3633 = vpack.c.b16 %v3281, %v3277
    %v3634 = vpack.c.b16 %v3282, %v3278
    %v3635 = vpack.c.b16 %v3287, %v3283
    %v3636 = vpack.c.b16 %v3288, %v3284
    %v3637 = vpack.c.b16 %v3289, %v3285
    %v3638 = vpack.c.b16 %v3290, %v3286
    %v3639 = vpack.c.b16 %v3295, %v3291
    %v3640 = vpack.c.b16 %v3296, %v3292
    %v3641 = vpack.c.b16 %v3297, %v3293
    %v3642 = vpack.c.b16 %v3298, %v3294
    %v3643 = vpack.c.b16 %v3303, %v3299
    %v3644 = vpack.c.b16 %v3304, %v3300
    %v3645 = vpack.c.b16 %v3305, %v3301
    %v3646 = vpack.c.b16 %v3306, %v3302
    %v3647 = vpack.c.b16 %v3311, %v3307
    %v3648 = vpack.c.b16 %v3312, %v3308
    %v3649 = vpack.c.b16 %v3313, %v3309
    %v3650 = vpack.c.b16 %v3314, %v3310
    %v3651 = vpack.c.b16 %v3319, %v3315
    %v3652 = vpack.c.b16 %v3320, %v3316
    %v3653 = vpack.c.b16 %v3321, %v3317
    %v3654 = vpack.c.b16 %v3322, %v3318
    %v3655 = vpack.c.b16 %v3327, %v3323
    %v3656 = vpack.c.b16 %v3328, %v3324
    %v3657 = vpack.c.b16 %v3329, %v3325
    %v3658 = vpack.c.b16 %v3330, %v3326
    %v3659 = vpack.c.b16 %v3335, %v3331
    %v3660 = vpack.c.b16 %v3336, %v3332
    %v3661 = vpack.c.b16 %v3337, %v3333
    %v3662 = vpack.c.b16 %v3338, %v3334
    %v3663 = vpack.c.b16 %v3343, %v3339
    %v3664 = vpack.c.b16 %v3344, %v3340
    %v3665 = vpack.c.b16 %v3345, %v3341
    %v3666 = vpack.c.b16 %v3346, %v3342
    %v3667 = vpack.c.b16 %v3351, %v3347
    %v3668 = vpack.c.b16 %v3352, %v3348
    %v3669 = vpack.c.b16 %v3353, %v3349
    %v3670 = vpack.c.b16 %v3354, %v3350
    %v3671 = vpack.c.b16 %v3359, %v3355
    %v3672 = vpack.c.b16 %v3360, %v3356
    %v3673 = vpack.c.b16 %v3361, %v3357
    %v3674 = vpack.c.b16 %v3362, %v3358
    %v3675 = vpack.c.b16 %v3367, %v3363
    %v3676 = vpack.c.b16 %v3368, %v3364
    %v3677 = vpack.c.b16 %v3369, %v3365
    %v3678 = vpack.c.b16 %v3370, %v3366
    %v3679 = vpack.c.b16 %v3375, %v3371
    %v3680 = vpack.c.b16 %v3376, %v3372
    %v3681 = vpack.c.b16 %v3377, %v3373
    %v3682 = vpack.c.b16 %v3378, %v3374
    %v3683 = vpack.c.b16 %v3383, %v3379
    %v3684 = vpack.c.b16 %v3384, %v3380
    %v3685 = vpack.c.b16 %v3385, %v3381
    %v3686 = vpack.c.b16 %v3386, %v3382
    %v3687 = vpack.c.b16 %v3391, %v3387
    %v3688 = vpack.c.b16 %v3392, %v3388
    %v3689 = vpack.c.b16 %v3393, %v3389
    %v3690 = vpack.c.b16 %v3394, %v3390
    %v3691 = vpack.c.b16 %v3399, %v3395
    %v3692 = vpack.c.b16 %v3400, %v3396
    %v3693 = vpack.c.b16 %v3401, %v3397
    %v3694 = vpack.c.b16 %v3402, %v3398
    %v3695 = vpack.c.b16 %v3407, %v3403
    %v3696 = vpack.c.b16 %v3408, %v3404
    %v3697 = vpack.c.b16 %v3409, %v3405
    %v3698 = vpack.c.b16 %v3410, %v3406
    %v3699 = vpack.c.b16 %v3415, %v3411
    %v3700 = vpack.c.b16 %v3416, %v3412
    %v3701 = vpack.c.b16 %v3417, %v3413
    %v3702 = vpack.c.b16 %v3418, %v3414
    %v3703 = vpack.c.b16 %v3423, %v3419
    %v3704 = vpack.c.b16 %v3424, %v3420
    %v3705 = vpack.c.b16 %v3425, %v3421
    %v3706 = vpack.c.b16 %v3426, %v3422
    %v3707 = vpack.c.b16 %v3431, %v3427
    %v3708 = vpack.c.b16 %v3432, %v3428
    %v3709 = vpack.c.b16 %v3433, %v3429
    %v3710 = vpack.c.b16 %v3434, %v3430
    %v3711 = vpack.c.b16 %v3439, %v3435
    %v3712 = vpack.c.b16 %v3440, %v3436
    %v3713 = vpack.c.b16 %v3441, %v3437
    %v3714 = vpack.c.b16 %v3442, %v3438
    %v3715 = vpack.c.b16 %v3447, %v3443
    %v3716 = vpack.c.b16 %v3448, %v3444
    %v3717 = vpack.c.b16 %v3449, %v3445
    %v3718 = vpack.c.b16 %v3450, %v3446
    %v3719 = vpack.c.b16 %v3455, %v3451
    %v3720 = vpack.c.b16 %v3456, %v3452
    %v3721 = vpack.c.b16 %v3457, %v3453
    %v3722 = vpack.c.b16 %v3458, %v3454
    %v3723 = vpack.c.b16 %v3463, %v3459
    %v3724 = vpack.c.b16 %v3464, %v3460
    %v3725 = vpack.c.b16 %v3465, %v3461
    %v3726 = vpack.c.b16 %v3466, %v3462
    %v3727 = vpack.c.b16 %v3471, %v3467
    %v3728 = vpack.c.b16 %v3472, %v3468
    %v3729 = vpack.c.b16 %v3473, %v3469
    %v3730 = vpack.c.b16 %v3474, %v3470
    %3987 = vmatpush.bf16.msra.mxu0 %v1633
    %3988 = vmatpush.bf16.msra.mxu0 %v1631
    %3989 = vmatpush.bf16.msra.mxu0 %v1629
    %3990 = vmatpush.bf16.msra.mxu0 %v1627
    %3991 = vmatpush.bf16.msra.mxu0 %v1625
    %3992 = vmatpush.bf16.msra.mxu0 %v1623
    %3993 = vmatpush.bf16.msra.mxu0 %v1621
    %3994 = vmatpush.bf16.msra.mxu0 %v1619
    %3995 = vmatmul.bf16.gmra.mxu0 %v3475
    %v3996 = vpop.f32.mrf.mxu0
    %v3997 = vadd.f32 %v2070, %v3996
    %v3998 = vpop.f32.mrf.mxu0
    %v3999 = vadd.f32 %v2075, %v3998
    %4000 = vmatmul.bf16.gmra.mxu0 %v3479
    %v4001 = vpop.f32.mrf.mxu0
    %v4002 = vadd.f32 %v2080, %v4001
    %v4003 = vpop.f32.mrf.mxu0
    %v4004 = vadd.f32 %v2085, %v4003
    %4005 = vmatmul.bf16.gmra.mxu0 %v3483
    %v4006 = vpop.f32.mrf.mxu0
    %v4007 = vadd.f32 %v2090, %v4006
    %v4008 = vpop.f32.mrf.mxu0
    %v4009 = vadd.f32 %v2095, %v4008
    %4010 = vmatmul.bf16.gmra.mxu0 %v3487
    %v4011 = vpop.f32.mrf.mxu0
    %v4012 = vadd.f32 %v2100, %v4011
    %v4013 = vpop.f32.mrf.mxu0
    %v4014 = vadd.f32 %v2105, %v4013
    %4015 = vmatmul.bf16.gmra.mxu0 %v3491
    %v4016 = vpop.f32.mrf.mxu0
    %v4017 = vadd.f32 %v2110, %v4016
    %v4018 = vpop.f32.mrf.mxu0
    %v4019 = vadd.f32 %v2115, %v4018
    %4020 = vmatmul.bf16.gmra.mxu0 %v3495
    %v4021 = vpop.f32.mrf.mxu0
    %v4022 = vadd.f32 %v2120, %v4021
    %v4023 = vpop.f32.mrf.mxu0
    %v4024 = vadd.f32 %v2125, %v4023
    %4025 = vmatmul.bf16.gmra.mxu0 %v3499
    %v4026 = vpop.f32.mrf.mxu0
    %v4027 = vadd.f32 %v2130, %v4026
    %v4028 = vpop.f32.mrf.mxu0
    %v4029 = vadd.f32 %v2135, %v4028
    %4030 = vmatmul.bf16.gmra.mxu0 %v3503
    %v4031 = vpop.f32.mrf.mxu0
    %v4032 = vadd.f32 %v2140, %v4031
    %v4033 = vpop.f32.mrf.mxu0
    %v4034 = vadd.f32 %v2145, %v4033
    %4035 = vmatmul.bf16.gmra.mxu0 %v3507
    %v4036 = vpop.f32.mrf.mxu0
    %v4037 = vadd.f32 %v2150, %v4036
    %v4038 = vpop.f32.mrf.mxu0
    %v4039 = vadd.f32 %v2155, %v4038
    %4040 = vmatmul.bf16.gmra.mxu0 %v3511
    %v4041 = vpop.f32.mrf.mxu0
    %v4042 = vadd.f32 %v2160, %v4041
    %v4043 = vpop.f32.mrf.mxu0
    %v4044 = vadd.f32 %v2165, %v4043
    %4045 = vmatmul.bf16.gmra.mxu0 %v3515
    %v4046 = vpop.f32.mrf.mxu0
    %v4047 = vadd.f32 %v2170, %v4046
    %v4048 = vpop.f32.mrf.mxu0
    %v4049 = vadd.f32 %v2175, %v4048
    %4050 = vmatmul.bf16.gmra.mxu0 %v3519
    %v4051 = vpop.f32.mrf.mxu0
    %v4052 = vadd.f32 %v2180, %v4051
    %v4053 = vpop.f32.mrf.mxu0
    %v4054 = vadd.f32 %v2185, %v4053
    %4055 = vmatmul.bf16.gmra.mxu0 %v3523
    %v4056 = vpop.f32.mrf.mxu0
    %v4057 = vadd.f32 %v2190, %v4056
    %v4058 = vpop.f32.mrf.mxu0
    %v4059 = vadd.f32 %v2195, %v4058
    %4060 = vmatmul.bf16.gmra.mxu0 %v3527
    %v4061 = vpop.f32.mrf.mxu0
    %v4062 = vadd.f32 %v2200, %v4061
    %v4063 = vpop.f32.mrf.mxu0
    %v4064 = vadd.f32 %v2205, %v4063
    %4065 = vmatmul.bf16.gmra.mxu0 %v3531
    %v4066 = vpop.f32.mrf.mxu0
    %v4067 = vadd.f32 %v2210, %v4066
    %v4068 = vpop.f32.mrf.mxu0
    %v4069 = vadd.f32 %v2215, %v4068
    %4070 = vmatmul.bf16.gmra.mxu0 %v3535
    %v4071 = vpop.f32.mrf.mxu0
    %v4072 = vadd.f32 %v2220, %v4071
    %v4073 = vpop.f32.mrf.mxu0
    %v4074 = vadd.f32 %v2225, %v4073
    %4075 = vmatmul.bf16.gmra.mxu0 %v3539
    %v4076 = vpop.f32.mrf.mxu0
    %v4077 = vadd.f32 %v2230, %v4076
    %v4078 = vpop.f32.mrf.mxu0
    %v4079 = vadd.f32 %v2235, %v4078
    %4080 = vmatmul.bf16.gmra.mxu0 %v3543
    %v4081 = vpop.f32.mrf.mxu0
    %v4082 = vadd.f32 %v2240, %v4081
    %v4083 = vpop.f32.mrf.mxu0
    %v4084 = vadd.f32 %v2245, %v4083
    %4085 = vmatmul.bf16.gmra.mxu0 %v3547
    %v4086 = vpop.f32.mrf.mxu0
    %v4087 = vadd.f32 %v2250, %v4086
    %v4088 = vpop.f32.mrf.mxu0
    %v4089 = vadd.f32 %v2255, %v4088
    %4090 = vmatmul.bf16.gmra.mxu0 %v3551
    %v4091 = vpop.f32.mrf.mxu0
    %v4092 = vadd.f32 %v2260, %v4091
    %v4093 = vpop.f32.mrf.mxu0
    %v4094 = vadd.f32 %v2265, %v4093
    %4095 = vmatmul.bf16.gmra.mxu0 %v3555
    %v4096 = vpop.f32.mrf.mxu0
    %v4097 = vadd.f32 %v2270, %v4096
    %v4098 = vpop.f32.mrf.mxu0
    %v4099 = vadd.f32 %v2275, %v4098
    %4100 = vmatmul.bf16.gmra.mxu0 %v3559
    %v4101 = vpop.f32.mrf.mxu0
    %v4102 = vadd.f32 %v2280, %v4101
    %v4103 = vpop.f32.mrf.mxu0
    %v4104 = vadd.f32 %v2285, %v4103
    %4105 = vmatmul.bf16.gmra.mxu0 %v3563
    %v4106 = vpop.f32.mrf.mxu0
    %v4107 = vadd.f32 %v2290, %v4106
    %v4108 = vpop.f32.mrf.mxu0
    %v4109 = vadd.f32 %v2295, %v4108
    %4110 = vmatmul.bf16.gmra.mxu0 %v3567
    %v4111 = vpop.f32.mrf.mxu0
    %v4112 = vadd.f32 %v2300, %v4111
    %v4113 = vpop.f32.mrf.mxu0
    %v4114 = vadd.f32 %v2305, %v4113
    %4115 = vmatmul.bf16.gmra.mxu0 %v3571
    %v4116 = vpop.f32.mrf.mxu0
    %v4117 = vadd.f32 %v2310, %v4116
    %v4118 = vpop.f32.mrf.mxu0
    %v4119 = vadd.f32 %v2315, %v4118
    %4120 = vmatmul.bf16.gmra.mxu0 %v3575
    %v4121 = vpop.f32.mrf.mxu0
    %v4122 = vadd.f32 %v2320, %v4121
    %v4123 = vpop.f32.mrf.mxu0
    %v4124 = vadd.f32 %v2325, %v4123
    %4125 = vmatmul.bf16.gmra.mxu0 %v3579
    %v4126 = vpop.f32.mrf.mxu0
    %v4127 = vadd.f32 %v2330, %v4126
    %v4128 = vpop.f32.mrf.mxu0
    %v4129 = vadd.f32 %v2335, %v4128
    %4130 = vmatmul.bf16.gmra.mxu0 %v3583
    %v4131 = vpop.f32.mrf.mxu0
    %v4132 = vadd.f32 %v2340, %v4131
    %v4133 = vpop.f32.mrf.mxu0
    %v4134 = vadd.f32 %v2345, %v4133
    %4135 = vmatmul.bf16.gmra.mxu0 %v3587
    %v4136 = vpop.f32.mrf.mxu0
    %v4137 = vadd.f32 %v2350, %v4136
    %v4138 = vpop.f32.mrf.mxu0
    %v4139 = vadd.f32 %v2355, %v4138
    %4140 = vmatmul.bf16.gmra.mxu0 %v3591
    %v4141 = vpop.f32.mrf.mxu0
    %v4142 = vadd.f32 %v2360, %v4141
    %v4143 = vpop.f32.mrf.mxu0
    %v4144 = vadd.f32 %v2365, %v4143
    %4145 = vmatmul.bf16.gmra.mxu0 %v3595
    %v4146 = vpop.f32.mrf.mxu0
    %v4147 = vadd.f32 %v2370, %v4146
    %v4148 = vpop.f32.mrf.mxu0
    %v4149 = vadd.f32 %v2375, %v4148
    %4150 = vmatmul.bf16.gmra.mxu0 %v3599
    %v4151 = vpop.f32.mrf.mxu0
    %v4152 = vadd.f32 %v2380, %v4151
    %v4153 = vpop.f32.mrf.mxu0
    %v4154 = vadd.f32 %v2385, %v4153
    %4155 = vmatmul.bf16.gmra.mxu0 %v3603
    %v4156 = vpop.f32.mrf.mxu0
    %v4157 = vadd.f32 %v2390, %v4156
    %v4158 = vpop.f32.mrf.mxu0
    %v4159 = vadd.f32 %v2395, %v4158
    %4160 = vmatmul.bf16.gmra.mxu0 %v3607
    %v4161 = vpop.f32.mrf.mxu0
    %v4162 = vadd.f32 %v2400, %v4161
    %v4163 = vpop.f32.mrf.mxu0
    %v4164 = vadd.f32 %v2405, %v4163
    %4165 = vmatmul.bf16.gmra.mxu0 %v3611
    %v4166 = vpop.f32.mrf.mxu0
    %v4167 = vadd.f32 %v2410, %v4166
    %v4168 = vpop.f32.mrf.mxu0
    %v4169 = vadd.f32 %v2415, %v4168
    %4170 = vmatmul.bf16.gmra.mxu0 %v3615
    %v4171 = vpop.f32.mrf.mxu0
    %v4172 = vadd.f32 %v2420, %v4171
    %v4173 = vpop.f32.mrf.mxu0
    %v4174 = vadd.f32 %v2425, %v4173
    %4175 = vmatmul.bf16.gmra.mxu0 %v3619
    %v4176 = vpop.f32.mrf.mxu0
    %v4177 = vadd.f32 %v2430, %v4176
    %v4178 = vpop.f32.mrf.mxu0
    %v4179 = vadd.f32 %v2435, %v4178
    %4180 = vmatmul.bf16.gmra.mxu0 %v3623
    %v4181 = vpop.f32.mrf.mxu0
    %v4182 = vadd.f32 %v2440, %v4181
    %v4183 = vpop.f32.mrf.mxu0
    %v4184 = vadd.f32 %v2445, %v4183
    %4185 = vmatmul.bf16.gmra.mxu0 %v3627
    %v4186 = vpop.f32.mrf.mxu0
    %v4187 = vadd.f32 %v2450, %v4186
    %v4188 = vpop.f32.mrf.mxu0
    %v4189 = vadd.f32 %v2455, %v4188
    %4190 = vmatmul.bf16.gmra.mxu0 %v3631
    %v4191 = vpop.f32.mrf.mxu0
    %v4192 = vadd.f32 %v2460, %v4191
    %v4193 = vpop.f32.mrf.mxu0
    %v4194 = vadd.f32 %v2465, %v4193
    %4195 = vmatmul.bf16.gmra.mxu0 %v3635
    %v4196 = vpop.f32.mrf.mxu0
    %v4197 = vadd.f32 %v2470, %v4196
    %v4198 = vpop.f32.mrf.mxu0
    %v4199 = vadd.f32 %v2475, %v4198
    %4200 = vmatmul.bf16.gmra.mxu0 %v3639
    %v4201 = vpop.f32.mrf.mxu0
    %v4202 = vadd.f32 %v2480, %v4201
    %v4203 = vpop.f32.mrf.mxu0
    %v4204 = vadd.f32 %v2485, %v4203
    %4205 = vmatmul.bf16.gmra.mxu0 %v3643
    %v4206 = vpop.f32.mrf.mxu0
    %v4207 = vadd.f32 %v2490, %v4206
    %v4208 = vpop.f32.mrf.mxu0
    %v4209 = vadd.f32 %v2495, %v4208
    %4210 = vmatmul.bf16.gmra.mxu0 %v3647
    %v4211 = vpop.f32.mrf.mxu0
    %v4212 = vadd.f32 %v2500, %v4211
    %v4213 = vpop.f32.mrf.mxu0
    %v4214 = vadd.f32 %v2505, %v4213
    %4215 = vmatmul.bf16.gmra.mxu0 %v3651
    %v4216 = vpop.f32.mrf.mxu0
    %v4217 = vadd.f32 %v2510, %v4216
    %v4218 = vpop.f32.mrf.mxu0
    %v4219 = vadd.f32 %v2515, %v4218
    %4220 = vmatmul.bf16.gmra.mxu0 %v3655
    %v4221 = vpop.f32.mrf.mxu0
    %v4222 = vadd.f32 %v2520, %v4221
    %v4223 = vpop.f32.mrf.mxu0
    %v4224 = vadd.f32 %v2525, %v4223
    %4225 = vmatmul.bf16.gmra.mxu0 %v3659
    %v4226 = vpop.f32.mrf.mxu0
    %v4227 = vadd.f32 %v2530, %v4226
    %v4228 = vpop.f32.mrf.mxu0
    %v4229 = vadd.f32 %v2535, %v4228
    %4230 = vmatmul.bf16.gmra.mxu0 %v3663
    %v4231 = vpop.f32.mrf.mxu0
    %v4232 = vadd.f32 %v2540, %v4231
    %v4233 = vpop.f32.mrf.mxu0
    %v4234 = vadd.f32 %v2545, %v4233
    %4235 = vmatmul.bf16.gmra.mxu0 %v3667
    %v4236 = vpop.f32.mrf.mxu0
    %v4237 = vadd.f32 %v2550, %v4236
    %v4238 = vpop.f32.mrf.mxu0
    %v4239 = vadd.f32 %v2555, %v4238
    %4240 = vmatmul.bf16.gmra.mxu0 %v3671
    %v4241 = vpop.f32.mrf.mxu0
    %v4242 = vadd.f32 %v2560, %v4241
    %v4243 = vpop.f32.mrf.mxu0
    %v4244 = vadd.f32 %v2565, %v4243
    %4245 = vmatmul.bf16.gmra.mxu0 %v3675
    %v4246 = vpop.f32.mrf.mxu0
    %v4247 = vadd.f32 %v2570, %v4246
    %v4248 = vpop.f32.mrf.mxu0
    %v4249 = vadd.f32 %v2575, %v4248
    %4250 = vmatmul.bf16.gmra.mxu0 %v3679
    %v4251 = vpop.f32.mrf.mxu0
    %v4252 = vadd.f32 %v2580, %v4251
    %v4253 = vpop.f32.mrf.mxu0
    %v4254 = vadd.f32 %v2585, %v4253
    %4255 = vmatmul.bf16.gmra.mxu0 %v3683
    %v4256 = vpop.f32.mrf.mxu0
    %v4257 = vadd.f32 %v2590, %v4256
    %v4258 = vpop.f32.mrf.mxu0
    %v4259 = vadd.f32 %v2595, %v4258
    %4260 = vmatmul.bf16.gmra.mxu0 %v3687
    %v4261 = vpop.f32.mrf.mxu0
    %v4262 = vadd.f32 %v2600, %v4261
    %v4263 = vpop.f32.mrf.mxu0
    %v4264 = vadd.f32 %v2605, %v4263
    %4265 = vmatmul.bf16.gmra.mxu0 %v3691
    %v4266 = vpop.f32.mrf.mxu0
    %v4267 = vadd.f32 %v2610, %v4266
    %v4268 = vpop.f32.mrf.mxu0
    %v4269 = vadd.f32 %v2615, %v4268
    %4270 = vmatmul.bf16.gmra.mxu0 %v3695
    %v4271 = vpop.f32.mrf.mxu0
    %v4272 = vadd.f32 %v2620, %v4271
    %v4273 = vpop.f32.mrf.mxu0
    %v4274 = vadd.f32 %v2625, %v4273
    %4275 = vmatmul.bf16.gmra.mxu0 %v3699
    %v4276 = vpop.f32.mrf.mxu0
    %v4277 = vadd.f32 %v2630, %v4276
    %v4278 = vpop.f32.mrf.mxu0
    %v4279 = vadd.f32 %v2635, %v4278
    %4280 = vmatmul.bf16.gmra.mxu0 %v3703
    %v4281 = vpop.f32.mrf.mxu0
    %v4282 = vadd.f32 %v2640, %v4281
    %v4283 = vpop.f32.mrf.mxu0
    %v4284 = vadd.f32 %v2645, %v4283
    %4285 = vmatmul.bf16.gmra.mxu0 %v3707
    %v4286 = vpop.f32.mrf.mxu0
    %v4287 = vadd.f32 %v2650, %v4286
    %v4288 = vpop.f32.mrf.mxu0
    %v4289 = vadd.f32 %v2655, %v4288
    %4290 = vmatmul.bf16.gmra.mxu0 %v3711
    %v4291 = vpop.f32.mrf.mxu0
    %v4292 = vadd.f32 %v2660, %v4291
    %v4293 = vpop.f32.mrf.mxu0
    %v4294 = vadd.f32 %v2665, %v4293
    %4295 = vmatmul.bf16.gmra.mxu0 %v3715
    %v4296 = vpop.f32.mrf.mxu0
    %v4297 = vadd.f32 %v2670, %v4296
    %v4298 = vpop.f32.mrf.mxu0
    %v4299 = vadd.f32 %v2675, %v4298
    %4300 = vmatmul.bf16.gmra.mxu0 %v3719
    %v4301 = vpop.f32.mrf.mxu0
    %v4302 = vadd.f32 %v2680, %v4301
    %v4303 = vpop.f32.mrf.mxu0
    %v4304 = vadd.f32 %v2685, %v4303
    %4305 = vmatmul.bf16.gmra.mxu0 %v3723
    %v4306 = vpop.f32.mrf.mxu0
    %v4307 = vadd.f32 %v2690, %v4306
    %v4308 = vpop.f32.mrf.mxu0
    %v4309 = vadd.f32 %v2695, %v4308
    %4310 = vmatmul.bf16.gmra.mxu0 %v3727
    %v4311 = vpop.f32.mrf.mxu0
    %v4312 = vadd.f32 %v2700, %v4311
    %v4313 = vpop.f32.mrf.mxu0
    %v4314 = vadd.f32 %v2705, %v4313
    %4315 = vdwg.mxu0
    %4316 = vmatpush.bf16.msra.mxu0 %v1649
    %4317 = vmatpush.bf16.msra.mxu0 %v1647
    %4318 = vmatpush.bf16.msra.mxu0 %v1645
    %4319 = vmatpush.bf16.msra.mxu0 %v1643
    %4320 = vmatpush.bf16.msra.mxu0 %v1641
    %4321 = vmatpush.bf16.msra.mxu0 %v1639
    %4322 = vmatpush.bf16.msra.mxu0 %v1637
    %4323 = vmatpush.bf16.msra.mxu0 %v1635
    %4324 = vmatmul.bf16.gmra.mxu0 %v3476
    %v4325 = vpop.f32.mrf.mxu0
    %v4326 = vadd.f32 %v3997, %v4325
    %v4327 = vpop.f32.mrf.mxu0
    %v4328 = vadd.f32 %v3999, %v4327
    %4329 = vmatmul.bf16.gmra.mxu0 %v3480
    %v4330 = vpop.f32.mrf.mxu0
    %v4331 = vadd.f32 %v4002, %v4330
    %v4332 = vpop.f32.mrf.mxu0
    %v4333 = vadd.f32 %v4004, %v4332
    %4334 = vmatmul.bf16.gmra.mxu0 %v3484
    %v4335 = vpop.f32.mrf.mxu0
    %v4336 = vadd.f32 %v4007, %v4335
    %v4337 = vpop.f32.mrf.mxu0
    %v4338 = vadd.f32 %v4009, %v4337
    %4339 = vmatmul.bf16.gmra.mxu0 %v3488
    %v4340 = vpop.f32.mrf.mxu0
    %v4341 = vadd.f32 %v4012, %v4340
    %v4342 = vpop.f32.mrf.mxu0
    %v4343 = vadd.f32 %v4014, %v4342
    %4344 = vmatmul.bf16.gmra.mxu0 %v3492
    %v4345 = vpop.f32.mrf.mxu0
    %v4346 = vadd.f32 %v4017, %v4345
    %v4347 = vpop.f32.mrf.mxu0
    %v4348 = vadd.f32 %v4019, %v4347
    %4349 = vmatmul.bf16.gmra.mxu0 %v3496
    %v4350 = vpop.f32.mrf.mxu0
    %v4351 = vadd.f32 %v4022, %v4350
    %v4352 = vpop.f32.mrf.mxu0
    %v4353 = vadd.f32 %v4024, %v4352
    %4354 = vmatmul.bf16.gmra.mxu0 %v3500
    %v4355 = vpop.f32.mrf.mxu0
    %v4356 = vadd.f32 %v4027, %v4355
    %v4357 = vpop.f32.mrf.mxu0
    %v4358 = vadd.f32 %v4029, %v4357
    %4359 = vmatmul.bf16.gmra.mxu0 %v3504
    %v4360 = vpop.f32.mrf.mxu0
    %v4361 = vadd.f32 %v4032, %v4360
    %v4362 = vpop.f32.mrf.mxu0
    %v4363 = vadd.f32 %v4034, %v4362
    %4364 = vmatmul.bf16.gmra.mxu0 %v3508
    %v4365 = vpop.f32.mrf.mxu0
    %v4366 = vadd.f32 %v4037, %v4365
    %v4367 = vpop.f32.mrf.mxu0
    %v4368 = vadd.f32 %v4039, %v4367
    %4369 = vmatmul.bf16.gmra.mxu0 %v3512
    %v4370 = vpop.f32.mrf.mxu0
    %v4371 = vadd.f32 %v4042, %v4370
    %v4372 = vpop.f32.mrf.mxu0
    %v4373 = vadd.f32 %v4044, %v4372
    %4374 = vmatmul.bf16.gmra.mxu0 %v3516
    %v4375 = vpop.f32.mrf.mxu0
    %v4376 = vadd.f32 %v4047, %v4375
    %v4377 = vpop.f32.mrf.mxu0
    %v4378 = vadd.f32 %v4049, %v4377
    %4379 = vmatmul.bf16.gmra.mxu0 %v3520
    %v4380 = vpop.f32.mrf.mxu0
    %v4381 = vadd.f32 %v4052, %v4380
    %v4382 = vpop.f32.mrf.mxu0
    %v4383 = vadd.f32 %v4054, %v4382
    %4384 = vmatmul.bf16.gmra.mxu0 %v3524
    %v4385 = vpop.f32.mrf.mxu0
    %v4386 = vadd.f32 %v4057, %v4385
    %v4387 = vpop.f32.mrf.mxu0
    %v4388 = vadd.f32 %v4059, %v4387
    %4389 = vmatmul.bf16.gmra.mxu0 %v3528
    %v4390 = vpop.f32.mrf.mxu0
    %v4391 = vadd.f32 %v4062, %v4390
    %v4392 = vpop.f32.mrf.mxu0
    %v4393 = vadd.f32 %v4064, %v4392
    %4394 = vmatmul.bf16.gmra.mxu0 %v3532
    %v4395 = vpop.f32.mrf.mxu0
    %v4396 = vadd.f32 %v4067, %v4395
    %v4397 = vpop.f32.mrf.mxu0
    %v4398 = vadd.f32 %v4069, %v4397
    %4399 = vmatmul.bf16.gmra.mxu0 %v3536
    %v4400 = vpop.f32.mrf.mxu0
    %v4401 = vadd.f32 %v4072, %v4400
    %v4402 = vpop.f32.mrf.mxu0
    %v4403 = vadd.f32 %v4074, %v4402
    %4404 = vmatmul.bf16.gmra.mxu0 %v3540
    %v4405 = vpop.f32.mrf.mxu0
    %v4406 = vadd.f32 %v4077, %v4405
    %v4407 = vpop.f32.mrf.mxu0
    %v4408 = vadd.f32 %v4079, %v4407
    %4409 = vmatmul.bf16.gmra.mxu0 %v3544
    %v4410 = vpop.f32.mrf.mxu0
    %v4411 = vadd.f32 %v4082, %v4410
    %v4412 = vpop.f32.mrf.mxu0
    %v4413 = vadd.f32 %v4084, %v4412
    %4414 = vmatmul.bf16.gmra.mxu0 %v3548
    %v4415 = vpop.f32.mrf.mxu0
    %v4416 = vadd.f32 %v4087, %v4415
    %v4417 = vpop.f32.mrf.mxu0
    %v4418 = vadd.f32 %v4089, %v4417
    %4419 = vmatmul.bf16.gmra.mxu0 %v3552
    %v4420 = vpop.f32.mrf.mxu0
    %v4421 = vadd.f32 %v4092, %v4420
    %v4422 = vpop.f32.mrf.mxu0
    %v4423 = vadd.f32 %v4094, %v4422
    %4424 = vmatmul.bf16.gmra.mxu0 %v3556
    %v4425 = vpop.f32.mrf.mxu0
    %v4426 = vadd.f32 %v4097, %v4425
    %v4427 = vpop.f32.mrf.mxu0
    %v4428 = vadd.f32 %v4099, %v4427
    %4429 = vmatmul.bf16.gmra.mxu0 %v3560
    %v4430 = vpop.f32.mrf.mxu0
    %v4431 = vadd.f32 %v4102, %v4430
    %v4432 = vpop.f32.mrf.mxu0
    %v4433 = vadd.f32 %v4104, %v4432
    %4434 = vmatmul.bf16.gmra.mxu0 %v3564
    %v4435 = vpop.f32.mrf.mxu0
    %v4436 = vadd.f32 %v4107, %v4435
    %v4437 = vpop.f32.mrf.mxu0
    %v4438 = vadd.f32 %v4109, %v4437
    %4439 = vmatmul.bf16.gmra.mxu0 %v3568
    %v4440 = vpop.f32.mrf.mxu0
    %v4441 = vadd.f32 %v4112, %v4440
    %v4442 = vpop.f32.mrf.mxu0
    %v4443 = vadd.f32 %v4114, %v4442
    %4444 = vmatmul.bf16.gmra.mxu0 %v3572
    %v4445 = vpop.f32.mrf.mxu0
    %v4446 = vadd.f32 %v4117, %v4445
    %v4447 = vpop.f32.mrf.mxu0
    %v4448 = vadd.f32 %v4119, %v4447
    %4449 = vmatmul.bf16.gmra.mxu0 %v3576
    %v4450 = vpop.f32.mrf.mxu0
    %v4451 = vadd.f32 %v4122, %v4450
    %v4452 = vpop.f32.mrf.mxu0
    %v4453 = vadd.f32 %v4124, %v4452
    %4454 = vmatmul.bf16.gmra.mxu0 %v3580
    %v4455 = vpop.f32.mrf.mxu0
    %v4456 = vadd.f32 %v4127, %v4455
    %v4457 = vpop.f32.mrf.mxu0
    %v4458 = vadd.f32 %v4129, %v4457
    %4459 = vmatmul.bf16.gmra.mxu0 %v3584
    %v4460 = vpop.f32.mrf.mxu0
    %v4461 = vadd.f32 %v4132, %v4460
    %v4462 = vpop.f32.mrf.mxu0
    %v4463 = vadd.f32 %v4134, %v4462
    %4464 = vmatmul.bf16.gmra.mxu0 %v3588
    %v4465 = vpop.f32.mrf.mxu0
    %v4466 = vadd.f32 %v4137, %v4465
    %v4467 = vpop.f32.mrf.mxu0
    %v4468 = vadd.f32 %v4139, %v4467
    %4469 = vmatmul.bf16.gmra.mxu0 %v3592
    %v4470 = vpop.f32.mrf.mxu0
    %v4471 = vadd.f32 %v4142, %v4470
    %v4472 = vpop.f32.mrf.mxu0
    %v4473 = vadd.f32 %v4144, %v4472
    %4474 = vmatmul.bf16.gmra.mxu0 %v3596
    %v4475 = vpop.f32.mrf.mxu0
    %v4476 = vadd.f32 %v4147, %v4475
    %v4477 = vpop.f32.mrf.mxu0
    %v4478 = vadd.f32 %v4149, %v4477
    %4479 = vmatmul.bf16.gmra.mxu0 %v3600
    %v4480 = vpop.f32.mrf.mxu0
    %v4481 = vadd.f32 %v4152, %v4480
    %v4482 = vpop.f32.mrf.mxu0
    %v4483 = vadd.f32 %v4154, %v4482
    %4484 = vmatmul.bf16.gmra.mxu0 %v3604
    %v4485 = vpop.f32.mrf.mxu0
    %v4486 = vadd.f32 %v4157, %v4485
    %v4487 = vpop.f32.mrf.mxu0
    %v4488 = vadd.f32 %v4159, %v4487
    %4489 = vmatmul.bf16.gmra.mxu0 %v3608
    %v4490 = vpop.f32.mrf.mxu0
    %v4491 = vadd.f32 %v4162, %v4490
    %v4492 = vpop.f32.mrf.mxu0
    %v4493 = vadd.f32 %v4164, %v4492
    %4494 = vmatmul.bf16.gmra.mxu0 %v3612
    %v4495 = vpop.f32.mrf.mxu0
    %v4496 = vadd.f32 %v4167, %v4495
    %v4497 = vpop.f32.mrf.mxu0
    %v4498 = vadd.f32 %v4169, %v4497
    %4499 = vmatmul.bf16.gmra.mxu0 %v3616
    %v4500 = vpop.f32.mrf.mxu0
    %v4501 = vadd.f32 %v4172, %v4500
    %v4502 = vpop.f32.mrf.mxu0
    %v4503 = vadd.f32 %v4174, %v4502
    %4504 = vmatmul.bf16.gmra.mxu0 %v3620
    %v4505 = vpop.f32.mrf.mxu0
    %v4506 = vadd.f32 %v4177, %v4505
    %v4507 = vpop.f32.mrf.mxu0
    %v4508 = vadd.f32 %v4179, %v4507
    %4509 = vmatmul.bf16.gmra.mxu0 %v3624
    %v4510 = vpop.f32.mrf.mxu0
    %v4511 = vadd.f32 %v4182, %v4510
    %v4512 = vpop.f32.mrf.mxu0
    %v4513 = vadd.f32 %v4184, %v4512
    %4514 = vmatmul.bf16.gmra.mxu0 %v3628
    %v4515 = vpop.f32.mrf.mxu0
    %v4516 = vadd.f32 %v4187, %v4515
    %v4517 = vpop.f32.mrf.mxu0
    %v4518 = vadd.f32 %v4189, %v4517
    %4519 = vmatmul.bf16.gmra.mxu0 %v3632
    %v4520 = vpop.f32.mrf.mxu0
    %v4521 = vadd.f32 %v4192, %v4520
    %v4522 = vpop.f32.mrf.mxu0
    %v4523 = vadd.f32 %v4194, %v4522
    %4524 = vmatmul.bf16.gmra.mxu0 %v3636
    %v4525 = vpop.f32.mrf.mxu0
    %v4526 = vadd.f32 %v4197, %v4525
    %v4527 = vpop.f32.mrf.mxu0
    %v4528 = vadd.f32 %v4199, %v4527
    %4529 = vmatmul.bf16.gmra.mxu0 %v3640
    %v4530 = vpop.f32.mrf.mxu0
    %v4531 = vadd.f32 %v4202, %v4530
    %v4532 = vpop.f32.mrf.mxu0
    %v4533 = vadd.f32 %v4204, %v4532
    %4534 = vmatmul.bf16.gmra.mxu0 %v3644
    %v4535 = vpop.f32.mrf.mxu0
    %v4536 = vadd.f32 %v4207, %v4535
    %v4537 = vpop.f32.mrf.mxu0
    %v4538 = vadd.f32 %v4209, %v4537
    %4539 = vmatmul.bf16.gmra.mxu0 %v3648
    %v4540 = vpop.f32.mrf.mxu0
    %v4541 = vadd.f32 %v4212, %v4540
    %v4542 = vpop.f32.mrf.mxu0
    %v4543 = vadd.f32 %v4214, %v4542
    %4544 = vmatmul.bf16.gmra.mxu0 %v3652
    %v4545 = vpop.f32.mrf.mxu0
    %v4546 = vadd.f32 %v4217, %v4545
    %v4547 = vpop.f32.mrf.mxu0
    %v4548 = vadd.f32 %v4219, %v4547
    %4549 = vmatmul.bf16.gmra.mxu0 %v3656
    %v4550 = vpop.f32.mrf.mxu0
    %v4551 = vadd.f32 %v4222, %v4550
    %v4552 = vpop.f32.mrf.mxu0
    %v4553 = vadd.f32 %v4224, %v4552
    %4554 = vmatmul.bf16.gmra.mxu0 %v3660
    %v4555 = vpop.f32.mrf.mxu0
    %v4556 = vadd.f32 %v4227, %v4555
    %v4557 = vpop.f32.mrf.mxu0
    %v4558 = vadd.f32 %v4229, %v4557
    %4559 = vmatmul.bf16.gmra.mxu0 %v3664
    %v4560 = vpop.f32.mrf.mxu0
    %v4561 = vadd.f32 %v4232, %v4560
    %v4562 = vpop.f32.mrf.mxu0
    %v4563 = vadd.f32 %v4234, %v4562
    %4564 = vmatmul.bf16.gmra.mxu0 %v3668
    %v4565 = vpop.f32.mrf.mxu0
    %v4566 = vadd.f32 %v4237, %v4565
    %v4567 = vpop.f32.mrf.mxu0
    %v4568 = vadd.f32 %v4239, %v4567
    %4569 = vmatmul.bf16.gmra.mxu0 %v3672
    %v4570 = vpop.f32.mrf.mxu0
    %v4571 = vadd.f32 %v4242, %v4570
    %v4572 = vpop.f32.mrf.mxu0
    %v4573 = vadd.f32 %v4244, %v4572
    %4574 = vmatmul.bf16.gmra.mxu0 %v3676
    %v4575 = vpop.f32.mrf.mxu0
    %v4576 = vadd.f32 %v4247, %v4575
    %v4577 = vpop.f32.mrf.mxu0
    %v4578 = vadd.f32 %v4249, %v4577
    %4579 = vmatmul.bf16.gmra.mxu0 %v3680
    %v4580 = vpop.f32.mrf.mxu0
    %v4581 = vadd.f32 %v4252, %v4580
    %v4582 = vpop.f32.mrf.mxu0
    %v4583 = vadd.f32 %v4254, %v4582
    %4584 = vmatmul.bf16.gmra.mxu0 %v3684
    %v4585 = vpop.f32.mrf.mxu0
    %v4586 = vadd.f32 %v4257, %v4585
    %v4587 = vpop.f32.mrf.mxu0
    %v4588 = vadd.f32 %v4259, %v4587
    %4589 = vmatmul.bf16.gmra.mxu0 %v3688
    %v4590 = vpop.f32.mrf.mxu0
    %v4591 = vadd.f32 %v4262, %v4590
    %v4592 = vpop.f32.mrf.mxu0
    %v4593 = vadd.f32 %v4264, %v4592
    %4594 = vmatmul.bf16.gmra.mxu0 %v3692
    %v4595 = vpop.f32.mrf.mxu0
    %v4596 = vadd.f32 %v4267, %v4595
    %v4597 = vpop.f32.mrf.mxu0
    %v4598 = vadd.f32 %v4269, %v4597
    %4599 = vmatmul.bf16.gmra.mxu0 %v3696
    %v4600 = vpop.f32.mrf.mxu0
    %v4601 = vadd.f32 %v4272, %v4600
    %v4602 = vpop.f32.mrf.mxu0
    %v4603 = vadd.f32 %v4274, %v4602
    %4604 = vmatmul.bf16.gmra.mxu0 %v3700
    %v4605 = vpop.f32.mrf.mxu0
    %v4606 = vadd.f32 %v4277, %v4605
    %v4607 = vpop.f32.mrf.mxu0
    %v4608 = vadd.f32 %v4279, %v4607
    %4609 = vmatmul.bf16.gmra.mxu0 %v3704
    %v4610 = vpop.f32.mrf.mxu0
    %v4611 = vadd.f32 %v4282, %v4610
    %v4612 = vpop.f32.mrf.mxu0
    %v4613 = vadd.f32 %v4284, %v4612
    %4614 = vmatmul.bf16.gmra.mxu0 %v3708
    %v4615 = vpop.f32.mrf.mxu0
    %v4616 = vadd.f32 %v4287, %v4615
    %v4617 = vpop.f32.mrf.mxu0
    %v4618 = vadd.f32 %v4289, %v4617
    %4619 = vmatmul.bf16.gmra.mxu0 %v3712
    %v4620 = vpop.f32.mrf.mxu0
    %v4621 = vadd.f32 %v4292, %v4620
    %v4622 = vpop.f32.mrf.mxu0
    %v4623 = vadd.f32 %v4294, %v4622
    %4624 = vmatmul.bf16.gmra.mxu0 %v3716
    %v4625 = vpop.f32.mrf.mxu0
    %v4626 = vadd.f32 %v4297, %v4625
    %v4627 = vpop.f32.mrf.mxu0
    %v4628 = vadd.f32 %v4299, %v4627
    %4629 = vmatmul.bf16.gmra.mxu0 %v3720
    %v4630 = vpop.f32.mrf.mxu0
    %v4631 = vadd.f32 %v4302, %v4630
    %v4632 = vpop.f32.mrf.mxu0
    %v4633 = vadd.f32 %v4304, %v4632
    %4634 = vmatmul.bf16.gmra.mxu0 %v3724
    %v4635 = vpop.f32.mrf.mxu0
    %v4636 = vadd.f32 %v4307, %v4635
    %v4637 = vpop.f32.mrf.mxu0
    %v4638 = vadd.f32 %v4309, %v4637
    %4639 = vmatmul.bf16.gmra.mxu0 %v3728
    %v4640 = vpop.f32.mrf.mxu0
    %v4641 = vadd.f32 %v4312, %v4640
    %v4642 = vpop.f32.mrf.mxu0
    %v4643 = vadd.f32 %v4314, %v4642
    %4644 = vdwg.mxu0
    %4645 = vmatpush.bf16.msra.mxu0 %v1665
    %4646 = vmatpush.bf16.msra.mxu0 %v1663
    %4647 = vmatpush.bf16.msra.mxu0 %v1661
    %4648 = vmatpush.bf16.msra.mxu0 %v1659
    %4649 = vmatpush.bf16.msra.mxu0 %v1657
    %4650 = vmatpush.bf16.msra.mxu0 %v1655
    %4651 = vmatpush.bf16.msra.mxu0 %v1653
    %4652 = vmatpush.bf16.msra.mxu0 %v1651
    %4653 = vmatmul.bf16.gmra.mxu0 %v3477
    %v4654 = vpop.f32.mrf.mxu0
    %v4655 = vadd.f32 %v4326, %v4654
    %v4656 = vpop.f32.mrf.mxu0
    %v4657 = vadd.f32 %v4328, %v4656
    %4658 = vmatmul.bf16.gmra.mxu0 %v3481
    %v4659 = vpop.f32.mrf.mxu0
    %v4660 = vadd.f32 %v4331, %v4659
    %v4661 = vpop.f32.mrf.mxu0
    %v4662 = vadd.f32 %v4333, %v4661
    %4663 = vmatmul.bf16.gmra.mxu0 %v3485
    %v4664 = vpop.f32.mrf.mxu0
    %v4665 = vadd.f32 %v4336, %v4664
    %v4666 = vpop.f32.mrf.mxu0
    %v4667 = vadd.f32 %v4338, %v4666
    %4668 = vmatmul.bf16.gmra.mxu0 %v3489
    %v4669 = vpop.f32.mrf.mxu0
    %v4670 = vadd.f32 %v4341, %v4669
    %v4671 = vpop.f32.mrf.mxu0
    %v4672 = vadd.f32 %v4343, %v4671
    %4673 = vmatmul.bf16.gmra.mxu0 %v3493
    %v4674 = vpop.f32.mrf.mxu0
    %v4675 = vadd.f32 %v4346, %v4674
    %v4676 = vpop.f32.mrf.mxu0
    %v4677 = vadd.f32 %v4348, %v4676
    %4678 = vmatmul.bf16.gmra.mxu0 %v3497
    %v4679 = vpop.f32.mrf.mxu0
    %v4680 = vadd.f32 %v4351, %v4679
    %v4681 = vpop.f32.mrf.mxu0
    %v4682 = vadd.f32 %v4353, %v4681
    %4683 = vmatmul.bf16.gmra.mxu0 %v3501
    %v4684 = vpop.f32.mrf.mxu0
    %v4685 = vadd.f32 %v4356, %v4684
    %v4686 = vpop.f32.mrf.mxu0
    %v4687 = vadd.f32 %v4358, %v4686
    %4688 = vmatmul.bf16.gmra.mxu0 %v3505
    %v4689 = vpop.f32.mrf.mxu0
    %v4690 = vadd.f32 %v4361, %v4689
    %v4691 = vpop.f32.mrf.mxu0
    %v4692 = vadd.f32 %v4363, %v4691
    %4693 = vmatmul.bf16.gmra.mxu0 %v3509
    %v4694 = vpop.f32.mrf.mxu0
    %v4695 = vadd.f32 %v4366, %v4694
    %v4696 = vpop.f32.mrf.mxu0
    %v4697 = vadd.f32 %v4368, %v4696
    %4698 = vmatmul.bf16.gmra.mxu0 %v3513
    %v4699 = vpop.f32.mrf.mxu0
    %v4700 = vadd.f32 %v4371, %v4699
    %v4701 = vpop.f32.mrf.mxu0
    %v4702 = vadd.f32 %v4373, %v4701
    %4703 = vmatmul.bf16.gmra.mxu0 %v3517
    %v4704 = vpop.f32.mrf.mxu0
    %v4705 = vadd.f32 %v4376, %v4704
    %v4706 = vpop.f32.mrf.mxu0
    %v4707 = vadd.f32 %v4378, %v4706
    %4708 = vmatmul.bf16.gmra.mxu0 %v3521
    %v4709 = vpop.f32.mrf.mxu0
    %v4710 = vadd.f32 %v4381, %v4709
    %v4711 = vpop.f32.mrf.mxu0
    %v4712 = vadd.f32 %v4383, %v4711
    %4713 = vmatmul.bf16.gmra.mxu0 %v3525
    %v4714 = vpop.f32.mrf.mxu0
    %v4715 = vadd.f32 %v4386, %v4714
    %v4716 = vpop.f32.mrf.mxu0
    %v4717 = vadd.f32 %v4388, %v4716
    %4718 = vmatmul.bf16.gmra.mxu0 %v3529
    %v4719 = vpop.f32.mrf.mxu0
    %v4720 = vadd.f32 %v4391, %v4719
    %v4721 = vpop.f32.mrf.mxu0
    %v4722 = vadd.f32 %v4393, %v4721
    %4723 = vmatmul.bf16.gmra.mxu0 %v3533
    %v4724 = vpop.f32.mrf.mxu0
    %v4725 = vadd.f32 %v4396, %v4724
    %v4726 = vpop.f32.mrf.mxu0
    %v4727 = vadd.f32 %v4398, %v4726
    %4728 = vmatmul.bf16.gmra.mxu0 %v3537
    %v4729 = vpop.f32.mrf.mxu0
    %v4730 = vadd.f32 %v4401, %v4729
    %v4731 = vpop.f32.mrf.mxu0
    %v4732 = vadd.f32 %v4403, %v4731
    %4733 = vmatmul.bf16.gmra.mxu0 %v3541
    %v4734 = vpop.f32.mrf.mxu0
    %v4735 = vadd.f32 %v4406, %v4734
    %v4736 = vpop.f32.mrf.mxu0
    %v4737 = vadd.f32 %v4408, %v4736
    %4738 = vmatmul.bf16.gmra.mxu0 %v3545
    %v4739 = vpop.f32.mrf.mxu0
    %v4740 = vadd.f32 %v4411, %v4739
    %v4741 = vpop.f32.mrf.mxu0
    %v4742 = vadd.f32 %v4413, %v4741
    %4743 = vmatmul.bf16.gmra.mxu0 %v3549
    %v4744 = vpop.f32.mrf.mxu0
    %v4745 = vadd.f32 %v4416, %v4744
    %v4746 = vpop.f32.mrf.mxu0
    %v4747 = vadd.f32 %v4418, %v4746
    %4748 = vmatmul.bf16.gmra.mxu0 %v3553
    %v4749 = vpop.f32.mrf.mxu0
    %v4750 = vadd.f32 %v4421, %v4749
    %v4751 = vpop.f32.mrf.mxu0
    %v4752 = vadd.f32 %v4423, %v4751
    %4753 = vmatmul.bf16.gmra.mxu0 %v3557
    %v4754 = vpop.f32.mrf.mxu0
    %v4755 = vadd.f32 %v4426, %v4754
    %v4756 = vpop.f32.mrf.mxu0
    %v4757 = vadd.f32 %v4428, %v4756
    %4758 = vmatmul.bf16.gmra.mxu0 %v3561
    %v4759 = vpop.f32.mrf.mxu0
    %v4760 = vadd.f32 %v4431, %v4759
    %v4761 = vpop.f32.mrf.mxu0
    %v4762 = vadd.f32 %v4433, %v4761
    %4763 = vmatmul.bf16.gmra.mxu0 %v3565
    %v4764 = vpop.f32.mrf.mxu0
    %v4765 = vadd.f32 %v4436, %v4764
    %v4766 = vpop.f32.mrf.mxu0
    %v4767 = vadd.f32 %v4438, %v4766
    %4768 = vmatmul.bf16.gmra.mxu0 %v3569
    %v4769 = vpop.f32.mrf.mxu0
    %v4770 = vadd.f32 %v4441, %v4769
    %v4771 = vpop.f32.mrf.mxu0
    %v4772 = vadd.f32 %v4443, %v4771
    %4773 = vmatmul.bf16.gmra.mxu0 %v3573
    %v4774 = vpop.f32.mrf.mxu0
    %v4775 = vadd.f32 %v4446, %v4774
    %v4776 = vpop.f32.mrf.mxu0
    %v4777 = vadd.f32 %v4448, %v4776
    %4778 = vmatmul.bf16.gmra.mxu0 %v3577
    %v4779 = vpop.f32.mrf.mxu0
    %v4780 = vadd.f32 %v4451, %v4779
    %v4781 = vpop.f32.mrf.mxu0
    %v4782 = vadd.f32 %v4453, %v4781
    %4783 = vmatmul.bf16.gmra.mxu0 %v3581
    %v4784 = vpop.f32.mrf.mxu0
    %v4785 = vadd.f32 %v4456, %v4784
    %v4786 = vpop.f32.mrf.mxu0
    %v4787 = vadd.f32 %v4458, %v4786
    %4788 = vmatmul.bf16.gmra.mxu0 %v3585
    %v4789 = vpop.f32.mrf.mxu0
    %v4790 = vadd.f32 %v4461, %v4789
    %v4791 = vpop.f32.mrf.mxu0
    %v4792 = vadd.f32 %v4463, %v4791
    %4793 = vmatmul.bf16.gmra.mxu0 %v3589
    %v4794 = vpop.f32.mrf.mxu0
    %v4795 = vadd.f32 %v4466, %v4794
    %v4796 = vpop.f32.mrf.mxu0
    %v4797 = vadd.f32 %v4468, %v4796
    %4798 = vmatmul.bf16.gmra.mxu0 %v3593
    %v4799 = vpop.f32.mrf.mxu0
    %v4800 = vadd.f32 %v4471, %v4799
    %v4801 = vpop.f32.mrf.mxu0
    %v4802 = vadd.f32 %v4473, %v4801
    %4803 = vmatmul.bf16.gmra.mxu0 %v3597
    %v4804 = vpop.f32.mrf.mxu0
    %v4805 = vadd.f32 %v4476, %v4804
    %v4806 = vpop.f32.mrf.mxu0
    %v4807 = vadd.f32 %v4478, %v4806
    %4808 = vmatmul.bf16.gmra.mxu0 %v3601
    %v4809 = vpop.f32.mrf.mxu0
    %v4810 = vadd.f32 %v4481, %v4809
    %v4811 = vpop.f32.mrf.mxu0
    %v4812 = vadd.f32 %v4483, %v4811
    %4813 = vmatmul.bf16.gmra.mxu0 %v3605
    %v4814 = vpop.f32.mrf.mxu0
    %v4815 = vadd.f32 %v4486, %v4814
    %v4816 = vpop.f32.mrf.mxu0
    %v4817 = vadd.f32 %v4488, %v4816
    %4818 = vmatmul.bf16.gmra.mxu0 %v3609
    %v4819 = vpop.f32.mrf.mxu0
    %v4820 = vadd.f32 %v4491, %v4819
    %v4821 = vpop.f32.mrf.mxu0
    %v4822 = vadd.f32 %v4493, %v4821
    %4823 = vmatmul.bf16.gmra.mxu0 %v3613
    %v4824 = vpop.f32.mrf.mxu0
    %v4825 = vadd.f32 %v4496, %v4824
    %v4826 = vpop.f32.mrf.mxu0
    %v4827 = vadd.f32 %v4498, %v4826
    %4828 = vmatmul.bf16.gmra.mxu0 %v3617
    %v4829 = vpop.f32.mrf.mxu0
    %v4830 = vadd.f32 %v4501, %v4829
    %v4831 = vpop.f32.mrf.mxu0
    %v4832 = vadd.f32 %v4503, %v4831
    %4833 = vmatmul.bf16.gmra.mxu0 %v3621
    %v4834 = vpop.f32.mrf.mxu0
    %v4835 = vadd.f32 %v4506, %v4834
    %v4836 = vpop.f32.mrf.mxu0
    %v4837 = vadd.f32 %v4508, %v4836
    %4838 = vmatmul.bf16.gmra.mxu0 %v3625
    %v4839 = vpop.f32.mrf.mxu0
    %v4840 = vadd.f32 %v4511, %v4839
    %v4841 = vpop.f32.mrf.mxu0
    %v4842 = vadd.f32 %v4513, %v4841
    %4843 = vmatmul.bf16.gmra.mxu0 %v3629
    %v4844 = vpop.f32.mrf.mxu0
    %v4845 = vadd.f32 %v4516, %v4844
    %v4846 = vpop.f32.mrf.mxu0
    %v4847 = vadd.f32 %v4518, %v4846
    %4848 = vmatmul.bf16.gmra.mxu0 %v3633
    %v4849 = vpop.f32.mrf.mxu0
    %v4850 = vadd.f32 %v4521, %v4849
    %v4851 = vpop.f32.mrf.mxu0
    %v4852 = vadd.f32 %v4523, %v4851
    %4853 = vmatmul.bf16.gmra.mxu0 %v3637
    %v4854 = vpop.f32.mrf.mxu0
    %v4855 = vadd.f32 %v4526, %v4854
    %v4856 = vpop.f32.mrf.mxu0
    %v4857 = vadd.f32 %v4528, %v4856
    %4858 = vmatmul.bf16.gmra.mxu0 %v3641
    %v4859 = vpop.f32.mrf.mxu0
    %v4860 = vadd.f32 %v4531, %v4859
    %v4861 = vpop.f32.mrf.mxu0
    %v4862 = vadd.f32 %v4533, %v4861
    %4863 = vmatmul.bf16.gmra.mxu0 %v3645
    %v4864 = vpop.f32.mrf.mxu0
    %v4865 = vadd.f32 %v4536, %v4864
    %v4866 = vpop.f32.mrf.mxu0
    %v4867 = vadd.f32 %v4538, %v4866
    %4868 = vmatmul.bf16.gmra.mxu0 %v3649
    %v4869 = vpop.f32.mrf.mxu0
    %v4870 = vadd.f32 %v4541, %v4869
    %v4871 = vpop.f32.mrf.mxu0
    %v4872 = vadd.f32 %v4543, %v4871
    %4873 = vmatmul.bf16.gmra.mxu0 %v3653
    %v4874 = vpop.f32.mrf.mxu0
    %v4875 = vadd.f32 %v4546, %v4874
    %v4876 = vpop.f32.mrf.mxu0
    %v4877 = vadd.f32 %v4548, %v4876
    %4878 = vmatmul.bf16.gmra.mxu0 %v3657
    %v4879 = vpop.f32.mrf.mxu0
    %v4880 = vadd.f32 %v4551, %v4879
    %v4881 = vpop.f32.mrf.mxu0
    %v4882 = vadd.f32 %v4553, %v4881
    %4883 = vmatmul.bf16.gmra.mxu0 %v3661
    %v4884 = vpop.f32.mrf.mxu0
    %v4885 = vadd.f32 %v4556, %v4884
    %v4886 = vpop.f32.mrf.mxu0
    %v4887 = vadd.f32 %v4558, %v4886
    %4888 = vmatmul.bf16.gmra.mxu0 %v3665
    %v4889 = vpop.f32.mrf.mxu0
    %v4890 = vadd.f32 %v4561, %v4889
    %v4891 = vpop.f32.mrf.mxu0
    %v4892 = vadd.f32 %v4563, %v4891
    %4893 = vmatmul.bf16.gmra.mxu0 %v3669
    %v4894 = vpop.f32.mrf.mxu0
    %v4895 = vadd.f32 %v4566, %v4894
    %v4896 = vpop.f32.mrf.mxu0
    %v4897 = vadd.f32 %v4568, %v4896
    %4898 = vmatmul.bf16.gmra.mxu0 %v3673
    %v4899 = vpop.f32.mrf.mxu0
    %v4900 = vadd.f32 %v4571, %v4899
    %v4901 = vpop.f32.mrf.mxu0
    %v4902 = vadd.f32 %v4573, %v4901
    %4903 = vmatmul.bf16.gmra.mxu0 %v3677
    %v4904 = vpop.f32.mrf.mxu0
    %v4905 = vadd.f32 %v4576, %v4904
    %v4906 = vpop.f32.mrf.mxu0
    %v4907 = vadd.f32 %v4578, %v4906
    %4908 = vmatmul.bf16.gmra.mxu0 %v3681
    %v4909 = vpop.f32.mrf.mxu0
    %v4910 = vadd.f32 %v4581, %v4909
    %v4911 = vpop.f32.mrf.mxu0
    %v4912 = vadd.f32 %v4583, %v4911
    %4913 = vmatmul.bf16.gmra.mxu0 %v3685
    %v4914 = vpop.f32.mrf.mxu0
    %v4915 = vadd.f32 %v4586, %v4914
    %v4916 = vpop.f32.mrf.mxu0
    %v4917 = vadd.f32 %v4588, %v4916
    %4918 = vmatmul.bf16.gmra.mxu0 %v3689
    %v4919 = vpop.f32.mrf.mxu0
    %v4920 = vadd.f32 %v4591, %v4919
    %v4921 = vpop.f32.mrf.mxu0
    %v4922 = vadd.f32 %v4593, %v4921
    %4923 = vmatmul.bf16.gmra.mxu0 %v3693
    %v4924 = vpop.f32.mrf.mxu0
    %v4925 = vadd.f32 %v4596, %v4924
    %v4926 = vpop.f32.mrf.mxu0
    %v4927 = vadd.f32 %v4598, %v4926
    %4928 = vmatmul.bf16.gmra.mxu0 %v3697
    %v4929 = vpop.f32.mrf.mxu0
    %v4930 = vadd.f32 %v4601, %v4929
    %v4931 = vpop.f32.mrf.mxu0
    %v4932 = vadd.f32 %v4603, %v4931
    %4933 = vmatmul.bf16.gmra.mxu0 %v3701
    %v4934 = vpop.f32.mrf.mxu0
    %v4935 = vadd.f32 %v4606, %v4934
    %v4936 = vpop.f32.mrf.mxu0
    %v4937 = vadd.f32 %v4608, %v4936
    %4938 = vmatmul.bf16.gmra.mxu0 %v3705
    %v4939 = vpop.f32.mrf.mxu0
    %v4940 = vadd.f32 %v4611, %v4939
    %v4941 = vpop.f32.mrf.mxu0
    %v4942 = vadd.f32 %v4613, %v4941
    %4943 = vmatmul.bf16.gmra.mxu0 %v3709
    %v4944 = vpop.f32.mrf.mxu0
    %v4945 = vadd.f32 %v4616, %v4944
    %v4946 = vpop.f32.mrf.mxu0
    %v4947 = vadd.f32 %v4618, %v4946
    %4948 = vmatmul.bf16.gmra.mxu0 %v3713
    %v4949 = vpop.f32.mrf.mxu0
    %v4950 = vadd.f32 %v4621, %v4949
    %v4951 = vpop.f32.mrf.mxu0
    %v4952 = vadd.f32 %v4623, %v4951
    %4953 = vmatmul.bf16.gmra.mxu0 %v3717
    %v4954 = vpop.f32.mrf.mxu0
    %v4955 = vadd.f32 %v4626, %v4954
    %v4956 = vpop.f32.mrf.mxu0
    %v4957 = vadd.f32 %v4628, %v4956
    %4958 = vmatmul.bf16.gmra.mxu0 %v3721
    %v4959 = vpop.f32.mrf.mxu0
    %v4960 = vadd.f32 %v4631, %v4959
    %v4961 = vpop.f32.mrf.mxu0
    %v4962 = vadd.f32 %v4633, %v4961
    %4963 = vmatmul.bf16.gmra.mxu0 %v3725
    %v4964 = vpop.f32.mrf.mxu0
    %v4965 = vadd.f32 %v4636, %v4964
    %v4966 = vpop.f32.mrf.mxu0
    %v4967 = vadd.f32 %v4638, %v4966
    %4968 = vmatmul.bf16.gmra.mxu0 %v3729
    %v4969 = vpop.f32.mrf.mxu0
    %v4970 = vadd.f32 %v4641, %v4969
    %v4971 = vpop.f32.mrf.mxu0
    %v4972 = vadd.f32 %v4643, %v4971
    %4973 = vdwg.mxu0
    %4974 = vmatpush.bf16.msra.mxu0 %v1681
    %4975 = vmatpush.bf16.msra.mxu0 %v1679
    %4976 = vmatpush.bf16.msra.mxu0 %v1677
    %4977 = vmatpush.bf16.msra.mxu0 %v1675
    %4978 = vmatpush.bf16.msra.mxu0 %v1673
    %4979 = vmatpush.bf16.msra.mxu0 %v1671
    %4980 = vmatpush.bf16.msra.mxu0 %v1669
    %4981 = vmatpush.bf16.msra.mxu0 %v1667
    %4982 = vmatmul.bf16.gmra.mxu0 %v3478
    %v4983 = vpop.f32.mrf.mxu0
    %v4984 = vadd.f32 %v4655, %v4983
    %v4985 = vpop.f32.mrf.mxu0
    %v4986 = vadd.f32 %v4657, %v4985
    %4987 = vmatmul.bf16.gmra.mxu0 %v3482
    %v4988 = vpop.f32.mrf.mxu0
    %v4989 = vadd.f32 %v4660, %v4988
    %v4990 = vpop.f32.mrf.mxu0
    %v4991 = vadd.f32 %v4662, %v4990
    %4992 = vmatmul.bf16.gmra.mxu0 %v3486
    %v4993 = vpop.f32.mrf.mxu0
    %v4994 = vadd.f32 %v4665, %v4993
    %v4995 = vpop.f32.mrf.mxu0
    %v4996 = vadd.f32 %v4667, %v4995
    %4997 = vmatmul.bf16.gmra.mxu0 %v3490
    %v4998 = vpop.f32.mrf.mxu0
    %v4999 = vadd.f32 %v4670, %v4998
    %v5000 = vpop.f32.mrf.mxu0
    %v5001 = vadd.f32 %v4672, %v5000
    %5002 = vmatmul.bf16.gmra.mxu0 %v3494
    %v5003 = vpop.f32.mrf.mxu0
    %v5004 = vadd.f32 %v4675, %v5003
    %v5005 = vpop.f32.mrf.mxu0
    %v5006 = vadd.f32 %v4677, %v5005
    %5007 = vmatmul.bf16.gmra.mxu0 %v3498
    %v5008 = vpop.f32.mrf.mxu0
    %v5009 = vadd.f32 %v4680, %v5008
    %v5010 = vpop.f32.mrf.mxu0
    %v5011 = vadd.f32 %v4682, %v5010
    %5012 = vmatmul.bf16.gmra.mxu0 %v3502
    %v5013 = vpop.f32.mrf.mxu0
    %v5014 = vadd.f32 %v4685, %v5013
    %v5015 = vpop.f32.mrf.mxu0
    %v5016 = vadd.f32 %v4687, %v5015
    %5017 = vmatmul.bf16.gmra.mxu0 %v3506
    %v5018 = vpop.f32.mrf.mxu0
    %v5019 = vadd.f32 %v4690, %v5018
    %v5020 = vpop.f32.mrf.mxu0
    %v5021 = vadd.f32 %v4692, %v5020
    %5022 = vmatmul.bf16.gmra.mxu0 %v3510
    %v5023 = vpop.f32.mrf.mxu0
    %v5024 = vadd.f32 %v4695, %v5023
    %v5025 = vpop.f32.mrf.mxu0
    %v5026 = vadd.f32 %v4697, %v5025
    %5027 = vmatmul.bf16.gmra.mxu0 %v3514
    %v5028 = vpop.f32.mrf.mxu0
    %v5029 = vadd.f32 %v4700, %v5028
    %v5030 = vpop.f32.mrf.mxu0
    %v5031 = vadd.f32 %v4702, %v5030
    %5032 = vmatmul.bf16.gmra.mxu0 %v3518
    %v5033 = vpop.f32.mrf.mxu0
    %v5034 = vadd.f32 %v4705, %v5033
    %v5035 = vpop.f32.mrf.mxu0
    %v5036 = vadd.f32 %v4707, %v5035
    %5037 = vmatmul.bf16.gmra.mxu0 %v3522
    %v5038 = vpop.f32.mrf.mxu0
    %v5039 = vadd.f32 %v4710, %v5038
    %v5040 = vpop.f32.mrf.mxu0
    %v5041 = vadd.f32 %v4712, %v5040
    %5042 = vmatmul.bf16.gmra.mxu0 %v3526
    %v5043 = vpop.f32.mrf.mxu0
    %v5044 = vadd.f32 %v4715, %v5043
    %v5045 = vpop.f32.mrf.mxu0
    %v5046 = vadd.f32 %v4717, %v5045
    %5047 = vmatmul.bf16.gmra.mxu0 %v3530
    %v5048 = vpop.f32.mrf.mxu0
    %v5049 = vadd.f32 %v4720, %v5048
    %v5050 = vpop.f32.mrf.mxu0
    %v5051 = vadd.f32 %v4722, %v5050
    %5052 = vmatmul.bf16.gmra.mxu0 %v3534
    %v5053 = vpop.f32.mrf.mxu0
    %v5054 = vadd.f32 %v4725, %v5053
    %v5055 = vpop.f32.mrf.mxu0
    %v5056 = vadd.f32 %v4727, %v5055
    %5057 = vmatmul.bf16.gmra.mxu0 %v3538
    %v5058 = vpop.f32.mrf.mxu0
    %v5059 = vadd.f32 %v4730, %v5058
    %v5060 = vpop.f32.mrf.mxu0
    %v5061 = vadd.f32 %v4732, %v5060
    %5062 = vmatmul.bf16.gmra.mxu0 %v3542
    %v5063 = vpop.f32.mrf.mxu0
    %v5064 = vadd.f32 %v4735, %v5063
    %v5065 = vpop.f32.mrf.mxu0
    %v5066 = vadd.f32 %v4737, %v5065
    %5067 = vmatmul.bf16.gmra.mxu0 %v3546
    %v5068 = vpop.f32.mrf.mxu0
    %v5069 = vadd.f32 %v4740, %v5068
    %v5070 = vpop.f32.mrf.mxu0
    %v5071 = vadd.f32 %v4742, %v5070
    %5072 = vmatmul.bf16.gmra.mxu0 %v3550
    %v5073 = vpop.f32.mrf.mxu0
    %v5074 = vadd.f32 %v4745, %v5073
    %v5075 = vpop.f32.mrf.mxu0
    %v5076 = vadd.f32 %v4747, %v5075
    %5077 = vmatmul.bf16.gmra.mxu0 %v3554
    %v5078 = vpop.f32.mrf.mxu0
    %v5079 = vadd.f32 %v4750, %v5078
    %v5080 = vpop.f32.mrf.mxu0
    %v5081 = vadd.f32 %v4752, %v5080
    %5082 = vmatmul.bf16.gmra.mxu0 %v3558
    %v5083 = vpop.f32.mrf.mxu0
    %v5084 = vadd.f32 %v4755, %v5083
    %v5085 = vpop.f32.mrf.mxu0
    %v5086 = vadd.f32 %v4757, %v5085
    %5087 = vmatmul.bf16.gmra.mxu0 %v3562
    %v5088 = vpop.f32.mrf.mxu0
    %v5089 = vadd.f32 %v4760, %v5088
    %v5090 = vpop.f32.mrf.mxu0
    %v5091 = vadd.f32 %v4762, %v5090
    %5092 = vmatmul.bf16.gmra.mxu0 %v3566
    %v5093 = vpop.f32.mrf.mxu0
    %v5094 = vadd.f32 %v4765, %v5093
    %v5095 = vpop.f32.mrf.mxu0
    %v5096 = vadd.f32 %v4767, %v5095
    %5097 = vmatmul.bf16.gmra.mxu0 %v3570
    %v5098 = vpop.f32.mrf.mxu0
    %v5099 = vadd.f32 %v4770, %v5098
    %v5100 = vpop.f32.mrf.mxu0
    %v5101 = vadd.f32 %v4772, %v5100
    %5102 = vmatmul.bf16.gmra.mxu0 %v3574
    %v5103 = vpop.f32.mrf.mxu0
    %v5104 = vadd.f32 %v4775, %v5103
    %v5105 = vpop.f32.mrf.mxu0
    %v5106 = vadd.f32 %v4777, %v5105
    %5107 = vmatmul.bf16.gmra.mxu0 %v3578
    %v5108 = vpop.f32.mrf.mxu0
    %v5109 = vadd.f32 %v4780, %v5108
    %v5110 = vpop.f32.mrf.mxu0
    %v5111 = vadd.f32 %v4782, %v5110
    %5112 = vmatmul.bf16.gmra.mxu0 %v3582
    %v5113 = vpop.f32.mrf.mxu0
    %v5114 = vadd.f32 %v4785, %v5113
    %v5115 = vpop.f32.mrf.mxu0
    %v5116 = vadd.f32 %v4787, %v5115
    %5117 = vmatmul.bf16.gmra.mxu0 %v3586
    %v5118 = vpop.f32.mrf.mxu0
    %v5119 = vadd.f32 %v4790, %v5118
    %v5120 = vpop.f32.mrf.mxu0
    %v5121 = vadd.f32 %v4792, %v5120
    %5122 = vmatmul.bf16.gmra.mxu0 %v3590
    %v5123 = vpop.f32.mrf.mxu0
    %v5124 = vadd.f32 %v4795, %v5123
    %v5125 = vpop.f32.mrf.mxu0
    %v5126 = vadd.f32 %v4797, %v5125
    %5127 = vmatmul.bf16.gmra.mxu0 %v3594
    %v5128 = vpop.f32.mrf.mxu0
    %v5129 = vadd.f32 %v4800, %v5128
    %v5130 = vpop.f32.mrf.mxu0
    %v5131 = vadd.f32 %v4802, %v5130
    %5132 = vmatmul.bf16.gmra.mxu0 %v3598
    %v5133 = vpop.f32.mrf.mxu0
    %v5134 = vadd.f32 %v4805, %v5133
    %v5135 = vpop.f32.mrf.mxu0
    %v5136 = vadd.f32 %v4807, %v5135
    %5137 = vmatmul.bf16.gmra.mxu0 %v3602
    %v5138 = vpop.f32.mrf.mxu0
    %v5139 = vadd.f32 %v4810, %v5138
    %v5140 = vpop.f32.mrf.mxu0
    %v5141 = vadd.f32 %v4812, %v5140
    %5142 = vmatmul.bf16.gmra.mxu0 %v3606
    %v5143 = vpop.f32.mrf.mxu0
    %v5144 = vadd.f32 %v4815, %v5143
    %v5145 = vpop.f32.mrf.mxu0
    %v5146 = vadd.f32 %v4817, %v5145
    %5147 = vmatmul.bf16.gmra.mxu0 %v3610
    %v5148 = vpop.f32.mrf.mxu0
    %v5149 = vadd.f32 %v4820, %v5148
    %v5150 = vpop.f32.mrf.mxu0
    %v5151 = vadd.f32 %v4822, %v5150
    %5152 = vmatmul.bf16.gmra.mxu0 %v3614
    %v5153 = vpop.f32.mrf.mxu0
    %v5154 = vadd.f32 %v4825, %v5153
    %v5155 = vpop.f32.mrf.mxu0
    %v5156 = vadd.f32 %v4827, %v5155
    %5157 = vmatmul.bf16.gmra.mxu0 %v3618
    %v5158 = vpop.f32.mrf.mxu0
    %v5159 = vadd.f32 %v4830, %v5158
    %v5160 = vpop.f32.mrf.mxu0
    %v5161 = vadd.f32 %v4832, %v5160
    %5162 = vmatmul.bf16.gmra.mxu0 %v3622
    %v5163 = vpop.f32.mrf.mxu0
    %v5164 = vadd.f32 %v4835, %v5163
    %v5165 = vpop.f32.mrf.mxu0
    %v5166 = vadd.f32 %v4837, %v5165
    %5167 = vmatmul.bf16.gmra.mxu0 %v3626
    %v5168 = vpop.f32.mrf.mxu0
    %v5169 = vadd.f32 %v4840, %v5168
    %v5170 = vpop.f32.mrf.mxu0
    %v5171 = vadd.f32 %v4842, %v5170
    %5172 = vmatmul.bf16.gmra.mxu0 %v3630
    %v5173 = vpop.f32.mrf.mxu0
    %v5174 = vadd.f32 %v4845, %v5173
    %v5175 = vpop.f32.mrf.mxu0
    %v5176 = vadd.f32 %v4847, %v5175
    %5177 = vmatmul.bf16.gmra.mxu0 %v3634
    %v5178 = vpop.f32.mrf.mxu0
    %v5179 = vadd.f32 %v4850, %v5178
    %v5180 = vpop.f32.mrf.mxu0
    %v5181 = vadd.f32 %v4852, %v5180
    %5182 = vmatmul.bf16.gmra.mxu0 %v3638
    %v5183 = vpop.f32.mrf.mxu0
    %v5184 = vadd.f32 %v4855, %v5183
    %v5185 = vpop.f32.mrf.mxu0
    %v5186 = vadd.f32 %v4857, %v5185
    %5187 = vmatmul.bf16.gmra.mxu0 %v3642
    %v5188 = vpop.f32.mrf.mxu0
    %v5189 = vadd.f32 %v4860, %v5188
    %v5190 = vpop.f32.mrf.mxu0
    %v5191 = vadd.f32 %v4862, %v5190
    %5192 = vmatmul.bf16.gmra.mxu0 %v3646
    %v5193 = vpop.f32.mrf.mxu0
    %v5194 = vadd.f32 %v4865, %v5193
    %v5195 = vpop.f32.mrf.mxu0
    %v5196 = vadd.f32 %v4867, %v5195
    %5197 = vmatmul.bf16.gmra.mxu0 %v3650
    %v5198 = vpop.f32.mrf.mxu0
    %v5199 = vadd.f32 %v4870, %v5198
    %v5200 = vpop.f32.mrf.mxu0
    %v5201 = vadd.f32 %v4872, %v5200
    %5202 = vmatmul.bf16.gmra.mxu0 %v3654
    %v5203 = vpop.f32.mrf.mxu0
    %v5204 = vadd.f32 %v4875, %v5203
    %v5205 = vpop.f32.mrf.mxu0
    %v5206 = vadd.f32 %v4877, %v5205
    %5207 = vmatmul.bf16.gmra.mxu0 %v3658
    %v5208 = vpop.f32.mrf.mxu0
    %v5209 = vadd.f32 %v4880, %v5208
    %v5210 = vpop.f32.mrf.mxu0
    %v5211 = vadd.f32 %v4882, %v5210
    %5212 = vmatmul.bf16.gmra.mxu0 %v3662
    %v5213 = vpop.f32.mrf.mxu0
    %v5214 = vadd.f32 %v4885, %v5213
    %v5215 = vpop.f32.mrf.mxu0
    %v5216 = vadd.f32 %v4887, %v5215
    %5217 = vmatmul.bf16.gmra.mxu0 %v3666
    %v5218 = vpop.f32.mrf.mxu0
    %v5219 = vadd.f32 %v4890, %v5218
    %v5220 = vpop.f32.mrf.mxu0
    %v5221 = vadd.f32 %v4892, %v5220
    %5222 = vmatmul.bf16.gmra.mxu0 %v3670
    %v5223 = vpop.f32.mrf.mxu0
    %v5224 = vadd.f32 %v4895, %v5223
    %v5225 = vpop.f32.mrf.mxu0
    %v5226 = vadd.f32 %v4897, %v5225
    %5227 = vmatmul.bf16.gmra.mxu0 %v3674
    %v5228 = vpop.f32.mrf.mxu0
    %v5229 = vadd.f32 %v4900, %v5228
    %v5230 = vpop.f32.mrf.mxu0
    %v5231 = vadd.f32 %v4902, %v5230
    %5232 = vmatmul.bf16.gmra.mxu0 %v3678
    %v5233 = vpop.f32.mrf.mxu0
    %v5234 = vadd.f32 %v4905, %v5233
    %v5235 = vpop.f32.mrf.mxu0
    %v5236 = vadd.f32 %v4907, %v5235
    %5237 = vmatmul.bf16.gmra.mxu0 %v3682
    %v5238 = vpop.f32.mrf.mxu0
    %v5239 = vadd.f32 %v4910, %v5238
    %v5240 = vpop.f32.mrf.mxu0
    %v5241 = vadd.f32 %v4912, %v5240
    %5242 = vmatmul.bf16.gmra.mxu0 %v3686
    %v5243 = vpop.f32.mrf.mxu0
    %v5244 = vadd.f32 %v4915, %v5243
    %v5245 = vpop.f32.mrf.mxu0
    %v5246 = vadd.f32 %v4917, %v5245
    %5247 = vmatmul.bf16.gmra.mxu0 %v3690
    %v5248 = vpop.f32.mrf.mxu0
    %v5249 = vadd.f32 %v4920, %v5248
    %v5250 = vpop.f32.mrf.mxu0
    %v5251 = vadd.f32 %v4922, %v5250
    %5252 = vmatmul.bf16.gmra.mxu0 %v3694
    %v5253 = vpop.f32.mrf.mxu0
    %v5254 = vadd.f32 %v4925, %v5253
    %v5255 = vpop.f32.mrf.mxu0
    %v5256 = vadd.f32 %v4927, %v5255
    %5257 = vmatmul.bf16.gmra.mxu0 %v3698
    %v5258 = vpop.f32.mrf.mxu0
    %v5259 = vadd.f32 %v4930, %v5258
    %v5260 = vpop.f32.mrf.mxu0
    %v5261 = vadd.f32 %v4932, %v5260
    %5262 = vmatmul.bf16.gmra.mxu0 %v3702
    %v5263 = vpop.f32.mrf.mxu0
    %v5264 = vadd.f32 %v4935, %v5263
    %v5265 = vpop.f32.mrf.mxu0
    %v5266 = vadd.f32 %v4937, %v5265
    %5267 = vmatmul.bf16.gmra.mxu0 %v3706
    %v5268 = vpop.f32.mrf.mxu0
    %v5269 = vadd.f32 %v4940, %v5268
    %v5270 = vpop.f32.mrf.mxu0
    %v5271 = vadd.f32 %v4942, %v5270
    %5272 = vmatmul.bf16.gmra.mxu0 %v3710
    %v5273 = vpop.f32.mrf.mxu0
    %v5274 = vadd.f32 %v4945, %v5273
    %v5275 = vpop.f32.mrf.mxu0
    %v5276 = vadd.f32 %v4947, %v5275
    %5277 = vmatmul.bf16.gmra.mxu0 %v3714
    %v5278 = vpop.f32.mrf.mxu0
    %v5279 = vadd.f32 %v4950, %v5278
    %v5280 = vpop.f32.mrf.mxu0
    %v5281 = vadd.f32 %v4952, %v5280
    %5282 = vmatmul.bf16.gmra.mxu0 %v3718
    %v5283 = vpop.f32.mrf.mxu0
    %v5284 = vadd.f32 %v4955, %v5283
    %v5285 = vpop.f32.mrf.mxu0
    %v5286 = vadd.f32 %v4957, %v5285
    %5287 = vmatmul.bf16.gmra.mxu0 %v3722
    %v5288 = vpop.f32.mrf.mxu0
    %v5289 = vadd.f32 %v4960, %v5288
    %v5290 = vpop.f32.mrf.mxu0
    %v5291 = vadd.f32 %v4962, %v5290
    %5292 = vmatmul.bf16.gmra.mxu0 %v3726
    %v5293 = vpop.f32.mrf.mxu0
    %v5294 = vadd.f32 %v4965, %v5293
    %v5295 = vpop.f32.mrf.mxu0
    %v5296 = vadd.f32 %v4967, %v5295
    %5297 = vmatmul.bf16.gmra.mxu0 %v3730
    %v5298 = vpop.f32.mrf.mxu0
    %v5299 = vadd.f32 %v4970, %v5298
    %v5300 = vpop.f32.mrf.mxu0
    %v5301 = vadd.f32 %v4972, %v5300
    %5302 = vdwg.mxu0
    %5303 = vmatpush.bf16.msra.mxu0 %v1634
    %5304 = vmatpush.bf16.msra.mxu0 %v1632
    %5305 = vmatpush.bf16.msra.mxu0 %v1630
    %5306 = vmatpush.bf16.msra.mxu0 %v1628
    %5307 = vmatpush.bf16.msra.mxu0 %v1626
    %5308 = vmatpush.bf16.msra.mxu0 %v1624
    %5309 = vmatpush.bf16.msra.mxu0 %v1622
    %5310 = vmatpush.bf16.msra.mxu0 %v1620
    %5311 = vmatmul.bf16.gmra.mxu0 %v3475
    %v5312 = vpop.f32.mrf.mxu0
    %v5313 = vadd.f32 %v2070, %v5312
    %v5314 = vpop.f32.mrf.mxu0
    %v5315 = vadd.f32 %v2075, %v5314
    %5316 = vmatmul.bf16.gmra.mxu0 %v3479
    %v5317 = vpop.f32.mrf.mxu0
    %v5318 = vadd.f32 %v2080, %v5317
    %v5319 = vpop.f32.mrf.mxu0
    %v5320 = vadd.f32 %v2085, %v5319
    %5321 = vmatmul.bf16.gmra.mxu0 %v3483
    %v5322 = vpop.f32.mrf.mxu0
    %v5323 = vadd.f32 %v2090, %v5322
    %v5324 = vpop.f32.mrf.mxu0
    %v5325 = vadd.f32 %v2095, %v5324
    %5326 = vmatmul.bf16.gmra.mxu0 %v3487
    %v5327 = vpop.f32.mrf.mxu0
    %v5328 = vadd.f32 %v2100, %v5327
    %v5329 = vpop.f32.mrf.mxu0
    %v5330 = vadd.f32 %v2105, %v5329
    %5331 = vmatmul.bf16.gmra.mxu0 %v3491
    %v5332 = vpop.f32.mrf.mxu0
    %v5333 = vadd.f32 %v2110, %v5332
    %v5334 = vpop.f32.mrf.mxu0
    %v5335 = vadd.f32 %v2115, %v5334
    %5336 = vmatmul.bf16.gmra.mxu0 %v3495
    %v5337 = vpop.f32.mrf.mxu0
    %v5338 = vadd.f32 %v2120, %v5337
    %v5339 = vpop.f32.mrf.mxu0
    %v5340 = vadd.f32 %v2125, %v5339
    %5341 = vmatmul.bf16.gmra.mxu0 %v3499
    %v5342 = vpop.f32.mrf.mxu0
    %v5343 = vadd.f32 %v2130, %v5342
    %v5344 = vpop.f32.mrf.mxu0
    %v5345 = vadd.f32 %v2135, %v5344
    %5346 = vmatmul.bf16.gmra.mxu0 %v3503
    %v5347 = vpop.f32.mrf.mxu0
    %v5348 = vadd.f32 %v2140, %v5347
    %v5349 = vpop.f32.mrf.mxu0
    %v5350 = vadd.f32 %v2145, %v5349
    %5351 = vmatmul.bf16.gmra.mxu0 %v3507
    %v5352 = vpop.f32.mrf.mxu0
    %v5353 = vadd.f32 %v2150, %v5352
    %v5354 = vpop.f32.mrf.mxu0
    %v5355 = vadd.f32 %v2155, %v5354
    %5356 = vmatmul.bf16.gmra.mxu0 %v3511
    %v5357 = vpop.f32.mrf.mxu0
    %v5358 = vadd.f32 %v2160, %v5357
    %v5359 = vpop.f32.mrf.mxu0
    %v5360 = vadd.f32 %v2165, %v5359
    %5361 = vmatmul.bf16.gmra.mxu0 %v3515
    %v5362 = vpop.f32.mrf.mxu0
    %v5363 = vadd.f32 %v2170, %v5362
    %v5364 = vpop.f32.mrf.mxu0
    %v5365 = vadd.f32 %v2175, %v5364
    %5366 = vmatmul.bf16.gmra.mxu0 %v3519
    %v5367 = vpop.f32.mrf.mxu0
    %v5368 = vadd.f32 %v2180, %v5367
    %v5369 = vpop.f32.mrf.mxu0
    %v5370 = vadd.f32 %v2185, %v5369
    %5371 = vmatmul.bf16.gmra.mxu0 %v3523
    %v5372 = vpop.f32.mrf.mxu0
    %v5373 = vadd.f32 %v2190, %v5372
    %v5374 = vpop.f32.mrf.mxu0
    %v5375 = vadd.f32 %v2195, %v5374
    %5376 = vmatmul.bf16.gmra.mxu0 %v3527
    %v5377 = vpop.f32.mrf.mxu0
    %v5378 = vadd.f32 %v2200, %v5377
    %v5379 = vpop.f32.mrf.mxu0
    %v5380 = vadd.f32 %v2205, %v5379
    %5381 = vmatmul.bf16.gmra.mxu0 %v3531
    %v5382 = vpop.f32.mrf.mxu0
    %v5383 = vadd.f32 %v2210, %v5382
    %v5384 = vpop.f32.mrf.mxu0
    %v5385 = vadd.f32 %v2215, %v5384
    %5386 = vmatmul.bf16.gmra.mxu0 %v3535
    %v5387 = vpop.f32.mrf.mxu0
    %v5388 = vadd.f32 %v2220, %v5387
    %v5389 = vpop.f32.mrf.mxu0
    %v5390 = vadd.f32 %v2225, %v5389
    %5391 = vmatmul.bf16.gmra.mxu0 %v3539
    %v5392 = vpop.f32.mrf.mxu0
    %v5393 = vadd.f32 %v2230, %v5392
    %v5394 = vpop.f32.mrf.mxu0
    %v5395 = vadd.f32 %v2235, %v5394
    %5396 = vmatmul.bf16.gmra.mxu0 %v3543
    %v5397 = vpop.f32.mrf.mxu0
    %v5398 = vadd.f32 %v2240, %v5397
    %v5399 = vpop.f32.mrf.mxu0
    %v5400 = vadd.f32 %v2245, %v5399
    %5401 = vmatmul.bf16.gmra.mxu0 %v3547
    %v5402 = vpop.f32.mrf.mxu0
    %v5403 = vadd.f32 %v2250, %v5402
    %v5404 = vpop.f32.mrf.mxu0
    %v5405 = vadd.f32 %v2255, %v5404
    %5406 = vmatmul.bf16.gmra.mxu0 %v3551
    %v5407 = vpop.f32.mrf.mxu0
    %v5408 = vadd.f32 %v2260, %v5407
    %v5409 = vpop.f32.mrf.mxu0
    %v5410 = vadd.f32 %v2265, %v5409
    %5411 = vmatmul.bf16.gmra.mxu0 %v3555
    %v5412 = vpop.f32.mrf.mxu0
    %v5413 = vadd.f32 %v2270, %v5412
    %v5414 = vpop.f32.mrf.mxu0
    %v5415 = vadd.f32 %v2275, %v5414
    %5416 = vmatmul.bf16.gmra.mxu0 %v3559
    %v5417 = vpop.f32.mrf.mxu0
    %v5418 = vadd.f32 %v2280, %v5417
    %v5419 = vpop.f32.mrf.mxu0
    %v5420 = vadd.f32 %v2285, %v5419
    %5421 = vmatmul.bf16.gmra.mxu0 %v3563
    %v5422 = vpop.f32.mrf.mxu0
    %v5423 = vadd.f32 %v2290, %v5422
    %v5424 = vpop.f32.mrf.mxu0
    %v5425 = vadd.f32 %v2295, %v5424
    %5426 = vmatmul.bf16.gmra.mxu0 %v3567
    %v5427 = vpop.f32.mrf.mxu0
    %v5428 = vadd.f32 %v2300, %v5427
    %v5429 = vpop.f32.mrf.mxu0
    %v5430 = vadd.f32 %v2305, %v5429
    %5431 = vmatmul.bf16.gmra.mxu0 %v3571
    %v5432 = vpop.f32.mrf.mxu0
    %v5433 = vadd.f32 %v2310, %v5432
    %v5434 = vpop.f32.mrf.mxu0
    %v5435 = vadd.f32 %v2315, %v5434
    %5436 = vmatmul.bf16.gmra.mxu0 %v3575
    %v5437 = vpop.f32.mrf.mxu0
    %v5438 = vadd.f32 %v2320, %v5437
    %v5439 = vpop.f32.mrf.mxu0
    %v5440 = vadd.f32 %v2325, %v5439
    %5441 = vmatmul.bf16.gmra.mxu0 %v3579
    %v5442 = vpop.f32.mrf.mxu0
    %v5443 = vadd.f32 %v2330, %v5442
    %v5444 = vpop.f32.mrf.mxu0
    %v5445 = vadd.f32 %v2335, %v5444
    %5446 = vmatmul.bf16.gmra.mxu0 %v3583
    %v5447 = vpop.f32.mrf.mxu0
    %v5448 = vadd.f32 %v2340, %v5447
    %v5449 = vpop.f32.mrf.mxu0
    %v5450 = vadd.f32 %v2345, %v5449
    %5451 = vmatmul.bf16.gmra.mxu0 %v3587
    %v5452 = vpop.f32.mrf.mxu0
    %v5453 = vadd.f32 %v2350, %v5452
    %v5454 = vpop.f32.mrf.mxu0
    %v5455 = vadd.f32 %v2355, %v5454
    %5456 = vmatmul.bf16.gmra.mxu0 %v3591
    %v5457 = vpop.f32.mrf.mxu0
    %v5458 = vadd.f32 %v2360, %v5457
    %v5459 = vpop.f32.mrf.mxu0
    %v5460 = vadd.f32 %v2365, %v5459
    %5461 = vmatmul.bf16.gmra.mxu0 %v3595
    %v5462 = vpop.f32.mrf.mxu0
    %v5463 = vadd.f32 %v2370, %v5462
    %v5464 = vpop.f32.mrf.mxu0
    %v5465 = vadd.f32 %v2375, %v5464
    %5466 = vmatmul.bf16.gmra.mxu0 %v3599
    %v5467 = vpop.f32.mrf.mxu0
    %v5468 = vadd.f32 %v2380, %v5467
    %v5469 = vpop.f32.mrf.mxu0
    %v5470 = vadd.f32 %v2385, %v5469
    %5471 = vmatmul.bf16.gmra.mxu0 %v3603
    %v5472 = vpop.f32.mrf.mxu0
    %v5473 = vadd.f32 %v2390, %v5472
    %v5474 = vpop.f32.mrf.mxu0
    %v5475 = vadd.f32 %v2395, %v5474
    %5476 = vmatmul.bf16.gmra.mxu0 %v3607
    %v5477 = vpop.f32.mrf.mxu0
    %v5478 = vadd.f32 %v2400, %v5477
    %v5479 = vpop.f32.mrf.mxu0
    %v5480 = vadd.f32 %v2405, %v5479
    %5481 = vmatmul.bf16.gmra.mxu0 %v3611
    %v5482 = vpop.f32.mrf.mxu0
    %v5483 = vadd.f32 %v2410, %v5482
    %v5484 = vpop.f32.mrf.mxu0
    %v5485 = vadd.f32 %v2415, %v5484
    %5486 = vmatmul.bf16.gmra.mxu0 %v3615
    %v5487 = vpop.f32.mrf.mxu0
    %v5488 = vadd.f32 %v2420, %v5487
    %v5489 = vpop.f32.mrf.mxu0
    %v5490 = vadd.f32 %v2425, %v5489
    %5491 = vmatmul.bf16.gmra.mxu0 %v3619
    %v5492 = vpop.f32.mrf.mxu0
    %v5493 = vadd.f32 %v2430, %v5492
    %v5494 = vpop.f32.mrf.mxu0
    %v5495 = vadd.f32 %v2435, %v5494
    %5496 = vmatmul.bf16.gmra.mxu0 %v3623
    %v5497 = vpop.f32.mrf.mxu0
    %v5498 = vadd.f32 %v2440, %v5497
    %v5499 = vpop.f32.mrf.mxu0
    %v5500 = vadd.f32 %v2445, %v5499
    %5501 = vmatmul.bf16.gmra.mxu0 %v3627
    %v5502 = vpop.f32.mrf.mxu0
    %v5503 = vadd.f32 %v2450, %v5502
    %v5504 = vpop.f32.mrf.mxu0
    %v5505 = vadd.f32 %v2455, %v5504
    %5506 = vmatmul.bf16.gmra.mxu0 %v3631
    %v5507 = vpop.f32.mrf.mxu0
    %v5508 = vadd.f32 %v2460, %v5507
    %v5509 = vpop.f32.mrf.mxu0
    %v5510 = vadd.f32 %v2465, %v5509
    %5511 = vmatmul.bf16.gmra.mxu0 %v3635
    %v5512 = vpop.f32.mrf.mxu0
    %v5513 = vadd.f32 %v2470, %v5512
    %v5514 = vpop.f32.mrf.mxu0
    %v5515 = vadd.f32 %v2475, %v5514
    %5516 = vmatmul.bf16.gmra.mxu0 %v3639
    %v5517 = vpop.f32.mrf.mxu0
    %v5518 = vadd.f32 %v2480, %v5517
    %v5519 = vpop.f32.mrf.mxu0
    %v5520 = vadd.f32 %v2485, %v5519
    %5521 = vmatmul.bf16.gmra.mxu0 %v3643
    %v5522 = vpop.f32.mrf.mxu0
    %v5523 = vadd.f32 %v2490, %v5522
    %v5524 = vpop.f32.mrf.mxu0
    %v5525 = vadd.f32 %v2495, %v5524
    %5526 = vmatmul.bf16.gmra.mxu0 %v3647
    %v5527 = vpop.f32.mrf.mxu0
    %v5528 = vadd.f32 %v2500, %v5527
    %v5529 = vpop.f32.mrf.mxu0
    %v5530 = vadd.f32 %v2505, %v5529
    %5531 = vmatmul.bf16.gmra.mxu0 %v3651
    %v5532 = vpop.f32.mrf.mxu0
    %v5533 = vadd.f32 %v2510, %v5532
    %v5534 = vpop.f32.mrf.mxu0
    %v5535 = vadd.f32 %v2515, %v5534
    %5536 = vmatmul.bf16.gmra.mxu0 %v3655
    %v5537 = vpop.f32.mrf.mxu0
    %v5538 = vadd.f32 %v2520, %v5537
    %v5539 = vpop.f32.mrf.mxu0
    %v5540 = vadd.f32 %v2525, %v5539
    %5541 = vmatmul.bf16.gmra.mxu0 %v3659
    %v5542 = vpop.f32.mrf.mxu0
    %v5543 = vadd.f32 %v2530, %v5542
    %v5544 = vpop.f32.mrf.mxu0
    %v5545 = vadd.f32 %v2535, %v5544
    %5546 = vmatmul.bf16.gmra.mxu0 %v3663
    %v5547 = vpop.f32.mrf.mxu0
    %v5548 = vadd.f32 %v2540, %v5547
    %v5549 = vpop.f32.mrf.mxu0
    %v5550 = vadd.f32 %v2545, %v5549
    %5551 = vmatmul.bf16.gmra.mxu0 %v3667
    %v5552 = vpop.f32.mrf.mxu0
    %v5553 = vadd.f32 %v2550, %v5552
    %v5554 = vpop.f32.mrf.mxu0
    %v5555 = vadd.f32 %v2555, %v5554
    %5556 = vmatmul.bf16.gmra.mxu0 %v3671
    %v5557 = vpop.f32.mrf.mxu0
    %v5558 = vadd.f32 %v2560, %v5557
    %v5559 = vpop.f32.mrf.mxu0
    %v5560 = vadd.f32 %v2565, %v5559
    %5561 = vmatmul.bf16.gmra.mxu0 %v3675
    %v5562 = vpop.f32.mrf.mxu0
    %v5563 = vadd.f32 %v2570, %v5562
    %v5564 = vpop.f32.mrf.mxu0
    %v5565 = vadd.f32 %v2575, %v5564
    %5566 = vmatmul.bf16.gmra.mxu0 %v3679
    %v5567 = vpop.f32.mrf.mxu0
    %v5568 = vadd.f32 %v2580, %v5567
    %v5569 = vpop.f32.mrf.mxu0
    %v5570 = vadd.f32 %v2585, %v5569
    %5571 = vmatmul.bf16.gmra.mxu0 %v3683
    %v5572 = vpop.f32.mrf.mxu0
    %v5573 = vadd.f32 %v2590, %v5572
    %v5574 = vpop.f32.mrf.mxu0
    %v5575 = vadd.f32 %v2595, %v5574
    %5576 = vmatmul.bf16.gmra.mxu0 %v3687
    %v5577 = vpop.f32.mrf.mxu0
    %v5578 = vadd.f32 %v2600, %v5577
    %v5579 = vpop.f32.mrf.mxu0
    %v5580 = vadd.f32 %v2605, %v5579
    %5581 = vmatmul.bf16.gmra.mxu0 %v3691
    %v5582 = vpop.f32.mrf.mxu0
    %v5583 = vadd.f32 %v2610, %v5582
    %v5584 = vpop.f32.mrf.mxu0
    %v5585 = vadd.f32 %v2615, %v5584
    %5586 = vmatmul.bf16.gmra.mxu0 %v3695
    %v5587 = vpop.f32.mrf.mxu0
    %v5588 = vadd.f32 %v2620, %v5587
    %v5589 = vpop.f32.mrf.mxu0
    %v5590 = vadd.f32 %v2625, %v5589
    %5591 = vmatmul.bf16.gmra.mxu0 %v3699
    %v5592 = vpop.f32.mrf.mxu0
    %v5593 = vadd.f32 %v2630, %v5592
    %v5594 = vpop.f32.mrf.mxu0
    %v5595 = vadd.f32 %v2635, %v5594
    %5596 = vmatmul.bf16.gmra.mxu0 %v3703
    %v5597 = vpop.f32.mrf.mxu0
    %v5598 = vadd.f32 %v2640, %v5597
    %v5599 = vpop.f32.mrf.mxu0
    %v5600 = vadd.f32 %v2645, %v5599
    %5601 = vmatmul.bf16.gmra.mxu0 %v3707
    %v5602 = vpop.f32.mrf.mxu0
    %v5603 = vadd.f32 %v2650, %v5602
    %v5604 = vpop.f32.mrf.mxu0
    %v5605 = vadd.f32 %v2655, %v5604
    %5606 = vmatmul.bf16.gmra.mxu0 %v3711
    %v5607 = vpop.f32.mrf.mxu0
    %v5608 = vadd.f32 %v2660, %v5607
    %v5609 = vpop.f32.mrf.mxu0
    %v5610 = vadd.f32 %v2665, %v5609
    %5611 = vmatmul.bf16.gmra.mxu0 %v3715
    %v5612 = vpop.f32.mrf.mxu0
    %v5613 = vadd.f32 %v2670, %v5612
    %v5614 = vpop.f32.mrf.mxu0
    %v5615 = vadd.f32 %v2675, %v5614
    %5616 = vmatmul.bf16.gmra.mxu0 %v3719
    %v5617 = vpop.f32.mrf.mxu0
    %v5618 = vadd.f32 %v2680, %v5617
    %v5619 = vpop.f32.mrf.mxu0
    %v5620 = vadd.f32 %v2685, %v5619
    %5621 = vmatmul.bf16.gmra.mxu0 %v3723
    %v5622 = vpop.f32.mrf.mxu0
    %v5623 = vadd.f32 %v2690, %v5622
    %v5624 = vpop.f32.mrf.mxu0
    %v5625 = vadd.f32 %v2695, %v5624
    %5626 = vmatmul.bf16.gmra.mxu0 %v3727
    %v5627 = vpop.f32.mrf.mxu0
    %v5628 = vadd.f32 %v2700, %v5627
    %v5629 = vpop.f32.mrf.mxu0
    %v5630 = vadd.f32 %v2705, %v5629
    %5631 = vdwg.mxu0
    %5632 = vmatpush.bf16.msra.mxu0 %v1650
    %5633 = vmatpush.bf16.msra.mxu0 %v1648
    %5634 = vmatpush.bf16.msra.mxu0 %v1646
    %5635 = vmatpush.bf16.msra.mxu0 %v1644
    %5636 = vmatpush.bf16.msra.mxu0 %v1642
    %5637 = vmatpush.bf16.msra.mxu0 %v1640
    %5638 = vmatpush.bf16.msra.mxu0 %v1638
    %5639 = vmatpush.bf16.msra.mxu0 %v1636
    %5640 = vmatmul.bf16.gmra.mxu0 %v3476
    %v5641 = vpop.f32.mrf.mxu0
    %v5642 = vadd.f32 %v5313, %v5641
    %v5643 = vpop.f32.mrf.mxu0
    %v5644 = vadd.f32 %v5315, %v5643
    %5645 = vmatmul.bf16.gmra.mxu0 %v3480
    %v5646 = vpop.f32.mrf.mxu0
    %v5647 = vadd.f32 %v5318, %v5646
    %v5648 = vpop.f32.mrf.mxu0
    %v5649 = vadd.f32 %v5320, %v5648
    %5650 = vmatmul.bf16.gmra.mxu0 %v3484
    %v5651 = vpop.f32.mrf.mxu0
    %v5652 = vadd.f32 %v5323, %v5651
    %v5653 = vpop.f32.mrf.mxu0
    %v5654 = vadd.f32 %v5325, %v5653
    %5655 = vmatmul.bf16.gmra.mxu0 %v3488
    %v5656 = vpop.f32.mrf.mxu0
    %v5657 = vadd.f32 %v5328, %v5656
    %v5658 = vpop.f32.mrf.mxu0
    %v5659 = vadd.f32 %v5330, %v5658
    %5660 = vmatmul.bf16.gmra.mxu0 %v3492
    %v5661 = vpop.f32.mrf.mxu0
    %v5662 = vadd.f32 %v5333, %v5661
    %v5663 = vpop.f32.mrf.mxu0
    %v5664 = vadd.f32 %v5335, %v5663
    %5665 = vmatmul.bf16.gmra.mxu0 %v3496
    %v5666 = vpop.f32.mrf.mxu0
    %v5667 = vadd.f32 %v5338, %v5666
    %v5668 = vpop.f32.mrf.mxu0
    %v5669 = vadd.f32 %v5340, %v5668
    %5670 = vmatmul.bf16.gmra.mxu0 %v3500
    %v5671 = vpop.f32.mrf.mxu0
    %v5672 = vadd.f32 %v5343, %v5671
    %v5673 = vpop.f32.mrf.mxu0
    %v5674 = vadd.f32 %v5345, %v5673
    %5675 = vmatmul.bf16.gmra.mxu0 %v3504
    %v5676 = vpop.f32.mrf.mxu0
    %v5677 = vadd.f32 %v5348, %v5676
    %v5678 = vpop.f32.mrf.mxu0
    %v5679 = vadd.f32 %v5350, %v5678
    %5680 = vmatmul.bf16.gmra.mxu0 %v3508
    %v5681 = vpop.f32.mrf.mxu0
    %v5682 = vadd.f32 %v5353, %v5681
    %v5683 = vpop.f32.mrf.mxu0
    %v5684 = vadd.f32 %v5355, %v5683
    %5685 = vmatmul.bf16.gmra.mxu0 %v3512
    %v5686 = vpop.f32.mrf.mxu0
    %v5687 = vadd.f32 %v5358, %v5686
    %v5688 = vpop.f32.mrf.mxu0
    %v5689 = vadd.f32 %v5360, %v5688
    %5690 = vmatmul.bf16.gmra.mxu0 %v3516
    %v5691 = vpop.f32.mrf.mxu0
    %v5692 = vadd.f32 %v5363, %v5691
    %v5693 = vpop.f32.mrf.mxu0
    %v5694 = vadd.f32 %v5365, %v5693
    %5695 = vmatmul.bf16.gmra.mxu0 %v3520
    %v5696 = vpop.f32.mrf.mxu0
    %v5697 = vadd.f32 %v5368, %v5696
    %v5698 = vpop.f32.mrf.mxu0
    %v5699 = vadd.f32 %v5370, %v5698
    %5700 = vmatmul.bf16.gmra.mxu0 %v3524
    %v5701 = vpop.f32.mrf.mxu0
    %v5702 = vadd.f32 %v5373, %v5701
    %v5703 = vpop.f32.mrf.mxu0
    %v5704 = vadd.f32 %v5375, %v5703
    %5705 = vmatmul.bf16.gmra.mxu0 %v3528
    %v5706 = vpop.f32.mrf.mxu0
    %v5707 = vadd.f32 %v5378, %v5706
    %v5708 = vpop.f32.mrf.mxu0
    %v5709 = vadd.f32 %v5380, %v5708
    %5710 = vmatmul.bf16.gmra.mxu0 %v3532
    %v5711 = vpop.f32.mrf.mxu0
    %v5712 = vadd.f32 %v5383, %v5711
    %v5713 = vpop.f32.mrf.mxu0
    %v5714 = vadd.f32 %v5385, %v5713
    %5715 = vmatmul.bf16.gmra.mxu0 %v3536
    %v5716 = vpop.f32.mrf.mxu0
    %v5717 = vadd.f32 %v5388, %v5716
    %v5718 = vpop.f32.mrf.mxu0
    %v5719 = vadd.f32 %v5390, %v5718
    %5720 = vmatmul.bf16.gmra.mxu0 %v3540
    %v5721 = vpop.f32.mrf.mxu0
    %v5722 = vadd.f32 %v5393, %v5721
    %v5723 = vpop.f32.mrf.mxu0
    %v5724 = vadd.f32 %v5395, %v5723
    %5725 = vmatmul.bf16.gmra.mxu0 %v3544
    %v5726 = vpop.f32.mrf.mxu0
    %v5727 = vadd.f32 %v5398, %v5726
    %v5728 = vpop.f32.mrf.mxu0
    %v5729 = vadd.f32 %v5400, %v5728
    %5730 = vmatmul.bf16.gmra.mxu0 %v3548
    %v5731 = vpop.f32.mrf.mxu0
    %v5732 = vadd.f32 %v5403, %v5731
    %v5733 = vpop.f32.mrf.mxu0
    %v5734 = vadd.f32 %v5405, %v5733
    %5735 = vmatmul.bf16.gmra.mxu0 %v3552
    %v5736 = vpop.f32.mrf.mxu0
    %v5737 = vadd.f32 %v5408, %v5736
    %v5738 = vpop.f32.mrf.mxu0
    %v5739 = vadd.f32 %v5410, %v5738
    %5740 = vmatmul.bf16.gmra.mxu0 %v3556
    %v5741 = vpop.f32.mrf.mxu0
    %v5742 = vadd.f32 %v5413, %v5741
    %v5743 = vpop.f32.mrf.mxu0
    %v5744 = vadd.f32 %v5415, %v5743
    %5745 = vmatmul.bf16.gmra.mxu0 %v3560
    %v5746 = vpop.f32.mrf.mxu0
    %v5747 = vadd.f32 %v5418, %v5746
    %v5748 = vpop.f32.mrf.mxu0
    %v5749 = vadd.f32 %v5420, %v5748
    %5750 = vmatmul.bf16.gmra.mxu0 %v3564
    %v5751 = vpop.f32.mrf.mxu0
    %v5752 = vadd.f32 %v5423, %v5751
    %v5753 = vpop.f32.mrf.mxu0
    %v5754 = vadd.f32 %v5425, %v5753
    %5755 = vmatmul.bf16.gmra.mxu0 %v3568
    %v5756 = vpop.f32.mrf.mxu0
    %v5757 = vadd.f32 %v5428, %v5756
    %v5758 = vpop.f32.mrf.mxu0
    %v5759 = vadd.f32 %v5430, %v5758
    %5760 = vmatmul.bf16.gmra.mxu0 %v3572
    %v5761 = vpop.f32.mrf.mxu0
    %v5762 = vadd.f32 %v5433, %v5761
    %v5763 = vpop.f32.mrf.mxu0
    %v5764 = vadd.f32 %v5435, %v5763
    %5765 = vmatmul.bf16.gmra.mxu0 %v3576
    %v5766 = vpop.f32.mrf.mxu0
    %v5767 = vadd.f32 %v5438, %v5766
    %v5768 = vpop.f32.mrf.mxu0
    %v5769 = vadd.f32 %v5440, %v5768
    %5770 = vmatmul.bf16.gmra.mxu0 %v3580
    %v5771 = vpop.f32.mrf.mxu0
    %v5772 = vadd.f32 %v5443, %v5771
    %v5773 = vpop.f32.mrf.mxu0
    %v5774 = vadd.f32 %v5445, %v5773
    %5775 = vmatmul.bf16.gmra.mxu0 %v3584
    %v5776 = vpop.f32.mrf.mxu0
    %v5777 = vadd.f32 %v5448, %v5776
    %v5778 = vpop.f32.mrf.mxu0
    %v5779 = vadd.f32 %v5450, %v5778
    %5780 = vmatmul.bf16.gmra.mxu0 %v3588
    %v5781 = vpop.f32.mrf.mxu0
    %v5782 = vadd.f32 %v5453, %v5781
    %v5783 = vpop.f32.mrf.mxu0
    %v5784 = vadd.f32 %v5455, %v5783
    %5785 = vmatmul.bf16.gmra.mxu0 %v3592
    %v5786 = vpop.f32.mrf.mxu0
    %v5787 = vadd.f32 %v5458, %v5786
    %v5788 = vpop.f32.mrf.mxu0
    %v5789 = vadd.f32 %v5460, %v5788
    %5790 = vmatmul.bf16.gmra.mxu0 %v3596
    %v5791 = vpop.f32.mrf.mxu0
    %v5792 = vadd.f32 %v5463, %v5791
    %v5793 = vpop.f32.mrf.mxu0
    %v5794 = vadd.f32 %v5465, %v5793
    %5795 = vmatmul.bf16.gmra.mxu0 %v3600
    %v5796 = vpop.f32.mrf.mxu0
    %v5797 = vadd.f32 %v5468, %v5796
    %v5798 = vpop.f32.mrf.mxu0
    %v5799 = vadd.f32 %v5470, %v5798
    %5800 = vmatmul.bf16.gmra.mxu0 %v3604
    %v5801 = vpop.f32.mrf.mxu0
    %v5802 = vadd.f32 %v5473, %v5801
    %v5803 = vpop.f32.mrf.mxu0
    %v5804 = vadd.f32 %v5475, %v5803
    %5805 = vmatmul.bf16.gmra.mxu0 %v3608
    %v5806 = vpop.f32.mrf.mxu0
    %v5807 = vadd.f32 %v5478, %v5806
    %v5808 = vpop.f32.mrf.mxu0
    %v5809 = vadd.f32 %v5480, %v5808
    %5810 = vmatmul.bf16.gmra.mxu0 %v3612
    %v5811 = vpop.f32.mrf.mxu0
    %v5812 = vadd.f32 %v5483, %v5811
    %v5813 = vpop.f32.mrf.mxu0
    %v5814 = vadd.f32 %v5485, %v5813
    %5815 = vmatmul.bf16.gmra.mxu0 %v3616
    %v5816 = vpop.f32.mrf.mxu0
    %v5817 = vadd.f32 %v5488, %v5816
    %v5818 = vpop.f32.mrf.mxu0
    %v5819 = vadd.f32 %v5490, %v5818
    %5820 = vmatmul.bf16.gmra.mxu0 %v3620
    %v5821 = vpop.f32.mrf.mxu0
    %v5822 = vadd.f32 %v5493, %v5821
    %v5823 = vpop.f32.mrf.mxu0
    %v5824 = vadd.f32 %v5495, %v5823
    %5825 = vmatmul.bf16.gmra.mxu0 %v3624
    %v5826 = vpop.f32.mrf.mxu0
    %v5827 = vadd.f32 %v5498, %v5826
    %v5828 = vpop.f32.mrf.mxu0
    %v5829 = vadd.f32 %v5500, %v5828
    %5830 = vmatmul.bf16.gmra.mxu0 %v3628
    %v5831 = vpop.f32.mrf.mxu0
    %v5832 = vadd.f32 %v5503, %v5831
    %v5833 = vpop.f32.mrf.mxu0
    %v5834 = vadd.f32 %v5505, %v5833
    %5835 = vmatmul.bf16.gmra.mxu0 %v3632
    %v5836 = vpop.f32.mrf.mxu0
    %v5837 = vadd.f32 %v5508, %v5836
    %v5838 = vpop.f32.mrf.mxu0
    %v5839 = vadd.f32 %v5510, %v5838
    %5840 = vmatmul.bf16.gmra.mxu0 %v3636
    %v5841 = vpop.f32.mrf.mxu0
    %v5842 = vadd.f32 %v5513, %v5841
    %v5843 = vpop.f32.mrf.mxu0
    %v5844 = vadd.f32 %v5515, %v5843
    %5845 = vmatmul.bf16.gmra.mxu0 %v3640
    %v5846 = vpop.f32.mrf.mxu0
    %v5847 = vadd.f32 %v5518, %v5846
    %v5848 = vpop.f32.mrf.mxu0
    %v5849 = vadd.f32 %v5520, %v5848
    %5850 = vmatmul.bf16.gmra.mxu0 %v3644
    %v5851 = vpop.f32.mrf.mxu0
    %v5852 = vadd.f32 %v5523, %v5851
    %v5853 = vpop.f32.mrf.mxu0
    %v5854 = vadd.f32 %v5525, %v5853
    %5855 = vmatmul.bf16.gmra.mxu0 %v3648
    %v5856 = vpop.f32.mrf.mxu0
    %v5857 = vadd.f32 %v5528, %v5856
    %v5858 = vpop.f32.mrf.mxu0
    %v5859 = vadd.f32 %v5530, %v5858
    %5860 = vmatmul.bf16.gmra.mxu0 %v3652
    %v5861 = vpop.f32.mrf.mxu0
    %v5862 = vadd.f32 %v5533, %v5861
    %v5863 = vpop.f32.mrf.mxu0
    %v5864 = vadd.f32 %v5535, %v5863
    %5865 = vmatmul.bf16.gmra.mxu0 %v3656
    %v5866 = vpop.f32.mrf.mxu0
    %v5867 = vadd.f32 %v5538, %v5866
    %v5868 = vpop.f32.mrf.mxu0
    %v5869 = vadd.f32 %v5540, %v5868
    %5870 = vmatmul.bf16.gmra.mxu0 %v3660
    %v5871 = vpop.f32.mrf.mxu0
    %v5872 = vadd.f32 %v5543, %v5871
    %v5873 = vpop.f32.mrf.mxu0
    %v5874 = vadd.f32 %v5545, %v5873
    %5875 = vmatmul.bf16.gmra.mxu0 %v3664
    %v5876 = vpop.f32.mrf.mxu0
    %v5877 = vadd.f32 %v5548, %v5876
    %v5878 = vpop.f32.mrf.mxu0
    %v5879 = vadd.f32 %v5550, %v5878
    %5880 = vmatmul.bf16.gmra.mxu0 %v3668
    %v5881 = vpop.f32.mrf.mxu0
    %v5882 = vadd.f32 %v5553, %v5881
    %v5883 = vpop.f32.mrf.mxu0
    %v5884 = vadd.f32 %v5555, %v5883
    %5885 = vmatmul.bf16.gmra.mxu0 %v3672
    %v5886 = vpop.f32.mrf.mxu0
    %v5887 = vadd.f32 %v5558, %v5886
    %v5888 = vpop.f32.mrf.mxu0
    %v5889 = vadd.f32 %v5560, %v5888
    %5890 = vmatmul.bf16.gmra.mxu0 %v3676
    %v5891 = vpop.f32.mrf.mxu0
    %v5892 = vadd.f32 %v5563, %v5891
    %v5893 = vpop.f32.mrf.mxu0
    %v5894 = vadd.f32 %v5565, %v5893
    %5895 = vmatmul.bf16.gmra.mxu0 %v3680
    %v5896 = vpop.f32.mrf.mxu0
    %v5897 = vadd.f32 %v5568, %v5896
    %v5898 = vpop.f32.mrf.mxu0
    %v5899 = vadd.f32 %v5570, %v5898
    %5900 = vmatmul.bf16.gmra.mxu0 %v3684
    %v5901 = vpop.f32.mrf.mxu0
    %v5902 = vadd.f32 %v5573, %v5901
    %v5903 = vpop.f32.mrf.mxu0
    %v5904 = vadd.f32 %v5575, %v5903
    %5905 = vmatmul.bf16.gmra.mxu0 %v3688
    %v5906 = vpop.f32.mrf.mxu0
    %v5907 = vadd.f32 %v5578, %v5906
    %v5908 = vpop.f32.mrf.mxu0
    %v5909 = vadd.f32 %v5580, %v5908
    %5910 = vmatmul.bf16.gmra.mxu0 %v3692
    %v5911 = vpop.f32.mrf.mxu0
    %v5912 = vadd.f32 %v5583, %v5911
    %v5913 = vpop.f32.mrf.mxu0
    %v5914 = vadd.f32 %v5585, %v5913
    %5915 = vmatmul.bf16.gmra.mxu0 %v3696
    %v5916 = vpop.f32.mrf.mxu0
    %v5917 = vadd.f32 %v5588, %v5916
    %v5918 = vpop.f32.mrf.mxu0
    %v5919 = vadd.f32 %v5590, %v5918
    %5920 = vmatmul.bf16.gmra.mxu0 %v3700
    %v5921 = vpop.f32.mrf.mxu0
    %v5922 = vadd.f32 %v5593, %v5921
    %v5923 = vpop.f32.mrf.mxu0
    %v5924 = vadd.f32 %v5595, %v5923
    %5925 = vmatmul.bf16.gmra.mxu0 %v3704
    %v5926 = vpop.f32.mrf.mxu0
    %v5927 = vadd.f32 %v5598, %v5926
    %v5928 = vpop.f32.mrf.mxu0
    %v5929 = vadd.f32 %v5600, %v5928
    %5930 = vmatmul.bf16.gmra.mxu0 %v3708
    %v5931 = vpop.f32.mrf.mxu0
    %v5932 = vadd.f32 %v5603, %v5931
    %v5933 = vpop.f32.mrf.mxu0
    %v5934 = vadd.f32 %v5605, %v5933
    %5935 = vmatmul.bf16.gmra.mxu0 %v3712
    %v5936 = vpop.f32.mrf.mxu0
    %v5937 = vadd.f32 %v5608, %v5936
    %v5938 = vpop.f32.mrf.mxu0
    %v5939 = vadd.f32 %v5610, %v5938
    %5940 = vmatmul.bf16.gmra.mxu0 %v3716
    %v5941 = vpop.f32.mrf.mxu0
    %v5942 = vadd.f32 %v5613, %v5941
    %v5943 = vpop.f32.mrf.mxu0
    %v5944 = vadd.f32 %v5615, %v5943
    %5945 = vmatmul.bf16.gmra.mxu0 %v3720
    %v5946 = vpop.f32.mrf.mxu0
    %v5947 = vadd.f32 %v5618, %v5946
    %v5948 = vpop.f32.mrf.mxu0
    %v5949 = vadd.f32 %v5620, %v5948
    %5950 = vmatmul.bf16.gmra.mxu0 %v3724
    %v5951 = vpop.f32.mrf.mxu0
    %v5952 = vadd.f32 %v5623, %v5951
    %v5953 = vpop.f32.mrf.mxu0
    %v5954 = vadd.f32 %v5625, %v5953
    %5955 = vmatmul.bf16.gmra.mxu0 %v3728
    %v5956 = vpop.f32.mrf.mxu0
    %v5957 = vadd.f32 %v5628, %v5956
    %v5958 = vpop.f32.mrf.mxu0
    %v5959 = vadd.f32 %v5630, %v5958
    %5960 = vdwg.mxu0
    %5961 = vmatpush.bf16.msra.mxu0 %v1666
    %5962 = vmatpush.bf16.msra.mxu0 %v1664
    %5963 = vmatpush.bf16.msra.mxu0 %v1662
    %5964 = vmatpush.bf16.msra.mxu0 %v1660
    %5965 = vmatpush.bf16.msra.mxu0 %v1658
    %5966 = vmatpush.bf16.msra.mxu0 %v1656
    %5967 = vmatpush.bf16.msra.mxu0 %v1654
    %5968 = vmatpush.bf16.msra.mxu0 %v1652
    %5969 = vmatmul.bf16.gmra.mxu0 %v3477
    %v5970 = vpop.f32.mrf.mxu0
    %v5971 = vadd.f32 %v5642, %v5970
    %v5972 = vpop.f32.mrf.mxu0
    %v5973 = vadd.f32 %v5644, %v5972
    %5974 = vmatmul.bf16.gmra.mxu0 %v3481
    %v5975 = vpop.f32.mrf.mxu0
    %v5976 = vadd.f32 %v5647, %v5975
    %v5977 = vpop.f32.mrf.mxu0
    %v5978 = vadd.f32 %v5649, %v5977
    %5979 = vmatmul.bf16.gmra.mxu0 %v3485
    %v5980 = vpop.f32.mrf.mxu0
    %v5981 = vadd.f32 %v5652, %v5980
    %v5982 = vpop.f32.mrf.mxu0
    %v5983 = vadd.f32 %v5654, %v5982
    %5984 = vmatmul.bf16.gmra.mxu0 %v3489
    %v5985 = vpop.f32.mrf.mxu0
    %v5986 = vadd.f32 %v5657, %v5985
    %v5987 = vpop.f32.mrf.mxu0
    %v5988 = vadd.f32 %v5659, %v5987
    %5989 = vmatmul.bf16.gmra.mxu0 %v3493
    %v5990 = vpop.f32.mrf.mxu0
    %v5991 = vadd.f32 %v5662, %v5990
    %v5992 = vpop.f32.mrf.mxu0
    %v5993 = vadd.f32 %v5664, %v5992
    %5994 = vmatmul.bf16.gmra.mxu0 %v3497
    %v5995 = vpop.f32.mrf.mxu0
    %v5996 = vadd.f32 %v5667, %v5995
    %v5997 = vpop.f32.mrf.mxu0
    %v5998 = vadd.f32 %v5669, %v5997
    %5999 = vmatmul.bf16.gmra.mxu0 %v3501
    %v6000 = vpop.f32.mrf.mxu0
    %v6001 = vadd.f32 %v5672, %v6000
    %v6002 = vpop.f32.mrf.mxu0
    %v6003 = vadd.f32 %v5674, %v6002
    %6004 = vmatmul.bf16.gmra.mxu0 %v3505
    %v6005 = vpop.f32.mrf.mxu0
    %v6006 = vadd.f32 %v5677, %v6005
    %v6007 = vpop.f32.mrf.mxu0
    %v6008 = vadd.f32 %v5679, %v6007
    %6009 = vmatmul.bf16.gmra.mxu0 %v3509
    %v6010 = vpop.f32.mrf.mxu0
    %v6011 = vadd.f32 %v5682, %v6010
    %v6012 = vpop.f32.mrf.mxu0
    %v6013 = vadd.f32 %v5684, %v6012
    %6014 = vmatmul.bf16.gmra.mxu0 %v3513
    %v6015 = vpop.f32.mrf.mxu0
    %v6016 = vadd.f32 %v5687, %v6015
    %v6017 = vpop.f32.mrf.mxu0
    %v6018 = vadd.f32 %v5689, %v6017
    %6019 = vmatmul.bf16.gmra.mxu0 %v3517
    %v6020 = vpop.f32.mrf.mxu0
    %v6021 = vadd.f32 %v5692, %v6020
    %v6022 = vpop.f32.mrf.mxu0
    %v6023 = vadd.f32 %v5694, %v6022
    %6024 = vmatmul.bf16.gmra.mxu0 %v3521
    %v6025 = vpop.f32.mrf.mxu0
    %v6026 = vadd.f32 %v5697, %v6025
    %v6027 = vpop.f32.mrf.mxu0
    %v6028 = vadd.f32 %v5699, %v6027
    %6029 = vmatmul.bf16.gmra.mxu0 %v3525
    %v6030 = vpop.f32.mrf.mxu0
    %v6031 = vadd.f32 %v5702, %v6030
    %v6032 = vpop.f32.mrf.mxu0
    %v6033 = vadd.f32 %v5704, %v6032
    %6034 = vmatmul.bf16.gmra.mxu0 %v3529
    %v6035 = vpop.f32.mrf.mxu0
    %v6036 = vadd.f32 %v5707, %v6035
    %v6037 = vpop.f32.mrf.mxu0
    %v6038 = vadd.f32 %v5709, %v6037
    %6039 = vmatmul.bf16.gmra.mxu0 %v3533
    %v6040 = vpop.f32.mrf.mxu0
    %v6041 = vadd.f32 %v5712, %v6040
    %v6042 = vpop.f32.mrf.mxu0
    %v6043 = vadd.f32 %v5714, %v6042
    %6044 = vmatmul.bf16.gmra.mxu0 %v3537
    %v6045 = vpop.f32.mrf.mxu0
    %v6046 = vadd.f32 %v5717, %v6045
    %v6047 = vpop.f32.mrf.mxu0
    %v6048 = vadd.f32 %v5719, %v6047
    %6049 = vmatmul.bf16.gmra.mxu0 %v3541
    %v6050 = vpop.f32.mrf.mxu0
    %v6051 = vadd.f32 %v5722, %v6050
    %v6052 = vpop.f32.mrf.mxu0
    %v6053 = vadd.f32 %v5724, %v6052
    %6054 = vmatmul.bf16.gmra.mxu0 %v3545
    %v6055 = vpop.f32.mrf.mxu0
    %v6056 = vadd.f32 %v5727, %v6055
    %v6057 = vpop.f32.mrf.mxu0
    %v6058 = vadd.f32 %v5729, %v6057
    %6059 = vmatmul.bf16.gmra.mxu0 %v3549
    %v6060 = vpop.f32.mrf.mxu0
    %v6061 = vadd.f32 %v5732, %v6060
    %v6062 = vpop.f32.mrf.mxu0
    %v6063 = vadd.f32 %v5734, %v6062
    %6064 = vmatmul.bf16.gmra.mxu0 %v3553
    %v6065 = vpop.f32.mrf.mxu0
    %v6066 = vadd.f32 %v5737, %v6065
    %v6067 = vpop.f32.mrf.mxu0
    %v6068 = vadd.f32 %v5739, %v6067
    %6069 = vmatmul.bf16.gmra.mxu0 %v3557
    %v6070 = vpop.f32.mrf.mxu0
    %v6071 = vadd.f32 %v5742, %v6070
    %v6072 = vpop.f32.mrf.mxu0
    %v6073 = vadd.f32 %v5744, %v6072
    %6074 = vmatmul.bf16.gmra.mxu0 %v3561
    %v6075 = vpop.f32.mrf.mxu0
    %v6076 = vadd.f32 %v5747, %v6075
    %v6077 = vpop.f32.mrf.mxu0
    %v6078 = vadd.f32 %v5749, %v6077
    %6079 = vmatmul.bf16.gmra.mxu0 %v3565
    %v6080 = vpop.f32.mrf.mxu0
    %v6081 = vadd.f32 %v5752, %v6080
    %v6082 = vpop.f32.mrf.mxu0
    %v6083 = vadd.f32 %v5754, %v6082
    %6084 = vmatmul.bf16.gmra.mxu0 %v3569
    %v6085 = vpop.f32.mrf.mxu0
    %v6086 = vadd.f32 %v5757, %v6085
    %v6087 = vpop.f32.mrf.mxu0
    %v6088 = vadd.f32 %v5759, %v6087
    %6089 = vmatmul.bf16.gmra.mxu0 %v3573
    %v6090 = vpop.f32.mrf.mxu0
    %v6091 = vadd.f32 %v5762, %v6090
    %v6092 = vpop.f32.mrf.mxu0
    %v6093 = vadd.f32 %v5764, %v6092
    %6094 = vmatmul.bf16.gmra.mxu0 %v3577
    %v6095 = vpop.f32.mrf.mxu0
    %v6096 = vadd.f32 %v5767, %v6095
    %v6097 = vpop.f32.mrf.mxu0
    %v6098 = vadd.f32 %v5769, %v6097
    %6099 = vmatmul.bf16.gmra.mxu0 %v3581
    %v6100 = vpop.f32.mrf.mxu0
    %v6101 = vadd.f32 %v5772, %v6100
    %v6102 = vpop.f32.mrf.mxu0
    %v6103 = vadd.f32 %v5774, %v6102
    %6104 = vmatmul.bf16.gmra.mxu0 %v3585
    %v6105 = vpop.f32.mrf.mxu0
    %v6106 = vadd.f32 %v5777, %v6105
    %v6107 = vpop.f32.mrf.mxu0
    %v6108 = vadd.f32 %v5779, %v6107
    %6109 = vmatmul.bf16.gmra.mxu0 %v3589
    %v6110 = vpop.f32.mrf.mxu0
    %v6111 = vadd.f32 %v5782, %v6110
    %v6112 = vpop.f32.mrf.mxu0
    %v6113 = vadd.f32 %v5784, %v6112
    %6114 = vmatmul.bf16.gmra.mxu0 %v3593
    %v6115 = vpop.f32.mrf.mxu0
    %v6116 = vadd.f32 %v5787, %v6115
    %v6117 = vpop.f32.mrf.mxu0
    %v6118 = vadd.f32 %v5789, %v6117
    %6119 = vmatmul.bf16.gmra.mxu0 %v3597
    %v6120 = vpop.f32.mrf.mxu0
    %v6121 = vadd.f32 %v5792, %v6120
    %v6122 = vpop.f32.mrf.mxu0
    %v6123 = vadd.f32 %v5794, %v6122
    %6124 = vmatmul.bf16.gmra.mxu0 %v3601
    %v6125 = vpop.f32.mrf.mxu0
    %v6126 = vadd.f32 %v5797, %v6125
    %v6127 = vpop.f32.mrf.mxu0
    %v6128 = vadd.f32 %v5799, %v6127
    %6129 = vmatmul.bf16.gmra.mxu0 %v3605
    %v6130 = vpop.f32.mrf.mxu0
    %v6131 = vadd.f32 %v5802, %v6130
    %v6132 = vpop.f32.mrf.mxu0
    %v6133 = vadd.f32 %v5804, %v6132
    %6134 = vmatmul.bf16.gmra.mxu0 %v3609
    %v6135 = vpop.f32.mrf.mxu0
    %v6136 = vadd.f32 %v5807, %v6135
    %v6137 = vpop.f32.mrf.mxu0
    %v6138 = vadd.f32 %v5809, %v6137
    %6139 = vmatmul.bf16.gmra.mxu0 %v3613
    %v6140 = vpop.f32.mrf.mxu0
    %v6141 = vadd.f32 %v5812, %v6140
    %v6142 = vpop.f32.mrf.mxu0
    %v6143 = vadd.f32 %v5814, %v6142
    %6144 = vmatmul.bf16.gmra.mxu0 %v3617
    %v6145 = vpop.f32.mrf.mxu0
    %v6146 = vadd.f32 %v5817, %v6145
    %v6147 = vpop.f32.mrf.mxu0
    %v6148 = vadd.f32 %v5819, %v6147
    %6149 = vmatmul.bf16.gmra.mxu0 %v3621
    %v6150 = vpop.f32.mrf.mxu0
    %v6151 = vadd.f32 %v5822, %v6150
    %v6152 = vpop.f32.mrf.mxu0
    %v6153 = vadd.f32 %v5824, %v6152
    %6154 = vmatmul.bf16.gmra.mxu0 %v3625
    %v6155 = vpop.f32.mrf.mxu0
    %v6156 = vadd.f32 %v5827, %v6155
    %v6157 = vpop.f32.mrf.mxu0
    %v6158 = vadd.f32 %v5829, %v6157
    %6159 = vmatmul.bf16.gmra.mxu0 %v3629
    %v6160 = vpop.f32.mrf.mxu0
    %v6161 = vadd.f32 %v5832, %v6160
    %v6162 = vpop.f32.mrf.mxu0
    %v6163 = vadd.f32 %v5834, %v6162
    %6164 = vmatmul.bf16.gmra.mxu0 %v3633
    %v6165 = vpop.f32.mrf.mxu0
    %v6166 = vadd.f32 %v5837, %v6165
    %v6167 = vpop.f32.mrf.mxu0
    %v6168 = vadd.f32 %v5839, %v6167
    %6169 = vmatmul.bf16.gmra.mxu0 %v3637
    %v6170 = vpop.f32.mrf.mxu0
    %v6171 = vadd.f32 %v5842, %v6170
    %v6172 = vpop.f32.mrf.mxu0
    %v6173 = vadd.f32 %v5844, %v6172
    %6174 = vmatmul.bf16.gmra.mxu0 %v3641
    %v6175 = vpop.f32.mrf.mxu0
    %v6176 = vadd.f32 %v5847, %v6175
    %v6177 = vpop.f32.mrf.mxu0
    %v6178 = vadd.f32 %v5849, %v6177
    %6179 = vmatmul.bf16.gmra.mxu0 %v3645
    %v6180 = vpop.f32.mrf.mxu0
    %v6181 = vadd.f32 %v5852, %v6180
    %v6182 = vpop.f32.mrf.mxu0
    %v6183 = vadd.f32 %v5854, %v6182
    %6184 = vmatmul.bf16.gmra.mxu0 %v3649
    %v6185 = vpop.f32.mrf.mxu0
    %v6186 = vadd.f32 %v5857, %v6185
    %v6187 = vpop.f32.mrf.mxu0
    %v6188 = vadd.f32 %v5859, %v6187
    %6189 = vmatmul.bf16.gmra.mxu0 %v3653
    %v6190 = vpop.f32.mrf.mxu0
    %v6191 = vadd.f32 %v5862, %v6190
    %v6192 = vpop.f32.mrf.mxu0
    %v6193 = vadd.f32 %v5864, %v6192
    %6194 = vmatmul.bf16.gmra.mxu0 %v3657
    %v6195 = vpop.f32.mrf.mxu0
    %v6196 = vadd.f32 %v5867, %v6195
    %v6197 = vpop.f32.mrf.mxu0
    %v6198 = vadd.f32 %v5869, %v6197
    %6199 = vmatmul.bf16.gmra.mxu0 %v3661
    %v6200 = vpop.f32.mrf.mxu0
    %v6201 = vadd.f32 %v5872, %v6200
    %v6202 = vpop.f32.mrf.mxu0
    %v6203 = vadd.f32 %v5874, %v6202
    %6204 = vmatmul.bf16.gmra.mxu0 %v3665
    %v6205 = vpop.f32.mrf.mxu0
    %v6206 = vadd.f32 %v5877, %v6205
    %v6207 = vpop.f32.mrf.mxu0
    %v6208 = vadd.f32 %v5879, %v6207
    %6209 = vmatmul.bf16.gmra.mxu0 %v3669
    %v6210 = vpop.f32.mrf.mxu0
    %v6211 = vadd.f32 %v5882, %v6210
    %v6212 = vpop.f32.mrf.mxu0
    %v6213 = vadd.f32 %v5884, %v6212
    %6214 = vmatmul.bf16.gmra.mxu0 %v3673
    %v6215 = vpop.f32.mrf.mxu0
    %v6216 = vadd.f32 %v5887, %v6215
    %v6217 = vpop.f32.mrf.mxu0
    %v6218 = vadd.f32 %v5889, %v6217
    %6219 = vmatmul.bf16.gmra.mxu0 %v3677
    %v6220 = vpop.f32.mrf.mxu0
    %v6221 = vadd.f32 %v5892, %v6220
    %v6222 = vpop.f32.mrf.mxu0
    %v6223 = vadd.f32 %v5894, %v6222
    %6224 = vmatmul.bf16.gmra.mxu0 %v3681
    %v6225 = vpop.f32.mrf.mxu0
    %v6226 = vadd.f32 %v5897, %v6225
    %v6227 = vpop.f32.mrf.mxu0
    %v6228 = vadd.f32 %v5899, %v6227
    %6229 = vmatmul.bf16.gmra.mxu0 %v3685
    %v6230 = vpop.f32.mrf.mxu0
    %v6231 = vadd.f32 %v5902, %v6230
    %v6232 = vpop.f32.mrf.mxu0
    %v6233 = vadd.f32 %v5904, %v6232
    %6234 = vmatmul.bf16.gmra.mxu0 %v3689
    %v6235 = vpop.f32.mrf.mxu0
    %v6236 = vadd.f32 %v5907, %v6235
    %v6237 = vpop.f32.mrf.mxu0
    %v6238 = vadd.f32 %v5909, %v6237
    %6239 = vmatmul.bf16.gmra.mxu0 %v3693
    %v6240 = vpop.f32.mrf.mxu0
    %v6241 = vadd.f32 %v5912, %v6240
    %v6242 = vpop.f32.mrf.mxu0
    %v6243 = vadd.f32 %v5914, %v6242
    %6244 = vmatmul.bf16.gmra.mxu0 %v3697
    %v6245 = vpop.f32.mrf.mxu0
    %v6246 = vadd.f32 %v5917, %v6245
    %v6247 = vpop.f32.mrf.mxu0
    %v6248 = vadd.f32 %v5919, %v6247
    %6249 = vmatmul.bf16.gmra.mxu0 %v3701
    %v6250 = vpop.f32.mrf.mxu0
    %v6251 = vadd.f32 %v5922, %v6250
    %v6252 = vpop.f32.mrf.mxu0
    %v6253 = vadd.f32 %v5924, %v6252
    %6254 = vmatmul.bf16.gmra.mxu0 %v3705
    %v6255 = vpop.f32.mrf.mxu0
    %v6256 = vadd.f32 %v5927, %v6255
    %v6257 = vpop.f32.mrf.mxu0
    %v6258 = vadd.f32 %v5929, %v6257
    %6259 = vmatmul.bf16.gmra.mxu0 %v3709
    %v6260 = vpop.f32.mrf.mxu0
    %v6261 = vadd.f32 %v5932, %v6260
    %v6262 = vpop.f32.mrf.mxu0
    %v6263 = vadd.f32 %v5934, %v6262
    %6264 = vmatmul.bf16.gmra.mxu0 %v3713
    %v6265 = vpop.f32.mrf.mxu0
    %v6266 = vadd.f32 %v5937, %v6265
    %v6267 = vpop.f32.mrf.mxu0
    %v6268 = vadd.f32 %v5939, %v6267
    %6269 = vmatmul.bf16.gmra.mxu0 %v3717
    %v6270 = vpop.f32.mrf.mxu0
    %v6271 = vadd.f32 %v5942, %v6270
    %v6272 = vpop.f32.mrf.mxu0
    %v6273 = vadd.f32 %v5944, %v6272
    %6274 = vmatmul.bf16.gmra.mxu0 %v3721
    %v6275 = vpop.f32.mrf.mxu0
    %v6276 = vadd.f32 %v5947, %v6275
    %v6277 = vpop.f32.mrf.mxu0
    %v6278 = vadd.f32 %v5949, %v6277
    %6279 = vmatmul.bf16.gmra.mxu0 %v3725
    %v6280 = vpop.f32.mrf.mxu0
    %v6281 = vadd.f32 %v5952, %v6280
    %v6282 = vpop.f32.mrf.mxu0
    %v6283 = vadd.f32 %v5954, %v6282
    %6284 = vmatmul.bf16.gmra.mxu0 %v3729
    %v6285 = vpop.f32.mrf.mxu0
    %v6286 = vadd.f32 %v5957, %v6285
    %v6287 = vpop.f32.mrf.mxu0
    %v6288 = vadd.f32 %v5959, %v6287
    %6289 = vdwg.mxu0
    %6290 = vmatpush.bf16.msra.mxu0 %v1682
    %6291 = vmatpush.bf16.msra.mxu0 %v1680
    %6292 = vmatpush.bf16.msra.mxu0 %v1678
    %6293 = vmatpush.bf16.msra.mxu0 %v1676
    %6294 = vmatpush.bf16.msra.mxu0 %v1674
    %6295 = vmatpush.bf16.msra.mxu0 %v1672
    %6296 = vmatpush.bf16.msra.mxu0 %v1670
    %6297 = vmatpush.bf16.msra.mxu0 %v1668
    %6298 = vmatmul.bf16.gmra.mxu0 %v3478
    %v6299 = vpop.f32.mrf.mxu0
    %v6300 = vadd.f32 %v5971, %v6299
    %v6301 = vpop.f32.mrf.mxu0
    %v6302 = vadd.f32 %v5973, %v6301
    %6303 = vmatmul.bf16.gmra.mxu0 %v3482
    %v6304 = vpop.f32.mrf.mxu0
    %v6305 = vadd.f32 %v5976, %v6304
    %v6306 = vpop.f32.mrf.mxu0
    %v6307 = vadd.f32 %v5978, %v6306
    %6308 = vmatmul.bf16.gmra.mxu0 %v3486
    %v6309 = vpop.f32.mrf.mxu0
    %v6310 = vadd.f32 %v5981, %v6309
    %v6311 = vpop.f32.mrf.mxu0
    %v6312 = vadd.f32 %v5983, %v6311
    %6313 = vmatmul.bf16.gmra.mxu0 %v3490
    %v6314 = vpop.f32.mrf.mxu0
    %v6315 = vadd.f32 %v5986, %v6314
    %v6316 = vpop.f32.mrf.mxu0
    %v6317 = vadd.f32 %v5988, %v6316
    %6318 = vmatmul.bf16.gmra.mxu0 %v3494
    %v6319 = vpop.f32.mrf.mxu0
    %v6320 = vadd.f32 %v5991, %v6319
    %v6321 = vpop.f32.mrf.mxu0
    %v6322 = vadd.f32 %v5993, %v6321
    %6323 = vmatmul.bf16.gmra.mxu0 %v3498
    %v6324 = vpop.f32.mrf.mxu0
    %v6325 = vadd.f32 %v5996, %v6324
    %v6326 = vpop.f32.mrf.mxu0
    %v6327 = vadd.f32 %v5998, %v6326
    %6328 = vmatmul.bf16.gmra.mxu0 %v3502
    %v6329 = vpop.f32.mrf.mxu0
    %v6330 = vadd.f32 %v6001, %v6329
    %v6331 = vpop.f32.mrf.mxu0
    %v6332 = vadd.f32 %v6003, %v6331
    %6333 = vmatmul.bf16.gmra.mxu0 %v3506
    %v6334 = vpop.f32.mrf.mxu0
    %v6335 = vadd.f32 %v6006, %v6334
    %v6336 = vpop.f32.mrf.mxu0
    %v6337 = vadd.f32 %v6008, %v6336
    %6338 = vmatmul.bf16.gmra.mxu0 %v3510
    %v6339 = vpop.f32.mrf.mxu0
    %v6340 = vadd.f32 %v6011, %v6339
    %v6341 = vpop.f32.mrf.mxu0
    %v6342 = vadd.f32 %v6013, %v6341
    %6343 = vmatmul.bf16.gmra.mxu0 %v3514
    %v6344 = vpop.f32.mrf.mxu0
    %v6345 = vadd.f32 %v6016, %v6344
    %v6346 = vpop.f32.mrf.mxu0
    %v6347 = vadd.f32 %v6018, %v6346
    %6348 = vmatmul.bf16.gmra.mxu0 %v3518
    %v6349 = vpop.f32.mrf.mxu0
    %v6350 = vadd.f32 %v6021, %v6349
    %v6351 = vpop.f32.mrf.mxu0
    %v6352 = vadd.f32 %v6023, %v6351
    %6353 = vmatmul.bf16.gmra.mxu0 %v3522
    %v6354 = vpop.f32.mrf.mxu0
    %v6355 = vadd.f32 %v6026, %v6354
    %v6356 = vpop.f32.mrf.mxu0
    %v6357 = vadd.f32 %v6028, %v6356
    %6358 = vmatmul.bf16.gmra.mxu0 %v3526
    %v6359 = vpop.f32.mrf.mxu0
    %v6360 = vadd.f32 %v6031, %v6359
    %v6361 = vpop.f32.mrf.mxu0
    %v6362 = vadd.f32 %v6033, %v6361
    %6363 = vmatmul.bf16.gmra.mxu0 %v3530
    %v6364 = vpop.f32.mrf.mxu0
    %v6365 = vadd.f32 %v6036, %v6364
    %v6366 = vpop.f32.mrf.mxu0
    %v6367 = vadd.f32 %v6038, %v6366
    %6368 = vmatmul.bf16.gmra.mxu0 %v3534
    %v6369 = vpop.f32.mrf.mxu0
    %v6370 = vadd.f32 %v6041, %v6369
    %v6371 = vpop.f32.mrf.mxu0
    %v6372 = vadd.f32 %v6043, %v6371
    %6373 = vmatmul.bf16.gmra.mxu0 %v3538
    %v6374 = vpop.f32.mrf.mxu0
    %v6375 = vadd.f32 %v6046, %v6374
    %v6376 = vpop.f32.mrf.mxu0
    %v6377 = vadd.f32 %v6048, %v6376
    %6378 = vmatmul.bf16.gmra.mxu0 %v3542
    %v6379 = vpop.f32.mrf.mxu0
    %v6380 = vadd.f32 %v6051, %v6379
    %v6381 = vpop.f32.mrf.mxu0
    %v6382 = vadd.f32 %v6053, %v6381
    %6383 = vmatmul.bf16.gmra.mxu0 %v3546
    %v6384 = vpop.f32.mrf.mxu0
    %v6385 = vadd.f32 %v6056, %v6384
    %v6386 = vpop.f32.mrf.mxu0
    %v6387 = vadd.f32 %v6058, %v6386
    %6388 = vmatmul.bf16.gmra.mxu0 %v3550
    %v6389 = vpop.f32.mrf.mxu0
    %v6390 = vadd.f32 %v6061, %v6389
    %v6391 = vpop.f32.mrf.mxu0
    %v6392 = vadd.f32 %v6063, %v6391
    %6393 = vmatmul.bf16.gmra.mxu0 %v3554
    %v6394 = vpop.f32.mrf.mxu0
    %v6395 = vadd.f32 %v6066, %v6394
    %v6396 = vpop.f32.mrf.mxu0
    %v6397 = vadd.f32 %v6068, %v6396
    %6398 = vmatmul.bf16.gmra.mxu0 %v3558
    %v6399 = vpop.f32.mrf.mxu0
    %v6400 = vadd.f32 %v6071, %v6399
    %v6401 = vpop.f32.mrf.mxu0
    %v6402 = vadd.f32 %v6073, %v6401
    %6403 = vmatmul.bf16.gmra.mxu0 %v3562
    %v6404 = vpop.f32.mrf.mxu0
    %v6405 = vadd.f32 %v6076, %v6404
    %v6406 = vpop.f32.mrf.mxu0
    %v6407 = vadd.f32 %v6078, %v6406
    %6408 = vmatmul.bf16.gmra.mxu0 %v3566
    %v6409 = vpop.f32.mrf.mxu0
    %v6410 = vadd.f32 %v6081, %v6409
    %v6411 = vpop.f32.mrf.mxu0
    %v6412 = vadd.f32 %v6083, %v6411
    %6413 = vmatmul.bf16.gmra.mxu0 %v3570
    %v6414 = vpop.f32.mrf.mxu0
    %v6415 = vadd.f32 %v6086, %v6414
    %v6416 = vpop.f32.mrf.mxu0
    %v6417 = vadd.f32 %v6088, %v6416
    %6418 = vmatmul.bf16.gmra.mxu0 %v3574
    %v6419 = vpop.f32.mrf.mxu0
    %v6420 = vadd.f32 %v6091, %v6419
    %v6421 = vpop.f32.mrf.mxu0
    %v6422 = vadd.f32 %v6093, %v6421
    %6423 = vmatmul.bf16.gmra.mxu0 %v3578
    %v6424 = vpop.f32.mrf.mxu0
    %v6425 = vadd.f32 %v6096, %v6424
    %v6426 = vpop.f32.mrf.mxu0
    %v6427 = vadd.f32 %v6098, %v6426
    %6428 = vmatmul.bf16.gmra.mxu0 %v3582
    %v6429 = vpop.f32.mrf.mxu0
    %v6430 = vadd.f32 %v6101, %v6429
    %v6431 = vpop.f32.mrf.mxu0
    %v6432 = vadd.f32 %v6103, %v6431
    %6433 = vmatmul.bf16.gmra.mxu0 %v3586
    %v6434 = vpop.f32.mrf.mxu0
    %v6435 = vadd.f32 %v6106, %v6434
    %v6436 = vpop.f32.mrf.mxu0
    %v6437 = vadd.f32 %v6108, %v6436
    %6438 = vmatmul.bf16.gmra.mxu0 %v3590
    %v6439 = vpop.f32.mrf.mxu0
    %v6440 = vadd.f32 %v6111, %v6439
    %v6441 = vpop.f32.mrf.mxu0
    %v6442 = vadd.f32 %v6113, %v6441
    %6443 = vmatmul.bf16.gmra.mxu0 %v3594
    %v6444 = vpop.f32.mrf.mxu0
    %v6445 = vadd.f32 %v6116, %v6444
    %v6446 = vpop.f32.mrf.mxu0
    %v6447 = vadd.f32 %v6118, %v6446
    %6448 = vmatmul.bf16.gmra.mxu0 %v3598
    %v6449 = vpop.f32.mrf.mxu0
    %v6450 = vadd.f32 %v6121, %v6449
    %v6451 = vpop.f32.mrf.mxu0
    %v6452 = vadd.f32 %v6123, %v6451
    %6453 = vmatmul.bf16.gmra.mxu0 %v3602
    %v6454 = vpop.f32.mrf.mxu0
    %v6455 = vadd.f32 %v6126, %v6454
    %v6456 = vpop.f32.mrf.mxu0
    %v6457 = vadd.f32 %v6128, %v6456
    %6458 = vmatmul.bf16.gmra.mxu0 %v3606
    %v6459 = vpop.f32.mrf.mxu0
    %v6460 = vadd.f32 %v6131, %v6459
    %v6461 = vpop.f32.mrf.mxu0
    %v6462 = vadd.f32 %v6133, %v6461
    %6463 = vmatmul.bf16.gmra.mxu0 %v3610
    %v6464 = vpop.f32.mrf.mxu0
    %v6465 = vadd.f32 %v6136, %v6464
    %v6466 = vpop.f32.mrf.mxu0
    %v6467 = vadd.f32 %v6138, %v6466
    %6468 = vmatmul.bf16.gmra.mxu0 %v3614
    %v6469 = vpop.f32.mrf.mxu0
    %v6470 = vadd.f32 %v6141, %v6469
    %v6471 = vpop.f32.mrf.mxu0
    %v6472 = vadd.f32 %v6143, %v6471
    %6473 = vmatmul.bf16.gmra.mxu0 %v3618
    %v6474 = vpop.f32.mrf.mxu0
    %v6475 = vadd.f32 %v6146, %v6474
    %v6476 = vpop.f32.mrf.mxu0
    %v6477 = vadd.f32 %v6148, %v6476
    %6478 = vmatmul.bf16.gmra.mxu0 %v3622
    %v6479 = vpop.f32.mrf.mxu0
    %v6480 = vadd.f32 %v6151, %v6479
    %v6481 = vpop.f32.mrf.mxu0
    %v6482 = vadd.f32 %v6153, %v6481
    %6483 = vmatmul.bf16.gmra.mxu0 %v3626
    %v6484 = vpop.f32.mrf.mxu0
    %v6485 = vadd.f32 %v6156, %v6484
    %v6486 = vpop.f32.mrf.mxu0
    %v6487 = vadd.f32 %v6158, %v6486
    %6488 = vmatmul.bf16.gmra.mxu0 %v3630
    %v6489 = vpop.f32.mrf.mxu0
    %v6490 = vadd.f32 %v6161, %v6489
    %v6491 = vpop.f32.mrf.mxu0
    %v6492 = vadd.f32 %v6163, %v6491
    %6493 = vmatmul.bf16.gmra.mxu0 %v3634
    %v6494 = vpop.f32.mrf.mxu0
    %v6495 = vadd.f32 %v6166, %v6494
    %v6496 = vpop.f32.mrf.mxu0
    %v6497 = vadd.f32 %v6168, %v6496
    %6498 = vmatmul.bf16.gmra.mxu0 %v3638
    %v6499 = vpop.f32.mrf.mxu0
    %v6500 = vadd.f32 %v6171, %v6499
    %v6501 = vpop.f32.mrf.mxu0
    %v6502 = vadd.f32 %v6173, %v6501
    %6503 = vmatmul.bf16.gmra.mxu0 %v3642
    %v6504 = vpop.f32.mrf.mxu0
    %v6505 = vadd.f32 %v6176, %v6504
    %v6506 = vpop.f32.mrf.mxu0
    %v6507 = vadd.f32 %v6178, %v6506
    %6508 = vmatmul.bf16.gmra.mxu0 %v3646
    %v6509 = vpop.f32.mrf.mxu0
    %v6510 = vadd.f32 %v6181, %v6509
    %v6511 = vpop.f32.mrf.mxu0
    %v6512 = vadd.f32 %v6183, %v6511
    %6513 = vmatmul.bf16.gmra.mxu0 %v3650
    %v6514 = vpop.f32.mrf.mxu0
    %v6515 = vadd.f32 %v6186, %v6514
    %v6516 = vpop.f32.mrf.mxu0
    %v6517 = vadd.f32 %v6188, %v6516
    %6518 = vmatmul.bf16.gmra.mxu0 %v3654
    %v6519 = vpop.f32.mrf.mxu0
    %v6520 = vadd.f32 %v6191, %v6519
    %v6521 = vpop.f32.mrf.mxu0
    %v6522 = vadd.f32 %v6193, %v6521
    %6523 = vmatmul.bf16.gmra.mxu0 %v3658
    %v6524 = vpop.f32.mrf.mxu0
    %v6525 = vadd.f32 %v6196, %v6524
    %v6526 = vpop.f32.mrf.mxu0
    %v6527 = vadd.f32 %v6198, %v6526
    %6528 = vmatmul.bf16.gmra.mxu0 %v3662
    %v6529 = vpop.f32.mrf.mxu0
    %v6530 = vadd.f32 %v6201, %v6529
    %v6531 = vpop.f32.mrf.mxu0
    %v6532 = vadd.f32 %v6203, %v6531
    %6533 = vmatmul.bf16.gmra.mxu0 %v3666
    %v6534 = vpop.f32.mrf.mxu0
    %v6535 = vadd.f32 %v6206, %v6534
    %v6536 = vpop.f32.mrf.mxu0
    %v6537 = vadd.f32 %v6208, %v6536
    %6538 = vmatmul.bf16.gmra.mxu0 %v3670
    %v6539 = vpop.f32.mrf.mxu0
    %v6540 = vadd.f32 %v6211, %v6539
    %v6541 = vpop.f32.mrf.mxu0
    %v6542 = vadd.f32 %v6213, %v6541
    %6543 = vmatmul.bf16.gmra.mxu0 %v3674
    %v6544 = vpop.f32.mrf.mxu0
    %v6545 = vadd.f32 %v6216, %v6544
    %v6546 = vpop.f32.mrf.mxu0
    %v6547 = vadd.f32 %v6218, %v6546
    %6548 = vmatmul.bf16.gmra.mxu0 %v3678
    %v6549 = vpop.f32.mrf.mxu0
    %v6550 = vadd.f32 %v6221, %v6549
    %v6551 = vpop.f32.mrf.mxu0
    %v6552 = vadd.f32 %v6223, %v6551
    %6553 = vmatmul.bf16.gmra.mxu0 %v3682
    %v6554 = vpop.f32.mrf.mxu0
    %v6555 = vadd.f32 %v6226, %v6554
    %v6556 = vpop.f32.mrf.mxu0
    %v6557 = vadd.f32 %v6228, %v6556
    %6558 = vmatmul.bf16.gmra.mxu0 %v3686
    %v6559 = vpop.f32.mrf.mxu0
    %v6560 = vadd.f32 %v6231, %v6559
    %v6561 = vpop.f32.mrf.mxu0
    %v6562 = vadd.f32 %v6233, %v6561
    %6563 = vmatmul.bf16.gmra.mxu0 %v3690
    %v6564 = vpop.f32.mrf.mxu0
    %v6565 = vadd.f32 %v6236, %v6564
    %v6566 = vpop.f32.mrf.mxu0
    %v6567 = vadd.f32 %v6238, %v6566
    %6568 = vmatmul.bf16.gmra.mxu0 %v3694
    %v6569 = vpop.f32.mrf.mxu0
    %v6570 = vadd.f32 %v6241, %v6569
    %v6571 = vpop.f32.mrf.mxu0
    %v6572 = vadd.f32 %v6243, %v6571
    %6573 = vmatmul.bf16.gmra.mxu0 %v3698
    %v6574 = vpop.f32.mrf.mxu0
    %v6575 = vadd.f32 %v6246, %v6574
    %v6576 = vpop.f32.mrf.mxu0
    %v6577 = vadd.f32 %v6248, %v6576
    %6578 = vmatmul.bf16.gmra.mxu0 %v3702
    %v6579 = vpop.f32.mrf.mxu0
    %v6580 = vadd.f32 %v6251, %v6579
    %v6581 = vpop.f32.mrf.mxu0
    %v6582 = vadd.f32 %v6253, %v6581
    %6583 = vmatmul.bf16.gmra.mxu0 %v3706
    %v6584 = vpop.f32.mrf.mxu0
    %v6585 = vadd.f32 %v6256, %v6584
    %v6586 = vpop.f32.mrf.mxu0
    %v6587 = vadd.f32 %v6258, %v6586
    %6588 = vmatmul.bf16.gmra.mxu0 %v3710
    %v6589 = vpop.f32.mrf.mxu0
    %v6590 = vadd.f32 %v6261, %v6589
    %v6591 = vpop.f32.mrf.mxu0
    %v6592 = vadd.f32 %v6263, %v6591
    %6593 = vmatmul.bf16.gmra.mxu0 %v3714
    %v6594 = vpop.f32.mrf.mxu0
    %v6595 = vadd.f32 %v6266, %v6594
    %v6596 = vpop.f32.mrf.mxu0
    %v6597 = vadd.f32 %v6268, %v6596
    %6598 = vmatmul.bf16.gmra.mxu0 %v3718
    %v6599 = vpop.f32.mrf.mxu0
    %v6600 = vadd.f32 %v6271, %v6599
    %v6601 = vpop.f32.mrf.mxu0
    %v6602 = vadd.f32 %v6273, %v6601
    %6603 = vmatmul.bf16.gmra.mxu0 %v3722
    %v6604 = vpop.f32.mrf.mxu0
    %v6605 = vadd.f32 %v6276, %v6604
    %v6606 = vpop.f32.mrf.mxu0
    %v6607 = vadd.f32 %v6278, %v6606
    %6608 = vmatmul.bf16.gmra.mxu0 %v3726
    %v6609 = vpop.f32.mrf.mxu0
    %v6610 = vadd.f32 %v6281, %v6609
    %v6611 = vpop.f32.mrf.mxu0
    %v6612 = vadd.f32 %v6283, %v6611
    %6613 = vmatmul.bf16.gmra.mxu0 %v3730
    %v6614 = vpop.f32.mrf.mxu0
    %v6615 = vadd.f32 %v6286, %v6614
    %v6616 = vpop.f32.mrf.mxu0
    %v6617 = vadd.f32 %v6288, %v6616
    %6618 = vdwg.mxu0
    %v6619 = vmax.f32 %v4984, 0.0
    %v6620 = vmax.f32 %v6300, 0.0
    %v6621 = vmax.f32 %v4986, 0.0
    %v6622 = vmax.f32 %v6302, 0.0
    %v6623 = vmax.f32 %v4989, 0.0
    %v6624 = vmax.f32 %v6305, 0.0
    %v6625 = vmax.f32 %v4991, 0.0
    %v6626 = vmax.f32 %v6307, 0.0
    %v6627 = vmax.f32 %v4994, 0.0
    %v6628 = vmax.f32 %v6310, 0.0
    %v6629 = vmax.f32 %v4996, 0.0
    %v6630 = vmax.f32 %v6312, 0.0
    %v6631 = vmax.f32 %v4999, 0.0
    %v6632 = vmax.f32 %v6315, 0.0
    %v6633 = vmax.f32 %v5001, 0.0
    %v6634 = vmax.f32 %v6317, 0.0
    %v6635 = vmax.f32 %v5004, 0.0
    %v6636 = vmax.f32 %v6320, 0.0
    %v6637 = vmax.f32 %v5006, 0.0
    %v6638 = vmax.f32 %v6322, 0.0
    %v6639 = vmax.f32 %v5009, 0.0
    %v6640 = vmax.f32 %v6325, 0.0
    %v6641 = vmax.f32 %v5011, 0.0
    %v6642 = vmax.f32 %v6327, 0.0
    %v6643 = vmax.f32 %v5014, 0.0
    %v6644 = vmax.f32 %v6330, 0.0
    %v6645 = vmax.f32 %v5016, 0.0
    %v6646 = vmax.f32 %v6332, 0.0
    %v6647 = vmax.f32 %v5019, 0.0
    %v6648 = vmax.f32 %v6335, 0.0
    %v6649 = vmax.f32 %v5021, 0.0
    %v6650 = vmax.f32 %v6337, 0.0
    %v6651 = vmax.f32 %v5024, 0.0
    %v6652 = vmax.f32 %v6340, 0.0
    %v6653 = vmax.f32 %v5026, 0.0
    %v6654 = vmax.f32 %v6342, 0.0
    %v6655 = vmax.f32 %v5029, 0.0
    %v6656 = vmax.f32 %v6345, 0.0
    %v6657 = vmax.f32 %v5031, 0.0
    %v6658 = vmax.f32 %v6347, 0.0
    %v6659 = vmax.f32 %v5034, 0.0
    %v6660 = vmax.f32 %v6350, 0.0
    %v6661 = vmax.f32 %v5036, 0.0
    %v6662 = vmax.f32 %v6352, 0.0
    %v6663 = vmax.f32 %v5039, 0.0
    %v6664 = vmax.f32 %v6355, 0.0
    %v6665 = vmax.f32 %v5041, 0.0
    %v6666 = vmax.f32 %v6357, 0.0
    %v6667 = vmax.f32 %v5044, 0.0
    %v6668 = vmax.f32 %v6360, 0.0
    %v6669 = vmax.f32 %v5046, 0.0
    %v6670 = vmax.f32 %v6362, 0.0
    %v6671 = vmax.f32 %v5049, 0.0
    %v6672 = vmax.f32 %v6365, 0.0
    %v6673 = vmax.f32 %v5051, 0.0
    %v6674 = vmax.f32 %v6367, 0.0
    %v6675 = vmax.f32 %v5054, 0.0
    %v6676 = vmax.f32 %v6370, 0.0
    %v6677 = vmax.f32 %v5056, 0.0
    %v6678 = vmax.f32 %v6372, 0.0
    %v6679 = vmax.f32 %v5059, 0.0
    %v6680 = vmax.f32 %v6375, 0.0
    %v6681 = vmax.f32 %v5061, 0.0
    %v6682 = vmax.f32 %v6377, 0.0
    %v6683 = vmax.f32 %v5064, 0.0
    %v6684 = vmax.f32 %v6380, 0.0
    %v6685 = vmax.f32 %v5066, 0.0
    %v6686 = vmax.f32 %v6382, 0.0
    %v6687 = vmax.f32 %v5069, 0.0
    %v6688 = vmax.f32 %v6385, 0.0
    %v6689 = vmax.f32 %v5071, 0.0
    %v6690 = vmax.f32 %v6387, 0.0
    %v6691 = vmax.f32 %v5074, 0.0
    %v6692 = vmax.f32 %v6390, 0.0
    %v6693 = vmax.f32 %v5076, 0.0
    %v6694 = vmax.f32 %v6392, 0.0
    %v6695 = vmax.f32 %v5079, 0.0
    %v6696 = vmax.f32 %v6395, 0.0
    %v6697 = vmax.f32 %v5081, 0.0
    %v6698 = vmax.f32 %v6397, 0.0
    %v6699 = vmax.f32 %v5084, 0.0
    %v6700 = vmax.f32 %v6400, 0.0
    %v6701 = vmax.f32 %v5086, 0.0
    %v6702 = vmax.f32 %v6402, 0.0
    %v6703 = vmax.f32 %v5089, 0.0
    %v6704 = vmax.f32 %v6405, 0.0
    %v6705 = vmax.f32 %v5091, 0.0
    %v6706 = vmax.f32 %v6407, 0.0
    %v6707 = vmax.f32 %v5094, 0.0
    %v6708 = vmax.f32 %v6410, 0.0
    %v6709 = vmax.f32 %v5096, 0.0
    %v6710 = vmax.f32 %v6412, 0.0
    %v6711 = vmax.f32 %v5099, 0.0
    %v6712 = vmax.f32 %v6415, 0.0
    %v6713 = vmax.f32 %v5101, 0.0
    %v6714 = vmax.f32 %v6417, 0.0
    %v6715 = vmax.f32 %v5104, 0.0
    %v6716 = vmax.f32 %v6420, 0.0
    %v6717 = vmax.f32 %v5106, 0.0
    %v6718 = vmax.f32 %v6422, 0.0
    %v6719 = vmax.f32 %v5109, 0.0
    %v6720 = vmax.f32 %v6425, 0.0
    %v6721 = vmax.f32 %v5111, 0.0
    %v6722 = vmax.f32 %v6427, 0.0
    %v6723 = vmax.f32 %v5114, 0.0
    %v6724 = vmax.f32 %v6430, 0.0
    %v6725 = vmax.f32 %v5116, 0.0
    %v6726 = vmax.f32 %v6432, 0.0
    %v6727 = vmax.f32 %v5119, 0.0
    %v6728 = vmax.f32 %v6435, 0.0
    %v6729 = vmax.f32 %v5121, 0.0
    %v6730 = vmax.f32 %v6437, 0.0
    %v6731 = vmax.f32 %v5124, 0.0
    %v6732 = vmax.f32 %v6440, 0.0
    %v6733 = vmax.f32 %v5126, 0.0
    %v6734 = vmax.f32 %v6442, 0.0
    %v6735 = vmax.f32 %v5129, 0.0
    %v6736 = vmax.f32 %v6445, 0.0
    %v6737 = vmax.f32 %v5131, 0.0
    %v6738 = vmax.f32 %v6447, 0.0
    %v6739 = vmax.f32 %v5134, 0.0
    %v6740 = vmax.f32 %v6450, 0.0
    %v6741 = vmax.f32 %v5136, 0.0
    %v6742 = vmax.f32 %v6452, 0.0
    %v6743 = vmax.f32 %v5139, 0.0
    %v6744 = vmax.f32 %v6455, 0.0
    %v6745 = vmax.f32 %v5141, 0.0
    %v6746 = vmax.f32 %v6457, 0.0
    %v6747 = vmax.f32 %v5144, 0.0
    %v6748 = vmax.f32 %v6460, 0.0
    %v6749 = vmax.f32 %v5146, 0.0
    %v6750 = vmax.f32 %v6462, 0.0
    %v6751 = vmax.f32 %v5149, 0.0
    %v6752 = vmax.f32 %v6465, 0.0
    %v6753 = vmax.f32 %v5151, 0.0
    %v6754 = vmax.f32 %v6467, 0.0
    %v6755 = vmax.f32 %v5154, 0.0
    %v6756 = vmax.f32 %v6470, 0.0
    %v6757 = vmax.f32 %v5156, 0.0
    %v6758 = vmax.f32 %v6472, 0.0
    %v6759 = vmax.f32 %v5159, 0.0
    %v6760 = vmax.f32 %v6475, 0.0
    %v6761 = vmax.f32 %v5161, 0.0
    %v6762 = vmax.f32 %v6477, 0.0
    %v6763 = vmax.f32 %v5164, 0.0
    %v6764 = vmax.f32 %v6480, 0.0
    %v6765 = vmax.f32 %v5166, 0.0
    %v6766 = vmax.f32 %v6482, 0.0
    %v6767 = vmax.f32 %v5169, 0.0
    %v6768 = vmax.f32 %v6485, 0.0
    %v6769 = vmax.f32 %v5171, 0.0
    %v6770 = vmax.f32 %v6487, 0.0
    %v6771 = vmax.f32 %v5174, 0.0
    %v6772 = vmax.f32 %v6490, 0.0
    %v6773 = vmax.f32 %v5176, 0.0
    %v6774 = vmax.f32 %v6492, 0.0
    %v6775 = vmax.f32 %v5179, 0.0
    %v6776 = vmax.f32 %v6495, 0.0
    %v6777 = vmax.f32 %v5181, 0.0
    %v6778 = vmax.f32 %v6497, 0.0
    %v6779 = vmax.f32 %v5184, 0.0
    %v6780 = vmax.f32 %v6500, 0.0
    %v6781 = vmax.f32 %v5186, 0.0
    %v6782 = vmax.f32 %v6502, 0.0
    %v6783 = vmax.f32 %v5189, 0.0
    %v6784 = vmax.f32 %v6505, 0.0
    %v6785 = vmax.f32 %v5191, 0.0
    %v6786 = vmax.f32 %v6507, 0.0
    %v6787 = vmax.f32 %v5194, 0.0
    %v6788 = vmax.f32 %v6510, 0.0
    %v6789 = vmax.f32 %v5196, 0.0
    %v6790 = vmax.f32 %v6512, 0.0
    %v6791 = vmax.f32 %v5199, 0.0
    %v6792 = vmax.f32 %v6515, 0.0
    %v6793 = vmax.f32 %v5201, 0.0
    %v6794 = vmax.f32 %v6517, 0.0
    %v6795 = vmax.f32 %v5204, 0.0
    %v6796 = vmax.f32 %v6520, 0.0
    %v6797 = vmax.f32 %v5206, 0.0
    %v6798 = vmax.f32 %v6522, 0.0
    %v6799 = vmax.f32 %v5209, 0.0
    %v6800 = vmax.f32 %v6525, 0.0
    %v6801 = vmax.f32 %v5211, 0.0
    %v6802 = vmax.f32 %v6527, 0.0
    %v6803 = vmax.f32 %v5214, 0.0
    %v6804 = vmax.f32 %v6530, 0.0
    %v6805 = vmax.f32 %v5216, 0.0
    %v6806 = vmax.f32 %v6532, 0.0
    %v6807 = vmax.f32 %v5219, 0.0
    %v6808 = vmax.f32 %v6535, 0.0
    %v6809 = vmax.f32 %v5221, 0.0
    %v6810 = vmax.f32 %v6537, 0.0
    %v6811 = vmax.f32 %v5224, 0.0
    %v6812 = vmax.f32 %v6540, 0.0
    %v6813 = vmax.f32 %v5226, 0.0
    %v6814 = vmax.f32 %v6542, 0.0
    %v6815 = vmax.f32 %v5229, 0.0
    %v6816 = vmax.f32 %v6545, 0.0
    %v6817 = vmax.f32 %v5231, 0.0
    %v6818 = vmax.f32 %v6547, 0.0
    %v6819 = vmax.f32 %v5234, 0.0
    %v6820 = vmax.f32 %v6550, 0.0
    %v6821 = vmax.f32 %v5236, 0.0
    %v6822 = vmax.f32 %v6552, 0.0
    %v6823 = vmax.f32 %v5239, 0.0
    %v6824 = vmax.f32 %v6555, 0.0
    %v6825 = vmax.f32 %v5241, 0.0
    %v6826 = vmax.f32 %v6557, 0.0
    %v6827 = vmax.f32 %v5244, 0.0
    %v6828 = vmax.f32 %v6560, 0.0
    %v6829 = vmax.f32 %v5246, 0.0
    %v6830 = vmax.f32 %v6562, 0.0
    %v6831 = vmax.f32 %v5249, 0.0
    %v6832 = vmax.f32 %v6565, 0.0
    %v6833 = vmax.f32 %v5251, 0.0
    %v6834 = vmax.f32 %v6567, 0.0
    %v6835 = vmax.f32 %v5254, 0.0
    %v6836 = vmax.f32 %v6570, 0.0
    %v6837 = vmax.f32 %v5256, 0.0
    %v6838 = vmax.f32 %v6572, 0.0
    %v6839 = vmax.f32 %v5259, 0.0
    %v6840 = vmax.f32 %v6575, 0.0
    %v6841 = vmax.f32 %v5261, 0.0
    %v6842 = vmax.f32 %v6577, 0.0
    %v6843 = vmax.f32 %v5264, 0.0
    %v6844 = vmax.f32 %v6580, 0.0
    %v6845 = vmax.f32 %v5266, 0.0
    %v6846 = vmax.f32 %v6582, 0.0
    %v6847 = vmax.f32 %v5269, 0.0
    %v6848 = vmax.f32 %v6585, 0.0
    %v6849 = vmax.f32 %v5271, 0.0
    %v6850 = vmax.f32 %v6587, 0.0
    %v6851 = vmax.f32 %v5274, 0.0
    %v6852 = vmax.f32 %v6590, 0.0
    %v6853 = vmax.f32 %v5276, 0.0
    %v6854 = vmax.f32 %v6592, 0.0
    %v6855 = vmax.f32 %v5279, 0.0
    %v6856 = vmax.f32 %v6595, 0.0
    %v6857 = vmax.f32 %v5281, 0.0
    %v6858 = vmax.f32 %v6597, 0.0
    %v6859 = vmax.f32 %v5284, 0.0
    %v6860 = vmax.f32 %v6600, 0.0
    %v6861 = vmax.f32 %v5286, 0.0
    %v6862 = vmax.f32 %v6602, 0.0
    %v6863 = vmax.f32 %v5289, 0.0
    %v6864 = vmax.f32 %v6605, 0.0
    %v6865 = vmax.f32 %v5291, 0.0
    %v6866 = vmax.f32 %v6607, 0.0
    %v6867 = vmax.f32 %v5294, 0.0
    %v6868 = vmax.f32 %v6610, 0.0
    %v6869 = vmax.f32 %v5296, 0.0
    %v6870 = vmax.f32 %v6612, 0.0
    %v6871 = vmax.f32 %v5299, 0.0
    %v6872 = vmax.f32 %v6615, 0.0
    %v6873 = vmax.f32 %v5301, 0.0
    %v6874 = vmax.f32 %v6617, 0.0
    %v6875 = vpack.c.bf16 %v6621, %v6619
    %v6876 = vpack.c.bf16 %v6622, %v6620
    %v6877 = vpack.c.bf16 %v6625, %v6623
    %v6878 = vpack.c.bf16 %v6626, %v6624
    %v6879 = vpack.c.bf16 %v6629, %v6627
    %v6880 = vpack.c.bf16 %v6630, %v6628
    %v6881 = vpack.c.bf16 %v6633, %v6631
    %v6882 = vpack.c.bf16 %v6634, %v6632
    %v6883 = vpack.c.bf16 %v6637, %v6635
    %v6884 = vpack.c.bf16 %v6638, %v6636
    %v6885 = vpack.c.bf16 %v6641, %v6639
    %v6886 = vpack.c.bf16 %v6642, %v6640
    %v6887 = vpack.c.bf16 %v6645, %v6643
    %v6888 = vpack.c.bf16 %v6646, %v6644
    %v6889 = vpack.c.bf16 %v6649, %v6647
    %v6890 = vpack.c.bf16 %v6650, %v6648
    %v6891 = vpack.c.bf16 %v6653, %v6651
    %v6892 = vpack.c.bf16 %v6654, %v6652
    %v6893 = vpack.c.bf16 %v6657, %v6655
    %v6894 = vpack.c.bf16 %v6658, %v6656
    %v6895 = vpack.c.bf16 %v6661, %v6659
    %v6896 = vpack.c.bf16 %v6662, %v6660
    %v6897 = vpack.c.bf16 %v6665, %v6663
    %v6898 = vpack.c.bf16 %v6666, %v6664
    %v6899 = vpack.c.bf16 %v6669, %v6667
    %v6900 = vpack.c.bf16 %v6670, %v6668
    %v6901 = vpack.c.bf16 %v6673, %v6671
    %v6902 = vpack.c.bf16 %v6674, %v6672
    %v6903 = vpack.c.bf16 %v6677, %v6675
    %v6904 = vpack.c.bf16 %v6678, %v6676
    %v6905 = vpack.c.bf16 %v6681, %v6679
    %v6906 = vpack.c.bf16 %v6682, %v6680
    %v6907 = vpack.c.bf16 %v6685, %v6683
    %v6908 = vpack.c.bf16 %v6686, %v6684
    %v6909 = vpack.c.bf16 %v6689, %v6687
    %v6910 = vpack.c.bf16 %v6690, %v6688
    %v6911 = vpack.c.bf16 %v6693, %v6691
    %v6912 = vpack.c.bf16 %v6694, %v6692
    %v6913 = vpack.c.bf16 %v6697, %v6695
    %v6914 = vpack.c.bf16 %v6698, %v6696
    %v6915 = vpack.c.bf16 %v6701, %v6699
    %v6916 = vpack.c.bf16 %v6702, %v6700
    %v6917 = vpack.c.bf16 %v6705, %v6703
    %v6918 = vpack.c.bf16 %v6706, %v6704
    %v6919 = vpack.c.bf16 %v6709, %v6707
    %v6920 = vpack.c.bf16 %v6710, %v6708
    %v6921 = vpack.c.bf16 %v6713, %v6711
    %v6922 = vpack.c.bf16 %v6714, %v6712
    %v6923 = vpack.c.bf16 %v6717, %v6715
    %v6924 = vpack.c.bf16 %v6718, %v6716
    %v6925 = vpack.c.bf16 %v6721, %v6719
    %v6926 = vpack.c.bf16 %v6722, %v6720
    %v6927 = vpack.c.bf16 %v6725, %v6723
    %v6928 = vpack.c.bf16 %v6726, %v6724
    %v6929 = vpack.c.bf16 %v6729, %v6727
    %v6930 = vpack.c.bf16 %v6730, %v6728
    %v6931 = vpack.c.bf16 %v6733, %v6731
    %v6932 = vpack.c.bf16 %v6734, %v6732
    %v6933 = vpack.c.bf16 %v6737, %v6735
    %v6934 = vpack.c.bf16 %v6738, %v6736
    %v6935 = vpack.c.bf16 %v6741, %v6739
    %v6936 = vpack.c.bf16 %v6742, %v6740
    %v6937 = vpack.c.bf16 %v6745, %v6743
    %v6938 = vpack.c.bf16 %v6746, %v6744
    %v6939 = vpack.c.bf16 %v6749, %v6747
    %v6940 = vpack.c.bf16 %v6750, %v6748
    %v6941 = vpack.c.bf16 %v6753, %v6751
    %v6942 = vpack.c.bf16 %v6754, %v6752
    %v6943 = vpack.c.bf16 %v6757, %v6755
    %v6944 = vpack.c.bf16 %v6758, %v6756
    %v6945 = vpack.c.bf16 %v6761, %v6759
    %v6946 = vpack.c.bf16 %v6762, %v6760
    %v6947 = vpack.c.bf16 %v6765, %v6763
    %v6948 = vpack.c.bf16 %v6766, %v6764
    %v6949 = vpack.c.bf16 %v6769, %v6767
    %v6950 = vpack.c.bf16 %v6770, %v6768
    %v6951 = vpack.c.bf16 %v6773, %v6771
    %v6952 = vpack.c.bf16 %v6774, %v6772
    %v6953 = vpack.c.bf16 %v6777, %v6775
    %v6954 = vpack.c.bf16 %v6778, %v6776
    %v6955 = vpack.c.bf16 %v6781, %v6779
    %v6956 = vpack.c.bf16 %v6782, %v6780
    %v6957 = vpack.c.bf16 %v6785, %v6783
    %v6958 = vpack.c.bf16 %v6786, %v6784
    %v6959 = vpack.c.bf16 %v6789, %v6787
    %v6960 = vpack.c.bf16 %v6790, %v6788
    %v6961 = vpack.c.bf16 %v6793, %v6791
    %v6962 = vpack.c.bf16 %v6794, %v6792
    %v6963 = vpack.c.bf16 %v6797, %v6795
    %v6964 = vpack.c.bf16 %v6798, %v6796
    %v6965 = vpack.c.bf16 %v6801, %v6799
    %v6966 = vpack.c.bf16 %v6802, %v6800
    %v6967 = vpack.c.bf16 %v6805, %v6803
    %v6968 = vpack.c.bf16 %v6806, %v6804
    %v6969 = vpack.c.bf16 %v6809, %v6807
    %v6970 = vpack.c.bf16 %v6810, %v6808
    %v6971 = vpack.c.bf16 %v6813, %v6811
    %v6972 = vpack.c.bf16 %v6814, %v6812
    %v6973 = vpack.c.bf16 %v6817, %v6815
    %v6974 = vpack.c.bf16 %v6818, %v6816
    %v6975 = vpack.c.bf16 %v6821, %v6819
    %v6976 = vpack.c.bf16 %v6822, %v6820
    %v6977 = vpack.c.bf16 %v6825, %v6823
    %v6978 = vpack.c.bf16 %v6826, %v6824
    %v6979 = vpack.c.bf16 %v6829, %v6827
    %v6980 = vpack.c.bf16 %v6830, %v6828
    %v6981 = vpack.c.bf16 %v6833, %v6831
    %v6982 = vpack.c.bf16 %v6834, %v6832
    %v6983 = vpack.c.bf16 %v6837, %v6835
    %v6984 = vpack.c.bf16 %v6838, %v6836
    %v6985 = vpack.c.bf16 %v6841, %v6839
    %v6986 = vpack.c.bf16 %v6842, %v6840
    %v6987 = vpack.c.bf16 %v6845, %v6843
    %v6988 = vpack.c.bf16 %v6846, %v6844
    %v6989 = vpack.c.bf16 %v6849, %v6847
    %v6990 = vpack.c.bf16 %v6850, %v6848
    %v6991 = vpack.c.bf16 %v6853, %v6851
    %v6992 = vpack.c.bf16 %v6854, %v6852
    %v6993 = vpack.c.bf16 %v6857, %v6855
    %v6994 = vpack.c.bf16 %v6858, %v6856
    %v6995 = vpack.c.bf16 %v6861, %v6859
    %v6996 = vpack.c.bf16 %v6862, %v6860
    %v6997 = vpack.c.bf16 %v6865, %v6863
    %v6998 = vpack.c.bf16 %v6866, %v6864
    %v6999 = vpack.c.bf16 %v6869, %v6867
    %v7000 = vpack.c.bf16 %v6870, %v6868
    %v7001 = vpack.c.bf16 %v6873, %v6871
    %v7002 = vpack.c.bf16 %v6874, %v6872
    %v7003 = vld [vmem:[#allocation13] sm:$0xff]
    %v7004 = vld [vmem:[#allocation13 + $0x8] sm:$0xff]
    %v7005 = vld [vmem:[#allocation13 + $0x10] sm:$0xff]
    %v7006 = vld [vmem:[#allocation13 + $0x18] sm:$0xff]
    %v7007 = vld [vmem:[#allocation13 + $0x20] sm:$0xff]
    %v7008 = vld [vmem:[#allocation13 + $0x28] sm:$0xff]
    %v7009 = vld [vmem:[#allocation13 + $0x30] sm:$0xff]
    %v7010 = vld [vmem:[#allocation13 + $0x38] sm:$0xff]
    %v7011 = vld [vmem:[#allocation13 + $0x40] sm:$0xff]
    %v7012 = vld [vmem:[#allocation13 + $0x48] sm:$0xff]
    %v7013 = vld [vmem:[#allocation13 + $0x50] sm:$0xff]
    %v7014 = vld [vmem:[#allocation13 + $0x58] sm:$0xff]
    %v7015 = vld [vmem:[#allocation13 + $0x60] sm:$0xff]
    %v7016 = vld [vmem:[#allocation13 + $0x68] sm:$0xff]
    %v7017 = vld [vmem:[#allocation13 + $0x70] sm:$0xff]
    %v7018 = vld [vmem:[#allocation13 + $0x78] sm:$0xff]
    %v7019 = vld [vmem:[#allocation13 + $0x80] sm:$0xff]
    %v7020 = vld [vmem:[#allocation13 + $0x88] sm:$0xff]
    %v7021 = vld [vmem:[#allocation13 + $0x90] sm:$0xff]
    %v7022 = vld [vmem:[#allocation13 + $0x98] sm:$0xff]
    %v7023 = vld [vmem:[#allocation13 + $0xa0] sm:$0xff]
    %v7024 = vld [vmem:[#allocation13 + $0xa8] sm:$0xff]
    %v7025 = vld [vmem:[#allocation13 + $0xb0] sm:$0xff]
    %v7026 = vld [vmem:[#allocation13 + $0xb8] sm:$0xff]
    %v7027 = vld [vmem:[#allocation13 + $0xc0] sm:$0xff]
    %v7028 = vld [vmem:[#allocation13 + $0xc8] sm:$0xff]
    %v7029 = vld [vmem:[#allocation13 + $0xd0] sm:$0xff]
    %v7030 = vld [vmem:[#allocation13 + $0xd8] sm:$0xff]
    %v7031 = vld [vmem:[#allocation13 + $0xe0] sm:$0xff]
    %v7032 = vld [vmem:[#allocation13 + $0xe8] sm:$0xff]
    %v7033 = vld [vmem:[#allocation13 + $0xf0] sm:$0xff]
    %v7034 = vld [vmem:[#allocation13 + $0xf8] sm:$0xff]
    %v7035 = vld [vmem:[#allocation13 + $0x100] sm:$0xff]
    %v7036 = vld [vmem:[#allocation13 + $0x108] sm:$0xff]
    %v7037 = vld [vmem:[#allocation13 + $0x110] sm:$0xff]
    %v7038 = vld [vmem:[#allocation13 + $0x118] sm:$0xff]
    %v7039 = vld [vmem:[#allocation13 + $0x120] sm:$0xff]
    %v7040 = vld [vmem:[#allocation13 + $0x128] sm:$0xff]
    %v7041 = vld [vmem:[#allocation13 + $0x130] sm:$0xff]
    %v7042 = vld [vmem:[#allocation13 + $0x138] sm:$0xff]
    %v7043 = vld [vmem:[#allocation13 + $0x140] sm:$0xff]
    %v7044 = vld [vmem:[#allocation13 + $0x148] sm:$0xff]
    %v7045 = vld [vmem:[#allocation13 + $0x150] sm:$0xff]
    %v7046 = vld [vmem:[#allocation13 + $0x158] sm:$0xff]
    %v7047 = vld [vmem:[#allocation13 + $0x160] sm:$0xff]
    %v7048 = vld [vmem:[#allocation13 + $0x168] sm:$0xff]
    %v7049 = vld [vmem:[#allocation13 + $0x170] sm:$0xff]
    %v7050 = vld [vmem:[#allocation13 + $0x178] sm:$0xff]
    %v7051 = vld [vmem:[#allocation13 + $0x180] sm:$0xff]
    %v7052 = vld [vmem:[#allocation13 + $0x188] sm:$0xff]
    %v7053 = vld [vmem:[#allocation13 + $0x190] sm:$0xff]
    %v7054 = vld [vmem:[#allocation13 + $0x198] sm:$0xff]
    %v7055 = vld [vmem:[#allocation13 + $0x1a0] sm:$0xff]
    %v7056 = vld [vmem:[#allocation13 + $0x1a8] sm:$0xff]
    %v7057 = vld [vmem:[#allocation13 + $0x1b0] sm:$0xff]
    %v7058 = vld [vmem:[#allocation13 + $0x1b8] sm:$0xff]
    %v7059 = vld [vmem:[#allocation13 + $0x1c0] sm:$0xff]
    %v7060 = vld [vmem:[#allocation13 + $0x1c8] sm:$0xff]
    %v7061 = vld [vmem:[#allocation13 + $0x1d0] sm:$0xff]
    %v7062 = vld [vmem:[#allocation13 + $0x1d8] sm:$0xff]
    %v7063 = vld [vmem:[#allocation13 + $0x1e0] sm:$0xff]
    %v7064 = vld [vmem:[#allocation13 + $0x1e8] sm:$0xff]
    %v7065 = vld [vmem:[#allocation13 + $0x1f0] sm:$0xff]
    %v7066 = vld [vmem:[#allocation13 + $0x1f8] sm:$0xff]
    %v7067 = vld [vmem:[#allocation13 + $0x200] sm:$0xff]
    %v7068 = vld [vmem:[#allocation13 + $0x208] sm:$0xff]
    %v7069 = vld [vmem:[#allocation13 + $0x210] sm:$0xff]
    %v7070 = vld [vmem:[#allocation13 + $0x218] sm:$0xff]
    %v7071 = vld [vmem:[#allocation13 + $0x220] sm:$0xff]
    %v7072 = vld [vmem:[#allocation13 + $0x228] sm:$0xff]
    %v7073 = vld [vmem:[#allocation13 + $0x230] sm:$0xff]
    %v7074 = vld [vmem:[#allocation13 + $0x238] sm:$0xff]
    %v7075 = vld [vmem:[#allocation13 + $0x240] sm:$0xff]
    %v7076 = vld [vmem:[#allocation13 + $0x248] sm:$0xff]
    %v7077 = vld [vmem:[#allocation13 + $0x250] sm:$0xff]
    %v7078 = vld [vmem:[#allocation13 + $0x258] sm:$0xff]
    %v7079 = vld [vmem:[#allocation13 + $0x260] sm:$0xff]
    %v7080 = vld [vmem:[#allocation13 + $0x268] sm:$0xff]
    %v7081 = vld [vmem:[#allocation13 + $0x270] sm:$0xff]
    %v7082 = vld [vmem:[#allocation13 + $0x278] sm:$0xff]
    %v7083 = vld [vmem:[#allocation13 + $0x280] sm:$0xff]
    %v7084 = vld [vmem:[#allocation13 + $0x288] sm:$0xff]
    %v7085 = vld [vmem:[#allocation13 + $0x290] sm:$0xff]
    %v7086 = vld [vmem:[#allocation13 + $0x298] sm:$0xff]
    %v7087 = vld [vmem:[#allocation13 + $0x2a0] sm:$0xff]
    %v7088 = vld [vmem:[#allocation13 + $0x2a8] sm:$0xff]
    %v7089 = vld [vmem:[#allocation13 + $0x2b0] sm:$0xff]
    %v7090 = vld [vmem:[#allocation13 + $0x2b8] sm:$0xff]
    %v7091 = vld [vmem:[#allocation13 + $0x2c0] sm:$0xff]
    %v7092 = vld [vmem:[#allocation13 + $0x2c8] sm:$0xff]
    %v7093 = vld [vmem:[#allocation13 + $0x2d0] sm:$0xff]
    %v7094 = vld [vmem:[#allocation13 + $0x2d8] sm:$0xff]
    %v7095 = vld [vmem:[#allocation13 + $0x2e0] sm:$0xff]
    %v7096 = vld [vmem:[#allocation13 + $0x2e8] sm:$0xff]
    %v7097 = vld [vmem:[#allocation13 + $0x2f0] sm:$0xff]
    %v7098 = vld [vmem:[#allocation13 + $0x2f8] sm:$0xff]
    %v7099 = vld [vmem:[#allocation13 + $0x300] sm:$0xff]
    %v7100 = vld [vmem:[#allocation13 + $0x308] sm:$0xff]
    %v7101 = vld [vmem:[#allocation13 + $0x310] sm:$0xff]
    %v7102 = vld [vmem:[#allocation13 + $0x318] sm:$0xff]
    %v7103 = vld [vmem:[#allocation13 + $0x320] sm:$0xff]
    %v7104 = vld [vmem:[#allocation13 + $0x328] sm:$0xff]
    %v7105 = vld [vmem:[#allocation13 + $0x330] sm:$0xff]
    %v7106 = vld [vmem:[#allocation13 + $0x338] sm:$0xff]
    %v7107 = vld [vmem:[#allocation13 + $0x340] sm:$0xff]
    %v7108 = vld [vmem:[#allocation13 + $0x348] sm:$0xff]
    %v7109 = vld [vmem:[#allocation13 + $0x350] sm:$0xff]
    %v7110 = vld [vmem:[#allocation13 + $0x358] sm:$0xff]
    %v7111 = vld [vmem:[#allocation13 + $0x360] sm:$0xff]
    %v7112 = vld [vmem:[#allocation13 + $0x368] sm:$0xff]
    %v7113 = vld [vmem:[#allocation13 + $0x370] sm:$0xff]
    %v7114 = vld [vmem:[#allocation13 + $0x378] sm:$0xff]
    %v7115 = vld [vmem:[#allocation13 + $0x380] sm:$0xff]
    %v7116 = vld [vmem:[#allocation13 + $0x388] sm:$0xff]
    %v7117 = vld [vmem:[#allocation13 + $0x390] sm:$0xff]
    %v7118 = vld [vmem:[#allocation13 + $0x398] sm:$0xff]
    %v7119 = vld [vmem:[#allocation13 + $0x3a0] sm:$0xff]
    %v7120 = vld [vmem:[#allocation13 + $0x3a8] sm:$0xff]
    %v7121 = vld [vmem:[#allocation13 + $0x3b0] sm:$0xff]
    %v7122 = vld [vmem:[#allocation13 + $0x3b8] sm:$0xff]
    %v7123 = vld [vmem:[#allocation13 + $0x3c0] sm:$0xff]
    %v7124 = vld [vmem:[#allocation13 + $0x3c8] sm:$0xff]
    %v7125 = vld [vmem:[#allocation13 + $0x3d0] sm:$0xff]
    %v7126 = vld [vmem:[#allocation13 + $0x3d8] sm:$0xff]
    %v7127 = vld [vmem:[#allocation13 + $0x3e0] sm:$0xff]
    %v7128 = vld [vmem:[#allocation13 + $0x3e8] sm:$0xff]
    %v7129 = vld [vmem:[#allocation13 + $0x3f0] sm:$0xff]
    %v7130 = vld [vmem:[#allocation13 + $0x3f8] sm:$0xff]
    %v7131 = vld [vmem:[#allocation13 + $0x400] sm:$0xff]
    %v7132 = vld [vmem:[#allocation13 + $0x408] sm:$0xff]
    %v7133 = vld [vmem:[#allocation13 + $0x410] sm:$0xff]
    %v7134 = vld [vmem:[#allocation13 + $0x418] sm:$0xff]
    %v7135 = vld [vmem:[#allocation13 + $0x420] sm:$0xff]
    %v7136 = vld [vmem:[#allocation13 + $0x428] sm:$0xff]
    %v7137 = vld [vmem:[#allocation13 + $0x430] sm:$0xff]
    %v7138 = vld [vmem:[#allocation13 + $0x438] sm:$0xff]
    %v7139 = vld [vmem:[#allocation13 + $0x440] sm:$0xff]
    %v7140 = vld [vmem:[#allocation13 + $0x448] sm:$0xff]
    %v7141 = vld [vmem:[#allocation13 + $0x450] sm:$0xff]
    %v7142 = vld [vmem:[#allocation13 + $0x458] sm:$0xff]
    %v7143 = vld [vmem:[#allocation13 + $0x460] sm:$0xff]
    %v7144 = vld [vmem:[#allocation13 + $0x468] sm:$0xff]
    %v7145 = vld [vmem:[#allocation13 + $0x470] sm:$0xff]
    %v7146 = vld [vmem:[#allocation13 + $0x478] sm:$0xff]
    %v7147 = vld [vmem:[#allocation13 + $0x480] sm:$0xff]
    %v7148 = vld [vmem:[#allocation13 + $0x488] sm:$0xff]
    %v7149 = vld [vmem:[#allocation13 + $0x490] sm:$0xff]
    %v7150 = vld [vmem:[#allocation13 + $0x498] sm:$0xff]
    %v7151 = vld [vmem:[#allocation13 + $0x4a0] sm:$0xff]
    %v7152 = vld [vmem:[#allocation13 + $0x4a8] sm:$0xff]
    %v7153 = vld [vmem:[#allocation13 + $0x4b0] sm:$0xff]
    %v7154 = vld [vmem:[#allocation13 + $0x4b8] sm:$0xff]
    %v7155 = vld [vmem:[#allocation13 + $0x4c0] sm:$0xff]
    %v7156 = vld [vmem:[#allocation13 + $0x4c8] sm:$0xff]
    %v7157 = vld [vmem:[#allocation13 + $0x4d0] sm:$0xff]
    %v7158 = vld [vmem:[#allocation13 + $0x4d8] sm:$0xff]
    %v7159 = vld [vmem:[#allocation13 + $0x4e0] sm:$0xff]
    %v7160 = vld [vmem:[#allocation13 + $0x4e8] sm:$0xff]
    %v7161 = vld [vmem:[#allocation13 + $0x4f0] sm:$0xff]
    %v7162 = vld [vmem:[#allocation13 + $0x4f8] sm:$0xff]
    %v7163 = vld [vmem:[#allocation13 + $0x500] sm:$0xff]
    %v7164 = vld [vmem:[#allocation13 + $0x508] sm:$0xff]
    %v7165 = vld [vmem:[#allocation13 + $0x510] sm:$0xff]
    %v7166 = vld [vmem:[#allocation13 + $0x518] sm:$0xff]
    %v7167 = vld [vmem:[#allocation13 + $0x520] sm:$0xff]
    %v7168 = vld [vmem:[#allocation13 + $0x528] sm:$0xff]
    %v7169 = vld [vmem:[#allocation13 + $0x530] sm:$0xff]
    %v7170 = vld [vmem:[#allocation13 + $0x538] sm:$0xff]
    %v7171 = vld [vmem:[#allocation13 + $0x540] sm:$0xff]
    %v7172 = vld [vmem:[#allocation13 + $0x548] sm:$0xff]
    %v7173 = vld [vmem:[#allocation13 + $0x550] sm:$0xff]
    %v7174 = vld [vmem:[#allocation13 + $0x558] sm:$0xff]
    %v7175 = vld [vmem:[#allocation13 + $0x560] sm:$0xff]
    %v7176 = vld [vmem:[#allocation13 + $0x568] sm:$0xff]
    %v7177 = vld [vmem:[#allocation13 + $0x570] sm:$0xff]
    %v7178 = vld [vmem:[#allocation13 + $0x578] sm:$0xff]
    %v7179 = vld [vmem:[#allocation13 + $0x580] sm:$0xff]
    %v7180 = vld [vmem:[#allocation13 + $0x588] sm:$0xff]
    %v7181 = vld [vmem:[#allocation13 + $0x590] sm:$0xff]
    %v7182 = vld [vmem:[#allocation13 + $0x598] sm:$0xff]
    %v7183 = vld [vmem:[#allocation13 + $0x5a0] sm:$0xff]
    %v7184 = vld [vmem:[#allocation13 + $0x5a8] sm:$0xff]
    %v7185 = vld [vmem:[#allocation13 + $0x5b0] sm:$0xff]
    %v7186 = vld [vmem:[#allocation13 + $0x5b8] sm:$0xff]
    %v7187 = vld [vmem:[#allocation13 + $0x5c0] sm:$0xff]
    %v7188 = vld [vmem:[#allocation13 + $0x5c8] sm:$0xff]
    %v7189 = vld [vmem:[#allocation13 + $0x5d0] sm:$0xff]
    %v7190 = vld [vmem:[#allocation13 + $0x5d8] sm:$0xff]
    %v7191 = vld [vmem:[#allocation13 + $0x5e0] sm:$0xff]
    %v7192 = vld [vmem:[#allocation13 + $0x5e8] sm:$0xff]
    %v7193 = vld [vmem:[#allocation13 + $0x5f0] sm:$0xff]
    %v7194 = vld [vmem:[#allocation13 + $0x5f8] sm:$0xff]
    %v7195 = vld [vmem:[#allocation13 + $0x600] sm:$0xff]
    %v7196 = vld [vmem:[#allocation13 + $0x608] sm:$0xff]
    %v7197 = vld [vmem:[#allocation13 + $0x610] sm:$0xff]
    %v7198 = vld [vmem:[#allocation13 + $0x618] sm:$0xff]
    %v7199 = vld [vmem:[#allocation13 + $0x620] sm:$0xff]
    %v7200 = vld [vmem:[#allocation13 + $0x628] sm:$0xff]
    %v7201 = vld [vmem:[#allocation13 + $0x630] sm:$0xff]
    %v7202 = vld [vmem:[#allocation13 + $0x638] sm:$0xff]
    %v7203 = vld [vmem:[#allocation13 + $0x640] sm:$0xff]
    %v7204 = vld [vmem:[#allocation13 + $0x648] sm:$0xff]
    %v7205 = vld [vmem:[#allocation13 + $0x650] sm:$0xff]
    %v7206 = vld [vmem:[#allocation13 + $0x658] sm:$0xff]
    %v7207 = vld [vmem:[#allocation13 + $0x660] sm:$0xff]
    %v7208 = vld [vmem:[#allocation13 + $0x668] sm:$0xff]
    %v7209 = vld [vmem:[#allocation13 + $0x670] sm:$0xff]
    %v7210 = vld [vmem:[#allocation13 + $0x678] sm:$0xff]
    %v7211 = vld [vmem:[#allocation13 + $0x680] sm:$0xff]
    %v7212 = vld [vmem:[#allocation13 + $0x688] sm:$0xff]
    %v7213 = vld [vmem:[#allocation13 + $0x690] sm:$0xff]
    %v7214 = vld [vmem:[#allocation13 + $0x698] sm:$0xff]
    %v7215 = vld [vmem:[#allocation13 + $0x6a0] sm:$0xff]
    %v7216 = vld [vmem:[#allocation13 + $0x6a8] sm:$0xff]
    %v7217 = vld [vmem:[#allocation13 + $0x6b0] sm:$0xff]
    %v7218 = vld [vmem:[#allocation13 + $0x6b8] sm:$0xff]
    %v7219 = vld [vmem:[#allocation13 + $0x6c0] sm:$0xff]
    %v7220 = vld [vmem:[#allocation13 + $0x6c8] sm:$0xff]
    %v7221 = vld [vmem:[#allocation13 + $0x6d0] sm:$0xff]
    %v7222 = vld [vmem:[#allocation13 + $0x6d8] sm:$0xff]
    %v7223 = vld [vmem:[#allocation13 + $0x6e0] sm:$0xff]
    %v7224 = vld [vmem:[#allocation13 + $0x6e8] sm:$0xff]
    %v7225 = vld [vmem:[#allocation13 + $0x6f0] sm:$0xff]
    %v7226 = vld [vmem:[#allocation13 + $0x6f8] sm:$0xff]
    %v7227 = vld [vmem:[#allocation13 + $0x700] sm:$0xff]
    %v7228 = vld [vmem:[#allocation13 + $0x708] sm:$0xff]
    %v7229 = vld [vmem:[#allocation13 + $0x710] sm:$0xff]
    %v7230 = vld [vmem:[#allocation13 + $0x718] sm:$0xff]
    %v7231 = vld [vmem:[#allocation13 + $0x720] sm:$0xff]
    %v7232 = vld [vmem:[#allocation13 + $0x728] sm:$0xff]
    %v7233 = vld [vmem:[#allocation13 + $0x730] sm:$0xff]
    %v7234 = vld [vmem:[#allocation13 + $0x738] sm:$0xff]
    %v7235 = vld [vmem:[#allocation13 + $0x740] sm:$0xff]
    %v7236 = vld [vmem:[#allocation13 + $0x748] sm:$0xff]
    %v7237 = vld [vmem:[#allocation13 + $0x750] sm:$0xff]
    %v7238 = vld [vmem:[#allocation13 + $0x758] sm:$0xff]
    %v7239 = vld [vmem:[#allocation13 + $0x760] sm:$0xff]
    %v7240 = vld [vmem:[#allocation13 + $0x768] sm:$0xff]
    %v7241 = vld [vmem:[#allocation13 + $0x770] sm:$0xff]
    %v7242 = vld [vmem:[#allocation13 + $0x778] sm:$0xff]
    %v7243 = vld [vmem:[#allocation13 + $0x780] sm:$0xff]
    %v7244 = vld [vmem:[#allocation13 + $0x788] sm:$0xff]
    %v7245 = vld [vmem:[#allocation13 + $0x790] sm:$0xff]
    %v7246 = vld [vmem:[#allocation13 + $0x798] sm:$0xff]
    %v7247 = vld [vmem:[#allocation13 + $0x7a0] sm:$0xff]
    %v7248 = vld [vmem:[#allocation13 + $0x7a8] sm:$0xff]
    %v7249 = vld [vmem:[#allocation13 + $0x7b0] sm:$0xff]
    %v7250 = vld [vmem:[#allocation13 + $0x7b8] sm:$0xff]
    %v7251 = vld [vmem:[#allocation13 + $0x7c0] sm:$0xff]
    %v7252 = vld [vmem:[#allocation13 + $0x7c8] sm:$0xff]
    %v7253 = vld [vmem:[#allocation13 + $0x7d0] sm:$0xff]
    %v7254 = vld [vmem:[#allocation13 + $0x7d8] sm:$0xff]
    %v7255 = vld [vmem:[#allocation13 + $0x7e0] sm:$0xff]
    %v7256 = vld [vmem:[#allocation13 + $0x7e8] sm:$0xff]
    %v7257 = vld [vmem:[#allocation13 + $0x7f0] sm:$0xff]
    %v7258 = vld [vmem:[#allocation13 + $0x7f8] sm:$0xff]
    %v7259 = vld [vmem:[#allocation14] sm:$0xff]
    %v7260 = vld [vmem:[#allocation14 + $0x8] sm:$0xff]
    %v7261 = vld [vmem:[#allocation14 + $0x10] sm:$0xff]
    %v7262 = vld [vmem:[#allocation14 + $0x18] sm:$0xff]
    %v7263 = vld [vmem:[#allocation14 + $0x20] sm:$0xff]
    %v7264 = vld [vmem:[#allocation14 + $0x28] sm:$0xff]
    %v7265 = vld [vmem:[#allocation14 + $0x30] sm:$0xff]
    %v7266 = vld [vmem:[#allocation14 + $0x38] sm:$0xff]
    %v7267 = vld [vmem:[#allocation14 + $0x40] sm:$0xff]
    %v7268 = vld [vmem:[#allocation14 + $0x48] sm:$0xff]
    %v7269 = vld [vmem:[#allocation14 + $0x50] sm:$0xff]
    %v7270 = vld [vmem:[#allocation14 + $0x58] sm:$0xff]
    %v7271 = vld [vmem:[#allocation14 + $0x60] sm:$0xff]
    %v7272 = vld [vmem:[#allocation14 + $0x68] sm:$0xff]
    %v7273 = vld [vmem:[#allocation14 + $0x70] sm:$0xff]
    %v7274 = vld [vmem:[#allocation14 + $0x78] sm:$0xff]
    %v7275 = vld [vmem:[#allocation14 + $0x80] sm:$0xff]
    %v7276 = vld [vmem:[#allocation14 + $0x88] sm:$0xff]
    %v7277 = vld [vmem:[#allocation14 + $0x90] sm:$0xff]
    %v7278 = vld [vmem:[#allocation14 + $0x98] sm:$0xff]
    %v7279 = vld [vmem:[#allocation14 + $0xa0] sm:$0xff]
    %v7280 = vld [vmem:[#allocation14 + $0xa8] sm:$0xff]
    %v7281 = vld [vmem:[#allocation14 + $0xb0] sm:$0xff]
    %v7282 = vld [vmem:[#allocation14 + $0xb8] sm:$0xff]
    %v7283 = vld [vmem:[#allocation14 + $0xc0] sm:$0xff]
    %v7284 = vld [vmem:[#allocation14 + $0xc8] sm:$0xff]
    %v7285 = vld [vmem:[#allocation14 + $0xd0] sm:$0xff]
    %v7286 = vld [vmem:[#allocation14 + $0xd8] sm:$0xff]
    %v7287 = vld [vmem:[#allocation14 + $0xe0] sm:$0xff]
    %v7288 = vld [vmem:[#allocation14 + $0xe8] sm:$0xff]
    %v7289 = vld [vmem:[#allocation14 + $0xf0] sm:$0xff]
    %v7290 = vld [vmem:[#allocation14 + $0xf8] sm:$0xff]
    %v7291 = vld [vmem:[#allocation14 + $0x100] sm:$0xff]
    %v7292 = vld [vmem:[#allocation14 + $0x108] sm:$0xff]
    %v7293 = vld [vmem:[#allocation14 + $0x110] sm:$0xff]
    %v7294 = vld [vmem:[#allocation14 + $0x118] sm:$0xff]
    %v7295 = vld [vmem:[#allocation14 + $0x120] sm:$0xff]
    %v7296 = vld [vmem:[#allocation14 + $0x128] sm:$0xff]
    %v7297 = vld [vmem:[#allocation14 + $0x130] sm:$0xff]
    %v7298 = vld [vmem:[#allocation14 + $0x138] sm:$0xff]
    %v7299 = vld [vmem:[#allocation14 + $0x140] sm:$0xff]
    %v7300 = vld [vmem:[#allocation14 + $0x148] sm:$0xff]
    %v7301 = vld [vmem:[#allocation14 + $0x150] sm:$0xff]
    %v7302 = vld [vmem:[#allocation14 + $0x158] sm:$0xff]
    %v7303 = vld [vmem:[#allocation14 + $0x160] sm:$0xff]
    %v7304 = vld [vmem:[#allocation14 + $0x168] sm:$0xff]
    %v7305 = vld [vmem:[#allocation14 + $0x170] sm:$0xff]
    %v7306 = vld [vmem:[#allocation14 + $0x178] sm:$0xff]
    %v7307 = vld [vmem:[#allocation14 + $0x180] sm:$0xff]
    %v7308 = vld [vmem:[#allocation14 + $0x188] sm:$0xff]
    %v7309 = vld [vmem:[#allocation14 + $0x190] sm:$0xff]
    %v7310 = vld [vmem:[#allocation14 + $0x198] sm:$0xff]
    %v7311 = vld [vmem:[#allocation14 + $0x1a0] sm:$0xff]
    %v7312 = vld [vmem:[#allocation14 + $0x1a8] sm:$0xff]
    %v7313 = vld [vmem:[#allocation14 + $0x1b0] sm:$0xff]
    %v7314 = vld [vmem:[#allocation14 + $0x1b8] sm:$0xff]
    %v7315 = vld [vmem:[#allocation14 + $0x1c0] sm:$0xff]
    %v7316 = vld [vmem:[#allocation14 + $0x1c8] sm:$0xff]
    %v7317 = vld [vmem:[#allocation14 + $0x1d0] sm:$0xff]
    %v7318 = vld [vmem:[#allocation14 + $0x1d8] sm:$0xff]
    %v7319 = vld [vmem:[#allocation14 + $0x1e0] sm:$0xff]
    %v7320 = vld [vmem:[#allocation14 + $0x1e8] sm:$0xff]
    %v7321 = vld [vmem:[#allocation14 + $0x1f0] sm:$0xff]
    %v7322 = vld [vmem:[#allocation14 + $0x1f8] sm:$0xff]
    %7324 = vset.pattern.permute.xlu0 0
    %7325 = vperm.xlu0 %7324, %v7259
    %v7326 = vpop.permute.xlu0 %7325
    %7329 = vset.pattern.permute.xlu0 0
    %7330 = vperm.xlu0 %7329, %v7260
    %v7331 = vpop.permute.xlu0 %7330
    %7334 = vset.pattern.permute.xlu0 0
    %7335 = vperm.xlu0 %7334, %v7261
    %v7336 = vpop.permute.xlu0 %7335
    %7339 = vset.pattern.permute.xlu0 0
    %7340 = vperm.xlu0 %7339, %v7262
    %v7341 = vpop.permute.xlu0 %7340
    %7344 = vset.pattern.permute.xlu0 0
    %7345 = vperm.xlu0 %7344, %v7263
    %v7346 = vpop.permute.xlu0 %7345
    %7349 = vset.pattern.permute.xlu0 0
    %7350 = vperm.xlu0 %7349, %v7264
    %v7351 = vpop.permute.xlu0 %7350
    %7354 = vset.pattern.permute.xlu0 0
    %7355 = vperm.xlu0 %7354, %v7265
    %v7356 = vpop.permute.xlu0 %7355
    %7359 = vset.pattern.permute.xlu0 0
    %7360 = vperm.xlu0 %7359, %v7266
    %v7361 = vpop.permute.xlu0 %7360
    %7364 = vset.pattern.permute.xlu0 0
    %7365 = vperm.xlu0 %7364, %v7267
    %v7366 = vpop.permute.xlu0 %7365
    %7369 = vset.pattern.permute.xlu0 0
    %7370 = vperm.xlu0 %7369, %v7268
    %v7371 = vpop.permute.xlu0 %7370
    %7374 = vset.pattern.permute.xlu0 0
    %7375 = vperm.xlu0 %7374, %v7269
    %v7376 = vpop.permute.xlu0 %7375
    %7379 = vset.pattern.permute.xlu0 0
    %7380 = vperm.xlu0 %7379, %v7270
    %v7381 = vpop.permute.xlu0 %7380
    %7384 = vset.pattern.permute.xlu0 0
    %7385 = vperm.xlu0 %7384, %v7271
    %v7386 = vpop.permute.xlu0 %7385
    %7389 = vset.pattern.permute.xlu0 0
    %7390 = vperm.xlu0 %7389, %v7272
    %v7391 = vpop.permute.xlu0 %7390
    %7394 = vset.pattern.permute.xlu0 0
    %7395 = vperm.xlu0 %7394, %v7273
    %v7396 = vpop.permute.xlu0 %7395
    %7399 = vset.pattern.permute.xlu0 0
    %7400 = vperm.xlu0 %7399, %v7274
    %v7401 = vpop.permute.xlu0 %7400
    %7404 = vset.pattern.permute.xlu0 0
    %7405 = vperm.xlu0 %7404, %v7275
    %v7406 = vpop.permute.xlu0 %7405
    %7409 = vset.pattern.permute.xlu0 0
    %7410 = vperm.xlu0 %7409, %v7276
    %v7411 = vpop.permute.xlu0 %7410
    %7414 = vset.pattern.permute.xlu0 0
    %7415 = vperm.xlu0 %7414, %v7277
    %v7416 = vpop.permute.xlu0 %7415
    %7419 = vset.pattern.permute.xlu0 0
    %7420 = vperm.xlu0 %7419, %v7278
    %v7421 = vpop.permute.xlu0 %7420
    %7424 = vset.pattern.permute.xlu0 0
    %7425 = vperm.xlu0 %7424, %v7279
    %v7426 = vpop.permute.xlu0 %7425
    %7429 = vset.pattern.permute.xlu0 0
    %7430 = vperm.xlu0 %7429, %v7280
    %v7431 = vpop.permute.xlu0 %7430
    %7434 = vset.pattern.permute.xlu0 0
    %7435 = vperm.xlu0 %7434, %v7281
    %v7436 = vpop.permute.xlu0 %7435
    %7439 = vset.pattern.permute.xlu0 0
    %7440 = vperm.xlu0 %7439, %v7282
    %v7441 = vpop.permute.xlu0 %7440
    %7444 = vset.pattern.permute.xlu0 0
    %7445 = vperm.xlu0 %7444, %v7283
    %v7446 = vpop.permute.xlu0 %7445
    %7449 = vset.pattern.permute.xlu0 0
    %7450 = vperm.xlu0 %7449, %v7284
    %v7451 = vpop.permute.xlu0 %7450
    %7454 = vset.pattern.permute.xlu0 0
    %7455 = vperm.xlu0 %7454, %v7285
    %v7456 = vpop.permute.xlu0 %7455
    %7459 = vset.pattern.permute.xlu0 0
    %7460 = vperm.xlu0 %7459, %v7286
    %v7461 = vpop.permute.xlu0 %7460
    %7464 = vset.pattern.permute.xlu0 0
    %7465 = vperm.xlu0 %7464, %v7287
    %v7466 = vpop.permute.xlu0 %7465
    %7469 = vset.pattern.permute.xlu0 0
    %7470 = vperm.xlu0 %7469, %v7288
    %v7471 = vpop.permute.xlu0 %7470
    %7474 = vset.pattern.permute.xlu0 0
    %7475 = vperm.xlu0 %7474, %v7289
    %v7476 = vpop.permute.xlu0 %7475
    %7479 = vset.pattern.permute.xlu0 0
    %7480 = vperm.xlu0 %7479, %v7290
    %v7481 = vpop.permute.xlu0 %7480
    %7484 = vset.pattern.permute.xlu0 0
    %7485 = vperm.xlu0 %7484, %v7291
    %v7486 = vpop.permute.xlu0 %7485
    %7489 = vset.pattern.permute.xlu0 0
    %7490 = vperm.xlu0 %7489, %v7292
    %v7491 = vpop.permute.xlu0 %7490
    %7494 = vset.pattern.permute.xlu0 0
    %7495 = vperm.xlu0 %7494, %v7293
    %v7496 = vpop.permute.xlu0 %7495
    %7499 = vset.pattern.permute.xlu0 0
    %7500 = vperm.xlu0 %7499, %v7294
    %v7501 = vpop.permute.xlu0 %7500
    %7504 = vset.pattern.permute.xlu0 0
    %7505 = vperm.xlu0 %7504, %v7295
    %v7506 = vpop.permute.xlu0 %7505
    %7509 = vset.pattern.permute.xlu0 0
    %7510 = vperm.xlu0 %7509, %v7296
    %v7511 = vpop.permute.xlu0 %7510
    %7514 = vset.pattern.permute.xlu0 0
    %7515 = vperm.xlu0 %7514, %v7297
    %v7516 = vpop.permute.xlu0 %7515
    %7519 = vset.pattern.permute.xlu0 0
    %7520 = vperm.xlu0 %7519, %v7298
    %v7521 = vpop.permute.xlu0 %7520
    %7524 = vset.pattern.permute.xlu0 0
    %7525 = vperm.xlu0 %7524, %v7299
    %v7526 = vpop.permute.xlu0 %7525
    %7529 = vset.pattern.permute.xlu0 0
    %7530 = vperm.xlu0 %7529, %v7300
    %v7531 = vpop.permute.xlu0 %7530
    %7534 = vset.pattern.permute.xlu0 0
    %7535 = vperm.xlu0 %7534, %v7301
    %v7536 = vpop.permute.xlu0 %7535
    %7539 = vset.pattern.permute.xlu0 0
    %7540 = vperm.xlu0 %7539, %v7302
    %v7541 = vpop.permute.xlu0 %7540
    %7544 = vset.pattern.permute.xlu0 0
    %7545 = vperm.xlu0 %7544, %v7303
    %v7546 = vpop.permute.xlu0 %7545
    %7549 = vset.pattern.permute.xlu0 0
    %7550 = vperm.xlu0 %7549, %v7304
    %v7551 = vpop.permute.xlu0 %7550
    %7554 = vset.pattern.permute.xlu0 0
    %7555 = vperm.xlu0 %7554, %v7305
    %v7556 = vpop.permute.xlu0 %7555
    %7559 = vset.pattern.permute.xlu0 0
    %7560 = vperm.xlu0 %7559, %v7306
    %v7561 = vpop.permute.xlu0 %7560
    %7564 = vset.pattern.permute.xlu0 0
    %7565 = vperm.xlu0 %7564, %v7307
    %v7566 = vpop.permute.xlu0 %7565
    %7569 = vset.pattern.permute.xlu0 0
    %7570 = vperm.xlu0 %7569, %v7308
    %v7571 = vpop.permute.xlu0 %7570
    %7574 = vset.pattern.permute.xlu0 0
    %7575 = vperm.xlu0 %7574, %v7309
    %v7576 = vpop.permute.xlu0 %7575
    %7579 = vset.pattern.permute.xlu0 0
    %7580 = vperm.xlu0 %7579, %v7310
    %v7581 = vpop.permute.xlu0 %7580
    %7584 = vset.pattern.permute.xlu0 0
    %7585 = vperm.xlu0 %7584, %v7311
    %v7586 = vpop.permute.xlu0 %7585
    %7589 = vset.pattern.permute.xlu0 0
    %7590 = vperm.xlu0 %7589, %v7312
    %v7591 = vpop.permute.xlu0 %7590
    %7594 = vset.pattern.permute.xlu0 0
    %7595 = vperm.xlu0 %7594, %v7313
    %v7596 = vpop.permute.xlu0 %7595
    %7599 = vset.pattern.permute.xlu0 0
    %7600 = vperm.xlu0 %7599, %v7314
    %v7601 = vpop.permute.xlu0 %7600
    %7604 = vset.pattern.permute.xlu0 0
    %7605 = vperm.xlu0 %7604, %v7315
    %v7606 = vpop.permute.xlu0 %7605
    %7609 = vset.pattern.permute.xlu0 0
    %7610 = vperm.xlu0 %7609, %v7316
    %v7611 = vpop.permute.xlu0 %7610
    %7614 = vset.pattern.permute.xlu0 0
    %7615 = vperm.xlu0 %7614, %v7317
    %v7616 = vpop.permute.xlu0 %7615
    %7619 = vset.pattern.permute.xlu0 0
    %7620 = vperm.xlu0 %7619, %v7318
    %v7621 = vpop.permute.xlu0 %7620
    %7624 = vset.pattern.permute.xlu0 0
    %7625 = vperm.xlu0 %7624, %v7319
    %v7626 = vpop.permute.xlu0 %7625
    %7629 = vset.pattern.permute.xlu0 0
    %7630 = vperm.xlu0 %7629, %v7320
    %v7631 = vpop.permute.xlu0 %7630
    %7634 = vset.pattern.permute.xlu0 0
    %7635 = vperm.xlu0 %7634, %v7321
    %v7636 = vpop.permute.xlu0 %7635
    %7639 = vset.pattern.permute.xlu0 0
    %7640 = vperm.xlu0 %7639, %v7322
    %v7641 = vpop.permute.xlu0 %7640
    %v7899 = vunpack.c.l.b16 %v7003
    %v7900 = vunpack.c.h.b16 %v7003
    %v7901 = vunpack.c.l.b16 %v7004
    %v7902 = vunpack.c.h.b16 %v7004
    %v7903 = vunpack.c.l.b16 %v7005
    %v7904 = vunpack.c.h.b16 %v7005
    %v7905 = vunpack.c.l.b16 %v7006
    %v7906 = vunpack.c.h.b16 %v7006
    %v7907 = vunpack.c.l.b16 %v7007
    %v7908 = vunpack.c.h.b16 %v7007
    %v7909 = vunpack.c.l.b16 %v7008
    %v7910 = vunpack.c.h.b16 %v7008
    %v7911 = vunpack.c.l.b16 %v7009
    %v7912 = vunpack.c.h.b16 %v7009
    %v7913 = vunpack.c.l.b16 %v7010
    %v7914 = vunpack.c.h.b16 %v7010
    %v7915 = vunpack.c.l.b16 %v7011
    %v7916 = vunpack.c.h.b16 %v7011
    %v7917 = vunpack.c.l.b16 %v7012
    %v7918 = vunpack.c.h.b16 %v7012
    %v7919 = vunpack.c.l.b16 %v7013
    %v7920 = vunpack.c.h.b16 %v7013
    %v7921 = vunpack.c.l.b16 %v7014
    %v7922 = vunpack.c.h.b16 %v7014
    %v7923 = vunpack.c.l.b16 %v7015
    %v7924 = vunpack.c.h.b16 %v7015
    %v7925 = vunpack.c.l.b16 %v7016
    %v7926 = vunpack.c.h.b16 %v7016
    %v7927 = vunpack.c.l.b16 %v7017
    %v7928 = vunpack.c.h.b16 %v7017
    %v7929 = vunpack.c.l.b16 %v7018
    %v7930 = vunpack.c.h.b16 %v7018
    %v7931 = vunpack.c.l.b16 %v7019
    %v7932 = vunpack.c.h.b16 %v7019
    %v7933 = vunpack.c.l.b16 %v7020
    %v7934 = vunpack.c.h.b16 %v7020
    %v7935 = vunpack.c.l.b16 %v7021
    %v7936 = vunpack.c.h.b16 %v7021
    %v7937 = vunpack.c.l.b16 %v7022
    %v7938 = vunpack.c.h.b16 %v7022
    %v7939 = vunpack.c.l.b16 %v7023
    %v7940 = vunpack.c.h.b16 %v7023
    %v7941 = vunpack.c.l.b16 %v7024
    %v7942 = vunpack.c.h.b16 %v7024
    %v7943 = vunpack.c.l.b16 %v7025
    %v7944 = vunpack.c.h.b16 %v7025
    %v7945 = vunpack.c.l.b16 %v7026
    %v7946 = vunpack.c.h.b16 %v7026
    %v7947 = vunpack.c.l.b16 %v7027
    %v7948 = vunpack.c.h.b16 %v7027
    %v7949 = vunpack.c.l.b16 %v7028
    %v7950 = vunpack.c.h.b16 %v7028
    %v7951 = vunpack.c.l.b16 %v7029
    %v7952 = vunpack.c.h.b16 %v7029
    %v7953 = vunpack.c.l.b16 %v7030
    %v7954 = vunpack.c.h.b16 %v7030
    %v7955 = vunpack.c.l.b16 %v7031
    %v7956 = vunpack.c.h.b16 %v7031
    %v7957 = vunpack.c.l.b16 %v7032
    %v7958 = vunpack.c.h.b16 %v7032
    %v7959 = vunpack.c.l.b16 %v7033
    %v7960 = vunpack.c.h.b16 %v7033
    %v7961 = vunpack.c.l.b16 %v7034
    %v7962 = vunpack.c.h.b16 %v7034
    %v7963 = vunpack.c.l.b16 %v7035
    %v7964 = vunpack.c.h.b16 %v7035
    %v7965 = vunpack.c.l.b16 %v7036
    %v7966 = vunpack.c.h.b16 %v7036
    %v7967 = vunpack.c.l.b16 %v7037
    %v7968 = vunpack.c.h.b16 %v7037
    %v7969 = vunpack.c.l.b16 %v7038
    %v7970 = vunpack.c.h.b16 %v7038
    %v7971 = vunpack.c.l.b16 %v7039
    %v7972 = vunpack.c.h.b16 %v7039
    %v7973 = vunpack.c.l.b16 %v7040
    %v7974 = vunpack.c.h.b16 %v7040
    %v7975 = vunpack.c.l.b16 %v7041
    %v7976 = vunpack.c.h.b16 %v7041
    %v7977 = vunpack.c.l.b16 %v7042
    %v7978 = vunpack.c.h.b16 %v7042
    %v7979 = vunpack.c.l.b16 %v7043
    %v7980 = vunpack.c.h.b16 %v7043
    %v7981 = vunpack.c.l.b16 %v7044
    %v7982 = vunpack.c.h.b16 %v7044
    %v7983 = vunpack.c.l.b16 %v7045
    %v7984 = vunpack.c.h.b16 %v7045
    %v7985 = vunpack.c.l.b16 %v7046
    %v7986 = vunpack.c.h.b16 %v7046
    %v7987 = vunpack.c.l.b16 %v7047
    %v7988 = vunpack.c.h.b16 %v7047
    %v7989 = vunpack.c.l.b16 %v7048
    %v7990 = vunpack.c.h.b16 %v7048
    %v7991 = vunpack.c.l.b16 %v7049
    %v7992 = vunpack.c.h.b16 %v7049
    %v7993 = vunpack.c.l.b16 %v7050
    %v7994 = vunpack.c.h.b16 %v7050
    %v7995 = vunpack.c.l.b16 %v7051
    %v7996 = vunpack.c.h.b16 %v7051
    %v7997 = vunpack.c.l.b16 %v7052
    %v7998 = vunpack.c.h.b16 %v7052
    %v7999 = vunpack.c.l.b16 %v7053
    %v8000 = vunpack.c.h.b16 %v7053
    %v8001 = vunpack.c.l.b16 %v7054
    %v8002 = vunpack.c.h.b16 %v7054
    %v8003 = vunpack.c.l.b16 %v7055
    %v8004 = vunpack.c.h.b16 %v7055
    %v8005 = vunpack.c.l.b16 %v7056
    %v8006 = vunpack.c.h.b16 %v7056
    %v8007 = vunpack.c.l.b16 %v7057
    %v8008 = vunpack.c.h.b16 %v7057
    %v8009 = vunpack.c.l.b16 %v7058
    %v8010 = vunpack.c.h.b16 %v7058
    %v8011 = vunpack.c.l.b16 %v7059
    %v8012 = vunpack.c.h.b16 %v7059
    %v8013 = vunpack.c.l.b16 %v7060
    %v8014 = vunpack.c.h.b16 %v7060
    %v8015 = vunpack.c.l.b16 %v7061
    %v8016 = vunpack.c.h.b16 %v7061
    %v8017 = vunpack.c.l.b16 %v7062
    %v8018 = vunpack.c.h.b16 %v7062
    %v8019 = vunpack.c.l.b16 %v7063
    %v8020 = vunpack.c.h.b16 %v7063
    %v8021 = vunpack.c.l.b16 %v7064
    %v8022 = vunpack.c.h.b16 %v7064
    %v8023 = vunpack.c.l.b16 %v7065
    %v8024 = vunpack.c.h.b16 %v7065
    %v8025 = vunpack.c.l.b16 %v7066
    %v8026 = vunpack.c.h.b16 %v7066
    %v8027 = vunpack.c.l.b16 %v7067
    %v8028 = vunpack.c.h.b16 %v7067
    %v8029 = vunpack.c.l.b16 %v7068
    %v8030 = vunpack.c.h.b16 %v7068
    %v8031 = vunpack.c.l.b16 %v7069
    %v8032 = vunpack.c.h.b16 %v7069
    %v8033 = vunpack.c.l.b16 %v7070
    %v8034 = vunpack.c.h.b16 %v7070
    %v8035 = vunpack.c.l.b16 %v7071
    %v8036 = vunpack.c.h.b16 %v7071
    %v8037 = vunpack.c.l.b16 %v7072
    %v8038 = vunpack.c.h.b16 %v7072
    %v8039 = vunpack.c.l.b16 %v7073
    %v8040 = vunpack.c.h.b16 %v7073
    %v8041 = vunpack.c.l.b16 %v7074
    %v8042 = vunpack.c.h.b16 %v7074
    %v8043 = vunpack.c.l.b16 %v7075
    %v8044 = vunpack.c.h.b16 %v7075
    %v8045 = vunpack.c.l.b16 %v7076
    %v8046 = vunpack.c.h.b16 %v7076
    %v8047 = vunpack.c.l.b16 %v7077
    %v8048 = vunpack.c.h.b16 %v7077
    %v8049 = vunpack.c.l.b16 %v7078
    %v8050 = vunpack.c.h.b16 %v7078
    %v8051 = vunpack.c.l.b16 %v7079
    %v8052 = vunpack.c.h.b16 %v7079
    %v8053 = vunpack.c.l.b16 %v7080
    %v8054 = vunpack.c.h.b16 %v7080
    %v8055 = vunpack.c.l.b16 %v7081
    %v8056 = vunpack.c.h.b16 %v7081
    %v8057 = vunpack.c.l.b16 %v7082
    %v8058 = vunpack.c.h.b16 %v7082
    %v8059 = vunpack.c.l.b16 %v7083
    %v8060 = vunpack.c.h.b16 %v7083
    %v8061 = vunpack.c.l.b16 %v7084
    %v8062 = vunpack.c.h.b16 %v7084
    %v8063 = vunpack.c.l.b16 %v7085
    %v8064 = vunpack.c.h.b16 %v7085
    %v8065 = vunpack.c.l.b16 %v7086
    %v8066 = vunpack.c.h.b16 %v7086
    %v8067 = vunpack.c.l.b16 %v7087
    %v8068 = vunpack.c.h.b16 %v7087
    %v8069 = vunpack.c.l.b16 %v7088
    %v8070 = vunpack.c.h.b16 %v7088
    %v8071 = vunpack.c.l.b16 %v7089
    %v8072 = vunpack.c.h.b16 %v7089
    %v8073 = vunpack.c.l.b16 %v7090
    %v8074 = vunpack.c.h.b16 %v7090
    %v8075 = vunpack.c.l.b16 %v7091
    %v8076 = vunpack.c.h.b16 %v7091
    %v8077 = vunpack.c.l.b16 %v7092
    %v8078 = vunpack.c.h.b16 %v7092
    %v8079 = vunpack.c.l.b16 %v7093
    %v8080 = vunpack.c.h.b16 %v7093
    %v8081 = vunpack.c.l.b16 %v7094
    %v8082 = vunpack.c.h.b16 %v7094
    %v8083 = vunpack.c.l.b16 %v7095
    %v8084 = vunpack.c.h.b16 %v7095
    %v8085 = vunpack.c.l.b16 %v7096
    %v8086 = vunpack.c.h.b16 %v7096
    %v8087 = vunpack.c.l.b16 %v7097
    %v8088 = vunpack.c.h.b16 %v7097
    %v8089 = vunpack.c.l.b16 %v7098
    %v8090 = vunpack.c.h.b16 %v7098
    %v8091 = vunpack.c.l.b16 %v7099
    %v8092 = vunpack.c.h.b16 %v7099
    %v8093 = vunpack.c.l.b16 %v7100
    %v8094 = vunpack.c.h.b16 %v7100
    %v8095 = vunpack.c.l.b16 %v7101
    %v8096 = vunpack.c.h.b16 %v7101
    %v8097 = vunpack.c.l.b16 %v7102
    %v8098 = vunpack.c.h.b16 %v7102
    %v8099 = vunpack.c.l.b16 %v7103
    %v8100 = vunpack.c.h.b16 %v7103
    %v8101 = vunpack.c.l.b16 %v7104
    %v8102 = vunpack.c.h.b16 %v7104
    %v8103 = vunpack.c.l.b16 %v7105
    %v8104 = vunpack.c.h.b16 %v7105
    %v8105 = vunpack.c.l.b16 %v7106
    %v8106 = vunpack.c.h.b16 %v7106
    %v8107 = vunpack.c.l.b16 %v7107
    %v8108 = vunpack.c.h.b16 %v7107
    %v8109 = vunpack.c.l.b16 %v7108
    %v8110 = vunpack.c.h.b16 %v7108
    %v8111 = vunpack.c.l.b16 %v7109
    %v8112 = vunpack.c.h.b16 %v7109
    %v8113 = vunpack.c.l.b16 %v7110
    %v8114 = vunpack.c.h.b16 %v7110
    %v8115 = vunpack.c.l.b16 %v7111
    %v8116 = vunpack.c.h.b16 %v7111
    %v8117 = vunpack.c.l.b16 %v7112
    %v8118 = vunpack.c.h.b16 %v7112
    %v8119 = vunpack.c.l.b16 %v7113
    %v8120 = vunpack.c.h.b16 %v7113
    %v8121 = vunpack.c.l.b16 %v7114
    %v8122 = vunpack.c.h.b16 %v7114
    %v8123 = vunpack.c.l.b16 %v7115
    %v8124 = vunpack.c.h.b16 %v7115
    %v8125 = vunpack.c.l.b16 %v7116
    %v8126 = vunpack.c.h.b16 %v7116
    %v8127 = vunpack.c.l.b16 %v7117
    %v8128 = vunpack.c.h.b16 %v7117
    %v8129 = vunpack.c.l.b16 %v7118
    %v8130 = vunpack.c.h.b16 %v7118
    %v8131 = vunpack.c.l.b16 %v7119
    %v8132 = vunpack.c.h.b16 %v7119
    %v8133 = vunpack.c.l.b16 %v7120
    %v8134 = vunpack.c.h.b16 %v7120
    %v8135 = vunpack.c.l.b16 %v7121
    %v8136 = vunpack.c.h.b16 %v7121
    %v8137 = vunpack.c.l.b16 %v7122
    %v8138 = vunpack.c.h.b16 %v7122
    %v8139 = vunpack.c.l.b16 %v7123
    %v8140 = vunpack.c.h.b16 %v7123
    %v8141 = vunpack.c.l.b16 %v7124
    %v8142 = vunpack.c.h.b16 %v7124
    %v8143 = vunpack.c.l.b16 %v7125
    %v8144 = vunpack.c.h.b16 %v7125
    %v8145 = vunpack.c.l.b16 %v7126
    %v8146 = vunpack.c.h.b16 %v7126
    %v8147 = vunpack.c.l.b16 %v7127
    %v8148 = vunpack.c.h.b16 %v7127
    %v8149 = vunpack.c.l.b16 %v7128
    %v8150 = vunpack.c.h.b16 %v7128
    %v8151 = vunpack.c.l.b16 %v7129
    %v8152 = vunpack.c.h.b16 %v7129
    %v8153 = vunpack.c.l.b16 %v7130
    %v8154 = vunpack.c.h.b16 %v7130
    %v8155 = vunpack.c.l.b16 %v7131
    %v8156 = vunpack.c.h.b16 %v7131
    %v8157 = vunpack.c.l.b16 %v7132
    %v8158 = vunpack.c.h.b16 %v7132
    %v8159 = vunpack.c.l.b16 %v7133
    %v8160 = vunpack.c.h.b16 %v7133
    %v8161 = vunpack.c.l.b16 %v7134
    %v8162 = vunpack.c.h.b16 %v7134
    %v8163 = vunpack.c.l.b16 %v7135
    %v8164 = vunpack.c.h.b16 %v7135
    %v8165 = vunpack.c.l.b16 %v7136
    %v8166 = vunpack.c.h.b16 %v7136
    %v8167 = vunpack.c.l.b16 %v7137
    %v8168 = vunpack.c.h.b16 %v7137
    %v8169 = vunpack.c.l.b16 %v7138
    %v8170 = vunpack.c.h.b16 %v7138
    %v8171 = vunpack.c.l.b16 %v7139
    %v8172 = vunpack.c.h.b16 %v7139
    %v8173 = vunpack.c.l.b16 %v7140
    %v8174 = vunpack.c.h.b16 %v7140
    %v8175 = vunpack.c.l.b16 %v7141
    %v8176 = vunpack.c.h.b16 %v7141
    %v8177 = vunpack.c.l.b16 %v7142
    %v8178 = vunpack.c.h.b16 %v7142
    %v8179 = vunpack.c.l.b16 %v7143
    %v8180 = vunpack.c.h.b16 %v7143
    %v8181 = vunpack.c.l.b16 %v7144
    %v8182 = vunpack.c.h.b16 %v7144
    %v8183 = vunpack.c.l.b16 %v7145
    %v8184 = vunpack.c.h.b16 %v7145
    %v8185 = vunpack.c.l.b16 %v7146
    %v8186 = vunpack.c.h.b16 %v7146
    %v8187 = vunpack.c.l.b16 %v7147
    %v8188 = vunpack.c.h.b16 %v7147
    %v8189 = vunpack.c.l.b16 %v7148
    %v8190 = vunpack.c.h.b16 %v7148
    %v8191 = vunpack.c.l.b16 %v7149
    %v8192 = vunpack.c.h.b16 %v7149
    %v8193 = vunpack.c.l.b16 %v7150
    %v8194 = vunpack.c.h.b16 %v7150
    %v8195 = vunpack.c.l.b16 %v7151
    %v8196 = vunpack.c.h.b16 %v7151
    %v8197 = vunpack.c.l.b16 %v7152
    %v8198 = vunpack.c.h.b16 %v7152
    %v8199 = vunpack.c.l.b16 %v7153
    %v8200 = vunpack.c.h.b16 %v7153
    %v8201 = vunpack.c.l.b16 %v7154
    %v8202 = vunpack.c.h.b16 %v7154
    %v8203 = vunpack.c.l.b16 %v7155
    %v8204 = vunpack.c.h.b16 %v7155
    %v8205 = vunpack.c.l.b16 %v7156
    %v8206 = vunpack.c.h.b16 %v7156
    %v8207 = vunpack.c.l.b16 %v7157
    %v8208 = vunpack.c.h.b16 %v7157
    %v8209 = vunpack.c.l.b16 %v7158
    %v8210 = vunpack.c.h.b16 %v7158
    %v8211 = vunpack.c.l.b16 %v7159
    %v8212 = vunpack.c.h.b16 %v7159
    %v8213 = vunpack.c.l.b16 %v7160
    %v8214 = vunpack.c.h.b16 %v7160
    %v8215 = vunpack.c.l.b16 %v7161
    %v8216 = vunpack.c.h.b16 %v7161
    %v8217 = vunpack.c.l.b16 %v7162
    %v8218 = vunpack.c.h.b16 %v7162
    %v8219 = vunpack.c.l.b16 %v7163
    %v8220 = vunpack.c.h.b16 %v7163
    %v8221 = vunpack.c.l.b16 %v7164
    %v8222 = vunpack.c.h.b16 %v7164
    %v8223 = vunpack.c.l.b16 %v7165
    %v8224 = vunpack.c.h.b16 %v7165
    %v8225 = vunpack.c.l.b16 %v7166
    %v8226 = vunpack.c.h.b16 %v7166
    %v8227 = vunpack.c.l.b16 %v7167
    %v8228 = vunpack.c.h.b16 %v7167
    %v8229 = vunpack.c.l.b16 %v7168
    %v8230 = vunpack.c.h.b16 %v7168
    %v8231 = vunpack.c.l.b16 %v7169
    %v8232 = vunpack.c.h.b16 %v7169
    %v8233 = vunpack.c.l.b16 %v7170
    %v8234 = vunpack.c.h.b16 %v7170
    %v8235 = vunpack.c.l.b16 %v7171
    %v8236 = vunpack.c.h.b16 %v7171
    %v8237 = vunpack.c.l.b16 %v7172
    %v8238 = vunpack.c.h.b16 %v7172
    %v8239 = vunpack.c.l.b16 %v7173
    %v8240 = vunpack.c.h.b16 %v7173
    %v8241 = vunpack.c.l.b16 %v7174
    %v8242 = vunpack.c.h.b16 %v7174
    %v8243 = vunpack.c.l.b16 %v7175
    %v8244 = vunpack.c.h.b16 %v7175
    %v8245 = vunpack.c.l.b16 %v7176
    %v8246 = vunpack.c.h.b16 %v7176
    %v8247 = vunpack.c.l.b16 %v7177
    %v8248 = vunpack.c.h.b16 %v7177
    %v8249 = vunpack.c.l.b16 %v7178
    %v8250 = vunpack.c.h.b16 %v7178
    %v8251 = vunpack.c.l.b16 %v7179
    %v8252 = vunpack.c.h.b16 %v7179
    %v8253 = vunpack.c.l.b16 %v7180
    %v8254 = vunpack.c.h.b16 %v7180
    %v8255 = vunpack.c.l.b16 %v7181
    %v8256 = vunpack.c.h.b16 %v7181
    %v8257 = vunpack.c.l.b16 %v7182
    %v8258 = vunpack.c.h.b16 %v7182
    %v8259 = vunpack.c.l.b16 %v7183
    %v8260 = vunpack.c.h.b16 %v7183
    %v8261 = vunpack.c.l.b16 %v7184
    %v8262 = vunpack.c.h.b16 %v7184
    %v8263 = vunpack.c.l.b16 %v7185
    %v8264 = vunpack.c.h.b16 %v7185
    %v8265 = vunpack.c.l.b16 %v7186
    %v8266 = vunpack.c.h.b16 %v7186
    %v8267 = vunpack.c.l.b16 %v7187
    %v8268 = vunpack.c.h.b16 %v7187
    %v8269 = vunpack.c.l.b16 %v7188
    %v8270 = vunpack.c.h.b16 %v7188
    %v8271 = vunpack.c.l.b16 %v7189
    %v8272 = vunpack.c.h.b16 %v7189
    %v8273 = vunpack.c.l.b16 %v7190
    %v8274 = vunpack.c.h.b16 %v7190
    %v8275 = vunpack.c.l.b16 %v7191
    %v8276 = vunpack.c.h.b16 %v7191
    %v8277 = vunpack.c.l.b16 %v7192
    %v8278 = vunpack.c.h.b16 %v7192
    %v8279 = vunpack.c.l.b16 %v7193
    %v8280 = vunpack.c.h.b16 %v7193
    %v8281 = vunpack.c.l.b16 %v7194
    %v8282 = vunpack.c.h.b16 %v7194
    %v8283 = vunpack.c.l.b16 %v7195
    %v8284 = vunpack.c.h.b16 %v7195
    %v8285 = vunpack.c.l.b16 %v7196
    %v8286 = vunpack.c.h.b16 %v7196
    %v8287 = vunpack.c.l.b16 %v7197
    %v8288 = vunpack.c.h.b16 %v7197
    %v8289 = vunpack.c.l.b16 %v7198
    %v8290 = vunpack.c.h.b16 %v7198
    %v8291 = vunpack.c.l.b16 %v7199
    %v8292 = vunpack.c.h.b16 %v7199
    %v8293 = vunpack.c.l.b16 %v7200
    %v8294 = vunpack.c.h.b16 %v7200
    %v8295 = vunpack.c.l.b16 %v7201
    %v8296 = vunpack.c.h.b16 %v7201
    %v8297 = vunpack.c.l.b16 %v7202
    %v8298 = vunpack.c.h.b16 %v7202
    %v8299 = vunpack.c.l.b16 %v7203
    %v8300 = vunpack.c.h.b16 %v7203
    %v8301 = vunpack.c.l.b16 %v7204
    %v8302 = vunpack.c.h.b16 %v7204
    %v8303 = vunpack.c.l.b16 %v7205
    %v8304 = vunpack.c.h.b16 %v7205
    %v8305 = vunpack.c.l.b16 %v7206
    %v8306 = vunpack.c.h.b16 %v7206
    %v8307 = vunpack.c.l.b16 %v7207
    %v8308 = vunpack.c.h.b16 %v7207
    %v8309 = vunpack.c.l.b16 %v7208
    %v8310 = vunpack.c.h.b16 %v7208
    %v8311 = vunpack.c.l.b16 %v7209
    %v8312 = vunpack.c.h.b16 %v7209
    %v8313 = vunpack.c.l.b16 %v7210
    %v8314 = vunpack.c.h.b16 %v7210
    %v8315 = vunpack.c.l.b16 %v7211
    %v8316 = vunpack.c.h.b16 %v7211
    %v8317 = vunpack.c.l.b16 %v7212
    %v8318 = vunpack.c.h.b16 %v7212
    %v8319 = vunpack.c.l.b16 %v7213
    %v8320 = vunpack.c.h.b16 %v7213
    %v8321 = vunpack.c.l.b16 %v7214
    %v8322 = vunpack.c.h.b16 %v7214
    %v8323 = vunpack.c.l.b16 %v7215
    %v8324 = vunpack.c.h.b16 %v7215
    %v8325 = vunpack.c.l.b16 %v7216
    %v8326 = vunpack.c.h.b16 %v7216
    %v8327 = vunpack.c.l.b16 %v7217
    %v8328 = vunpack.c.h.b16 %v7217
    %v8329 = vunpack.c.l.b16 %v7218
    %v8330 = vunpack.c.h.b16 %v7218
    %v8331 = vunpack.c.l.b16 %v7219
    %v8332 = vunpack.c.h.b16 %v7219
    %v8333 = vunpack.c.l.b16 %v7220
    %v8334 = vunpack.c.h.b16 %v7220
    %v8335 = vunpack.c.l.b16 %v7221
    %v8336 = vunpack.c.h.b16 %v7221
    %v8337 = vunpack.c.l.b16 %v7222
    %v8338 = vunpack.c.h.b16 %v7222
    %v8339 = vunpack.c.l.b16 %v7223
    %v8340 = vunpack.c.h.b16 %v7223
    %v8341 = vunpack.c.l.b16 %v7224
    %v8342 = vunpack.c.h.b16 %v7224
    %v8343 = vunpack.c.l.b16 %v7225
    %v8344 = vunpack.c.h.b16 %v7225
    %v8345 = vunpack.c.l.b16 %v7226
    %v8346 = vunpack.c.h.b16 %v7226
    %v8347 = vunpack.c.l.b16 %v7227
    %v8348 = vunpack.c.h.b16 %v7227
    %v8349 = vunpack.c.l.b16 %v7228
    %v8350 = vunpack.c.h.b16 %v7228
    %v8351 = vunpack.c.l.b16 %v7229
    %v8352 = vunpack.c.h.b16 %v7229
    %v8353 = vunpack.c.l.b16 %v7230
    %v8354 = vunpack.c.h.b16 %v7230
    %v8355 = vunpack.c.l.b16 %v7231
    %v8356 = vunpack.c.h.b16 %v7231
    %v8357 = vunpack.c.l.b16 %v7232
    %v8358 = vunpack.c.h.b16 %v7232
    %v8359 = vunpack.c.l.b16 %v7233
    %v8360 = vunpack.c.h.b16 %v7233
    %v8361 = vunpack.c.l.b16 %v7234
    %v8362 = vunpack.c.h.b16 %v7234
    %v8363 = vunpack.c.l.b16 %v7235
    %v8364 = vunpack.c.h.b16 %v7235
    %v8365 = vunpack.c.l.b16 %v7236
    %v8366 = vunpack.c.h.b16 %v7236
    %v8367 = vunpack.c.l.b16 %v7237
    %v8368 = vunpack.c.h.b16 %v7237
    %v8369 = vunpack.c.l.b16 %v7238
    %v8370 = vunpack.c.h.b16 %v7238
    %v8371 = vunpack.c.l.b16 %v7239
    %v8372 = vunpack.c.h.b16 %v7239
    %v8373 = vunpack.c.l.b16 %v7240
    %v8374 = vunpack.c.h.b16 %v7240
    %v8375 = vunpack.c.l.b16 %v7241
    %v8376 = vunpack.c.h.b16 %v7241
    %v8377 = vunpack.c.l.b16 %v7242
    %v8378 = vunpack.c.h.b16 %v7242
    %v8379 = vunpack.c.l.b16 %v7243
    %v8380 = vunpack.c.h.b16 %v7243
    %v8381 = vunpack.c.l.b16 %v7244
    %v8382 = vunpack.c.h.b16 %v7244
    %v8383 = vunpack.c.l.b16 %v7245
    %v8384 = vunpack.c.h.b16 %v7245
    %v8385 = vunpack.c.l.b16 %v7246
    %v8386 = vunpack.c.h.b16 %v7246
    %v8387 = vunpack.c.l.b16 %v7247
    %v8388 = vunpack.c.h.b16 %v7247
    %v8389 = vunpack.c.l.b16 %v7248
    %v8390 = vunpack.c.h.b16 %v7248
    %v8391 = vunpack.c.l.b16 %v7249
    %v8392 = vunpack.c.h.b16 %v7249
    %v8393 = vunpack.c.l.b16 %v7250
    %v8394 = vunpack.c.h.b16 %v7250
    %v8395 = vunpack.c.l.b16 %v7251
    %v8396 = vunpack.c.h.b16 %v7251
    %v8397 = vunpack.c.l.b16 %v7252
    %v8398 = vunpack.c.h.b16 %v7252
    %v8399 = vunpack.c.l.b16 %v7253
    %v8400 = vunpack.c.h.b16 %v7253
    %v8401 = vunpack.c.l.b16 %v7254
    %v8402 = vunpack.c.h.b16 %v7254
    %v8403 = vunpack.c.l.b16 %v7255
    %v8404 = vunpack.c.h.b16 %v7255
    %v8405 = vunpack.c.l.b16 %v7256
    %v8406 = vunpack.c.h.b16 %v7256
    %v8407 = vunpack.c.l.b16 %v7257
    %v8408 = vunpack.c.h.b16 %v7257
    %v8409 = vunpack.c.l.b16 %v7258
    %v8410 = vunpack.c.h.b16 %v7258
    %v8411 = vpack.c.b16 %v7907, %v7899
    %v8412 = vpack.c.b16 %v7908, %v7900
    %v8413 = vpack.c.b16 %v7909, %v7901
    %v8414 = vpack.c.b16 %v7910, %v7902
    %v8415 = vpack.c.b16 %v7911, %v7903
    %v8416 = vpack.c.b16 %v7912, %v7904
    %v8417 = vpack.c.b16 %v7913, %v7905
    %v8418 = vpack.c.b16 %v7914, %v7906
    %v8419 = vpack.c.b16 %v7923, %v7915
    %v8420 = vpack.c.b16 %v7924, %v7916
    %v8421 = vpack.c.b16 %v7925, %v7917
    %v8422 = vpack.c.b16 %v7926, %v7918
    %v8423 = vpack.c.b16 %v7927, %v7919
    %v8424 = vpack.c.b16 %v7928, %v7920
    %v8425 = vpack.c.b16 %v7929, %v7921
    %v8426 = vpack.c.b16 %v7930, %v7922
    %v8427 = vpack.c.b16 %v7939, %v7931
    %v8428 = vpack.c.b16 %v7940, %v7932
    %v8429 = vpack.c.b16 %v7941, %v7933
    %v8430 = vpack.c.b16 %v7942, %v7934
    %v8431 = vpack.c.b16 %v7943, %v7935
    %v8432 = vpack.c.b16 %v7944, %v7936
    %v8433 = vpack.c.b16 %v7945, %v7937
    %v8434 = vpack.c.b16 %v7946, %v7938
    %v8435 = vpack.c.b16 %v7955, %v7947
    %v8436 = vpack.c.b16 %v7956, %v7948
    %v8437 = vpack.c.b16 %v7957, %v7949
    %v8438 = vpack.c.b16 %v7958, %v7950
    %v8439 = vpack.c.b16 %v7959, %v7951
    %v8440 = vpack.c.b16 %v7960, %v7952
    %v8441 = vpack.c.b16 %v7961, %v7953
    %v8442 = vpack.c.b16 %v7962, %v7954
    %v8443 = vpack.c.b16 %v7971, %v7963
    %v8444 = vpack.c.b16 %v7972, %v7964
    %v8445 = vpack.c.b16 %v7973, %v7965
    %v8446 = vpack.c.b16 %v7974, %v7966
    %v8447 = vpack.c.b16 %v7975, %v7967
    %v8448 = vpack.c.b16 %v7976, %v7968
    %v8449 = vpack.c.b16 %v7977, %v7969
    %v8450 = vpack.c.b16 %v7978, %v7970
    %v8451 = vpack.c.b16 %v7987, %v7979
    %v8452 = vpack.c.b16 %v7988, %v7980
    %v8453 = vpack.c.b16 %v7989, %v7981
    %v8454 = vpack.c.b16 %v7990, %v7982
    %v8455 = vpack.c.b16 %v7991, %v7983
    %v8456 = vpack.c.b16 %v7992, %v7984
    %v8457 = vpack.c.b16 %v7993, %v7985
    %v8458 = vpack.c.b16 %v7994, %v7986
    %v8459 = vpack.c.b16 %v8003, %v7995
    %v8460 = vpack.c.b16 %v8004, %v7996
    %v8461 = vpack.c.b16 %v8005, %v7997
    %v8462 = vpack.c.b16 %v8006, %v7998
    %v8463 = vpack.c.b16 %v8007, %v7999
    %v8464 = vpack.c.b16 %v8008, %v8000
    %v8465 = vpack.c.b16 %v8009, %v8001
    %v8466 = vpack.c.b16 %v8010, %v8002
    %v8467 = vpack.c.b16 %v8019, %v8011
    %v8468 = vpack.c.b16 %v8020, %v8012
    %v8469 = vpack.c.b16 %v8021, %v8013
    %v8470 = vpack.c.b16 %v8022, %v8014
    %v8471 = vpack.c.b16 %v8023, %v8015
    %v8472 = vpack.c.b16 %v8024, %v8016
    %v8473 = vpack.c.b16 %v8025, %v8017
    %v8474 = vpack.c.b16 %v8026, %v8018
    %v8475 = vpack.c.b16 %v8035, %v8027
    %v8476 = vpack.c.b16 %v8036, %v8028
    %v8477 = vpack.c.b16 %v8037, %v8029
    %v8478 = vpack.c.b16 %v8038, %v8030
    %v8479 = vpack.c.b16 %v8039, %v8031
    %v8480 = vpack.c.b16 %v8040, %v8032
    %v8481 = vpack.c.b16 %v8041, %v8033
    %v8482 = vpack.c.b16 %v8042, %v8034
    %v8483 = vpack.c.b16 %v8051, %v8043
    %v8484 = vpack.c.b16 %v8052, %v8044
    %v8485 = vpack.c.b16 %v8053, %v8045
    %v8486 = vpack.c.b16 %v8054, %v8046
    %v8487 = vpack.c.b16 %v8055, %v8047
    %v8488 = vpack.c.b16 %v8056, %v8048
    %v8489 = vpack.c.b16 %v8057, %v8049
    %v8490 = vpack.c.b16 %v8058, %v8050
    %v8491 = vpack.c.b16 %v8067, %v8059
    %v8492 = vpack.c.b16 %v8068, %v8060
    %v8493 = vpack.c.b16 %v8069, %v8061
    %v8494 = vpack.c.b16 %v8070, %v8062
    %v8495 = vpack.c.b16 %v8071, %v8063
    %v8496 = vpack.c.b16 %v8072, %v8064
    %v8497 = vpack.c.b16 %v8073, %v8065
    %v8498 = vpack.c.b16 %v8074, %v8066
    %v8499 = vpack.c.b16 %v8083, %v8075
    %v8500 = vpack.c.b16 %v8084, %v8076
    %v8501 = vpack.c.b16 %v8085, %v8077
    %v8502 = vpack.c.b16 %v8086, %v8078
    %v8503 = vpack.c.b16 %v8087, %v8079
    %v8504 = vpack.c.b16 %v8088, %v8080
    %v8505 = vpack.c.b16 %v8089, %v8081
    %v8506 = vpack.c.b16 %v8090, %v8082
    %v8507 = vpack.c.b16 %v8099, %v8091
    %v8508 = vpack.c.b16 %v8100, %v8092
    %v8509 = vpack.c.b16 %v8101, %v8093
    %v8510 = vpack.c.b16 %v8102, %v8094
    %v8511 = vpack.c.b16 %v8103, %v8095
    %v8512 = vpack.c.b16 %v8104, %v8096
    %v8513 = vpack.c.b16 %v8105, %v8097
    %v8514 = vpack.c.b16 %v8106, %v8098
    %v8515 = vpack.c.b16 %v8115, %v8107
    %v8516 = vpack.c.b16 %v8116, %v8108
    %v8517 = vpack.c.b16 %v8117, %v8109
    %v8518 = vpack.c.b16 %v8118, %v8110
    %v8519 = vpack.c.b16 %v8119, %v8111
    %v8520 = vpack.c.b16 %v8120, %v8112
    %v8521 = vpack.c.b16 %v8121, %v8113
    %v8522 = vpack.c.b16 %v8122, %v8114
    %v8523 = vpack.c.b16 %v8131, %v8123
    %v8524 = vpack.c.b16 %v8132, %v8124
    %v8525 = vpack.c.b16 %v8133, %v8125
    %v8526 = vpack.c.b16 %v8134, %v8126
    %v8527 = vpack.c.b16 %v8135, %v8127
    %v8528 = vpack.c.b16 %v8136, %v8128
    %v8529 = vpack.c.b16 %v8137, %v8129
    %v8530 = vpack.c.b16 %v8138, %v8130
    %v8531 = vpack.c.b16 %v8147, %v8139
    %v8532 = vpack.c.b16 %v8148, %v8140
    %v8533 = vpack.c.b16 %v8149, %v8141
    %v8534 = vpack.c.b16 %v8150, %v8142
    %v8535 = vpack.c.b16 %v8151, %v8143
    %v8536 = vpack.c.b16 %v8152, %v8144
    %v8537 = vpack.c.b16 %v8153, %v8145
    %v8538 = vpack.c.b16 %v8154, %v8146
    %v8539 = vpack.c.b16 %v8163, %v8155
    %v8540 = vpack.c.b16 %v8164, %v8156
    %v8541 = vpack.c.b16 %v8165, %v8157
    %v8542 = vpack.c.b16 %v8166, %v8158
    %v8543 = vpack.c.b16 %v8167, %v8159
    %v8544 = vpack.c.b16 %v8168, %v8160
    %v8545 = vpack.c.b16 %v8169, %v8161
    %v8546 = vpack.c.b16 %v8170, %v8162
    %v8547 = vpack.c.b16 %v8179, %v8171
    %v8548 = vpack.c.b16 %v8180, %v8172
    %v8549 = vpack.c.b16 %v8181, %v8173
    %v8550 = vpack.c.b16 %v8182, %v8174
    %v8551 = vpack.c.b16 %v8183, %v8175
    %v8552 = vpack.c.b16 %v8184, %v8176
    %v8553 = vpack.c.b16 %v8185, %v8177
    %v8554 = vpack.c.b16 %v8186, %v8178
    %v8555 = vpack.c.b16 %v8195, %v8187
    %v8556 = vpack.c.b16 %v8196, %v8188
    %v8557 = vpack.c.b16 %v8197, %v8189
    %v8558 = vpack.c.b16 %v8198, %v8190
    %v8559 = vpack.c.b16 %v8199, %v8191
    %v8560 = vpack.c.b16 %v8200, %v8192
    %v8561 = vpack.c.b16 %v8201, %v8193
    %v8562 = vpack.c.b16 %v8202, %v8194
    %v8563 = vpack.c.b16 %v8211, %v8203
    %v8564 = vpack.c.b16 %v8212, %v8204
    %v8565 = vpack.c.b16 %v8213, %v8205
    %v8566 = vpack.c.b16 %v8214, %v8206
    %v8567 = vpack.c.b16 %v8215, %v8207
    %v8568 = vpack.c.b16 %v8216, %v8208
    %v8569 = vpack.c.b16 %v8217, %v8209
    %v8570 = vpack.c.b16 %v8218, %v8210
    %v8571 = vpack.c.b16 %v8227, %v8219
    %v8572 = vpack.c.b16 %v8228, %v8220
    %v8573 = vpack.c.b16 %v8229, %v8221
    %v8574 = vpack.c.b16 %v8230, %v8222
    %v8575 = vpack.c.b16 %v8231, %v8223
    %v8576 = vpack.c.b16 %v8232, %v8224
    %v8577 = vpack.c.b16 %v8233, %v8225
    %v8578 = vpack.c.b16 %v8234, %v8226
    %v8579 = vpack.c.b16 %v8243, %v8235
    %v8580 = vpack.c.b16 %v8244, %v8236
    %v8581 = vpack.c.b16 %v8245, %v8237
    %v8582 = vpack.c.b16 %v8246, %v8238
    %v8583 = vpack.c.b16 %v8247, %v8239
    %v8584 = vpack.c.b16 %v8248, %v8240
    %v8585 = vpack.c.b16 %v8249, %v8241
    %v8586 = vpack.c.b16 %v8250, %v8242
    %v8587 = vpack.c.b16 %v8259, %v8251
    %v8588 = vpack.c.b16 %v8260, %v8252
    %v8589 = vpack.c.b16 %v8261, %v8253
    %v8590 = vpack.c.b16 %v8262, %v8254
    %v8591 = vpack.c.b16 %v8263, %v8255
    %v8592 = vpack.c.b16 %v8264, %v8256
    %v8593 = vpack.c.b16 %v8265, %v8257
    %v8594 = vpack.c.b16 %v8266, %v8258
    %v8595 = vpack.c.b16 %v8275, %v8267
    %v8596 = vpack.c.b16 %v8276, %v8268
    %v8597 = vpack.c.b16 %v8277, %v8269
    %v8598 = vpack.c.b16 %v8278, %v8270
    %v8599 = vpack.c.b16 %v8279, %v8271
    %v8600 = vpack.c.b16 %v8280, %v8272
    %v8601 = vpack.c.b16 %v8281, %v8273
    %v8602 = vpack.c.b16 %v8282, %v8274
    %v8603 = vpack.c.b16 %v8291, %v8283
    %v8604 = vpack.c.b16 %v8292, %v8284
    %v8605 = vpack.c.b16 %v8293, %v8285
    %v8606 = vpack.c.b16 %v8294, %v8286
    %v8607 = vpack.c.b16 %v8295, %v8287
    %v8608 = vpack.c.b16 %v8296, %v8288
    %v8609 = vpack.c.b16 %v8297, %v8289
    %v8610 = vpack.c.b16 %v8298, %v8290
    %v8611 = vpack.c.b16 %v8307, %v8299
    %v8612 = vpack.c.b16 %v8308, %v8300
    %v8613 = vpack.c.b16 %v8309, %v8301
    %v8614 = vpack.c.b16 %v8310, %v8302
    %v8615 = vpack.c.b16 %v8311, %v8303
    %v8616 = vpack.c.b16 %v8312, %v8304
    %v8617 = vpack.c.b16 %v8313, %v8305
    %v8618 = vpack.c.b16 %v8314, %v8306
    %v8619 = vpack.c.b16 %v8323, %v8315
    %v8620 = vpack.c.b16 %v8324, %v8316
    %v8621 = vpack.c.b16 %v8325, %v8317
    %v8622 = vpack.c.b16 %v8326, %v8318
    %v8623 = vpack.c.b16 %v8327, %v8319
    %v8624 = vpack.c.b16 %v8328, %v8320
    %v8625 = vpack.c.b16 %v8329, %v8321
    %v8626 = vpack.c.b16 %v8330, %v8322
    %v8627 = vpack.c.b16 %v8339, %v8331
    %v8628 = vpack.c.b16 %v8340, %v8332
    %v8629 = vpack.c.b16 %v8341, %v8333
    %v8630 = vpack.c.b16 %v8342, %v8334
    %v8631 = vpack.c.b16 %v8343, %v8335
    %v8632 = vpack.c.b16 %v8344, %v8336
    %v8633 = vpack.c.b16 %v8345, %v8337
    %v8634 = vpack.c.b16 %v8346, %v8338
    %v8635 = vpack.c.b16 %v8355, %v8347
    %v8636 = vpack.c.b16 %v8356, %v8348
    %v8637 = vpack.c.b16 %v8357, %v8349
    %v8638 = vpack.c.b16 %v8358, %v8350
    %v8639 = vpack.c.b16 %v8359, %v8351
    %v8640 = vpack.c.b16 %v8360, %v8352
    %v8641 = vpack.c.b16 %v8361, %v8353
    %v8642 = vpack.c.b16 %v8362, %v8354
    %v8643 = vpack.c.b16 %v8371, %v8363
    %v8644 = vpack.c.b16 %v8372, %v8364
    %v8645 = vpack.c.b16 %v8373, %v8365
    %v8646 = vpack.c.b16 %v8374, %v8366
    %v8647 = vpack.c.b16 %v8375, %v8367
    %v8648 = vpack.c.b16 %v8376, %v8368
    %v8649 = vpack.c.b16 %v8377, %v8369
    %v8650 = vpack.c.b16 %v8378, %v8370
    %v8651 = vpack.c.b16 %v8387, %v8379
    %v8652 = vpack.c.b16 %v8388, %v8380
    %v8653 = vpack.c.b16 %v8389, %v8381
    %v8654 = vpack.c.b16 %v8390, %v8382
    %v8655 = vpack.c.b16 %v8391, %v8383
    %v8656 = vpack.c.b16 %v8392, %v8384
    %v8657 = vpack.c.b16 %v8393, %v8385
    %v8658 = vpack.c.b16 %v8394, %v8386
    %v8659 = vpack.c.b16 %v8403, %v8395
    %v8660 = vpack.c.b16 %v8404, %v8396
    %v8661 = vpack.c.b16 %v8405, %v8397
    %v8662 = vpack.c.b16 %v8406, %v8398
    %v8663 = vpack.c.b16 %v8407, %v8399
    %v8664 = vpack.c.b16 %v8408, %v8400
    %v8665 = vpack.c.b16 %v8409, %v8401
    %v8666 = vpack.c.b16 %v8410, %v8402
    %8923 = vmatpush.bf16.msra.mxu0 %v6889
    %8924 = vmatpush.bf16.msra.mxu0 %v6887
    %8925 = vmatpush.bf16.msra.mxu0 %v6885
    %8926 = vmatpush.bf16.msra.mxu0 %v6883
    %8927 = vmatpush.bf16.msra.mxu0 %v6881
    %8928 = vmatpush.bf16.msra.mxu0 %v6879
    %8929 = vmatpush.bf16.msra.mxu0 %v6877
    %8930 = vmatpush.bf16.msra.mxu0 %v6875
    %8931 = vmatmul.bf16.gmra.mxu0 %v8411
    %v8932 = vpop.f32.mrf.mxu0
    %v8933 = vadd.f32 %v7326, %v8932
    %v8934 = vpop.f32.mrf.mxu0
    %v8935 = vadd.f32 %v7331, %v8934
    %8936 = vmatmul.bf16.gmra.mxu0 %v8419
    %v8937 = vpop.f32.mrf.mxu0
    %v8938 = vadd.f32 %v7336, %v8937
    %v8939 = vpop.f32.mrf.mxu0
    %v8940 = vadd.f32 %v7341, %v8939
    %8941 = vmatmul.bf16.gmra.mxu0 %v8427
    %v8942 = vpop.f32.mrf.mxu0
    %v8943 = vadd.f32 %v7346, %v8942
    %v8944 = vpop.f32.mrf.mxu0
    %v8945 = vadd.f32 %v7351, %v8944
    %8946 = vmatmul.bf16.gmra.mxu0 %v8435
    %v8947 = vpop.f32.mrf.mxu0
    %v8948 = vadd.f32 %v7356, %v8947
    %v8949 = vpop.f32.mrf.mxu0
    %v8950 = vadd.f32 %v7361, %v8949
    %8951 = vmatmul.bf16.gmra.mxu0 %v8443
    %v8952 = vpop.f32.mrf.mxu0
    %v8953 = vadd.f32 %v7366, %v8952
    %v8954 = vpop.f32.mrf.mxu0
    %v8955 = vadd.f32 %v7371, %v8954
    %8956 = vmatmul.bf16.gmra.mxu0 %v8451
    %v8957 = vpop.f32.mrf.mxu0
    %v8958 = vadd.f32 %v7376, %v8957
    %v8959 = vpop.f32.mrf.mxu0
    %v8960 = vadd.f32 %v7381, %v8959
    %8961 = vmatmul.bf16.gmra.mxu0 %v8459
    %v8962 = vpop.f32.mrf.mxu0
    %v8963 = vadd.f32 %v7386, %v8962
    %v8964 = vpop.f32.mrf.mxu0
    %v8965 = vadd.f32 %v7391, %v8964
    %8966 = vmatmul.bf16.gmra.mxu0 %v8467
    %v8967 = vpop.f32.mrf.mxu0
    %v8968 = vadd.f32 %v7396, %v8967
    %v8969 = vpop.f32.mrf.mxu0
    %v8970 = vadd.f32 %v7401, %v8969
    %8971 = vmatmul.bf16.gmra.mxu0 %v8475
    %v8972 = vpop.f32.mrf.mxu0
    %v8973 = vadd.f32 %v7406, %v8972
    %v8974 = vpop.f32.mrf.mxu0
    %v8975 = vadd.f32 %v7411, %v8974
    %8976 = vmatmul.bf16.gmra.mxu0 %v8483
    %v8977 = vpop.f32.mrf.mxu0
    %v8978 = vadd.f32 %v7416, %v8977
    %v8979 = vpop.f32.mrf.mxu0
    %v8980 = vadd.f32 %v7421, %v8979
    %8981 = vmatmul.bf16.gmra.mxu0 %v8491
    %v8982 = vpop.f32.mrf.mxu0
    %v8983 = vadd.f32 %v7426, %v8982
    %v8984 = vpop.f32.mrf.mxu0
    %v8985 = vadd.f32 %v7431, %v8984
    %8986 = vmatmul.bf16.gmra.mxu0 %v8499
    %v8987 = vpop.f32.mrf.mxu0
    %v8988 = vadd.f32 %v7436, %v8987
    %v8989 = vpop.f32.mrf.mxu0
    %v8990 = vadd.f32 %v7441, %v8989
    %8991 = vmatmul.bf16.gmra.mxu0 %v8507
    %v8992 = vpop.f32.mrf.mxu0
    %v8993 = vadd.f32 %v7446, %v8992
    %v8994 = vpop.f32.mrf.mxu0
    %v8995 = vadd.f32 %v7451, %v8994
    %8996 = vmatmul.bf16.gmra.mxu0 %v8515
    %v8997 = vpop.f32.mrf.mxu0
    %v8998 = vadd.f32 %v7456, %v8997
    %v8999 = vpop.f32.mrf.mxu0
    %v9000 = vadd.f32 %v7461, %v8999
    %9001 = vmatmul.bf16.gmra.mxu0 %v8523
    %v9002 = vpop.f32.mrf.mxu0
    %v9003 = vadd.f32 %v7466, %v9002
    %v9004 = vpop.f32.mrf.mxu0
    %v9005 = vadd.f32 %v7471, %v9004
    %9006 = vmatmul.bf16.gmra.mxu0 %v8531
    %v9007 = vpop.f32.mrf.mxu0
    %v9008 = vadd.f32 %v7476, %v9007
    %v9009 = vpop.f32.mrf.mxu0
    %v9010 = vadd.f32 %v7481, %v9009
    %9011 = vmatmul.bf16.gmra.mxu0 %v8539
    %v9012 = vpop.f32.mrf.mxu0
    %v9013 = vadd.f32 %v7486, %v9012
    %v9014 = vpop.f32.mrf.mxu0
    %v9015 = vadd.f32 %v7491, %v9014
    %9016 = vmatmul.bf16.gmra.mxu0 %v8547
    %v9017 = vpop.f32.mrf.mxu0
    %v9018 = vadd.f32 %v7496, %v9017
    %v9019 = vpop.f32.mrf.mxu0
    %v9020 = vadd.f32 %v7501, %v9019
    %9021 = vmatmul.bf16.gmra.mxu0 %v8555
    %v9022 = vpop.f32.mrf.mxu0
    %v9023 = vadd.f32 %v7506, %v9022
    %v9024 = vpop.f32.mrf.mxu0
    %v9025 = vadd.f32 %v7511, %v9024
    %9026 = vmatmul.bf16.gmra.mxu0 %v8563
    %v9027 = vpop.f32.mrf.mxu0
    %v9028 = vadd.f32 %v7516, %v9027
    %v9029 = vpop.f32.mrf.mxu0
    %v9030 = vadd.f32 %v7521, %v9029
    %9031 = vmatmul.bf16.gmra.mxu0 %v8571
    %v9032 = vpop.f32.mrf.mxu0
    %v9033 = vadd.f32 %v7526, %v9032
    %v9034 = vpop.f32.mrf.mxu0
    %v9035 = vadd.f32 %v7531, %v9034
    %9036 = vmatmul.bf16.gmra.mxu0 %v8579
    %v9037 = vpop.f32.mrf.mxu0
    %v9038 = vadd.f32 %v7536, %v9037
    %v9039 = vpop.f32.mrf.mxu0
    %v9040 = vadd.f32 %v7541, %v9039
    %9041 = vmatmul.bf16.gmra.mxu0 %v8587
    %v9042 = vpop.f32.mrf.mxu0
    %v9043 = vadd.f32 %v7546, %v9042
    %v9044 = vpop.f32.mrf.mxu0
    %v9045 = vadd.f32 %v7551, %v9044
    %9046 = vmatmul.bf16.gmra.mxu0 %v8595
    %v9047 = vpop.f32.mrf.mxu0
    %v9048 = vadd.f32 %v7556, %v9047
    %v9049 = vpop.f32.mrf.mxu0
    %v9050 = vadd.f32 %v7561, %v9049
    %9051 = vmatmul.bf16.gmra.mxu0 %v8603
    %v9052 = vpop.f32.mrf.mxu0
    %v9053 = vadd.f32 %v7566, %v9052
    %v9054 = vpop.f32.mrf.mxu0
    %v9055 = vadd.f32 %v7571, %v9054
    %9056 = vmatmul.bf16.gmra.mxu0 %v8611
    %v9057 = vpop.f32.mrf.mxu0
    %v9058 = vadd.f32 %v7576, %v9057
    %v9059 = vpop.f32.mrf.mxu0
    %v9060 = vadd.f32 %v7581, %v9059
    %9061 = vmatmul.bf16.gmra.mxu0 %v8619
    %v9062 = vpop.f32.mrf.mxu0
    %v9063 = vadd.f32 %v7586, %v9062
    %v9064 = vpop.f32.mrf.mxu0
    %v9065 = vadd.f32 %v7591, %v9064
    %9066 = vmatmul.bf16.gmra.mxu0 %v8627
    %v9067 = vpop.f32.mrf.mxu0
    %v9068 = vadd.f32 %v7596, %v9067
    %v9069 = vpop.f32.mrf.mxu0
    %v9070 = vadd.f32 %v7601, %v9069
    %9071 = vmatmul.bf16.gmra.mxu0 %v8635
    %v9072 = vpop.f32.mrf.mxu0
    %v9073 = vadd.f32 %v7606, %v9072
    %v9074 = vpop.f32.mrf.mxu0
    %v9075 = vadd.f32 %v7611, %v9074
    %9076 = vmatmul.bf16.gmra.mxu0 %v8643
    %v9077 = vpop.f32.mrf.mxu0
    %v9078 = vadd.f32 %v7616, %v9077
    %v9079 = vpop.f32.mrf.mxu0
    %v9080 = vadd.f32 %v7621, %v9079
    %9081 = vmatmul.bf16.gmra.mxu0 %v8651
    %v9082 = vpop.f32.mrf.mxu0
    %v9083 = vadd.f32 %v7626, %v9082
    %v9084 = vpop.f32.mrf.mxu0
    %v9085 = vadd.f32 %v7631, %v9084
    %9086 = vmatmul.bf16.gmra.mxu0 %v8659
    %v9087 = vpop.f32.mrf.mxu0
    %v9088 = vadd.f32 %v7636, %v9087
    %v9089 = vpop.f32.mrf.mxu0
    %v9090 = vadd.f32 %v7641, %v9089
    %9091 = vdwg.mxu0
    %9092 = vmatpush.bf16.msra.mxu0 %v6905
    %9093 = vmatpush.bf16.msra.mxu0 %v6903
    %9094 = vmatpush.bf16.msra.mxu0 %v6901
    %9095 = vmatpush.bf16.msra.mxu0 %v6899
    %9096 = vmatpush.bf16.msra.mxu0 %v6897
    %9097 = vmatpush.bf16.msra.mxu0 %v6895
    %9098 = vmatpush.bf16.msra.mxu0 %v6893
    %9099 = vmatpush.bf16.msra.mxu0 %v6891
    %9100 = vmatmul.bf16.gmra.mxu0 %v8412
    %v9101 = vpop.f32.mrf.mxu0
    %v9102 = vadd.f32 %v8933, %v9101
    %v9103 = vpop.f32.mrf.mxu0
    %v9104 = vadd.f32 %v8935, %v9103
    %9105 = vmatmul.bf16.gmra.mxu0 %v8420
    %v9106 = vpop.f32.mrf.mxu0
    %v9107 = vadd.f32 %v8938, %v9106
    %v9108 = vpop.f32.mrf.mxu0
    %v9109 = vadd.f32 %v8940, %v9108
    %9110 = vmatmul.bf16.gmra.mxu0 %v8428
    %v9111 = vpop.f32.mrf.mxu0
    %v9112 = vadd.f32 %v8943, %v9111
    %v9113 = vpop.f32.mrf.mxu0
    %v9114 = vadd.f32 %v8945, %v9113
    %9115 = vmatmul.bf16.gmra.mxu0 %v8436
    %v9116 = vpop.f32.mrf.mxu0
    %v9117 = vadd.f32 %v8948, %v9116
    %v9118 = vpop.f32.mrf.mxu0
    %v9119 = vadd.f32 %v8950, %v9118
    %9120 = vmatmul.bf16.gmra.mxu0 %v8444
    %v9121 = vpop.f32.mrf.mxu0
    %v9122 = vadd.f32 %v8953, %v9121
    %v9123 = vpop.f32.mrf.mxu0
    %v9124 = vadd.f32 %v8955, %v9123
    %9125 = vmatmul.bf16.gmra.mxu0 %v8452
    %v9126 = vpop.f32.mrf.mxu0
    %v9127 = vadd.f32 %v8958, %v9126
    %v9128 = vpop.f32.mrf.mxu0
    %v9129 = vadd.f32 %v8960, %v9128
    %9130 = vmatmul.bf16.gmra.mxu0 %v8460
    %v9131 = vpop.f32.mrf.mxu0
    %v9132 = vadd.f32 %v8963, %v9131
    %v9133 = vpop.f32.mrf.mxu0
    %v9134 = vadd.f32 %v8965, %v9133
    %9135 = vmatmul.bf16.gmra.mxu0 %v8468
    %v9136 = vpop.f32.mrf.mxu0
    %v9137 = vadd.f32 %v8968, %v9136
    %v9138 = vpop.f32.mrf.mxu0
    %v9139 = vadd.f32 %v8970, %v9138
    %9140 = vmatmul.bf16.gmra.mxu0 %v8476
    %v9141 = vpop.f32.mrf.mxu0
    %v9142 = vadd.f32 %v8973, %v9141
    %v9143 = vpop.f32.mrf.mxu0
    %v9144 = vadd.f32 %v8975, %v9143
    %9145 = vmatmul.bf16.gmra.mxu0 %v8484
    %v9146 = vpop.f32.mrf.mxu0
    %v9147 = vadd.f32 %v8978, %v9146
    %v9148 = vpop.f32.mrf.mxu0
    %v9149 = vadd.f32 %v8980, %v9148
    %9150 = vmatmul.bf16.gmra.mxu0 %v8492
    %v9151 = vpop.f32.mrf.mxu0
    %v9152 = vadd.f32 %v8983, %v9151
    %v9153 = vpop.f32.mrf.mxu0
    %v9154 = vadd.f32 %v8985, %v9153
    %9155 = vmatmul.bf16.gmra.mxu0 %v8500
    %v9156 = vpop.f32.mrf.mxu0
    %v9157 = vadd.f32 %v8988, %v9156
    %v9158 = vpop.f32.mrf.mxu0
    %v9159 = vadd.f32 %v8990, %v9158
    %9160 = vmatmul.bf16.gmra.mxu0 %v8508
    %v9161 = vpop.f32.mrf.mxu0
    %v9162 = vadd.f32 %v8993, %v9161
    %v9163 = vpop.f32.mrf.mxu0
    %v9164 = vadd.f32 %v8995, %v9163
    %9165 = vmatmul.bf16.gmra.mxu0 %v8516
    %v9166 = vpop.f32.mrf.mxu0
    %v9167 = vadd.f32 %v8998, %v9166
    %v9168 = vpop.f32.mrf.mxu0
    %v9169 = vadd.f32 %v9000, %v9168
    %9170 = vmatmul.bf16.gmra.mxu0 %v8524
    %v9171 = vpop.f32.mrf.mxu0
    %v9172 = vadd.f32 %v9003, %v9171
    %v9173 = vpop.f32.mrf.mxu0
    %v9174 = vadd.f32 %v9005, %v9173
    %9175 = vmatmul.bf16.gmra.mxu0 %v8532
    %v9176 = vpop.f32.mrf.mxu0
    %v9177 = vadd.f32 %v9008, %v9176
    %v9178 = vpop.f32.mrf.mxu0
    %v9179 = vadd.f32 %v9010, %v9178
    %9180 = vmatmul.bf16.gmra.mxu0 %v8540
    %v9181 = vpop.f32.mrf.mxu0
    %v9182 = vadd.f32 %v9013, %v9181
    %v9183 = vpop.f32.mrf.mxu0
    %v9184 = vadd.f32 %v9015, %v9183
    %9185 = vmatmul.bf16.gmra.mxu0 %v8548
    %v9186 = vpop.f32.mrf.mxu0
    %v9187 = vadd.f32 %v9018, %v9186
    %v9188 = vpop.f32.mrf.mxu0
    %v9189 = vadd.f32 %v9020, %v9188
    %9190 = vmatmul.bf16.gmra.mxu0 %v8556
    %v9191 = vpop.f32.mrf.mxu0
    %v9192 = vadd.f32 %v9023, %v9191
    %v9193 = vpop.f32.mrf.mxu0
    %v9194 = vadd.f32 %v9025, %v9193
    %9195 = vmatmul.bf16.gmra.mxu0 %v8564
    %v9196 = vpop.f32.mrf.mxu0
    %v9197 = vadd.f32 %v9028, %v9196
    %v9198 = vpop.f32.mrf.mxu0
    %v9199 = vadd.f32 %v9030, %v9198
    %9200 = vmatmul.bf16.gmra.mxu0 %v8572
    %v9201 = vpop.f32.mrf.mxu0
    %v9202 = vadd.f32 %v9033, %v9201
    %v9203 = vpop.f32.mrf.mxu0
    %v9204 = vadd.f32 %v9035, %v9203
    %9205 = vmatmul.bf16.gmra.mxu0 %v8580
    %v9206 = vpop.f32.mrf.mxu0
    %v9207 = vadd.f32 %v9038, %v9206
    %v9208 = vpop.f32.mrf.mxu0
    %v9209 = vadd.f32 %v9040, %v9208
    %9210 = vmatmul.bf16.gmra.mxu0 %v8588
    %v9211 = vpop.f32.mrf.mxu0
    %v9212 = vadd.f32 %v9043, %v9211
    %v9213 = vpop.f32.mrf.mxu0
    %v9214 = vadd.f32 %v9045, %v9213
    %9215 = vmatmul.bf16.gmra.mxu0 %v8596
    %v9216 = vpop.f32.mrf.mxu0
    %v9217 = vadd.f32 %v9048, %v9216
    %v9218 = vpop.f32.mrf.mxu0
    %v9219 = vadd.f32 %v9050, %v9218
    %9220 = vmatmul.bf16.gmra.mxu0 %v8604
    %v9221 = vpop.f32.mrf.mxu0
    %v9222 = vadd.f32 %v9053, %v9221
    %v9223 = vpop.f32.mrf.mxu0
    %v9224 = vadd.f32 %v9055, %v9223
    %9225 = vmatmul.bf16.gmra.mxu0 %v8612
    %v9226 = vpop.f32.mrf.mxu0
    %v9227 = vadd.f32 %v9058, %v9226
    %v9228 = vpop.f32.mrf.mxu0
    %v9229 = vadd.f32 %v9060, %v9228
    %9230 = vmatmul.bf16.gmra.mxu0 %v8620
    %v9231 = vpop.f32.mrf.mxu0
    %v9232 = vadd.f32 %v9063, %v9231
    %v9233 = vpop.f32.mrf.mxu0
    %v9234 = vadd.f32 %v9065, %v9233
    %9235 = vmatmul.bf16.gmra.mxu0 %v8628
    %v9236 = vpop.f32.mrf.mxu0
    %v9237 = vadd.f32 %v9068, %v9236
    %v9238 = vpop.f32.mrf.mxu0
    %v9239 = vadd.f32 %v9070, %v9238
    %9240 = vmatmul.bf16.gmra.mxu0 %v8636
    %v9241 = vpop.f32.mrf.mxu0
    %v9242 = vadd.f32 %v9073, %v9241
    %v9243 = vpop.f32.mrf.mxu0
    %v9244 = vadd.f32 %v9075, %v9243
    %9245 = vmatmul.bf16.gmra.mxu0 %v8644
    %v9246 = vpop.f32.mrf.mxu0
    %v9247 = vadd.f32 %v9078, %v9246
    %v9248 = vpop.f32.mrf.mxu0
    %v9249 = vadd.f32 %v9080, %v9248
    %9250 = vmatmul.bf16.gmra.mxu0 %v8652
    %v9251 = vpop.f32.mrf.mxu0
    %v9252 = vadd.f32 %v9083, %v9251
    %v9253 = vpop.f32.mrf.mxu0
    %v9254 = vadd.f32 %v9085, %v9253
    %9255 = vmatmul.bf16.gmra.mxu0 %v8660
    %v9256 = vpop.f32.mrf.mxu0
    %v9257 = vadd.f32 %v9088, %v9256
    %v9258 = vpop.f32.mrf.mxu0
    %v9259 = vadd.f32 %v9090, %v9258
    %9260 = vdwg.mxu0
    %9261 = vmatpush.bf16.msra.mxu0 %v6921
    %9262 = vmatpush.bf16.msra.mxu0 %v6919
    %9263 = vmatpush.bf16.msra.mxu0 %v6917
    %9264 = vmatpush.bf16.msra.mxu0 %v6915
    %9265 = vmatpush.bf16.msra.mxu0 %v6913
    %9266 = vmatpush.bf16.msra.mxu0 %v6911
    %9267 = vmatpush.bf16.msra.mxu0 %v6909
    %9268 = vmatpush.bf16.msra.mxu0 %v6907
    %9269 = vmatmul.bf16.gmra.mxu0 %v8413
    %v9270 = vpop.f32.mrf.mxu0
    %v9271 = vadd.f32 %v9102, %v9270
    %v9272 = vpop.f32.mrf.mxu0
    %v9273 = vadd.f32 %v9104, %v9272
    %9274 = vmatmul.bf16.gmra.mxu0 %v8421
    %v9275 = vpop.f32.mrf.mxu0
    %v9276 = vadd.f32 %v9107, %v9275
    %v9277 = vpop.f32.mrf.mxu0
    %v9278 = vadd.f32 %v9109, %v9277
    %9279 = vmatmul.bf16.gmra.mxu0 %v8429
    %v9280 = vpop.f32.mrf.mxu0
    %v9281 = vadd.f32 %v9112, %v9280
    %v9282 = vpop.f32.mrf.mxu0
    %v9283 = vadd.f32 %v9114, %v9282
    %9284 = vmatmul.bf16.gmra.mxu0 %v8437
    %v9285 = vpop.f32.mrf.mxu0
    %v9286 = vadd.f32 %v9117, %v9285
    %v9287 = vpop.f32.mrf.mxu0
    %v9288 = vadd.f32 %v9119, %v9287
    %9289 = vmatmul.bf16.gmra.mxu0 %v8445
    %v9290 = vpop.f32.mrf.mxu0
    %v9291 = vadd.f32 %v9122, %v9290
    %v9292 = vpop.f32.mrf.mxu0
    %v9293 = vadd.f32 %v9124, %v9292
    %9294 = vmatmul.bf16.gmra.mxu0 %v8453
    %v9295 = vpop.f32.mrf.mxu0
    %v9296 = vadd.f32 %v9127, %v9295
    %v9297 = vpop.f32.mrf.mxu0
    %v9298 = vadd.f32 %v9129, %v9297
    %9299 = vmatmul.bf16.gmra.mxu0 %v8461
    %v9300 = vpop.f32.mrf.mxu0
    %v9301 = vadd.f32 %v9132, %v9300
    %v9302 = vpop.f32.mrf.mxu0
    %v9303 = vadd.f32 %v9134, %v9302
    %9304 = vmatmul.bf16.gmra.mxu0 %v8469
    %v9305 = vpop.f32.mrf.mxu0
    %v9306 = vadd.f32 %v9137, %v9305
    %v9307 = vpop.f32.mrf.mxu0
    %v9308 = vadd.f32 %v9139, %v9307
    %9309 = vmatmul.bf16.gmra.mxu0 %v8477
    %v9310 = vpop.f32.mrf.mxu0
    %v9311 = vadd.f32 %v9142, %v9310
    %v9312 = vpop.f32.mrf.mxu0
    %v9313 = vadd.f32 %v9144, %v9312
    %9314 = vmatmul.bf16.gmra.mxu0 %v8485
    %v9315 = vpop.f32.mrf.mxu0
    %v9316 = vadd.f32 %v9147, %v9315
    %v9317 = vpop.f32.mrf.mxu0
    %v9318 = vadd.f32 %v9149, %v9317
    %9319 = vmatmul.bf16.gmra.mxu0 %v8493
    %v9320 = vpop.f32.mrf.mxu0
    %v9321 = vadd.f32 %v9152, %v9320
    %v9322 = vpop.f32.mrf.mxu0
    %v9323 = vadd.f32 %v9154, %v9322
    %9324 = vmatmul.bf16.gmra.mxu0 %v8501
    %v9325 = vpop.f32.mrf.mxu0
    %v9326 = vadd.f32 %v9157, %v9325
    %v9327 = vpop.f32.mrf.mxu0
    %v9328 = vadd.f32 %v9159, %v9327
    %9329 = vmatmul.bf16.gmra.mxu0 %v8509
    %v9330 = vpop.f32.mrf.mxu0
    %v9331 = vadd.f32 %v9162, %v9330
    %v9332 = vpop.f32.mrf.mxu0
    %v9333 = vadd.f32 %v9164, %v9332
    %9334 = vmatmul.bf16.gmra.mxu0 %v8517
    %v9335 = vpop.f32.mrf.mxu0
    %v9336 = vadd.f32 %v9167, %v9335
    %v9337 = vpop.f32.mrf.mxu0
    %v9338 = vadd.f32 %v9169, %v9337
    %9339 = vmatmul.bf16.gmra.mxu0 %v8525
    %v9340 = vpop.f32.mrf.mxu0
    %v9341 = vadd.f32 %v9172, %v9340
    %v9342 = vpop.f32.mrf.mxu0
    %v9343 = vadd.f32 %v9174, %v9342
    %9344 = vmatmul.bf16.gmra.mxu0 %v8533
    %v9345 = vpop.f32.mrf.mxu0
    %v9346 = vadd.f32 %v9177, %v9345
    %v9347 = vpop.f32.mrf.mxu0
    %v9348 = vadd.f32 %v9179, %v9347
    %9349 = vmatmul.bf16.gmra.mxu0 %v8541
    %v9350 = vpop.f32.mrf.mxu0
    %v9351 = vadd.f32 %v9182, %v9350
    %v9352 = vpop.f32.mrf.mxu0
    %v9353 = vadd.f32 %v9184, %v9352
    %9354 = vmatmul.bf16.gmra.mxu0 %v8549
    %v9355 = vpop.f32.mrf.mxu0
    %v9356 = vadd.f32 %v9187, %v9355
    %v9357 = vpop.f32.mrf.mxu0
    %v9358 = vadd.f32 %v9189, %v9357
    %9359 = vmatmul.bf16.gmra.mxu0 %v8557
    %v9360 = vpop.f32.mrf.mxu0
    %v9361 = vadd.f32 %v9192, %v9360
    %v9362 = vpop.f32.mrf.mxu0
    %v9363 = vadd.f32 %v9194, %v9362
    %9364 = vmatmul.bf16.gmra.mxu0 %v8565
    %v9365 = vpop.f32.mrf.mxu0
    %v9366 = vadd.f32 %v9197, %v9365
    %v9367 = vpop.f32.mrf.mxu0
    %v9368 = vadd.f32 %v9199, %v9367
    %9369 = vmatmul.bf16.gmra.mxu0 %v8573
    %v9370 = vpop.f32.mrf.mxu0
    %v9371 = vadd.f32 %v9202, %v9370
    %v9372 = vpop.f32.mrf.mxu0
    %v9373 = vadd.f32 %v9204, %v9372
    %9374 = vmatmul.bf16.gmra.mxu0 %v8581
    %v9375 = vpop.f32.mrf.mxu0
    %v9376 = vadd.f32 %v9207, %v9375
    %v9377 = vpop.f32.mrf.mxu0
    %v9378 = vadd.f32 %v9209, %v9377
    %9379 = vmatmul.bf16.gmra.mxu0 %v8589
    %v9380 = vpop.f32.mrf.mxu0
    %v9381 = vadd.f32 %v9212, %v9380
    %v9382 = vpop.f32.mrf.mxu0
    %v9383 = vadd.f32 %v9214, %v9382
    %9384 = vmatmul.bf16.gmra.mxu0 %v8597
    %v9385 = vpop.f32.mrf.mxu0
    %v9386 = vadd.f32 %v9217, %v9385
    %v9387 = vpop.f32.mrf.mxu0
    %v9388 = vadd.f32 %v9219, %v9387
    %9389 = vmatmul.bf16.gmra.mxu0 %v8605
    %v9390 = vpop.f32.mrf.mxu0
    %v9391 = vadd.f32 %v9222, %v9390
    %v9392 = vpop.f32.mrf.mxu0
    %v9393 = vadd.f32 %v9224, %v9392
    %9394 = vmatmul.bf16.gmra.mxu0 %v8613
    %v9395 = vpop.f32.mrf.mxu0
    %v9396 = vadd.f32 %v9227, %v9395
    %v9397 = vpop.f32.mrf.mxu0
    %v9398 = vadd.f32 %v9229, %v9397
    %9399 = vmatmul.bf16.gmra.mxu0 %v8621
    %v9400 = vpop.f32.mrf.mxu0
    %v9401 = vadd.f32 %v9232, %v9400
    %v9402 = vpop.f32.mrf.mxu0
    %v9403 = vadd.f32 %v9234, %v9402
    %9404 = vmatmul.bf16.gmra.mxu0 %v8629
    %v9405 = vpop.f32.mrf.mxu0
    %v9406 = vadd.f32 %v9237, %v9405
    %v9407 = vpop.f32.mrf.mxu0
    %v9408 = vadd.f32 %v9239, %v9407
    %9409 = vmatmul.bf16.gmra.mxu0 %v8637
    %v9410 = vpop.f32.mrf.mxu0
    %v9411 = vadd.f32 %v9242, %v9410
    %v9412 = vpop.f32.mrf.mxu0
    %v9413 = vadd.f32 %v9244, %v9412
    %9414 = vmatmul.bf16.gmra.mxu0 %v8645
    %v9415 = vpop.f32.mrf.mxu0
    %v9416 = vadd.f32 %v9247, %v9415
    %v9417 = vpop.f32.mrf.mxu0
    %v9418 = vadd.f32 %v9249, %v9417
    %9419 = vmatmul.bf16.gmra.mxu0 %v8653
    %v9420 = vpop.f32.mrf.mxu0
    %v9421 = vadd.f32 %v9252, %v9420
    %v9422 = vpop.f32.mrf.mxu0
    %v9423 = vadd.f32 %v9254, %v9422
    %9424 = vmatmul.bf16.gmra.mxu0 %v8661
    %v9425 = vpop.f32.mrf.mxu0
    %v9426 = vadd.f32 %v9257, %v9425
    %v9427 = vpop.f32.mrf.mxu0
    %v9428 = vadd.f32 %v9259, %v9427
    %9429 = vdwg.mxu0
    %9430 = vmatpush.bf16.msra.mxu0 %v6937
    %9431 = vmatpush.bf16.msra.mxu0 %v6935
    %9432 = vmatpush.bf16.msra.mxu0 %v6933
    %9433 = vmatpush.bf16.msra.mxu0 %v6931
    %9434 = vmatpush.bf16.msra.mxu0 %v6929
    %9435 = vmatpush.bf16.msra.mxu0 %v6927
    %9436 = vmatpush.bf16.msra.mxu0 %v6925
    %9437 = vmatpush.bf16.msra.mxu0 %v6923
    %9438 = vmatmul.bf16.gmra.mxu0 %v8414
    %v9439 = vpop.f32.mrf.mxu0
    %v9440 = vadd.f32 %v9271, %v9439
    %v9441 = vpop.f32.mrf.mxu0
    %v9442 = vadd.f32 %v9273, %v9441
    %9443 = vmatmul.bf16.gmra.mxu0 %v8422
    %v9444 = vpop.f32.mrf.mxu0
    %v9445 = vadd.f32 %v9276, %v9444
    %v9446 = vpop.f32.mrf.mxu0
    %v9447 = vadd.f32 %v9278, %v9446
    %9448 = vmatmul.bf16.gmra.mxu0 %v8430
    %v9449 = vpop.f32.mrf.mxu0
    %v9450 = vadd.f32 %v9281, %v9449
    %v9451 = vpop.f32.mrf.mxu0
    %v9452 = vadd.f32 %v9283, %v9451
    %9453 = vmatmul.bf16.gmra.mxu0 %v8438
    %v9454 = vpop.f32.mrf.mxu0
    %v9455 = vadd.f32 %v9286, %v9454
    %v9456 = vpop.f32.mrf.mxu0
    %v9457 = vadd.f32 %v9288, %v9456
    %9458 = vmatmul.bf16.gmra.mxu0 %v8446
    %v9459 = vpop.f32.mrf.mxu0
    %v9460 = vadd.f32 %v9291, %v9459
    %v9461 = vpop.f32.mrf.mxu0
    %v9462 = vadd.f32 %v9293, %v9461
    %9463 = vmatmul.bf16.gmra.mxu0 %v8454
    %v9464 = vpop.f32.mrf.mxu0
    %v9465 = vadd.f32 %v9296, %v9464
    %v9466 = vpop.f32.mrf.mxu0
    %v9467 = vadd.f32 %v9298, %v9466
    %9468 = vmatmul.bf16.gmra.mxu0 %v8462
    %v9469 = vpop.f32.mrf.mxu0
    %v9470 = vadd.f32 %v9301, %v9469
    %v9471 = vpop.f32.mrf.mxu0
    %v9472 = vadd.f32 %v9303, %v9471
    %9473 = vmatmul.bf16.gmra.mxu0 %v8470
    %v9474 = vpop.f32.mrf.mxu0
    %v9475 = vadd.f32 %v9306, %v9474
    %v9476 = vpop.f32.mrf.mxu0
    %v9477 = vadd.f32 %v9308, %v9476
    %9478 = vmatmul.bf16.gmra.mxu0 %v8478
    %v9479 = vpop.f32.mrf.mxu0
    %v9480 = vadd.f32 %v9311, %v9479
    %v9481 = vpop.f32.mrf.mxu0
    %v9482 = vadd.f32 %v9313, %v9481
    %9483 = vmatmul.bf16.gmra.mxu0 %v8486
    %v9484 = vpop.f32.mrf.mxu0
    %v9485 = vadd.f32 %v9316, %v9484
    %v9486 = vpop.f32.mrf.mxu0
    %v9487 = vadd.f32 %v9318, %v9486
    %9488 = vmatmul.bf16.gmra.mxu0 %v8494
    %v9489 = vpop.f32.mrf.mxu0
    %v9490 = vadd.f32 %v9321, %v9489
    %v9491 = vpop.f32.mrf.mxu0
    %v9492 = vadd.f32 %v9323, %v9491
    %9493 = vmatmul.bf16.gmra.mxu0 %v8502
    %v9494 = vpop.f32.mrf.mxu0
    %v9495 = vadd.f32 %v9326, %v9494
    %v9496 = vpop.f32.mrf.mxu0
    %v9497 = vadd.f32 %v9328, %v9496
    %9498 = vmatmul.bf16.gmra.mxu0 %v8510
    %v9499 = vpop.f32.mrf.mxu0
    %v9500 = vadd.f32 %v9331, %v9499
    %v9501 = vpop.f32.mrf.mxu0
    %v9502 = vadd.f32 %v9333, %v9501
    %9503 = vmatmul.bf16.gmra.mxu0 %v8518
    %v9504 = vpop.f32.mrf.mxu0
    %v9505 = vadd.f32 %v9336, %v9504
    %v9506 = vpop.f32.mrf.mxu0
    %v9507 = vadd.f32 %v9338, %v9506
    %9508 = vmatmul.bf16.gmra.mxu0 %v8526
    %v9509 = vpop.f32.mrf.mxu0
    %v9510 = vadd.f32 %v9341, %v9509
    %v9511 = vpop.f32.mrf.mxu0
    %v9512 = vadd.f32 %v9343, %v9511
    %9513 = vmatmul.bf16.gmra.mxu0 %v8534
    %v9514 = vpop.f32.mrf.mxu0
    %v9515 = vadd.f32 %v9346, %v9514
    %v9516 = vpop.f32.mrf.mxu0
    %v9517 = vadd.f32 %v9348, %v9516
    %9518 = vmatmul.bf16.gmra.mxu0 %v8542
    %v9519 = vpop.f32.mrf.mxu0
    %v9520 = vadd.f32 %v9351, %v9519
    %v9521 = vpop.f32.mrf.mxu0
    %v9522 = vadd.f32 %v9353, %v9521
    %9523 = vmatmul.bf16.gmra.mxu0 %v8550
    %v9524 = vpop.f32.mrf.mxu0
    %v9525 = vadd.f32 %v9356, %v9524
    %v9526 = vpop.f32.mrf.mxu0
    %v9527 = vadd.f32 %v9358, %v9526
    %9528 = vmatmul.bf16.gmra.mxu0 %v8558
    %v9529 = vpop.f32.mrf.mxu0
    %v9530 = vadd.f32 %v9361, %v9529
    %v9531 = vpop.f32.mrf.mxu0
    %v9532 = vadd.f32 %v9363, %v9531
    %9533 = vmatmul.bf16.gmra.mxu0 %v8566
    %v9534 = vpop.f32.mrf.mxu0
    %v9535 = vadd.f32 %v9366, %v9534
    %v9536 = vpop.f32.mrf.mxu0
    %v9537 = vadd.f32 %v9368, %v9536
    %9538 = vmatmul.bf16.gmra.mxu0 %v8574
    %v9539 = vpop.f32.mrf.mxu0
    %v9540 = vadd.f32 %v9371, %v9539
    %v9541 = vpop.f32.mrf.mxu0
    %v9542 = vadd.f32 %v9373, %v9541
    %9543 = vmatmul.bf16.gmra.mxu0 %v8582
    %v9544 = vpop.f32.mrf.mxu0
    %v9545 = vadd.f32 %v9376, %v9544
    %v9546 = vpop.f32.mrf.mxu0
    %v9547 = vadd.f32 %v9378, %v9546
    %9548 = vmatmul.bf16.gmra.mxu0 %v8590
    %v9549 = vpop.f32.mrf.mxu0
    %v9550 = vadd.f32 %v9381, %v9549
    %v9551 = vpop.f32.mrf.mxu0
    %v9552 = vadd.f32 %v9383, %v9551
    %9553 = vmatmul.bf16.gmra.mxu0 %v8598
    %v9554 = vpop.f32.mrf.mxu0
    %v9555 = vadd.f32 %v9386, %v9554
    %v9556 = vpop.f32.mrf.mxu0
    %v9557 = vadd.f32 %v9388, %v9556
    %9558 = vmatmul.bf16.gmra.mxu0 %v8606
    %v9559 = vpop.f32.mrf.mxu0
    %v9560 = vadd.f32 %v9391, %v9559
    %v9561 = vpop.f32.mrf.mxu0
    %v9562 = vadd.f32 %v9393, %v9561
    %9563 = vmatmul.bf16.gmra.mxu0 %v8614
    %v9564 = vpop.f32.mrf.mxu0
    %v9565 = vadd.f32 %v9396, %v9564
    %v9566 = vpop.f32.mrf.mxu0
    %v9567 = vadd.f32 %v9398, %v9566
    %9568 = vmatmul.bf16.gmra.mxu0 %v8622
    %v9569 = vpop.f32.mrf.mxu0
    %v9570 = vadd.f32 %v9401, %v9569
    %v9571 = vpop.f32.mrf.mxu0
    %v9572 = vadd.f32 %v9403, %v9571
    %9573 = vmatmul.bf16.gmra.mxu0 %v8630
    %v9574 = vpop.f32.mrf.mxu0
    %v9575 = vadd.f32 %v9406, %v9574
    %v9576 = vpop.f32.mrf.mxu0
    %v9577 = vadd.f32 %v9408, %v9576
    %9578 = vmatmul.bf16.gmra.mxu0 %v8638
    %v9579 = vpop.f32.mrf.mxu0
    %v9580 = vadd.f32 %v9411, %v9579
    %v9581 = vpop.f32.mrf.mxu0
    %v9582 = vadd.f32 %v9413, %v9581
    %9583 = vmatmul.bf16.gmra.mxu0 %v8646
    %v9584 = vpop.f32.mrf.mxu0
    %v9585 = vadd.f32 %v9416, %v9584
    %v9586 = vpop.f32.mrf.mxu0
    %v9587 = vadd.f32 %v9418, %v9586
    %9588 = vmatmul.bf16.gmra.mxu0 %v8654
    %v9589 = vpop.f32.mrf.mxu0
    %v9590 = vadd.f32 %v9421, %v9589
    %v9591 = vpop.f32.mrf.mxu0
    %v9592 = vadd.f32 %v9423, %v9591
    %9593 = vmatmul.bf16.gmra.mxu0 %v8662
    %v9594 = vpop.f32.mrf.mxu0
    %v9595 = vadd.f32 %v9426, %v9594
    %v9596 = vpop.f32.mrf.mxu0
    %v9597 = vadd.f32 %v9428, %v9596
    %9598 = vdwg.mxu0
    %9599 = vmatpush.bf16.msra.mxu0 %v6953
    %9600 = vmatpush.bf16.msra.mxu0 %v6951
    %9601 = vmatpush.bf16.msra.mxu0 %v6949
    %9602 = vmatpush.bf16.msra.mxu0 %v6947
    %9603 = vmatpush.bf16.msra.mxu0 %v6945
    %9604 = vmatpush.bf16.msra.mxu0 %v6943
    %9605 = vmatpush.bf16.msra.mxu0 %v6941
    %9606 = vmatpush.bf16.msra.mxu0 %v6939
    %9607 = vmatmul.bf16.gmra.mxu0 %v8415
    %v9608 = vpop.f32.mrf.mxu0
    %v9609 = vadd.f32 %v9440, %v9608
    %v9610 = vpop.f32.mrf.mxu0
    %v9611 = vadd.f32 %v9442, %v9610
    %9612 = vmatmul.bf16.gmra.mxu0 %v8423
    %v9613 = vpop.f32.mrf.mxu0
    %v9614 = vadd.f32 %v9445, %v9613
    %v9615 = vpop.f32.mrf.mxu0
    %v9616 = vadd.f32 %v9447, %v9615
    %9617 = vmatmul.bf16.gmra.mxu0 %v8431
    %v9618 = vpop.f32.mrf.mxu0
    %v9619 = vadd.f32 %v9450, %v9618
    %v9620 = vpop.f32.mrf.mxu0
    %v9621 = vadd.f32 %v9452, %v9620
    %9622 = vmatmul.bf16.gmra.mxu0 %v8439
    %v9623 = vpop.f32.mrf.mxu0
    %v9624 = vadd.f32 %v9455, %v9623
    %v9625 = vpop.f32.mrf.mxu0
    %v9626 = vadd.f32 %v9457, %v9625
    %9627 = vmatmul.bf16.gmra.mxu0 %v8447
    %v9628 = vpop.f32.mrf.mxu0
    %v9629 = vadd.f32 %v9460, %v9628
    %v9630 = vpop.f32.mrf.mxu0
    %v9631 = vadd.f32 %v9462, %v9630
    %9632 = vmatmul.bf16.gmra.mxu0 %v8455
    %v9633 = vpop.f32.mrf.mxu0
    %v9634 = vadd.f32 %v9465, %v9633
    %v9635 = vpop.f32.mrf.mxu0
    %v9636 = vadd.f32 %v9467, %v9635
    %9637 = vmatmul.bf16.gmra.mxu0 %v8463
    %v9638 = vpop.f32.mrf.mxu0
    %v9639 = vadd.f32 %v9470, %v9638
    %v9640 = vpop.f32.mrf.mxu0
    %v9641 = vadd.f32 %v9472, %v9640
    %9642 = vmatmul.bf16.gmra.mxu0 %v8471
    %v9643 = vpop.f32.mrf.mxu0
    %v9644 = vadd.f32 %v9475, %v9643
    %v9645 = vpop.f32.mrf.mxu0
    %v9646 = vadd.f32 %v9477, %v9645
    %9647 = vmatmul.bf16.gmra.mxu0 %v8479
    %v9648 = vpop.f32.mrf.mxu0
    %v9649 = vadd.f32 %v9480, %v9648
    %v9650 = vpop.f32.mrf.mxu0
    %v9651 = vadd.f32 %v9482, %v9650
    %9652 = vmatmul.bf16.gmra.mxu0 %v8487
    %v9653 = vpop.f32.mrf.mxu0
    %v9654 = vadd.f32 %v9485, %v9653
    %v9655 = vpop.f32.mrf.mxu0
    %v9656 = vadd.f32 %v9487, %v9655
    %9657 = vmatmul.bf16.gmra.mxu0 %v8495
    %v9658 = vpop.f32.mrf.mxu0
    %v9659 = vadd.f32 %v9490, %v9658
    %v9660 = vpop.f32.mrf.mxu0
    %v9661 = vadd.f32 %v9492, %v9660
    %9662 = vmatmul.bf16.gmra.mxu0 %v8503
    %v9663 = vpop.f32.mrf.mxu0
    %v9664 = vadd.f32 %v9495, %v9663
    %v9665 = vpop.f32.mrf.mxu0
    %v9666 = vadd.f32 %v9497, %v9665
    %9667 = vmatmul.bf16.gmra.mxu0 %v8511
    %v9668 = vpop.f32.mrf.mxu0
    %v9669 = vadd.f32 %v9500, %v9668
    %v9670 = vpop.f32.mrf.mxu0
    %v9671 = vadd.f32 %v9502, %v9670
    %9672 = vmatmul.bf16.gmra.mxu0 %v8519
    %v9673 = vpop.f32.mrf.mxu0
    %v9674 = vadd.f32 %v9505, %v9673
    %v9675 = vpop.f32.mrf.mxu0
    %v9676 = vadd.f32 %v9507, %v9675
    %9677 = vmatmul.bf16.gmra.mxu0 %v8527
    %v9678 = vpop.f32.mrf.mxu0
    %v9679 = vadd.f32 %v9510, %v9678
    %v9680 = vpop.f32.mrf.mxu0
    %v9681 = vadd.f32 %v9512, %v9680
    %9682 = vmatmul.bf16.gmra.mxu0 %v8535
    %v9683 = vpop.f32.mrf.mxu0
    %v9684 = vadd.f32 %v9515, %v9683
    %v9685 = vpop.f32.mrf.mxu0
    %v9686 = vadd.f32 %v9517, %v9685
    %9687 = vmatmul.bf16.gmra.mxu0 %v8543
    %v9688 = vpop.f32.mrf.mxu0
    %v9689 = vadd.f32 %v9520, %v9688
    %v9690 = vpop.f32.mrf.mxu0
    %v9691 = vadd.f32 %v9522, %v9690
    %9692 = vmatmul.bf16.gmra.mxu0 %v8551
    %v9693 = vpop.f32.mrf.mxu0
    %v9694 = vadd.f32 %v9525, %v9693
    %v9695 = vpop.f32.mrf.mxu0
    %v9696 = vadd.f32 %v9527, %v9695
    %9697 = vmatmul.bf16.gmra.mxu0 %v8559
    %v9698 = vpop.f32.mrf.mxu0
    %v9699 = vadd.f32 %v9530, %v9698
    %v9700 = vpop.f32.mrf.mxu0
    %v9701 = vadd.f32 %v9532, %v9700
    %9702 = vmatmul.bf16.gmra.mxu0 %v8567
    %v9703 = vpop.f32.mrf.mxu0
    %v9704 = vadd.f32 %v9535, %v9703
    %v9705 = vpop.f32.mrf.mxu0
    %v9706 = vadd.f32 %v9537, %v9705
    %9707 = vmatmul.bf16.gmra.mxu0 %v8575
    %v9708 = vpop.f32.mrf.mxu0
    %v9709 = vadd.f32 %v9540, %v9708
    %v9710 = vpop.f32.mrf.mxu0
    %v9711 = vadd.f32 %v9542, %v9710
    %9712 = vmatmul.bf16.gmra.mxu0 %v8583
    %v9713 = vpop.f32.mrf.mxu0
    %v9714 = vadd.f32 %v9545, %v9713
    %v9715 = vpop.f32.mrf.mxu0
    %v9716 = vadd.f32 %v9547, %v9715
    %9717 = vmatmul.bf16.gmra.mxu0 %v8591
    %v9718 = vpop.f32.mrf.mxu0
    %v9719 = vadd.f32 %v9550, %v9718
    %v9720 = vpop.f32.mrf.mxu0
    %v9721 = vadd.f32 %v9552, %v9720
    %9722 = vmatmul.bf16.gmra.mxu0 %v8599
    %v9723 = vpop.f32.mrf.mxu0
    %v9724 = vadd.f32 %v9555, %v9723
    %v9725 = vpop.f32.mrf.mxu0
    %v9726 = vadd.f32 %v9557, %v9725
    %9727 = vmatmul.bf16.gmra.mxu0 %v8607
    %v9728 = vpop.f32.mrf.mxu0
    %v9729 = vadd.f32 %v9560, %v9728
    %v9730 = vpop.f32.mrf.mxu0
    %v9731 = vadd.f32 %v9562, %v9730
    %9732 = vmatmul.bf16.gmra.mxu0 %v8615
    %v9733 = vpop.f32.mrf.mxu0
    %v9734 = vadd.f32 %v9565, %v9733
    %v9735 = vpop.f32.mrf.mxu0
    %v9736 = vadd.f32 %v9567, %v9735
    %9737 = vmatmul.bf16.gmra.mxu0 %v8623
    %v9738 = vpop.f32.mrf.mxu0
    %v9739 = vadd.f32 %v9570, %v9738
    %v9740 = vpop.f32.mrf.mxu0
    %v9741 = vadd.f32 %v9572, %v9740
    %9742 = vmatmul.bf16.gmra.mxu0 %v8631
    %v9743 = vpop.f32.mrf.mxu0
    %v9744 = vadd.f32 %v9575, %v9743
    %v9745 = vpop.f32.mrf.mxu0
    %v9746 = vadd.f32 %v9577, %v9745
    %9747 = vmatmul.bf16.gmra.mxu0 %v8639
    %v9748 = vpop.f32.mrf.mxu0
    %v9749 = vadd.f32 %v9580, %v9748
    %v9750 = vpop.f32.mrf.mxu0
    %v9751 = vadd.f32 %v9582, %v9750
    %9752 = vmatmul.bf16.gmra.mxu0 %v8647
    %v9753 = vpop.f32.mrf.mxu0
    %v9754 = vadd.f32 %v9585, %v9753
    %v9755 = vpop.f32.mrf.mxu0
    %v9756 = vadd.f32 %v9587, %v9755
    %9757 = vmatmul.bf16.gmra.mxu0 %v8655
    %v9758 = vpop.f32.mrf.mxu0
    %v9759 = vadd.f32 %v9590, %v9758
    %v9760 = vpop.f32.mrf.mxu0
    %v9761 = vadd.f32 %v9592, %v9760
    %9762 = vmatmul.bf16.gmra.mxu0 %v8663
    %v9763 = vpop.f32.mrf.mxu0
    %v9764 = vadd.f32 %v9595, %v9763
    %v9765 = vpop.f32.mrf.mxu0
    %v9766 = vadd.f32 %v9597, %v9765
    %9767 = vdwg.mxu0
    %9768 = vmatpush.bf16.msra.mxu0 %v6969
    %9769 = vmatpush.bf16.msra.mxu0 %v6967
    %9770 = vmatpush.bf16.msra.mxu0 %v6965
    %9771 = vmatpush.bf16.msra.mxu0 %v6963
    %9772 = vmatpush.bf16.msra.mxu0 %v6961
    %9773 = vmatpush.bf16.msra.mxu0 %v6959
    %9774 = vmatpush.bf16.msra.mxu0 %v6957
    %9775 = vmatpush.bf16.msra.mxu0 %v6955
    %9776 = vmatmul.bf16.gmra.mxu0 %v8416
    %v9777 = vpop.f32.mrf.mxu0
    %v9778 = vadd.f32 %v9609, %v9777
    %v9779 = vpop.f32.mrf.mxu0
    %v9780 = vadd.f32 %v9611, %v9779
    %9781 = vmatmul.bf16.gmra.mxu0 %v8424
    %v9782 = vpop.f32.mrf.mxu0
    %v9783 = vadd.f32 %v9614, %v9782
    %v9784 = vpop.f32.mrf.mxu0
    %v9785 = vadd.f32 %v9616, %v9784
    %9786 = vmatmul.bf16.gmra.mxu0 %v8432
    %v9787 = vpop.f32.mrf.mxu0
    %v9788 = vadd.f32 %v9619, %v9787
    %v9789 = vpop.f32.mrf.mxu0
    %v9790 = vadd.f32 %v9621, %v9789
    %9791 = vmatmul.bf16.gmra.mxu0 %v8440
    %v9792 = vpop.f32.mrf.mxu0
    %v9793 = vadd.f32 %v9624, %v9792
    %v9794 = vpop.f32.mrf.mxu0
    %v9795 = vadd.f32 %v9626, %v9794
    %9796 = vmatmul.bf16.gmra.mxu0 %v8448
    %v9797 = vpop.f32.mrf.mxu0
    %v9798 = vadd.f32 %v9629, %v9797
    %v9799 = vpop.f32.mrf.mxu0
    %v9800 = vadd.f32 %v9631, %v9799
    %9801 = vmatmul.bf16.gmra.mxu0 %v8456
    %v9802 = vpop.f32.mrf.mxu0
    %v9803 = vadd.f32 %v9634, %v9802
    %v9804 = vpop.f32.mrf.mxu0
    %v9805 = vadd.f32 %v9636, %v9804
    %9806 = vmatmul.bf16.gmra.mxu0 %v8464
    %v9807 = vpop.f32.mrf.mxu0
    %v9808 = vadd.f32 %v9639, %v9807
    %v9809 = vpop.f32.mrf.mxu0
    %v9810 = vadd.f32 %v9641, %v9809
    %9811 = vmatmul.bf16.gmra.mxu0 %v8472
    %v9812 = vpop.f32.mrf.mxu0
    %v9813 = vadd.f32 %v9644, %v9812
    %v9814 = vpop.f32.mrf.mxu0
    %v9815 = vadd.f32 %v9646, %v9814
    %9816 = vmatmul.bf16.gmra.mxu0 %v8480
    %v9817 = vpop.f32.mrf.mxu0
    %v9818 = vadd.f32 %v9649, %v9817
    %v9819 = vpop.f32.mrf.mxu0
    %v9820 = vadd.f32 %v9651, %v9819
    %9821 = vmatmul.bf16.gmra.mxu0 %v8488
    %v9822 = vpop.f32.mrf.mxu0
    %v9823 = vadd.f32 %v9654, %v9822
    %v9824 = vpop.f32.mrf.mxu0
    %v9825 = vadd.f32 %v9656, %v9824
    %9826 = vmatmul.bf16.gmra.mxu0 %v8496
    %v9827 = vpop.f32.mrf.mxu0
    %v9828 = vadd.f32 %v9659, %v9827
    %v9829 = vpop.f32.mrf.mxu0
    %v9830 = vadd.f32 %v9661, %v9829
    %9831 = vmatmul.bf16.gmra.mxu0 %v8504
    %v9832 = vpop.f32.mrf.mxu0
    %v9833 = vadd.f32 %v9664, %v9832
    %v9834 = vpop.f32.mrf.mxu0
    %v9835 = vadd.f32 %v9666, %v9834
    %9836 = vmatmul.bf16.gmra.mxu0 %v8512
    %v9837 = vpop.f32.mrf.mxu0
    %v9838 = vadd.f32 %v9669, %v9837
    %v9839 = vpop.f32.mrf.mxu0
    %v9840 = vadd.f32 %v9671, %v9839
    %9841 = vmatmul.bf16.gmra.mxu0 %v8520
    %v9842 = vpop.f32.mrf.mxu0
    %v9843 = vadd.f32 %v9674, %v9842
    %v9844 = vpop.f32.mrf.mxu0
    %v9845 = vadd.f32 %v9676, %v9844
    %9846 = vmatmul.bf16.gmra.mxu0 %v8528
    %v9847 = vpop.f32.mrf.mxu0
    %v9848 = vadd.f32 %v9679, %v9847
    %v9849 = vpop.f32.mrf.mxu0
    %v9850 = vadd.f32 %v9681, %v9849
    %9851 = vmatmul.bf16.gmra.mxu0 %v8536
    %v9852 = vpop.f32.mrf.mxu0
    %v9853 = vadd.f32 %v9684, %v9852
    %v9854 = vpop.f32.mrf.mxu0
    %v9855 = vadd.f32 %v9686, %v9854
    %9856 = vmatmul.bf16.gmra.mxu0 %v8544
    %v9857 = vpop.f32.mrf.mxu0
    %v9858 = vadd.f32 %v9689, %v9857
    %v9859 = vpop.f32.mrf.mxu0
    %v9860 = vadd.f32 %v9691, %v9859
    %9861 = vmatmul.bf16.gmra.mxu0 %v8552
    %v9862 = vpop.f32.mrf.mxu0
    %v9863 = vadd.f32 %v9694, %v9862
    %v9864 = vpop.f32.mrf.mxu0
    %v9865 = vadd.f32 %v9696, %v9864
    %9866 = vmatmul.bf16.gmra.mxu0 %v8560
    %v9867 = vpop.f32.mrf.mxu0
    %v9868 = vadd.f32 %v9699, %v9867
    %v9869 = vpop.f32.mrf.mxu0
    %v9870 = vadd.f32 %v9701, %v9869
    %9871 = vmatmul.bf16.gmra.mxu0 %v8568
    %v9872 = vpop.f32.mrf.mxu0
    %v9873 = vadd.f32 %v9704, %v9872
    %v9874 = vpop.f32.mrf.mxu0
    %v9875 = vadd.f32 %v9706, %v9874
    %9876 = vmatmul.bf16.gmra.mxu0 %v8576
    %v9877 = vpop.f32.mrf.mxu0
    %v9878 = vadd.f32 %v9709, %v9877
    %v9879 = vpop.f32.mrf.mxu0
    %v9880 = vadd.f32 %v9711, %v9879
    %9881 = vmatmul.bf16.gmra.mxu0 %v8584
    %v9882 = vpop.f32.mrf.mxu0
    %v9883 = vadd.f32 %v9714, %v9882
    %v9884 = vpop.f32.mrf.mxu0
    %v9885 = vadd.f32 %v9716, %v9884
    %9886 = vmatmul.bf16.gmra.mxu0 %v8592
    %v9887 = vpop.f32.mrf.mxu0
    %v9888 = vadd.f32 %v9719, %v9887
    %v9889 = vpop.f32.mrf.mxu0
    %v9890 = vadd.f32 %v9721, %v9889
    %9891 = vmatmul.bf16.gmra.mxu0 %v8600
    %v9892 = vpop.f32.mrf.mxu0
    %v9893 = vadd.f32 %v9724, %v9892
    %v9894 = vpop.f32.mrf.mxu0
    %v9895 = vadd.f32 %v9726, %v9894
    %9896 = vmatmul.bf16.gmra.mxu0 %v8608
    %v9897 = vpop.f32.mrf.mxu0
    %v9898 = vadd.f32 %v9729, %v9897
    %v9899 = vpop.f32.mrf.mxu0
    %v9900 = vadd.f32 %v9731, %v9899
    %9901 = vmatmul.bf16.gmra.mxu0 %v8616
    %v9902 = vpop.f32.mrf.mxu0
    %v9903 = vadd.f32 %v9734, %v9902
    %v9904 = vpop.f32.mrf.mxu0
    %v9905 = vadd.f32 %v9736, %v9904
    %9906 = vmatmul.bf16.gmra.mxu0 %v8624
    %v9907 = vpop.f32.mrf.mxu0
    %v9908 = vadd.f32 %v9739, %v9907
    %v9909 = vpop.f32.mrf.mxu0
    %v9910 = vadd.f32 %v9741, %v9909
    %9911 = vmatmul.bf16.gmra.mxu0 %v8632
    %v9912 = vpop.f32.mrf.mxu0
    %v9913 = vadd.f32 %v9744, %v9912
    %v9914 = vpop.f32.mrf.mxu0
    %v9915 = vadd.f32 %v9746, %v9914
    %9916 = vmatmul.bf16.gmra.mxu0 %v8640
    %v9917 = vpop.f32.mrf.mxu0
    %v9918 = vadd.f32 %v9749, %v9917
    %v9919 = vpop.f32.mrf.mxu0
    %v9920 = vadd.f32 %v9751, %v9919
    %9921 = vmatmul.bf16.gmra.mxu0 %v8648
    %v9922 = vpop.f32.mrf.mxu0
    %v9923 = vadd.f32 %v9754, %v9922
    %v9924 = vpop.f32.mrf.mxu0
    %v9925 = vadd.f32 %v9756, %v9924
    %9926 = vmatmul.bf16.gmra.mxu0 %v8656
    %v9927 = vpop.f32.mrf.mxu0
    %v9928 = vadd.f32 %v9759, %v9927
    %v9929 = vpop.f32.mrf.mxu0
    %v9930 = vadd.f32 %v9761, %v9929
    %9931 = vmatmul.bf16.gmra.mxu0 %v8664
    %v9932 = vpop.f32.mrf.mxu0
    %v9933 = vadd.f32 %v9764, %v9932
    %v9934 = vpop.f32.mrf.mxu0
    %v9935 = vadd.f32 %v9766, %v9934
    %9936 = vdwg.mxu0
    %9937 = vmatpush.bf16.msra.mxu0 %v6985
    %9938 = vmatpush.bf16.msra.mxu0 %v6983
    %9939 = vmatpush.bf16.msra.mxu0 %v6981
    %9940 = vmatpush.bf16.msra.mxu0 %v6979
    %9941 = vmatpush.bf16.msra.mxu0 %v6977
    %9942 = vmatpush.bf16.msra.mxu0 %v6975
    %9943 = vmatpush.bf16.msra.mxu0 %v6973
    %9944 = vmatpush.bf16.msra.mxu0 %v6971
    %9945 = vmatmul.bf16.gmra.mxu0 %v8417
    %v9946 = vpop.f32.mrf.mxu0
    %v9947 = vadd.f32 %v9778, %v9946
    %v9948 = vpop.f32.mrf.mxu0
    %v9949 = vadd.f32 %v9780, %v9948
    %9950 = vmatmul.bf16.gmra.mxu0 %v8425
    %v9951 = vpop.f32.mrf.mxu0
    %v9952 = vadd.f32 %v9783, %v9951
    %v9953 = vpop.f32.mrf.mxu0
    %v9954 = vadd.f32 %v9785, %v9953
    %9955 = vmatmul.bf16.gmra.mxu0 %v8433
    %v9956 = vpop.f32.mrf.mxu0
    %v9957 = vadd.f32 %v9788, %v9956
    %v9958 = vpop.f32.mrf.mxu0
    %v9959 = vadd.f32 %v9790, %v9958
    %9960 = vmatmul.bf16.gmra.mxu0 %v8441
    %v9961 = vpop.f32.mrf.mxu0
    %v9962 = vadd.f32 %v9793, %v9961
    %v9963 = vpop.f32.mrf.mxu0
    %v9964 = vadd.f32 %v9795, %v9963
    %9965 = vmatmul.bf16.gmra.mxu0 %v8449
    %v9966 = vpop.f32.mrf.mxu0
    %v9967 = vadd.f32 %v9798, %v9966
    %v9968 = vpop.f32.mrf.mxu0
    %v9969 = vadd.f32 %v9800, %v9968
    %9970 = vmatmul.bf16.gmra.mxu0 %v8457
    %v9971 = vpop.f32.mrf.mxu0
    %v9972 = vadd.f32 %v9803, %v9971
    %v9973 = vpop.f32.mrf.mxu0
    %v9974 = vadd.f32 %v9805, %v9973
    %9975 = vmatmul.bf16.gmra.mxu0 %v8465
    %v9976 = vpop.f32.mrf.mxu0
    %v9977 = vadd.f32 %v9808, %v9976
    %v9978 = vpop.f32.mrf.mxu0
    %v9979 = vadd.f32 %v9810, %v9978
    %9980 = vmatmul.bf16.gmra.mxu0 %v8473
    %v9981 = vpop.f32.mrf.mxu0
    %v9982 = vadd.f32 %v9813, %v9981
    %v9983 = vpop.f32.mrf.mxu0
    %v9984 = vadd.f32 %v9815, %v9983
    %9985 = vmatmul.bf16.gmra.mxu0 %v8481
    %v9986 = vpop.f32.mrf.mxu0
    %v9987 = vadd.f32 %v9818, %v9986
    %v9988 = vpop.f32.mrf.mxu0
    %v9989 = vadd.f32 %v9820, %v9988
    %9990 = vmatmul.bf16.gmra.mxu0 %v8489
    %v9991 = vpop.f32.mrf.mxu0
    %v9992 = vadd.f32 %v9823, %v9991
    %v9993 = vpop.f32.mrf.mxu0
    %v9994 = vadd.f32 %v9825, %v9993
    %9995 = vmatmul.bf16.gmra.mxu0 %v8497
    %v9996 = vpop.f32.mrf.mxu0
    %v9997 = vadd.f32 %v9828, %v9996
    %v9998 = vpop.f32.mrf.mxu0
    %v9999 = vadd.f32 %v9830, %v9998
    %10000 = vmatmul.bf16.gmra.mxu0 %v8505
    %v10001 = vpop.f32.mrf.mxu0
    %v10002 = vadd.f32 %v9833, %v10001
    %v10003 = vpop.f32.mrf.mxu0
    %v10004 = vadd.f32 %v9835, %v10003
    %10005 = vmatmul.bf16.gmra.mxu0 %v8513
    %v10006 = vpop.f32.mrf.mxu0
    %v10007 = vadd.f32 %v9838, %v10006
    %v10008 = vpop.f32.mrf.mxu0
    %v10009 = vadd.f32 %v9840, %v10008
    %10010 = vmatmul.bf16.gmra.mxu0 %v8521
    %v10011 = vpop.f32.mrf.mxu0
    %v10012 = vadd.f32 %v9843, %v10011
    %v10013 = vpop.f32.mrf.mxu0
    %v10014 = vadd.f32 %v9845, %v10013
    %10015 = vmatmul.bf16.gmra.mxu0 %v8529
    %v10016 = vpop.f32.mrf.mxu0
    %v10017 = vadd.f32 %v9848, %v10016
    %v10018 = vpop.f32.mrf.mxu0
    %v10019 = vadd.f32 %v9850, %v10018
    %10020 = vmatmul.bf16.gmra.mxu0 %v8537
    %v10021 = vpop.f32.mrf.mxu0
    %v10022 = vadd.f32 %v9853, %v10021
    %v10023 = vpop.f32.mrf.mxu0
    %v10024 = vadd.f32 %v9855, %v10023
    %10025 = vmatmul.bf16.gmra.mxu0 %v8545
    %v10026 = vpop.f32.mrf.mxu0
    %v10027 = vadd.f32 %v9858, %v10026
    %v10028 = vpop.f32.mrf.mxu0
    %v10029 = vadd.f32 %v9860, %v10028
    %10030 = vmatmul.bf16.gmra.mxu0 %v8553
    %v10031 = vpop.f32.mrf.mxu0
    %v10032 = vadd.f32 %v9863, %v10031
    %v10033 = vpop.f32.mrf.mxu0
    %v10034 = vadd.f32 %v9865, %v10033
    %10035 = vmatmul.bf16.gmra.mxu0 %v8561
    %v10036 = vpop.f32.mrf.mxu0
    %v10037 = vadd.f32 %v9868, %v10036
    %v10038 = vpop.f32.mrf.mxu0
    %v10039 = vadd.f32 %v9870, %v10038
    %10040 = vmatmul.bf16.gmra.mxu0 %v8569
    %v10041 = vpop.f32.mrf.mxu0
    %v10042 = vadd.f32 %v9873, %v10041
    %v10043 = vpop.f32.mrf.mxu0
    %v10044 = vadd.f32 %v9875, %v10043
    %10045 = vmatmul.bf16.gmra.mxu0 %v8577
    %v10046 = vpop.f32.mrf.mxu0
    %v10047 = vadd.f32 %v9878, %v10046
    %v10048 = vpop.f32.mrf.mxu0
    %v10049 = vadd.f32 %v9880, %v10048
    %10050 = vmatmul.bf16.gmra.mxu0 %v8585
    %v10051 = vpop.f32.mrf.mxu0
    %v10052 = vadd.f32 %v9883, %v10051
    %v10053 = vpop.f32.mrf.mxu0
    %v10054 = vadd.f32 %v9885, %v10053
    %10055 = vmatmul.bf16.gmra.mxu0 %v8593
    %v10056 = vpop.f32.mrf.mxu0
    %v10057 = vadd.f32 %v9888, %v10056
    %v10058 = vpop.f32.mrf.mxu0
    %v10059 = vadd.f32 %v9890, %v10058
    %10060 = vmatmul.bf16.gmra.mxu0 %v8601
    %v10061 = vpop.f32.mrf.mxu0
    %v10062 = vadd.f32 %v9893, %v10061
    %v10063 = vpop.f32.mrf.mxu0
    %v10064 = vadd.f32 %v9895, %v10063
    %10065 = vmatmul.bf16.gmra.mxu0 %v8609
    %v10066 = vpop.f32.mrf.mxu0
    %v10067 = vadd.f32 %v9898, %v10066
    %v10068 = vpop.f32.mrf.mxu0
    %v10069 = vadd.f32 %v9900, %v10068
    %10070 = vmatmul.bf16.gmra.mxu0 %v8617
    %v10071 = vpop.f32.mrf.mxu0
    %v10072 = vadd.f32 %v9903, %v10071
    %v10073 = vpop.f32.mrf.mxu0
    %v10074 = vadd.f32 %v9905, %v10073
    %10075 = vmatmul.bf16.gmra.mxu0 %v8625
    %v10076 = vpop.f32.mrf.mxu0
    %v10077 = vadd.f32 %v9908, %v10076
    %v10078 = vpop.f32.mrf.mxu0
    %v10079 = vadd.f32 %v9910, %v10078
    %10080 = vmatmul.bf16.gmra.mxu0 %v8633
    %v10081 = vpop.f32.mrf.mxu0
    %v10082 = vadd.f32 %v9913, %v10081
    %v10083 = vpop.f32.mrf.mxu0
    %v10084 = vadd.f32 %v9915, %v10083
    %10085 = vmatmul.bf16.gmra.mxu0 %v8641
    %v10086 = vpop.f32.mrf.mxu0
    %v10087 = vadd.f32 %v9918, %v10086
    %v10088 = vpop.f32.mrf.mxu0
    %v10089 = vadd.f32 %v9920, %v10088
    %10090 = vmatmul.bf16.gmra.mxu0 %v8649
    %v10091 = vpop.f32.mrf.mxu0
    %v10092 = vadd.f32 %v9923, %v10091
    %v10093 = vpop.f32.mrf.mxu0
    %v10094 = vadd.f32 %v9925, %v10093
    %10095 = vmatmul.bf16.gmra.mxu0 %v8657
    %v10096 = vpop.f32.mrf.mxu0
    %v10097 = vadd.f32 %v9928, %v10096
    %v10098 = vpop.f32.mrf.mxu0
    %v10099 = vadd.f32 %v9930, %v10098
    %10100 = vmatmul.bf16.gmra.mxu0 %v8665
    %v10101 = vpop.f32.mrf.mxu0
    %v10102 = vadd.f32 %v9933, %v10101
    %v10103 = vpop.f32.mrf.mxu0
    %v10104 = vadd.f32 %v9935, %v10103
    %10105 = vdwg.mxu0
    %10106 = vmatpush.bf16.msra.mxu0 %v7001
    %10107 = vmatpush.bf16.msra.mxu0 %v6999
    %10108 = vmatpush.bf16.msra.mxu0 %v6997
    %10109 = vmatpush.bf16.msra.mxu0 %v6995
    %10110 = vmatpush.bf16.msra.mxu0 %v6993
    %10111 = vmatpush.bf16.msra.mxu0 %v6991
    %10112 = vmatpush.bf16.msra.mxu0 %v6989
    %10113 = vmatpush.bf16.msra.mxu0 %v6987
    %10114 = vmatmul.bf16.gmra.mxu0 %v8418
    %v10115 = vpop.f32.mrf.mxu0
    %v10116 = vadd.f32 %v9947, %v10115
    %v10117 = vpop.f32.mrf.mxu0
    %v10118 = vadd.f32 %v9949, %v10117
    %10119 = vmatmul.bf16.gmra.mxu0 %v8426
    %v10120 = vpop.f32.mrf.mxu0
    %v10121 = vadd.f32 %v9952, %v10120
    %v10122 = vpop.f32.mrf.mxu0
    %v10123 = vadd.f32 %v9954, %v10122
    %10124 = vmatmul.bf16.gmra.mxu0 %v8434
    %v10125 = vpop.f32.mrf.mxu0
    %v10126 = vadd.f32 %v9957, %v10125
    %v10127 = vpop.f32.mrf.mxu0
    %v10128 = vadd.f32 %v9959, %v10127
    %10129 = vmatmul.bf16.gmra.mxu0 %v8442
    %v10130 = vpop.f32.mrf.mxu0
    %v10131 = vadd.f32 %v9962, %v10130
    %v10132 = vpop.f32.mrf.mxu0
    %v10133 = vadd.f32 %v9964, %v10132
    %10134 = vmatmul.bf16.gmra.mxu0 %v8450
    %v10135 = vpop.f32.mrf.mxu0
    %v10136 = vadd.f32 %v9967, %v10135
    %v10137 = vpop.f32.mrf.mxu0
    %v10138 = vadd.f32 %v9969, %v10137
    %10139 = vmatmul.bf16.gmra.mxu0 %v8458
    %v10140 = vpop.f32.mrf.mxu0
    %v10141 = vadd.f32 %v9972, %v10140
    %v10142 = vpop.f32.mrf.mxu0
    %v10143 = vadd.f32 %v9974, %v10142
    %10144 = vmatmul.bf16.gmra.mxu0 %v8466
    %v10145 = vpop.f32.mrf.mxu0
    %v10146 = vadd.f32 %v9977, %v10145
    %v10147 = vpop.f32.mrf.mxu0
    %v10148 = vadd.f32 %v9979, %v10147
    %10149 = vmatmul.bf16.gmra.mxu0 %v8474
    %v10150 = vpop.f32.mrf.mxu0
    %v10151 = vadd.f32 %v9982, %v10150
    %v10152 = vpop.f32.mrf.mxu0
    %v10153 = vadd.f32 %v9984, %v10152
    %10154 = vmatmul.bf16.gmra.mxu0 %v8482
    %v10155 = vpop.f32.mrf.mxu0
    %v10156 = vadd.f32 %v9987, %v10155
    %v10157 = vpop.f32.mrf.mxu0
    %v10158 = vadd.f32 %v9989, %v10157
    %10159 = vmatmul.bf16.gmra.mxu0 %v8490
    %v10160 = vpop.f32.mrf.mxu0
    %v10161 = vadd.f32 %v9992, %v10160
    %v10162 = vpop.f32.mrf.mxu0
    %v10163 = vadd.f32 %v9994, %v10162
    %10164 = vmatmul.bf16.gmra.mxu0 %v8498
    %v10165 = vpop.f32.mrf.mxu0
    %v10166 = vadd.f32 %v9997, %v10165
    %v10167 = vpop.f32.mrf.mxu0
    %v10168 = vadd.f32 %v9999, %v10167
    %10169 = vmatmul.bf16.gmra.mxu0 %v8506
    %v10170 = vpop.f32.mrf.mxu0
    %v10171 = vadd.f32 %v10002, %v10170
    %v10172 = vpop.f32.mrf.mxu0
    %v10173 = vadd.f32 %v10004, %v10172
    %10174 = vmatmul.bf16.gmra.mxu0 %v8514
    %v10175 = vpop.f32.mrf.mxu0
    %v10176 = vadd.f32 %v10007, %v10175
    %v10177 = vpop.f32.mrf.mxu0
    %v10178 = vadd.f32 %v10009, %v10177
    %10179 = vmatmul.bf16.gmra.mxu0 %v8522
    %v10180 = vpop.f32.mrf.mxu0
    %v10181 = vadd.f32 %v10012, %v10180
    %v10182 = vpop.f32.mrf.mxu0
    %v10183 = vadd.f32 %v10014, %v10182
    %10184 = vmatmul.bf16.gmra.mxu0 %v8530
    %v10185 = vpop.f32.mrf.mxu0
    %v10186 = vadd.f32 %v10017, %v10185
    %v10187 = vpop.f32.mrf.mxu0
    %v10188 = vadd.f32 %v10019, %v10187
    %10189 = vmatmul.bf16.gmra.mxu0 %v8538
    %v10190 = vpop.f32.mrf.mxu0
    %v10191 = vadd.f32 %v10022, %v10190
    %v10192 = vpop.f32.mrf.mxu0
    %v10193 = vadd.f32 %v10024, %v10192
    %10194 = vmatmul.bf16.gmra.mxu0 %v8546
    %v10195 = vpop.f32.mrf.mxu0
    %v10196 = vadd.f32 %v10027, %v10195
    %v10197 = vpop.f32.mrf.mxu0
    %v10198 = vadd.f32 %v10029, %v10197
    %10199 = vmatmul.bf16.gmra.mxu0 %v8554
    %v10200 = vpop.f32.mrf.mxu0
    %v10201 = vadd.f32 %v10032, %v10200
    %v10202 = vpop.f32.mrf.mxu0
    %v10203 = vadd.f32 %v10034, %v10202
    %10204 = vmatmul.bf16.gmra.mxu0 %v8562
    %v10205 = vpop.f32.mrf.mxu0
    %v10206 = vadd.f32 %v10037, %v10205
    %v10207 = vpop.f32.mrf.mxu0
    %v10208 = vadd.f32 %v10039, %v10207
    %10209 = vmatmul.bf16.gmra.mxu0 %v8570
    %v10210 = vpop.f32.mrf.mxu0
    %v10211 = vadd.f32 %v10042, %v10210
    %v10212 = vpop.f32.mrf.mxu0
    %v10213 = vadd.f32 %v10044, %v10212
    %10214 = vmatmul.bf16.gmra.mxu0 %v8578
    %v10215 = vpop.f32.mrf.mxu0
    %v10216 = vadd.f32 %v10047, %v10215
    %v10217 = vpop.f32.mrf.mxu0
    %v10218 = vadd.f32 %v10049, %v10217
    %10219 = vmatmul.bf16.gmra.mxu0 %v8586
    %v10220 = vpop.f32.mrf.mxu0
    %v10221 = vadd.f32 %v10052, %v10220
    %v10222 = vpop.f32.mrf.mxu0
    %v10223 = vadd.f32 %v10054, %v10222
    %10224 = vmatmul.bf16.gmra.mxu0 %v8594
    %v10225 = vpop.f32.mrf.mxu0
    %v10226 = vadd.f32 %v10057, %v10225
    %v10227 = vpop.f32.mrf.mxu0
    %v10228 = vadd.f32 %v10059, %v10227
    %10229 = vmatmul.bf16.gmra.mxu0 %v8602
    %v10230 = vpop.f32.mrf.mxu0
    %v10231 = vadd.f32 %v10062, %v10230
    %v10232 = vpop.f32.mrf.mxu0
    %v10233 = vadd.f32 %v10064, %v10232
    %10234 = vmatmul.bf16.gmra.mxu0 %v8610
    %v10235 = vpop.f32.mrf.mxu0
    %v10236 = vadd.f32 %v10067, %v10235
    %v10237 = vpop.f32.mrf.mxu0
    %v10238 = vadd.f32 %v10069, %v10237
    %10239 = vmatmul.bf16.gmra.mxu0 %v8618
    %v10240 = vpop.f32.mrf.mxu0
    %v10241 = vadd.f32 %v10072, %v10240
    %v10242 = vpop.f32.mrf.mxu0
    %v10243 = vadd.f32 %v10074, %v10242
    %10244 = vmatmul.bf16.gmra.mxu0 %v8626
    %v10245 = vpop.f32.mrf.mxu0
    %v10246 = vadd.f32 %v10077, %v10245
    %v10247 = vpop.f32.mrf.mxu0
    %v10248 = vadd.f32 %v10079, %v10247
    %10249 = vmatmul.bf16.gmra.mxu0 %v8634
    %v10250 = vpop.f32.mrf.mxu0
    %v10251 = vadd.f32 %v10082, %v10250
    %v10252 = vpop.f32.mrf.mxu0
    %v10253 = vadd.f32 %v10084, %v10252
    %10254 = vmatmul.bf16.gmra.mxu0 %v8642
    %v10255 = vpop.f32.mrf.mxu0
    %v10256 = vadd.f32 %v10087, %v10255
    %v10257 = vpop.f32.mrf.mxu0
    %v10258 = vadd.f32 %v10089, %v10257
    %10259 = vmatmul.bf16.gmra.mxu0 %v8650
    %v10260 = vpop.f32.mrf.mxu0
    %v10261 = vadd.f32 %v10092, %v10260
    %v10262 = vpop.f32.mrf.mxu0
    %v10263 = vadd.f32 %v10094, %v10262
    %10264 = vmatmul.bf16.gmra.mxu0 %v8658
    %v10265 = vpop.f32.mrf.mxu0
    %v10266 = vadd.f32 %v10097, %v10265
    %v10267 = vpop.f32.mrf.mxu0
    %v10268 = vadd.f32 %v10099, %v10267
    %10269 = vmatmul.bf16.gmra.mxu0 %v8666
    %v10270 = vpop.f32.mrf.mxu0
    %v10271 = vadd.f32 %v10102, %v10270
    %v10272 = vpop.f32.mrf.mxu0
    %v10273 = vadd.f32 %v10104, %v10272
    %10274 = vdwg.mxu0
    %10275 = vmatpush.bf16.msra.mxu0 %v6890
    %10276 = vmatpush.bf16.msra.mxu0 %v6888
    %10277 = vmatpush.bf16.msra.mxu0 %v6886
    %10278 = vmatpush.bf16.msra.mxu0 %v6884
    %10279 = vmatpush.bf16.msra.mxu0 %v6882
    %10280 = vmatpush.bf16.msra.mxu0 %v6880
    %10281 = vmatpush.bf16.msra.mxu0 %v6878
    %10282 = vmatpush.bf16.msra.mxu0 %v6876
    %10283 = vmatmul.bf16.gmra.mxu0 %v8411
    %v10284 = vpop.f32.mrf.mxu0
    %v10285 = vadd.f32 %v7326, %v10284
    %v10286 = vpop.f32.mrf.mxu0
    %v10287 = vadd.f32 %v7331, %v10286
    %10288 = vmatmul.bf16.gmra.mxu0 %v8419
    %v10289 = vpop.f32.mrf.mxu0
    %v10290 = vadd.f32 %v7336, %v10289
    %v10291 = vpop.f32.mrf.mxu0
    %v10292 = vadd.f32 %v7341, %v10291
    %10293 = vmatmul.bf16.gmra.mxu0 %v8427
    %v10294 = vpop.f32.mrf.mxu0
    %v10295 = vadd.f32 %v7346, %v10294
    %v10296 = vpop.f32.mrf.mxu0
    %v10297 = vadd.f32 %v7351, %v10296
    %10298 = vmatmul.bf16.gmra.mxu0 %v8435
    %v10299 = vpop.f32.mrf.mxu0
    %v10300 = vadd.f32 %v7356, %v10299
    %v10301 = vpop.f32.mrf.mxu0
    %v10302 = vadd.f32 %v7361, %v10301
    %10303 = vmatmul.bf16.gmra.mxu0 %v8443
    %v10304 = vpop.f32.mrf.mxu0
    %v10305 = vadd.f32 %v7366, %v10304
    %v10306 = vpop.f32.mrf.mxu0
    %v10307 = vadd.f32 %v7371, %v10306
    %10308 = vmatmul.bf16.gmra.mxu0 %v8451
    %v10309 = vpop.f32.mrf.mxu0
    %v10310 = vadd.f32 %v7376, %v10309
    %v10311 = vpop.f32.mrf.mxu0
    %v10312 = vadd.f32 %v7381, %v10311
    %10313 = vmatmul.bf16.gmra.mxu0 %v8459
    %v10314 = vpop.f32.mrf.mxu0
    %v10315 = vadd.f32 %v7386, %v10314
    %v10316 = vpop.f32.mrf.mxu0
    %v10317 = vadd.f32 %v7391, %v10316
    %10318 = vmatmul.bf16.gmra.mxu0 %v8467
    %v10319 = vpop.f32.mrf.mxu0
    %v10320 = vadd.f32 %v7396, %v10319
    %v10321 = vpop.f32.mrf.mxu0
    %v10322 = vadd.f32 %v7401, %v10321
    %10323 = vmatmul.bf16.gmra.mxu0 %v8475
    %v10324 = vpop.f32.mrf.mxu0
    %v10325 = vadd.f32 %v7406, %v10324
    %v10326 = vpop.f32.mrf.mxu0
    %v10327 = vadd.f32 %v7411, %v10326
    %10328 = vmatmul.bf16.gmra.mxu0 %v8483
    %v10329 = vpop.f32.mrf.mxu0
    %v10330 = vadd.f32 %v7416, %v10329
    %v10331 = vpop.f32.mrf.mxu0
    %v10332 = vadd.f32 %v7421, %v10331
    %10333 = vmatmul.bf16.gmra.mxu0 %v8491
    %v10334 = vpop.f32.mrf.mxu0
    %v10335 = vadd.f32 %v7426, %v10334
    %v10336 = vpop.f32.mrf.mxu0
    %v10337 = vadd.f32 %v7431, %v10336
    %10338 = vmatmul.bf16.gmra.mxu0 %v8499
    %v10339 = vpop.f32.mrf.mxu0
    %v10340 = vadd.f32 %v7436, %v10339
    %v10341 = vpop.f32.mrf.mxu0
    %v10342 = vadd.f32 %v7441, %v10341
    %10343 = vmatmul.bf16.gmra.mxu0 %v8507
    %v10344 = vpop.f32.mrf.mxu0
    %v10345 = vadd.f32 %v7446, %v10344
    %v10346 = vpop.f32.mrf.mxu0
    %v10347 = vadd.f32 %v7451, %v10346
    %10348 = vmatmul.bf16.gmra.mxu0 %v8515
    %v10349 = vpop.f32.mrf.mxu0
    %v10350 = vadd.f32 %v7456, %v10349
    %v10351 = vpop.f32.mrf.mxu0
    %v10352 = vadd.f32 %v7461, %v10351
    %10353 = vmatmul.bf16.gmra.mxu0 %v8523
    %v10354 = vpop.f32.mrf.mxu0
    %v10355 = vadd.f32 %v7466, %v10354
    %v10356 = vpop.f32.mrf.mxu0
    %v10357 = vadd.f32 %v7471, %v10356
    %10358 = vmatmul.bf16.gmra.mxu0 %v8531
    %v10359 = vpop.f32.mrf.mxu0
    %v10360 = vadd.f32 %v7476, %v10359
    %v10361 = vpop.f32.mrf.mxu0
    %v10362 = vadd.f32 %v7481, %v10361
    %10363 = vmatmul.bf16.gmra.mxu0 %v8539
    %v10364 = vpop.f32.mrf.mxu0
    %v10365 = vadd.f32 %v7486, %v10364
    %v10366 = vpop.f32.mrf.mxu0
    %v10367 = vadd.f32 %v7491, %v10366
    %10368 = vmatmul.bf16.gmra.mxu0 %v8547
    %v10369 = vpop.f32.mrf.mxu0
    %v10370 = vadd.f32 %v7496, %v10369
    %v10371 = vpop.f32.mrf.mxu0
    %v10372 = vadd.f32 %v7501, %v10371
    %10373 = vmatmul.bf16.gmra.mxu0 %v8555
    %v10374 = vpop.f32.mrf.mxu0
    %v10375 = vadd.f32 %v7506, %v10374
    %v10376 = vpop.f32.mrf.mxu0
    %v10377 = vadd.f32 %v7511, %v10376
    %10378 = vmatmul.bf16.gmra.mxu0 %v8563
    %v10379 = vpop.f32.mrf.mxu0
    %v10380 = vadd.f32 %v7516, %v10379
    %v10381 = vpop.f32.mrf.mxu0
    %v10382 = vadd.f32 %v7521, %v10381
    %10383 = vmatmul.bf16.gmra.mxu0 %v8571
    %v10384 = vpop.f32.mrf.mxu0
    %v10385 = vadd.f32 %v7526, %v10384
    %v10386 = vpop.f32.mrf.mxu0
    %v10387 = vadd.f32 %v7531, %v10386
    %10388 = vmatmul.bf16.gmra.mxu0 %v8579
    %v10389 = vpop.f32.mrf.mxu0
    %v10390 = vadd.f32 %v7536, %v10389
    %v10391 = vpop.f32.mrf.mxu0
    %v10392 = vadd.f32 %v7541, %v10391
    %10393 = vmatmul.bf16.gmra.mxu0 %v8587
    %v10394 = vpop.f32.mrf.mxu0
    %v10395 = vadd.f32 %v7546, %v10394
    %v10396 = vpop.f32.mrf.mxu0
    %v10397 = vadd.f32 %v7551, %v10396
    %10398 = vmatmul.bf16.gmra.mxu0 %v8595
    %v10399 = vpop.f32.mrf.mxu0
    %v10400 = vadd.f32 %v7556, %v10399
    %v10401 = vpop.f32.mrf.mxu0
    %v10402 = vadd.f32 %v7561, %v10401
    %10403 = vmatmul.bf16.gmra.mxu0 %v8603
    %v10404 = vpop.f32.mrf.mxu0
    %v10405 = vadd.f32 %v7566, %v10404
    %v10406 = vpop.f32.mrf.mxu0
    %v10407 = vadd.f32 %v7571, %v10406
    %10408 = vmatmul.bf16.gmra.mxu0 %v8611
    %v10409 = vpop.f32.mrf.mxu0
    %v10410 = vadd.f32 %v7576, %v10409
    %v10411 = vpop.f32.mrf.mxu0
    %v10412 = vadd.f32 %v7581, %v10411
    %10413 = vmatmul.bf16.gmra.mxu0 %v8619
    %v10414 = vpop.f32.mrf.mxu0
    %v10415 = vadd.f32 %v7586, %v10414
    %v10416 = vpop.f32.mrf.mxu0
    %v10417 = vadd.f32 %v7591, %v10416
    %10418 = vmatmul.bf16.gmra.mxu0 %v8627
    %v10419 = vpop.f32.mrf.mxu0
    %v10420 = vadd.f32 %v7596, %v10419
    %v10421 = vpop.f32.mrf.mxu0
    %v10422 = vadd.f32 %v7601, %v10421
    %10423 = vmatmul.bf16.gmra.mxu0 %v8635
    %v10424 = vpop.f32.mrf.mxu0
    %v10425 = vadd.f32 %v7606, %v10424
    %v10426 = vpop.f32.mrf.mxu0
    %v10427 = vadd.f32 %v7611, %v10426
    %10428 = vmatmul.bf16.gmra.mxu0 %v8643
    %v10429 = vpop.f32.mrf.mxu0
    %v10430 = vadd.f32 %v7616, %v10429
    %v10431 = vpop.f32.mrf.mxu0
    %v10432 = vadd.f32 %v7621, %v10431
    %10433 = vmatmul.bf16.gmra.mxu0 %v8651
    %v10434 = vpop.f32.mrf.mxu0
    %v10435 = vadd.f32 %v7626, %v10434
    %v10436 = vpop.f32.mrf.mxu0
    %v10437 = vadd.f32 %v7631, %v10436
    %10438 = vmatmul.bf16.gmra.mxu0 %v8659
    %v10439 = vpop.f32.mrf.mxu0
    %v10440 = vadd.f32 %v7636, %v10439
    %v10441 = vpop.f32.mrf.mxu0
    %v10442 = vadd.f32 %v7641, %v10441
    %10443 = vdwg.mxu0
    %10444 = vmatpush.bf16.msra.mxu0 %v6906
    %10445 = vmatpush.bf16.msra.mxu0 %v6904
    %10446 = vmatpush.bf16.msra.mxu0 %v6902
    %10447 = vmatpush.bf16.msra.mxu0 %v6900
    %10448 = vmatpush.bf16.msra.mxu0 %v6898
    %10449 = vmatpush.bf16.msra.mxu0 %v6896
    %10450 = vmatpush.bf16.msra.mxu0 %v6894
    %10451 = vmatpush.bf16.msra.mxu0 %v6892
    %10452 = vmatmul.bf16.gmra.mxu0 %v8412
    %v10453 = vpop.f32.mrf.mxu0
    %v10454 = vadd.f32 %v10285, %v10453
    %v10455 = vpop.f32.mrf.mxu0
    %v10456 = vadd.f32 %v10287, %v10455
    %10457 = vmatmul.bf16.gmra.mxu0 %v8420
    %v10458 = vpop.f32.mrf.mxu0
    %v10459 = vadd.f32 %v10290, %v10458
    %v10460 = vpop.f32.mrf.mxu0
    %v10461 = vadd.f32 %v10292, %v10460
    %10462 = vmatmul.bf16.gmra.mxu0 %v8428
    %v10463 = vpop.f32.mrf.mxu0
    %v10464 = vadd.f32 %v10295, %v10463
    %v10465 = vpop.f32.mrf.mxu0
    %v10466 = vadd.f32 %v10297, %v10465
    %10467 = vmatmul.bf16.gmra.mxu0 %v8436
    %v10468 = vpop.f32.mrf.mxu0
    %v10469 = vadd.f32 %v10300, %v10468
    %v10470 = vpop.f32.mrf.mxu0
    %v10471 = vadd.f32 %v10302, %v10470
    %10472 = vmatmul.bf16.gmra.mxu0 %v8444
    %v10473 = vpop.f32.mrf.mxu0
    %v10474 = vadd.f32 %v10305, %v10473
    %v10475 = vpop.f32.mrf.mxu0
    %v10476 = vadd.f32 %v10307, %v10475
    %10477 = vmatmul.bf16.gmra.mxu0 %v8452
    %v10478 = vpop.f32.mrf.mxu0
    %v10479 = vadd.f32 %v10310, %v10478
    %v10480 = vpop.f32.mrf.mxu0
    %v10481 = vadd.f32 %v10312, %v10480
    %10482 = vmatmul.bf16.gmra.mxu0 %v8460
    %v10483 = vpop.f32.mrf.mxu0
    %v10484 = vadd.f32 %v10315, %v10483
    %v10485 = vpop.f32.mrf.mxu0
    %v10486 = vadd.f32 %v10317, %v10485
    %10487 = vmatmul.bf16.gmra.mxu0 %v8468
    %v10488 = vpop.f32.mrf.mxu0
    %v10489 = vadd.f32 %v10320, %v10488
    %v10490 = vpop.f32.mrf.mxu0
    %v10491 = vadd.f32 %v10322, %v10490
    %10492 = vmatmul.bf16.gmra.mxu0 %v8476
    %v10493 = vpop.f32.mrf.mxu0
    %v10494 = vadd.f32 %v10325, %v10493
    %v10495 = vpop.f32.mrf.mxu0
    %v10496 = vadd.f32 %v10327, %v10495
    %10497 = vmatmul.bf16.gmra.mxu0 %v8484
    %v10498 = vpop.f32.mrf.mxu0
    %v10499 = vadd.f32 %v10330, %v10498
    %v10500 = vpop.f32.mrf.mxu0
    %v10501 = vadd.f32 %v10332, %v10500
    %10502 = vmatmul.bf16.gmra.mxu0 %v8492
    %v10503 = vpop.f32.mrf.mxu0
    %v10504 = vadd.f32 %v10335, %v10503
    %v10505 = vpop.f32.mrf.mxu0
    %v10506 = vadd.f32 %v10337, %v10505
    %10507 = vmatmul.bf16.gmra.mxu0 %v8500
    %v10508 = vpop.f32.mrf.mxu0
    %v10509 = vadd.f32 %v10340, %v10508
    %v10510 = vpop.f32.mrf.mxu0
    %v10511 = vadd.f32 %v10342, %v10510
    %10512 = vmatmul.bf16.gmra.mxu0 %v8508
    %v10513 = vpop.f32.mrf.mxu0
    %v10514 = vadd.f32 %v10345, %v10513
    %v10515 = vpop.f32.mrf.mxu0
    %v10516 = vadd.f32 %v10347, %v10515
    %10517 = vmatmul.bf16.gmra.mxu0 %v8516
    %v10518 = vpop.f32.mrf.mxu0
    %v10519 = vadd.f32 %v10350, %v10518
    %v10520 = vpop.f32.mrf.mxu0
    %v10521 = vadd.f32 %v10352, %v10520
    %10522 = vmatmul.bf16.gmra.mxu0 %v8524
    %v10523 = vpop.f32.mrf.mxu0
    %v10524 = vadd.f32 %v10355, %v10523
    %v10525 = vpop.f32.mrf.mxu0
    %v10526 = vadd.f32 %v10357, %v10525
    %10527 = vmatmul.bf16.gmra.mxu0 %v8532
    %v10528 = vpop.f32.mrf.mxu0
    %v10529 = vadd.f32 %v10360, %v10528
    %v10530 = vpop.f32.mrf.mxu0
    %v10531 = vadd.f32 %v10362, %v10530
    %10532 = vmatmul.bf16.gmra.mxu0 %v8540
    %v10533 = vpop.f32.mrf.mxu0
    %v10534 = vadd.f32 %v10365, %v10533
    %v10535 = vpop.f32.mrf.mxu0
    %v10536 = vadd.f32 %v10367, %v10535
    %10537 = vmatmul.bf16.gmra.mxu0 %v8548
    %v10538 = vpop.f32.mrf.mxu0
    %v10539 = vadd.f32 %v10370, %v10538
    %v10540 = vpop.f32.mrf.mxu0
    %v10541 = vadd.f32 %v10372, %v10540
    %10542 = vmatmul.bf16.gmra.mxu0 %v8556
    %v10543 = vpop.f32.mrf.mxu0
    %v10544 = vadd.f32 %v10375, %v10543
    %v10545 = vpop.f32.mrf.mxu0
    %v10546 = vadd.f32 %v10377, %v10545
    %10547 = vmatmul.bf16.gmra.mxu0 %v8564
    %v10548 = vpop.f32.mrf.mxu0
    %v10549 = vadd.f32 %v10380, %v10548
    %v10550 = vpop.f32.mrf.mxu0
    %v10551 = vadd.f32 %v10382, %v10550
    %10552 = vmatmul.bf16.gmra.mxu0 %v8572
    %v10553 = vpop.f32.mrf.mxu0
    %v10554 = vadd.f32 %v10385, %v10553
    %v10555 = vpop.f32.mrf.mxu0
    %v10556 = vadd.f32 %v10387, %v10555
    %10557 = vmatmul.bf16.gmra.mxu0 %v8580
    %v10558 = vpop.f32.mrf.mxu0
    %v10559 = vadd.f32 %v10390, %v10558
    %v10560 = vpop.f32.mrf.mxu0
    %v10561 = vadd.f32 %v10392, %v10560
    %10562 = vmatmul.bf16.gmra.mxu0 %v8588
    %v10563 = vpop.f32.mrf.mxu0
    %v10564 = vadd.f32 %v10395, %v10563
    %v10565 = vpop.f32.mrf.mxu0
    %v10566 = vadd.f32 %v10397, %v10565
    %10567 = vmatmul.bf16.gmra.mxu0 %v8596
    %v10568 = vpop.f32.mrf.mxu0
    %v10569 = vadd.f32 %v10400, %v10568
    %v10570 = vpop.f32.mrf.mxu0
    %v10571 = vadd.f32 %v10402, %v10570
    %10572 = vmatmul.bf16.gmra.mxu0 %v8604
    %v10573 = vpop.f32.mrf.mxu0
    %v10574 = vadd.f32 %v10405, %v10573
    %v10575 = vpop.f32.mrf.mxu0
    %v10576 = vadd.f32 %v10407, %v10575
    %10577 = vmatmul.bf16.gmra.mxu0 %v8612
    %v10578 = vpop.f32.mrf.mxu0
    %v10579 = vadd.f32 %v10410, %v10578
    %v10580 = vpop.f32.mrf.mxu0
    %v10581 = vadd.f32 %v10412, %v10580
    %10582 = vmatmul.bf16.gmra.mxu0 %v8620
    %v10583 = vpop.f32.mrf.mxu0
    %v10584 = vadd.f32 %v10415, %v10583
    %v10585 = vpop.f32.mrf.mxu0
    %v10586 = vadd.f32 %v10417, %v10585
    %10587 = vmatmul.bf16.gmra.mxu0 %v8628
    %v10588 = vpop.f32.mrf.mxu0
    %v10589 = vadd.f32 %v10420, %v10588
    %v10590 = vpop.f32.mrf.mxu0
    %v10591 = vadd.f32 %v10422, %v10590
    %10592 = vmatmul.bf16.gmra.mxu0 %v8636
    %v10593 = vpop.f32.mrf.mxu0
    %v10594 = vadd.f32 %v10425, %v10593
    %v10595 = vpop.f32.mrf.mxu0
    %v10596 = vadd.f32 %v10427, %v10595
    %10597 = vmatmul.bf16.gmra.mxu0 %v8644
    %v10598 = vpop.f32.mrf.mxu0
    %v10599 = vadd.f32 %v10430, %v10598
    %v10600 = vpop.f32.mrf.mxu0
    %v10601 = vadd.f32 %v10432, %v10600
    %10602 = vmatmul.bf16.gmra.mxu0 %v8652
    %v10603 = vpop.f32.mrf.mxu0
    %v10604 = vadd.f32 %v10435, %v10603
    %v10605 = vpop.f32.mrf.mxu0
    %v10606 = vadd.f32 %v10437, %v10605
    %10607 = vmatmul.bf16.gmra.mxu0 %v8660
    %v10608 = vpop.f32.mrf.mxu0
    %v10609 = vadd.f32 %v10440, %v10608
    %v10610 = vpop.f32.mrf.mxu0
    %v10611 = vadd.f32 %v10442, %v10610
    %10612 = vdwg.mxu0
    %10613 = vmatpush.bf16.msra.mxu0 %v6922
    %10614 = vmatpush.bf16.msra.mxu0 %v6920
    %10615 = vmatpush.bf16.msra.mxu0 %v6918
    %10616 = vmatpush.bf16.msra.mxu0 %v6916
    %10617 = vmatpush.bf16.msra.mxu0 %v6914
    %10618 = vmatpush.bf16.msra.mxu0 %v6912
    %10619 = vmatpush.bf16.msra.mxu0 %v6910
    %10620 = vmatpush.bf16.msra.mxu0 %v6908
    %10621 = vmatmul.bf16.gmra.mxu0 %v8413
    %v10622 = vpop.f32.mrf.mxu0
    %v10623 = vadd.f32 %v10454, %v10622
    %v10624 = vpop.f32.mrf.mxu0
    %v10625 = vadd.f32 %v10456, %v10624
    %10626 = vmatmul.bf16.gmra.mxu0 %v8421
    %v10627 = vpop.f32.mrf.mxu0
    %v10628 = vadd.f32 %v10459, %v10627
    %v10629 = vpop.f32.mrf.mxu0
    %v10630 = vadd.f32 %v10461, %v10629
    %10631 = vmatmul.bf16.gmra.mxu0 %v8429
    %v10632 = vpop.f32.mrf.mxu0
    %v10633 = vadd.f32 %v10464, %v10632
    %v10634 = vpop.f32.mrf.mxu0
    %v10635 = vadd.f32 %v10466, %v10634
    %10636 = vmatmul.bf16.gmra.mxu0 %v8437
    %v10637 = vpop.f32.mrf.mxu0
    %v10638 = vadd.f32 %v10469, %v10637
    %v10639 = vpop.f32.mrf.mxu0
    %v10640 = vadd.f32 %v10471, %v10639
    %10641 = vmatmul.bf16.gmra.mxu0 %v8445
    %v10642 = vpop.f32.mrf.mxu0
    %v10643 = vadd.f32 %v10474, %v10642
    %v10644 = vpop.f32.mrf.mxu0
    %v10645 = vadd.f32 %v10476, %v10644
    %10646 = vmatmul.bf16.gmra.mxu0 %v8453
    %v10647 = vpop.f32.mrf.mxu0
    %v10648 = vadd.f32 %v10479, %v10647
    %v10649 = vpop.f32.mrf.mxu0
    %v10650 = vadd.f32 %v10481, %v10649
    %10651 = vmatmul.bf16.gmra.mxu0 %v8461
    %v10652 = vpop.f32.mrf.mxu0
    %v10653 = vadd.f32 %v10484, %v10652
    %v10654 = vpop.f32.mrf.mxu0
    %v10655 = vadd.f32 %v10486, %v10654
    %10656 = vmatmul.bf16.gmra.mxu0 %v8469
    %v10657 = vpop.f32.mrf.mxu0
    %v10658 = vadd.f32 %v10489, %v10657
    %v10659 = vpop.f32.mrf.mxu0
    %v10660 = vadd.f32 %v10491, %v10659
    %10661 = vmatmul.bf16.gmra.mxu0 %v8477
    %v10662 = vpop.f32.mrf.mxu0
    %v10663 = vadd.f32 %v10494, %v10662
    %v10664 = vpop.f32.mrf.mxu0
    %v10665 = vadd.f32 %v10496, %v10664
    %10666 = vmatmul.bf16.gmra.mxu0 %v8485
    %v10667 = vpop.f32.mrf.mxu0
    %v10668 = vadd.f32 %v10499, %v10667
    %v10669 = vpop.f32.mrf.mxu0
    %v10670 = vadd.f32 %v10501, %v10669
    %10671 = vmatmul.bf16.gmra.mxu0 %v8493
    %v10672 = vpop.f32.mrf.mxu0
    %v10673 = vadd.f32 %v10504, %v10672
    %v10674 = vpop.f32.mrf.mxu0
    %v10675 = vadd.f32 %v10506, %v10674
    %10676 = vmatmul.bf16.gmra.mxu0 %v8501
    %v10677 = vpop.f32.mrf.mxu0
    %v10678 = vadd.f32 %v10509, %v10677
    %v10679 = vpop.f32.mrf.mxu0
    %v10680 = vadd.f32 %v10511, %v10679
    %10681 = vmatmul.bf16.gmra.mxu0 %v8509
    %v10682 = vpop.f32.mrf.mxu0
    %v10683 = vadd.f32 %v10514, %v10682
    %v10684 = vpop.f32.mrf.mxu0
    %v10685 = vadd.f32 %v10516, %v10684
    %10686 = vmatmul.bf16.gmra.mxu0 %v8517
    %v10687 = vpop.f32.mrf.mxu0
    %v10688 = vadd.f32 %v10519, %v10687
    %v10689 = vpop.f32.mrf.mxu0
    %v10690 = vadd.f32 %v10521, %v10689
    %10691 = vmatmul.bf16.gmra.mxu0 %v8525
    %v10692 = vpop.f32.mrf.mxu0
    %v10693 = vadd.f32 %v10524, %v10692
    %v10694 = vpop.f32.mrf.mxu0
    %v10695 = vadd.f32 %v10526, %v10694
    %10696 = vmatmul.bf16.gmra.mxu0 %v8533
    %v10697 = vpop.f32.mrf.mxu0
    %v10698 = vadd.f32 %v10529, %v10697
    %v10699 = vpop.f32.mrf.mxu0
    %v10700 = vadd.f32 %v10531, %v10699
    %10701 = vmatmul.bf16.gmra.mxu0 %v8541
    %v10702 = vpop.f32.mrf.mxu0
    %v10703 = vadd.f32 %v10534, %v10702
    %v10704 = vpop.f32.mrf.mxu0
    %v10705 = vadd.f32 %v10536, %v10704
    %10706 = vmatmul.bf16.gmra.mxu0 %v8549
    %v10707 = vpop.f32.mrf.mxu0
    %v10708 = vadd.f32 %v10539, %v10707
    %v10709 = vpop.f32.mrf.mxu0
    %v10710 = vadd.f32 %v10541, %v10709
    %10711 = vmatmul.bf16.gmra.mxu0 %v8557
    %v10712 = vpop.f32.mrf.mxu0
    %v10713 = vadd.f32 %v10544, %v10712
    %v10714 = vpop.f32.mrf.mxu0
    %v10715 = vadd.f32 %v10546, %v10714
    %10716 = vmatmul.bf16.gmra.mxu0 %v8565
    %v10717 = vpop.f32.mrf.mxu0
    %v10718 = vadd.f32 %v10549, %v10717
    %v10719 = vpop.f32.mrf.mxu0
    %v10720 = vadd.f32 %v10551, %v10719
    %10721 = vmatmul.bf16.gmra.mxu0 %v8573
    %v10722 = vpop.f32.mrf.mxu0
    %v10723 = vadd.f32 %v10554, %v10722
    %v10724 = vpop.f32.mrf.mxu0
    %v10725 = vadd.f32 %v10556, %v10724
    %10726 = vmatmul.bf16.gmra.mxu0 %v8581
    %v10727 = vpop.f32.mrf.mxu0
    %v10728 = vadd.f32 %v10559, %v10727
    %v10729 = vpop.f32.mrf.mxu0
    %v10730 = vadd.f32 %v10561, %v10729
    %10731 = vmatmul.bf16.gmra.mxu0 %v8589
    %v10732 = vpop.f32.mrf.mxu0
    %v10733 = vadd.f32 %v10564, %v10732
    %v10734 = vpop.f32.mrf.mxu0
    %v10735 = vadd.f32 %v10566, %v10734
    %10736 = vmatmul.bf16.gmra.mxu0 %v8597
    %v10737 = vpop.f32.mrf.mxu0
    %v10738 = vadd.f32 %v10569, %v10737
    %v10739 = vpop.f32.mrf.mxu0
    %v10740 = vadd.f32 %v10571, %v10739
    %10741 = vmatmul.bf16.gmra.mxu0 %v8605
    %v10742 = vpop.f32.mrf.mxu0
    %v10743 = vadd.f32 %v10574, %v10742
    %v10744 = vpop.f32.mrf.mxu0
    %v10745 = vadd.f32 %v10576, %v10744
    %10746 = vmatmul.bf16.gmra.mxu0 %v8613
    %v10747 = vpop.f32.mrf.mxu0
    %v10748 = vadd.f32 %v10579, %v10747
    %v10749 = vpop.f32.mrf.mxu0
    %v10750 = vadd.f32 %v10581, %v10749
    %10751 = vmatmul.bf16.gmra.mxu0 %v8621
    %v10752 = vpop.f32.mrf.mxu0
    %v10753 = vadd.f32 %v10584, %v10752
    %v10754 = vpop.f32.mrf.mxu0
    %v10755 = vadd.f32 %v10586, %v10754
    %10756 = vmatmul.bf16.gmra.mxu0 %v8629
    %v10757 = vpop.f32.mrf.mxu0
    %v10758 = vadd.f32 %v10589, %v10757
    %v10759 = vpop.f32.mrf.mxu0
    %v10760 = vadd.f32 %v10591, %v10759
    %10761 = vmatmul.bf16.gmra.mxu0 %v8637
    %v10762 = vpop.f32.mrf.mxu0
    %v10763 = vadd.f32 %v10594, %v10762
    %v10764 = vpop.f32.mrf.mxu0
    %v10765 = vadd.f32 %v10596, %v10764
    %10766 = vmatmul.bf16.gmra.mxu0 %v8645
    %v10767 = vpop.f32.mrf.mxu0
    %v10768 = vadd.f32 %v10599, %v10767
    %v10769 = vpop.f32.mrf.mxu0
    %v10770 = vadd.f32 %v10601, %v10769
    %10771 = vmatmul.bf16.gmra.mxu0 %v8653
    %v10772 = vpop.f32.mrf.mxu0
    %v10773 = vadd.f32 %v10604, %v10772
    %v10774 = vpop.f32.mrf.mxu0
    %v10775 = vadd.f32 %v10606, %v10774
    %10776 = vmatmul.bf16.gmra.mxu0 %v8661
    %v10777 = vpop.f32.mrf.mxu0
    %v10778 = vadd.f32 %v10609, %v10777
    %v10779 = vpop.f32.mrf.mxu0
    %v10780 = vadd.f32 %v10611, %v10779
    %10781 = vdwg.mxu0
    %10782 = vmatpush.bf16.msra.mxu0 %v6938
    %10783 = vmatpush.bf16.msra.mxu0 %v6936
    %10784 = vmatpush.bf16.msra.mxu0 %v6934
    %10785 = vmatpush.bf16.msra.mxu0 %v6932
    %10786 = vmatpush.bf16.msra.mxu0 %v6930
    %10787 = vmatpush.bf16.msra.mxu0 %v6928
    %10788 = vmatpush.bf16.msra.mxu0 %v6926
    %10789 = vmatpush.bf16.msra.mxu0 %v6924
    %10790 = vmatmul.bf16.gmra.mxu0 %v8414
    %v10791 = vpop.f32.mrf.mxu0
    %v10792 = vadd.f32 %v10623, %v10791
    %v10793 = vpop.f32.mrf.mxu0
    %v10794 = vadd.f32 %v10625, %v10793
    %10795 = vmatmul.bf16.gmra.mxu0 %v8422
    %v10796 = vpop.f32.mrf.mxu0
    %v10797 = vadd.f32 %v10628, %v10796
    %v10798 = vpop.f32.mrf.mxu0
    %v10799 = vadd.f32 %v10630, %v10798
    %10800 = vmatmul.bf16.gmra.mxu0 %v8430
    %v10801 = vpop.f32.mrf.mxu0
    %v10802 = vadd.f32 %v10633, %v10801
    %v10803 = vpop.f32.mrf.mxu0
    %v10804 = vadd.f32 %v10635, %v10803
    %10805 = vmatmul.bf16.gmra.mxu0 %v8438
    %v10806 = vpop.f32.mrf.mxu0
    %v10807 = vadd.f32 %v10638, %v10806
    %v10808 = vpop.f32.mrf.mxu0
    %v10809 = vadd.f32 %v10640, %v10808
    %10810 = vmatmul.bf16.gmra.mxu0 %v8446
    %v10811 = vpop.f32.mrf.mxu0
    %v10812 = vadd.f32 %v10643, %v10811
    %v10813 = vpop.f32.mrf.mxu0
    %v10814 = vadd.f32 %v10645, %v10813
    %10815 = vmatmul.bf16.gmra.mxu0 %v8454
    %v10816 = vpop.f32.mrf.mxu0
    %v10817 = vadd.f32 %v10648, %v10816
    %v10818 = vpop.f32.mrf.mxu0
    %v10819 = vadd.f32 %v10650, %v10818
    %10820 = vmatmul.bf16.gmra.mxu0 %v8462
    %v10821 = vpop.f32.mrf.mxu0
    %v10822 = vadd.f32 %v10653, %v10821
    %v10823 = vpop.f32.mrf.mxu0
    %v10824 = vadd.f32 %v10655, %v10823
    %10825 = vmatmul.bf16.gmra.mxu0 %v8470
    %v10826 = vpop.f32.mrf.mxu0
    %v10827 = vadd.f32 %v10658, %v10826
    %v10828 = vpop.f32.mrf.mxu0
    %v10829 = vadd.f32 %v10660, %v10828
    %10830 = vmatmul.bf16.gmra.mxu0 %v8478
    %v10831 = vpop.f32.mrf.mxu0
    %v10832 = vadd.f32 %v10663, %v10831
    %v10833 = vpop.f32.mrf.mxu0
    %v10834 = vadd.f32 %v10665, %v10833
    %10835 = vmatmul.bf16.gmra.mxu0 %v8486
    %v10836 = vpop.f32.mrf.mxu0
    %v10837 = vadd.f32 %v10668, %v10836
    %v10838 = vpop.f32.mrf.mxu0
    %v10839 = vadd.f32 %v10670, %v10838
    %10840 = vmatmul.bf16.gmra.mxu0 %v8494
    %v10841 = vpop.f32.mrf.mxu0
    %v10842 = vadd.f32 %v10673, %v10841
    %v10843 = vpop.f32.mrf.mxu0
    %v10844 = vadd.f32 %v10675, %v10843
    %10845 = vmatmul.bf16.gmra.mxu0 %v8502
    %v10846 = vpop.f32.mrf.mxu0
    %v10847 = vadd.f32 %v10678, %v10846
    %v10848 = vpop.f32.mrf.mxu0
    %v10849 = vadd.f32 %v10680, %v10848
    %10850 = vmatmul.bf16.gmra.mxu0 %v8510
    %v10851 = vpop.f32.mrf.mxu0
    %v10852 = vadd.f32 %v10683, %v10851
    %v10853 = vpop.f32.mrf.mxu0
    %v10854 = vadd.f32 %v10685, %v10853
    %10855 = vmatmul.bf16.gmra.mxu0 %v8518
    %v10856 = vpop.f32.mrf.mxu0
    %v10857 = vadd.f32 %v10688, %v10856
    %v10858 = vpop.f32.mrf.mxu0
    %v10859 = vadd.f32 %v10690, %v10858
    %10860 = vmatmul.bf16.gmra.mxu0 %v8526
    %v10861 = vpop.f32.mrf.mxu0
    %v10862 = vadd.f32 %v10693, %v10861
    %v10863 = vpop.f32.mrf.mxu0
    %v10864 = vadd.f32 %v10695, %v10863
    %10865 = vmatmul.bf16.gmra.mxu0 %v8534
    %v10866 = vpop.f32.mrf.mxu0
    %v10867 = vadd.f32 %v10698, %v10866
    %v10868 = vpop.f32.mrf.mxu0
    %v10869 = vadd.f32 %v10700, %v10868
    %10870 = vmatmul.bf16.gmra.mxu0 %v8542
    %v10871 = vpop.f32.mrf.mxu0
    %v10872 = vadd.f32 %v10703, %v10871
    %v10873 = vpop.f32.mrf.mxu0
    %v10874 = vadd.f32 %v10705, %v10873
    %10875 = vmatmul.bf16.gmra.mxu0 %v8550
    %v10876 = vpop.f32.mrf.mxu0
    %v10877 = vadd.f32 %v10708, %v10876
    %v10878 = vpop.f32.mrf.mxu0
    %v10879 = vadd.f32 %v10710, %v10878
    %10880 = vmatmul.bf16.gmra.mxu0 %v8558
    %v10881 = vpop.f32.mrf.mxu0
    %v10882 = vadd.f32 %v10713, %v10881
    %v10883 = vpop.f32.mrf.mxu0
    %v10884 = vadd.f32 %v10715, %v10883
    %10885 = vmatmul.bf16.gmra.mxu0 %v8566
    %v10886 = vpop.f32.mrf.mxu0
    %v10887 = vadd.f32 %v10718, %v10886
    %v10888 = vpop.f32.mrf.mxu0
    %v10889 = vadd.f32 %v10720, %v10888
    %10890 = vmatmul.bf16.gmra.mxu0 %v8574
    %v10891 = vpop.f32.mrf.mxu0
    %v10892 = vadd.f32 %v10723, %v10891
    %v10893 = vpop.f32.mrf.mxu0
    %v10894 = vadd.f32 %v10725, %v10893
    %10895 = vmatmul.bf16.gmra.mxu0 %v8582
    %v10896 = vpop.f32.mrf.mxu0
    %v10897 = vadd.f32 %v10728, %v10896
    %v10898 = vpop.f32.mrf.mxu0
    %v10899 = vadd.f32 %v10730, %v10898
    %10900 = vmatmul.bf16.gmra.mxu0 %v8590
    %v10901 = vpop.f32.mrf.mxu0
    %v10902 = vadd.f32 %v10733, %v10901
    %v10903 = vpop.f32.mrf.mxu0
    %v10904 = vadd.f32 %v10735, %v10903
    %10905 = vmatmul.bf16.gmra.mxu0 %v8598
    %v10906 = vpop.f32.mrf.mxu0
    %v10907 = vadd.f32 %v10738, %v10906
    %v10908 = vpop.f32.mrf.mxu0
    %v10909 = vadd.f32 %v10740, %v10908
    %10910 = vmatmul.bf16.gmra.mxu0 %v8606
    %v10911 = vpop.f32.mrf.mxu0
    %v10912 = vadd.f32 %v10743, %v10911
    %v10913 = vpop.f32.mrf.mxu0
    %v10914 = vadd.f32 %v10745, %v10913
    %10915 = vmatmul.bf16.gmra.mxu0 %v8614
    %v10916 = vpop.f32.mrf.mxu0
    %v10917 = vadd.f32 %v10748, %v10916
    %v10918 = vpop.f32.mrf.mxu0
    %v10919 = vadd.f32 %v10750, %v10918
    %10920 = vmatmul.bf16.gmra.mxu0 %v8622
    %v10921 = vpop.f32.mrf.mxu0
    %v10922 = vadd.f32 %v10753, %v10921
    %v10923 = vpop.f32.mrf.mxu0
    %v10924 = vadd.f32 %v10755, %v10923
    %10925 = vmatmul.bf16.gmra.mxu0 %v8630
    %v10926 = vpop.f32.mrf.mxu0
    %v10927 = vadd.f32 %v10758, %v10926
    %v10928 = vpop.f32.mrf.mxu0
    %v10929 = vadd.f32 %v10760, %v10928
    %10930 = vmatmul.bf16.gmra.mxu0 %v8638
    %v10931 = vpop.f32.mrf.mxu0
    %v10932 = vadd.f32 %v10763, %v10931
    %v10933 = vpop.f32.mrf.mxu0
    %v10934 = vadd.f32 %v10765, %v10933
    %10935 = vmatmul.bf16.gmra.mxu0 %v8646
    %v10936 = vpop.f32.mrf.mxu0
    %v10937 = vadd.f32 %v10768, %v10936
    %v10938 = vpop.f32.mrf.mxu0
    %v10939 = vadd.f32 %v10770, %v10938
    %10940 = vmatmul.bf16.gmra.mxu0 %v8654
    %v10941 = vpop.f32.mrf.mxu0
    %v10942 = vadd.f32 %v10773, %v10941
    %v10943 = vpop.f32.mrf.mxu0
    %v10944 = vadd.f32 %v10775, %v10943
    %10945 = vmatmul.bf16.gmra.mxu0 %v8662
    %v10946 = vpop.f32.mrf.mxu0
    %v10947 = vadd.f32 %v10778, %v10946
    %v10948 = vpop.f32.mrf.mxu0
    %v10949 = vadd.f32 %v10780, %v10948
    %10950 = vdwg.mxu0
    %10951 = vmatpush.bf16.msra.mxu0 %v6954
    %10952 = vmatpush.bf16.msra.mxu0 %v6952
    %10953 = vmatpush.bf16.msra.mxu0 %v6950
    %10954 = vmatpush.bf16.msra.mxu0 %v6948
    %10955 = vmatpush.bf16.msra.mxu0 %v6946
    %10956 = vmatpush.bf16.msra.mxu0 %v6944
    %10957 = vmatpush.bf16.msra.mxu0 %v6942
    %10958 = vmatpush.bf16.msra.mxu0 %v6940
    %10959 = vmatmul.bf16.gmra.mxu0 %v8415
    %v10960 = vpop.f32.mrf.mxu0
    %v10961 = vadd.f32 %v10792, %v10960
    %v10962 = vpop.f32.mrf.mxu0
    %v10963 = vadd.f32 %v10794, %v10962
    %10964 = vmatmul.bf16.gmra.mxu0 %v8423
    %v10965 = vpop.f32.mrf.mxu0
    %v10966 = vadd.f32 %v10797, %v10965
    %v10967 = vpop.f32.mrf.mxu0
    %v10968 = vadd.f32 %v10799, %v10967
    %10969 = vmatmul.bf16.gmra.mxu0 %v8431
    %v10970 = vpop.f32.mrf.mxu0
    %v10971 = vadd.f32 %v10802, %v10970
    %v10972 = vpop.f32.mrf.mxu0
    %v10973 = vadd.f32 %v10804, %v10972
    %10974 = vmatmul.bf16.gmra.mxu0 %v8439
    %v10975 = vpop.f32.mrf.mxu0
    %v10976 = vadd.f32 %v10807, %v10975
    %v10977 = vpop.f32.mrf.mxu0
    %v10978 = vadd.f32 %v10809, %v10977
    %10979 = vmatmul.bf16.gmra.mxu0 %v8447
    %v10980 = vpop.f32.mrf.mxu0
    %v10981 = vadd.f32 %v10812, %v10980
    %v10982 = vpop.f32.mrf.mxu0
    %v10983 = vadd.f32 %v10814, %v10982
    %10984 = vmatmul.bf16.gmra.mxu0 %v8455
    %v10985 = vpop.f32.mrf.mxu0
    %v10986 = vadd.f32 %v10817, %v10985
    %v10987 = vpop.f32.mrf.mxu0
    %v10988 = vadd.f32 %v10819, %v10987
    %10989 = vmatmul.bf16.gmra.mxu0 %v8463
    %v10990 = vpop.f32.mrf.mxu0
    %v10991 = vadd.f32 %v10822, %v10990
    %v10992 = vpop.f32.mrf.mxu0
    %v10993 = vadd.f32 %v10824, %v10992
    %10994 = vmatmul.bf16.gmra.mxu0 %v8471
    %v10995 = vpop.f32.mrf.mxu0
    %v10996 = vadd.f32 %v10827, %v10995
    %v10997 = vpop.f32.mrf.mxu0
    %v10998 = vadd.f32 %v10829, %v10997
    %10999 = vmatmul.bf16.gmra.mxu0 %v8479
    %v11000 = vpop.f32.mrf.mxu0
    %v11001 = vadd.f32 %v10832, %v11000
    %v11002 = vpop.f32.mrf.mxu0
    %v11003 = vadd.f32 %v10834, %v11002
    %11004 = vmatmul.bf16.gmra.mxu0 %v8487
    %v11005 = vpop.f32.mrf.mxu0
    %v11006 = vadd.f32 %v10837, %v11005
    %v11007 = vpop.f32.mrf.mxu0
    %v11008 = vadd.f32 %v10839, %v11007
    %11009 = vmatmul.bf16.gmra.mxu0 %v8495
    %v11010 = vpop.f32.mrf.mxu0
    %v11011 = vadd.f32 %v10842, %v11010
    %v11012 = vpop.f32.mrf.mxu0
    %v11013 = vadd.f32 %v10844, %v11012
    %11014 = vmatmul.bf16.gmra.mxu0 %v8503
    %v11015 = vpop.f32.mrf.mxu0
    %v11016 = vadd.f32 %v10847, %v11015
    %v11017 = vpop.f32.mrf.mxu0
    %v11018 = vadd.f32 %v10849, %v11017
    %11019 = vmatmul.bf16.gmra.mxu0 %v8511
    %v11020 = vpop.f32.mrf.mxu0
    %v11021 = vadd.f32 %v10852, %v11020
    %v11022 = vpop.f32.mrf.mxu0
    %v11023 = vadd.f32 %v10854, %v11022
    %11024 = vmatmul.bf16.gmra.mxu0 %v8519
    %v11025 = vpop.f32.mrf.mxu0
    %v11026 = vadd.f32 %v10857, %v11025
    %v11027 = vpop.f32.mrf.mxu0
    %v11028 = vadd.f32 %v10859, %v11027
    %11029 = vmatmul.bf16.gmra.mxu0 %v8527
    %v11030 = vpop.f32.mrf.mxu0
    %v11031 = vadd.f32 %v10862, %v11030
    %v11032 = vpop.f32.mrf.mxu0
    %v11033 = vadd.f32 %v10864, %v11032
    %11034 = vmatmul.bf16.gmra.mxu0 %v8535
    %v11035 = vpop.f32.mrf.mxu0
    %v11036 = vadd.f32 %v10867, %v11035
    %v11037 = vpop.f32.mrf.mxu0
    %v11038 = vadd.f32 %v10869, %v11037
    %11039 = vmatmul.bf16.gmra.mxu0 %v8543
    %v11040 = vpop.f32.mrf.mxu0
    %v11041 = vadd.f32 %v10872, %v11040
    %v11042 = vpop.f32.mrf.mxu0
    %v11043 = vadd.f32 %v10874, %v11042
    %11044 = vmatmul.bf16.gmra.mxu0 %v8551
    %v11045 = vpop.f32.mrf.mxu0
    %v11046 = vadd.f32 %v10877, %v11045
    %v11047 = vpop.f32.mrf.mxu0
    %v11048 = vadd.f32 %v10879, %v11047
    %11049 = vmatmul.bf16.gmra.mxu0 %v8559
    %v11050 = vpop.f32.mrf.mxu0
    %v11051 = vadd.f32 %v10882, %v11050
    %v11052 = vpop.f32.mrf.mxu0
    %v11053 = vadd.f32 %v10884, %v11052
    %11054 = vmatmul.bf16.gmra.mxu0 %v8567
    %v11055 = vpop.f32.mrf.mxu0
    %v11056 = vadd.f32 %v10887, %v11055
    %v11057 = vpop.f32.mrf.mxu0
    %v11058 = vadd.f32 %v10889, %v11057
    %11059 = vmatmul.bf16.gmra.mxu0 %v8575
    %v11060 = vpop.f32.mrf.mxu0
    %v11061 = vadd.f32 %v10892, %v11060
    %v11062 = vpop.f32.mrf.mxu0
    %v11063 = vadd.f32 %v10894, %v11062
    %11064 = vmatmul.bf16.gmra.mxu0 %v8583
    %v11065 = vpop.f32.mrf.mxu0
    %v11066 = vadd.f32 %v10897, %v11065
    %v11067 = vpop.f32.mrf.mxu0
    %v11068 = vadd.f32 %v10899, %v11067
    %11069 = vmatmul.bf16.gmra.mxu0 %v8591
    %v11070 = vpop.f32.mrf.mxu0
    %v11071 = vadd.f32 %v10902, %v11070
    %v11072 = vpop.f32.mrf.mxu0
    %v11073 = vadd.f32 %v10904, %v11072
    %11074 = vmatmul.bf16.gmra.mxu0 %v8599
    %v11075 = vpop.f32.mrf.mxu0
    %v11076 = vadd.f32 %v10907, %v11075
    %v11077 = vpop.f32.mrf.mxu0
    %v11078 = vadd.f32 %v10909, %v11077
    %11079 = vmatmul.bf16.gmra.mxu0 %v8607
    %v11080 = vpop.f32.mrf.mxu0
    %v11081 = vadd.f32 %v10912, %v11080
    %v11082 = vpop.f32.mrf.mxu0
    %v11083 = vadd.f32 %v10914, %v11082
    %11084 = vmatmul.bf16.gmra.mxu0 %v8615
    %v11085 = vpop.f32.mrf.mxu0
    %v11086 = vadd.f32 %v10917, %v11085
    %v11087 = vpop.f32.mrf.mxu0
    %v11088 = vadd.f32 %v10919, %v11087
    %11089 = vmatmul.bf16.gmra.mxu0 %v8623
    %v11090 = vpop.f32.mrf.mxu0
    %v11091 = vadd.f32 %v10922, %v11090
    %v11092 = vpop.f32.mrf.mxu0
    %v11093 = vadd.f32 %v10924, %v11092
    %11094 = vmatmul.bf16.gmra.mxu0 %v8631
    %v11095 = vpop.f32.mrf.mxu0
    %v11096 = vadd.f32 %v10927, %v11095
    %v11097 = vpop.f32.mrf.mxu0
    %v11098 = vadd.f32 %v10929, %v11097
    %11099 = vmatmul.bf16.gmra.mxu0 %v8639
    %v11100 = vpop.f32.mrf.mxu0
    %v11101 = vadd.f32 %v10932, %v11100
    %v11102 = vpop.f32.mrf.mxu0
    %v11103 = vadd.f32 %v10934, %v11102
    %11104 = vmatmul.bf16.gmra.mxu0 %v8647
    %v11105 = vpop.f32.mrf.mxu0
    %v11106 = vadd.f32 %v10937, %v11105
    %v11107 = vpop.f32.mrf.mxu0
    %v11108 = vadd.f32 %v10939, %v11107
    %11109 = vmatmul.bf16.gmra.mxu0 %v8655
    %v11110 = vpop.f32.mrf.mxu0
    %v11111 = vadd.f32 %v10942, %v11110
    %v11112 = vpop.f32.mrf.mxu0
    %v11113 = vadd.f32 %v10944, %v11112
    %11114 = vmatmul.bf16.gmra.mxu0 %v8663
    %v11115 = vpop.f32.mrf.mxu0
    %v11116 = vadd.f32 %v10947, %v11115
    %v11117 = vpop.f32.mrf.mxu0
    %v11118 = vadd.f32 %v10949, %v11117
    %11119 = vdwg.mxu0
    %11120 = vmatpush.bf16.msra.mxu0 %v6970
    %11121 = vmatpush.bf16.msra.mxu0 %v6968
    %11122 = vmatpush.bf16.msra.mxu0 %v6966
    %11123 = vmatpush.bf16.msra.mxu0 %v6964
    %11124 = vmatpush.bf16.msra.mxu0 %v6962
    %11125 = vmatpush.bf16.msra.mxu0 %v6960
    %11126 = vmatpush.bf16.msra.mxu0 %v6958
    %11127 = vmatpush.bf16.msra.mxu0 %v6956
    %11128 = vmatmul.bf16.gmra.mxu0 %v8416
    %v11129 = vpop.f32.mrf.mxu0
    %v11130 = vadd.f32 %v10961, %v11129
    %v11131 = vpop.f32.mrf.mxu0
    %v11132 = vadd.f32 %v10963, %v11131
    %11133 = vmatmul.bf16.gmra.mxu0 %v8424
    %v11134 = vpop.f32.mrf.mxu0
    %v11135 = vadd.f32 %v10966, %v11134
    %v11136 = vpop.f32.mrf.mxu0
    %v11137 = vadd.f32 %v10968, %v11136
    %11138 = vmatmul.bf16.gmra.mxu0 %v8432
    %v11139 = vpop.f32.mrf.mxu0
    %v11140 = vadd.f32 %v10971, %v11139
    %v11141 = vpop.f32.mrf.mxu0
    %v11142 = vadd.f32 %v10973, %v11141
    %11143 = vmatmul.bf16.gmra.mxu0 %v8440
    %v11144 = vpop.f32.mrf.mxu0
    %v11145 = vadd.f32 %v10976, %v11144
    %v11146 = vpop.f32.mrf.mxu0
    %v11147 = vadd.f32 %v10978, %v11146
    %11148 = vmatmul.bf16.gmra.mxu0 %v8448
    %v11149 = vpop.f32.mrf.mxu0
    %v11150 = vadd.f32 %v10981, %v11149
    %v11151 = vpop.f32.mrf.mxu0
    %v11152 = vadd.f32 %v10983, %v11151
    %11153 = vmatmul.bf16.gmra.mxu0 %v8456
    %v11154 = vpop.f32.mrf.mxu0
    %v11155 = vadd.f32 %v10986, %v11154
    %v11156 = vpop.f32.mrf.mxu0
    %v11157 = vadd.f32 %v10988, %v11156
    %11158 = vmatmul.bf16.gmra.mxu0 %v8464
    %v11159 = vpop.f32.mrf.mxu0
    %v11160 = vadd.f32 %v10991, %v11159
    %v11161 = vpop.f32.mrf.mxu0
    %v11162 = vadd.f32 %v10993, %v11161
    %11163 = vmatmul.bf16.gmra.mxu0 %v8472
    %v11164 = vpop.f32.mrf.mxu0
    %v11165 = vadd.f32 %v10996, %v11164
    %v11166 = vpop.f32.mrf.mxu0
    %v11167 = vadd.f32 %v10998, %v11166
    %11168 = vmatmul.bf16.gmra.mxu0 %v8480
    %v11169 = vpop.f32.mrf.mxu0
    %v11170 = vadd.f32 %v11001, %v11169
    %v11171 = vpop.f32.mrf.mxu0
    %v11172 = vadd.f32 %v11003, %v11171
    %11173 = vmatmul.bf16.gmra.mxu0 %v8488
    %v11174 = vpop.f32.mrf.mxu0
    %v11175 = vadd.f32 %v11006, %v11174
    %v11176 = vpop.f32.mrf.mxu0
    %v11177 = vadd.f32 %v11008, %v11176
    %11178 = vmatmul.bf16.gmra.mxu0 %v8496
    %v11179 = vpop.f32.mrf.mxu0
    %v11180 = vadd.f32 %v11011, %v11179
    %v11181 = vpop.f32.mrf.mxu0
    %v11182 = vadd.f32 %v11013, %v11181
    %11183 = vmatmul.bf16.gmra.mxu0 %v8504
    %v11184 = vpop.f32.mrf.mxu0
    %v11185 = vadd.f32 %v11016, %v11184
    %v11186 = vpop.f32.mrf.mxu0
    %v11187 = vadd.f32 %v11018, %v11186
    %11188 = vmatmul.bf16.gmra.mxu0 %v8512
    %v11189 = vpop.f32.mrf.mxu0
    %v11190 = vadd.f32 %v11021, %v11189
    %v11191 = vpop.f32.mrf.mxu0
    %v11192 = vadd.f32 %v11023, %v11191
    %11193 = vmatmul.bf16.gmra.mxu0 %v8520
    %v11194 = vpop.f32.mrf.mxu0
    %v11195 = vadd.f32 %v11026, %v11194
    %v11196 = vpop.f32.mrf.mxu0
    %v11197 = vadd.f32 %v11028, %v11196
    %11198 = vmatmul.bf16.gmra.mxu0 %v8528
    %v11199 = vpop.f32.mrf.mxu0
    %v11200 = vadd.f32 %v11031, %v11199
    %v11201 = vpop.f32.mrf.mxu0
    %v11202 = vadd.f32 %v11033, %v11201
    %11203 = vmatmul.bf16.gmra.mxu0 %v8536
    %v11204 = vpop.f32.mrf.mxu0
    %v11205 = vadd.f32 %v11036, %v11204
    %v11206 = vpop.f32.mrf.mxu0
    %v11207 = vadd.f32 %v11038, %v11206
    %11208 = vmatmul.bf16.gmra.mxu0 %v8544
    %v11209 = vpop.f32.mrf.mxu0
    %v11210 = vadd.f32 %v11041, %v11209
    %v11211 = vpop.f32.mrf.mxu0
    %v11212 = vadd.f32 %v11043, %v11211
    %11213 = vmatmul.bf16.gmra.mxu0 %v8552
    %v11214 = vpop.f32.mrf.mxu0
    %v11215 = vadd.f32 %v11046, %v11214
    %v11216 = vpop.f32.mrf.mxu0
    %v11217 = vadd.f32 %v11048, %v11216
    %11218 = vmatmul.bf16.gmra.mxu0 %v8560
    %v11219 = vpop.f32.mrf.mxu0
    %v11220 = vadd.f32 %v11051, %v11219
    %v11221 = vpop.f32.mrf.mxu0
    %v11222 = vadd.f32 %v11053, %v11221
    %11223 = vmatmul.bf16.gmra.mxu0 %v8568
    %v11224 = vpop.f32.mrf.mxu0
    %v11225 = vadd.f32 %v11056, %v11224
    %v11226 = vpop.f32.mrf.mxu0
    %v11227 = vadd.f32 %v11058, %v11226
    %11228 = vmatmul.bf16.gmra.mxu0 %v8576
    %v11229 = vpop.f32.mrf.mxu0
    %v11230 = vadd.f32 %v11061, %v11229
    %v11231 = vpop.f32.mrf.mxu0
    %v11232 = vadd.f32 %v11063, %v11231
    %11233 = vmatmul.bf16.gmra.mxu0 %v8584
    %v11234 = vpop.f32.mrf.mxu0
    %v11235 = vadd.f32 %v11066, %v11234
    %v11236 = vpop.f32.mrf.mxu0
    %v11237 = vadd.f32 %v11068, %v11236
    %11238 = vmatmul.bf16.gmra.mxu0 %v8592
    %v11239 = vpop.f32.mrf.mxu0
    %v11240 = vadd.f32 %v11071, %v11239
    %v11241 = vpop.f32.mrf.mxu0
    %v11242 = vadd.f32 %v11073, %v11241
    %11243 = vmatmul.bf16.gmra.mxu0 %v8600
    %v11244 = vpop.f32.mrf.mxu0
    %v11245 = vadd.f32 %v11076, %v11244
    %v11246 = vpop.f32.mrf.mxu0
    %v11247 = vadd.f32 %v11078, %v11246
    %11248 = vmatmul.bf16.gmra.mxu0 %v8608
    %v11249 = vpop.f32.mrf.mxu0
    %v11250 = vadd.f32 %v11081, %v11249
    %v11251 = vpop.f32.mrf.mxu0
    %v11252 = vadd.f32 %v11083, %v11251
    %11253 = vmatmul.bf16.gmra.mxu0 %v8616
    %v11254 = vpop.f32.mrf.mxu0
    %v11255 = vadd.f32 %v11086, %v11254
    %v11256 = vpop.f32.mrf.mxu0
    %v11257 = vadd.f32 %v11088, %v11256
    %11258 = vmatmul.bf16.gmra.mxu0 %v8624
    %v11259 = vpop.f32.mrf.mxu0
    %v11260 = vadd.f32 %v11091, %v11259
    %v11261 = vpop.f32.mrf.mxu0
    %v11262 = vadd.f32 %v11093, %v11261
    %11263 = vmatmul.bf16.gmra.mxu0 %v8632
    %v11264 = vpop.f32.mrf.mxu0
    %v11265 = vadd.f32 %v11096, %v11264
    %v11266 = vpop.f32.mrf.mxu0
    %v11267 = vadd.f32 %v11098, %v11266
    %11268 = vmatmul.bf16.gmra.mxu0 %v8640
    %v11269 = vpop.f32.mrf.mxu0
    %v11270 = vadd.f32 %v11101, %v11269
    %v11271 = vpop.f32.mrf.mxu0
    %v11272 = vadd.f32 %v11103, %v11271
    %11273 = vmatmul.bf16.gmra.mxu0 %v8648
    %v11274 = vpop.f32.mrf.mxu0
    %v11275 = vadd.f32 %v11106, %v11274
    %v11276 = vpop.f32.mrf.mxu0
    %v11277 = vadd.f32 %v11108, %v11276
    %11278 = vmatmul.bf16.gmra.mxu0 %v8656
    %v11279 = vpop.f32.mrf.mxu0
    %v11280 = vadd.f32 %v11111, %v11279
    %v11281 = vpop.f32.mrf.mxu0
    %v11282 = vadd.f32 %v11113, %v11281
    %11283 = vmatmul.bf16.gmra.mxu0 %v8664
    %v11284 = vpop.f32.mrf.mxu0
    %v11285 = vadd.f32 %v11116, %v11284
    %v11286 = vpop.f32.mrf.mxu0
    %v11287 = vadd.f32 %v11118, %v11286
    %11288 = vdwg.mxu0
    %11289 = vmatpush.bf16.msra.mxu0 %v6986
    %11290 = vmatpush.bf16.msra.mxu0 %v6984
    %11291 = vmatpush.bf16.msra.mxu0 %v6982
    %11292 = vmatpush.bf16.msra.mxu0 %v6980
    %11293 = vmatpush.bf16.msra.mxu0 %v6978
    %11294 = vmatpush.bf16.msra.mxu0 %v6976
    %11295 = vmatpush.bf16.msra.mxu0 %v6974
    %11296 = vmatpush.bf16.msra.mxu0 %v6972
    %11297 = vmatmul.bf16.gmra.mxu0 %v8417
    %v11298 = vpop.f32.mrf.mxu0
    %v11299 = vadd.f32 %v11130, %v11298
    %v11300 = vpop.f32.mrf.mxu0
    %v11301 = vadd.f32 %v11132, %v11300
    %11302 = vmatmul.bf16.gmra.mxu0 %v8425
    %v11303 = vpop.f32.mrf.mxu0
    %v11304 = vadd.f32 %v11135, %v11303
    %v11305 = vpop.f32.mrf.mxu0
    %v11306 = vadd.f32 %v11137, %v11305
    %11307 = vmatmul.bf16.gmra.mxu0 %v8433
    %v11308 = vpop.f32.mrf.mxu0
    %v11309 = vadd.f32 %v11140, %v11308
    %v11310 = vpop.f32.mrf.mxu0
    %v11311 = vadd.f32 %v11142, %v11310
    %11312 = vmatmul.bf16.gmra.mxu0 %v8441
    %v11313 = vpop.f32.mrf.mxu0
    %v11314 = vadd.f32 %v11145, %v11313
    %v11315 = vpop.f32.mrf.mxu0
    %v11316 = vadd.f32 %v11147, %v11315
    %11317 = vmatmul.bf16.gmra.mxu0 %v8449
    %v11318 = vpop.f32.mrf.mxu0
    %v11319 = vadd.f32 %v11150, %v11318
    %v11320 = vpop.f32.mrf.mxu0
    %v11321 = vadd.f32 %v11152, %v11320
    %11322 = vmatmul.bf16.gmra.mxu0 %v8457
    %v11323 = vpop.f32.mrf.mxu0
    %v11324 = vadd.f32 %v11155, %v11323
    %v11325 = vpop.f32.mrf.mxu0
    %v11326 = vadd.f32 %v11157, %v11325
    %11327 = vmatmul.bf16.gmra.mxu0 %v8465
    %v11328 = vpop.f32.mrf.mxu0
    %v11329 = vadd.f32 %v11160, %v11328
    %v11330 = vpop.f32.mrf.mxu0
    %v11331 = vadd.f32 %v11162, %v11330
    %11332 = vmatmul.bf16.gmra.mxu0 %v8473
    %v11333 = vpop.f32.mrf.mxu0
    %v11334 = vadd.f32 %v11165, %v11333
    %v11335 = vpop.f32.mrf.mxu0
    %v11336 = vadd.f32 %v11167, %v11335
    %11337 = vmatmul.bf16.gmra.mxu0 %v8481
    %v11338 = vpop.f32.mrf.mxu0
    %v11339 = vadd.f32 %v11170, %v11338
    %v11340 = vpop.f32.mrf.mxu0
    %v11341 = vadd.f32 %v11172, %v11340
    %11342 = vmatmul.bf16.gmra.mxu0 %v8489
    %v11343 = vpop.f32.mrf.mxu0
    %v11344 = vadd.f32 %v11175, %v11343
    %v11345 = vpop.f32.mrf.mxu0
    %v11346 = vadd.f32 %v11177, %v11345
    %11347 = vmatmul.bf16.gmra.mxu0 %v8497
    %v11348 = vpop.f32.mrf.mxu0
    %v11349 = vadd.f32 %v11180, %v11348
    %v11350 = vpop.f32.mrf.mxu0
    %v11351 = vadd.f32 %v11182, %v11350
    %11352 = vmatmul.bf16.gmra.mxu0 %v8505
    %v11353 = vpop.f32.mrf.mxu0
    %v11354 = vadd.f32 %v11185, %v11353
    %v11355 = vpop.f32.mrf.mxu0
    %v11356 = vadd.f32 %v11187, %v11355
    %11357 = vmatmul.bf16.gmra.mxu0 %v8513
    %v11358 = vpop.f32.mrf.mxu0
    %v11359 = vadd.f32 %v11190, %v11358
    %v11360 = vpop.f32.mrf.mxu0
    %v11361 = vadd.f32 %v11192, %v11360
    %11362 = vmatmul.bf16.gmra.mxu0 %v8521
    %v11363 = vpop.f32.mrf.mxu0
    %v11364 = vadd.f32 %v11195, %v11363
    %v11365 = vpop.f32.mrf.mxu0
    %v11366 = vadd.f32 %v11197, %v11365
    %11367 = vmatmul.bf16.gmra.mxu0 %v8529
    %v11368 = vpop.f32.mrf.mxu0
    %v11369 = vadd.f32 %v11200, %v11368
    %v11370 = vpop.f32.mrf.mxu0
    %v11371 = vadd.f32 %v11202, %v11370
    %11372 = vmatmul.bf16.gmra.mxu0 %v8537
    %v11373 = vpop.f32.mrf.mxu0
    %v11374 = vadd.f32 %v11205, %v11373
    %v11375 = vpop.f32.mrf.mxu0
    %v11376 = vadd.f32 %v11207, %v11375
    %11377 = vmatmul.bf16.gmra.mxu0 %v8545
    %v11378 = vpop.f32.mrf.mxu0
    %v11379 = vadd.f32 %v11210, %v11378
    %v11380 = vpop.f32.mrf.mxu0
    %v11381 = vadd.f32 %v11212, %v11380
    %11382 = vmatmul.bf16.gmra.mxu0 %v8553
    %v11383 = vpop.f32.mrf.mxu0
    %v11384 = vadd.f32 %v11215, %v11383
    %v11385 = vpop.f32.mrf.mxu0
    %v11386 = vadd.f32 %v11217, %v11385
    %11387 = vmatmul.bf16.gmra.mxu0 %v8561
    %v11388 = vpop.f32.mrf.mxu0
    %v11389 = vadd.f32 %v11220, %v11388
    %v11390 = vpop.f32.mrf.mxu0
    %v11391 = vadd.f32 %v11222, %v11390
    %11392 = vmatmul.bf16.gmra.mxu0 %v8569
    %v11393 = vpop.f32.mrf.mxu0
    %v11394 = vadd.f32 %v11225, %v11393
    %v11395 = vpop.f32.mrf.mxu0
    %v11396 = vadd.f32 %v11227, %v11395
    %11397 = vmatmul.bf16.gmra.mxu0 %v8577
    %v11398 = vpop.f32.mrf.mxu0
    %v11399 = vadd.f32 %v11230, %v11398
    %v11400 = vpop.f32.mrf.mxu0
    %v11401 = vadd.f32 %v11232, %v11400
    %11402 = vmatmul.bf16.gmra.mxu0 %v8585
    %v11403 = vpop.f32.mrf.mxu0
    %v11404 = vadd.f32 %v11235, %v11403
    %v11405 = vpop.f32.mrf.mxu0
    %v11406 = vadd.f32 %v11237, %v11405
    %11407 = vmatmul.bf16.gmra.mxu0 %v8593
    %v11408 = vpop.f32.mrf.mxu0
    %v11409 = vadd.f32 %v11240, %v11408
    %v11410 = vpop.f32.mrf.mxu0
    %v11411 = vadd.f32 %v11242, %v11410
    %11412 = vmatmul.bf16.gmra.mxu0 %v8601
    %v11413 = vpop.f32.mrf.mxu0
    %v11414 = vadd.f32 %v11245, %v11413
    %v11415 = vpop.f32.mrf.mxu0
    %v11416 = vadd.f32 %v11247, %v11415
    %11417 = vmatmul.bf16.gmra.mxu0 %v8609
    %v11418 = vpop.f32.mrf.mxu0
    %v11419 = vadd.f32 %v11250, %v11418
    %v11420 = vpop.f32.mrf.mxu0
    %v11421 = vadd.f32 %v11252, %v11420
    %11422 = vmatmul.bf16.gmra.mxu0 %v8617
    %v11423 = vpop.f32.mrf.mxu0
    %v11424 = vadd.f32 %v11255, %v11423
    %v11425 = vpop.f32.mrf.mxu0
    %v11426 = vadd.f32 %v11257, %v11425
    %11427 = vmatmul.bf16.gmra.mxu0 %v8625
    %v11428 = vpop.f32.mrf.mxu0
    %v11429 = vadd.f32 %v11260, %v11428
    %v11430 = vpop.f32.mrf.mxu0
    %v11431 = vadd.f32 %v11262, %v11430
    %11432 = vmatmul.bf16.gmra.mxu0 %v8633
    %v11433 = vpop.f32.mrf.mxu0
    %v11434 = vadd.f32 %v11265, %v11433
    %v11435 = vpop.f32.mrf.mxu0
    %v11436 = vadd.f32 %v11267, %v11435
    %11437 = vmatmul.bf16.gmra.mxu0 %v8641
    %v11438 = vpop.f32.mrf.mxu0
    %v11439 = vadd.f32 %v11270, %v11438
    %v11440 = vpop.f32.mrf.mxu0
    %v11441 = vadd.f32 %v11272, %v11440
    %11442 = vmatmul.bf16.gmra.mxu0 %v8649
    %v11443 = vpop.f32.mrf.mxu0
    %v11444 = vadd.f32 %v11275, %v11443
    %v11445 = vpop.f32.mrf.mxu0
    %v11446 = vadd.f32 %v11277, %v11445
    %11447 = vmatmul.bf16.gmra.mxu0 %v8657
    %v11448 = vpop.f32.mrf.mxu0
    %v11449 = vadd.f32 %v11280, %v11448
    %v11450 = vpop.f32.mrf.mxu0
    %v11451 = vadd.f32 %v11282, %v11450
    %11452 = vmatmul.bf16.gmra.mxu0 %v8665
    %v11453 = vpop.f32.mrf.mxu0
    %v11454 = vadd.f32 %v11285, %v11453
    %v11455 = vpop.f32.mrf.mxu0
    %v11456 = vadd.f32 %v11287, %v11455
    %11457 = vdwg.mxu0
    %11458 = vmatpush.bf16.msra.mxu0 %v7002
    %11459 = vmatpush.bf16.msra.mxu0 %v7000
    %11460 = vmatpush.bf16.msra.mxu0 %v6998
    %11461 = vmatpush.bf16.msra.mxu0 %v6996
    %11462 = vmatpush.bf16.msra.mxu0 %v6994
    %11463 = vmatpush.bf16.msra.mxu0 %v6992
    %11464 = vmatpush.bf16.msra.mxu0 %v6990
    %11465 = vmatpush.bf16.msra.mxu0 %v6988
    %11466 = vmatmul.bf16.gmra.mxu0 %v8418
    %v11467 = vpop.f32.mrf.mxu0
    %v11468 = vadd.f32 %v11299, %v11467
    %v11469 = vpop.f32.mrf.mxu0
    %v11470 = vadd.f32 %v11301, %v11469
    %11471 = vmatmul.bf16.gmra.mxu0 %v8426
    %v11472 = vpop.f32.mrf.mxu0
    %v11473 = vadd.f32 %v11304, %v11472
    %v11474 = vpop.f32.mrf.mxu0
    %v11475 = vadd.f32 %v11306, %v11474
    %11476 = vmatmul.bf16.gmra.mxu0 %v8434
    %v11477 = vpop.f32.mrf.mxu0
    %v11478 = vadd.f32 %v11309, %v11477
    %v11479 = vpop.f32.mrf.mxu0
    %v11480 = vadd.f32 %v11311, %v11479
    %11481 = vmatmul.bf16.gmra.mxu0 %v8442
    %v11482 = vpop.f32.mrf.mxu0
    %v11483 = vadd.f32 %v11314, %v11482
    %v11484 = vpop.f32.mrf.mxu0
    %v11485 = vadd.f32 %v11316, %v11484
    %11486 = vmatmul.bf16.gmra.mxu0 %v8450
    %v11487 = vpop.f32.mrf.mxu0
    %v11488 = vadd.f32 %v11319, %v11487
    %v11489 = vpop.f32.mrf.mxu0
    %v11490 = vadd.f32 %v11321, %v11489
    %11491 = vmatmul.bf16.gmra.mxu0 %v8458
    %v11492 = vpop.f32.mrf.mxu0
    %v11493 = vadd.f32 %v11324, %v11492
    %v11494 = vpop.f32.mrf.mxu0
    %v11495 = vadd.f32 %v11326, %v11494
    %11496 = vmatmul.bf16.gmra.mxu0 %v8466
    %v11497 = vpop.f32.mrf.mxu0
    %v11498 = vadd.f32 %v11329, %v11497
    %v11499 = vpop.f32.mrf.mxu0
    %v11500 = vadd.f32 %v11331, %v11499
    %11501 = vmatmul.bf16.gmra.mxu0 %v8474
    %v11502 = vpop.f32.mrf.mxu0
    %v11503 = vadd.f32 %v11334, %v11502
    %v11504 = vpop.f32.mrf.mxu0
    %v11505 = vadd.f32 %v11336, %v11504
    %11506 = vmatmul.bf16.gmra.mxu0 %v8482
    %v11507 = vpop.f32.mrf.mxu0
    %v11508 = vadd.f32 %v11339, %v11507
    %v11509 = vpop.f32.mrf.mxu0
    %v11510 = vadd.f32 %v11341, %v11509
    %11511 = vmatmul.bf16.gmra.mxu0 %v8490
    %v11512 = vpop.f32.mrf.mxu0
    %v11513 = vadd.f32 %v11344, %v11512
    %v11514 = vpop.f32.mrf.mxu0
    %v11515 = vadd.f32 %v11346, %v11514
    %11516 = vmatmul.bf16.gmra.mxu0 %v8498
    %v11517 = vpop.f32.mrf.mxu0
    %v11518 = vadd.f32 %v11349, %v11517
    %v11519 = vpop.f32.mrf.mxu0
    %v11520 = vadd.f32 %v11351, %v11519
    %11521 = vmatmul.bf16.gmra.mxu0 %v8506
    %v11522 = vpop.f32.mrf.mxu0
    %v11523 = vadd.f32 %v11354, %v11522
    %v11524 = vpop.f32.mrf.mxu0
    %v11525 = vadd.f32 %v11356, %v11524
    %11526 = vmatmul.bf16.gmra.mxu0 %v8514
    %v11527 = vpop.f32.mrf.mxu0
    %v11528 = vadd.f32 %v11359, %v11527
    %v11529 = vpop.f32.mrf.mxu0
    %v11530 = vadd.f32 %v11361, %v11529
    %11531 = vmatmul.bf16.gmra.mxu0 %v8522
    %v11532 = vpop.f32.mrf.mxu0
    %v11533 = vadd.f32 %v11364, %v11532
    %v11534 = vpop.f32.mrf.mxu0
    %v11535 = vadd.f32 %v11366, %v11534
    %11536 = vmatmul.bf16.gmra.mxu0 %v8530
    %v11537 = vpop.f32.mrf.mxu0
    %v11538 = vadd.f32 %v11369, %v11537
    %v11539 = vpop.f32.mrf.mxu0
    %v11540 = vadd.f32 %v11371, %v11539
    %11541 = vmatmul.bf16.gmra.mxu0 %v8538
    %v11542 = vpop.f32.mrf.mxu0
    %v11543 = vadd.f32 %v11374, %v11542
    %v11544 = vpop.f32.mrf.mxu0
    %v11545 = vadd.f32 %v11376, %v11544
    %11546 = vmatmul.bf16.gmra.mxu0 %v8546
    %v11547 = vpop.f32.mrf.mxu0
    %v11548 = vadd.f32 %v11379, %v11547
    %v11549 = vpop.f32.mrf.mxu0
    %v11550 = vadd.f32 %v11381, %v11549
    %11551 = vmatmul.bf16.gmra.mxu0 %v8554
    %v11552 = vpop.f32.mrf.mxu0
    %v11553 = vadd.f32 %v11384, %v11552
    %v11554 = vpop.f32.mrf.mxu0
    %v11555 = vadd.f32 %v11386, %v11554
    %11556 = vmatmul.bf16.gmra.mxu0 %v8562
    %v11557 = vpop.f32.mrf.mxu0
    %v11558 = vadd.f32 %v11389, %v11557
    %v11559 = vpop.f32.mrf.mxu0
    %v11560 = vadd.f32 %v11391, %v11559
    %11561 = vmatmul.bf16.gmra.mxu0 %v8570
    %v11562 = vpop.f32.mrf.mxu0
    %v11563 = vadd.f32 %v11394, %v11562
    %v11564 = vpop.f32.mrf.mxu0
    %v11565 = vadd.f32 %v11396, %v11564
    %11566 = vmatmul.bf16.gmra.mxu0 %v8578
    %v11567 = vpop.f32.mrf.mxu0
    %v11568 = vadd.f32 %v11399, %v11567
    %v11569 = vpop.f32.mrf.mxu0
    %v11570 = vadd.f32 %v11401, %v11569
    %11571 = vmatmul.bf16.gmra.mxu0 %v8586
    %v11572 = vpop.f32.mrf.mxu0
    %v11573 = vadd.f32 %v11404, %v11572
    %v11574 = vpop.f32.mrf.mxu0
    %v11575 = vadd.f32 %v11406, %v11574
    %11576 = vmatmul.bf16.gmra.mxu0 %v8594
    %v11577 = vpop.f32.mrf.mxu0
    %v11578 = vadd.f32 %v11409, %v11577
    %v11579 = vpop.f32.mrf.mxu0
    %v11580 = vadd.f32 %v11411, %v11579
    %11581 = vmatmul.bf16.gmra.mxu0 %v8602
    %v11582 = vpop.f32.mrf.mxu0
    %v11583 = vadd.f32 %v11414, %v11582
    %v11584 = vpop.f32.mrf.mxu0
    %v11585 = vadd.f32 %v11416, %v11584
    %11586 = vmatmul.bf16.gmra.mxu0 %v8610
    %v11587 = vpop.f32.mrf.mxu0
    %v11588 = vadd.f32 %v11419, %v11587
    %v11589 = vpop.f32.mrf.mxu0
    %v11590 = vadd.f32 %v11421, %v11589
    %11591 = vmatmul.bf16.gmra.mxu0 %v8618
    %v11592 = vpop.f32.mrf.mxu0
    %v11593 = vadd.f32 %v11424, %v11592
    %v11594 = vpop.f32.mrf.mxu0
    %v11595 = vadd.f32 %v11426, %v11594
    %11596 = vmatmul.bf16.gmra.mxu0 %v8626
    %v11597 = vpop.f32.mrf.mxu0
    %v11598 = vadd.f32 %v11429, %v11597
    %v11599 = vpop.f32.mrf.mxu0
    %v11600 = vadd.f32 %v11431, %v11599
    %11601 = vmatmul.bf16.gmra.mxu0 %v8634
    %v11602 = vpop.f32.mrf.mxu0
    %v11603 = vadd.f32 %v11434, %v11602
    %v11604 = vpop.f32.mrf.mxu0
    %v11605 = vadd.f32 %v11436, %v11604
    %11606 = vmatmul.bf16.gmra.mxu0 %v8642
    %v11607 = vpop.f32.mrf.mxu0
    %v11608 = vadd.f32 %v11439, %v11607
    %v11609 = vpop.f32.mrf.mxu0
    %v11610 = vadd.f32 %v11441, %v11609
    %11611 = vmatmul.bf16.gmra.mxu0 %v8650
    %v11612 = vpop.f32.mrf.mxu0
    %v11613 = vadd.f32 %v11444, %v11612
    %v11614 = vpop.f32.mrf.mxu0
    %v11615 = vadd.f32 %v11446, %v11614
    %11616 = vmatmul.bf16.gmra.mxu0 %v8658
    %v11617 = vpop.f32.mrf.mxu0
    %v11618 = vadd.f32 %v11449, %v11617
    %v11619 = vpop.f32.mrf.mxu0
    %v11620 = vadd.f32 %v11451, %v11619
    %11621 = vmatmul.bf16.gmra.mxu0 %v8666
    %v11622 = vpop.f32.mrf.mxu0
    %v11623 = vadd.f32 %v11454, %v11622
    %v11624 = vpop.f32.mrf.mxu0
    %v11625 = vadd.f32 %v11456, %v11624
    %11626 = vdwg.mxu0
    %v11627 = vmax.f32 %v10116, 0.0
    %v11628 = vmax.f32 %v11468, 0.0
    %v11629 = vmax.f32 %v10118, 0.0
    %v11630 = vmax.f32 %v11470, 0.0
    %v11631 = vmax.f32 %v10121, 0.0
    %v11632 = vmax.f32 %v11473, 0.0
    %v11633 = vmax.f32 %v10123, 0.0
    %v11634 = vmax.f32 %v11475, 0.0
    %v11635 = vmax.f32 %v10126, 0.0
    %v11636 = vmax.f32 %v11478, 0.0
    %v11637 = vmax.f32 %v10128, 0.0
    %v11638 = vmax.f32 %v11480, 0.0
    %v11639 = vmax.f32 %v10131, 0.0
    %v11640 = vmax.f32 %v11483, 0.0
    %v11641 = vmax.f32 %v10133, 0.0
    %v11642 = vmax.f32 %v11485, 0.0
    %v11643 = vmax.f32 %v10136, 0.0
    %v11644 = vmax.f32 %v11488, 0.0
    %v11645 = vmax.f32 %v10138, 0.0
    %v11646 = vmax.f32 %v11490, 0.0
    %v11647 = vmax.f32 %v10141, 0.0
    %v11648 = vmax.f32 %v11493, 0.0
    %v11649 = vmax.f32 %v10143, 0.0
    %v11650 = vmax.f32 %v11495, 0.0
    %v11651 = vmax.f32 %v10146, 0.0
    %v11652 = vmax.f32 %v11498, 0.0
    %v11653 = vmax.f32 %v10148, 0.0
    %v11654 = vmax.f32 %v11500, 0.0
    %v11655 = vmax.f32 %v10151, 0.0
    %v11656 = vmax.f32 %v11503, 0.0
    %v11657 = vmax.f32 %v10153, 0.0
    %v11658 = vmax.f32 %v11505, 0.0
    %v11659 = vmax.f32 %v10156, 0.0
    %v11660 = vmax.f32 %v11508, 0.0
    %v11661 = vmax.f32 %v10158, 0.0
    %v11662 = vmax.f32 %v11510, 0.0
    %v11663 = vmax.f32 %v10161, 0.0
    %v11664 = vmax.f32 %v11513, 0.0
    %v11665 = vmax.f32 %v10163, 0.0
    %v11666 = vmax.f32 %v11515, 0.0
    %v11667 = vmax.f32 %v10166, 0.0
    %v11668 = vmax.f32 %v11518, 0.0
    %v11669 = vmax.f32 %v10168, 0.0
    %v11670 = vmax.f32 %v11520, 0.0
    %v11671 = vmax.f32 %v10171, 0.0
    %v11672 = vmax.f32 %v11523, 0.0
    %v11673 = vmax.f32 %v10173, 0.0
    %v11674 = vmax.f32 %v11525, 0.0
    %v11675 = vmax.f32 %v10176, 0.0
    %v11676 = vmax.f32 %v11528, 0.0
    %v11677 = vmax.f32 %v10178, 0.0
    %v11678 = vmax.f32 %v11530, 0.0
    %v11679 = vmax.f32 %v10181, 0.0
    %v11680 = vmax.f32 %v11533, 0.0
    %v11681 = vmax.f32 %v10183, 0.0
    %v11682 = vmax.f32 %v11535, 0.0
    %v11683 = vmax.f32 %v10186, 0.0
    %v11684 = vmax.f32 %v11538, 0.0
    %v11685 = vmax.f32 %v10188, 0.0
    %v11686 = vmax.f32 %v11540, 0.0
    %v11687 = vmax.f32 %v10191, 0.0
    %v11688 = vmax.f32 %v11543, 0.0
    %v11689 = vmax.f32 %v10193, 0.0
    %v11690 = vmax.f32 %v11545, 0.0
    %v11691 = vmax.f32 %v10196, 0.0
    %v11692 = vmax.f32 %v11548, 0.0
    %v11693 = vmax.f32 %v10198, 0.0
    %v11694 = vmax.f32 %v11550, 0.0
    %v11695 = vmax.f32 %v10201, 0.0
    %v11696 = vmax.f32 %v11553, 0.0
    %v11697 = vmax.f32 %v10203, 0.0
    %v11698 = vmax.f32 %v11555, 0.0
    %v11699 = vmax.f32 %v10206, 0.0
    %v11700 = vmax.f32 %v11558, 0.0
    %v11701 = vmax.f32 %v10208, 0.0
    %v11702 = vmax.f32 %v11560, 0.0
    %v11703 = vmax.f32 %v10211, 0.0
    %v11704 = vmax.f32 %v11563, 0.0
    %v11705 = vmax.f32 %v10213, 0.0
    %v11706 = vmax.f32 %v11565, 0.0
    %v11707 = vmax.f32 %v10216, 0.0
    %v11708 = vmax.f32 %v11568, 0.0
    %v11709 = vmax.f32 %v10218, 0.0
    %v11710 = vmax.f32 %v11570, 0.0
    %v11711 = vmax.f32 %v10221, 0.0
    %v11712 = vmax.f32 %v11573, 0.0
    %v11713 = vmax.f32 %v10223, 0.0
    %v11714 = vmax.f32 %v11575, 0.0
    %v11715 = vmax.f32 %v10226, 0.0
    %v11716 = vmax.f32 %v11578, 0.0
    %v11717 = vmax.f32 %v10228, 0.0
    %v11718 = vmax.f32 %v11580, 0.0
    %v11719 = vmax.f32 %v10231, 0.0
    %v11720 = vmax.f32 %v11583, 0.0
    %v11721 = vmax.f32 %v10233, 0.0
    %v11722 = vmax.f32 %v11585, 0.0
    %v11723 = vmax.f32 %v10236, 0.0
    %v11724 = vmax.f32 %v11588, 0.0
    %v11725 = vmax.f32 %v10238, 0.0
    %v11726 = vmax.f32 %v11590, 0.0
    %v11727 = vmax.f32 %v10241, 0.0
    %v11728 = vmax.f32 %v11593, 0.0
    %v11729 = vmax.f32 %v10243, 0.0
    %v11730 = vmax.f32 %v11595, 0.0
    %v11731 = vmax.f32 %v10246, 0.0
    %v11732 = vmax.f32 %v11598, 0.0
    %v11733 = vmax.f32 %v10248, 0.0
    %v11734 = vmax.f32 %v11600, 0.0
    %v11735 = vmax.f32 %v10251, 0.0
    %v11736 = vmax.f32 %v11603, 0.0
    %v11737 = vmax.f32 %v10253, 0.0
    %v11738 = vmax.f32 %v11605, 0.0
    %v11739 = vmax.f32 %v10256, 0.0
    %v11740 = vmax.f32 %v11608, 0.0
    %v11741 = vmax.f32 %v10258, 0.0
    %v11742 = vmax.f32 %v11610, 0.0
    %v11743 = vmax.f32 %v10261, 0.0
    %v11744 = vmax.f32 %v11613, 0.0
    %v11745 = vmax.f32 %v10263, 0.0
    %v11746 = vmax.f32 %v11615, 0.0
    %v11747 = vmax.f32 %v10266, 0.0
    %v11748 = vmax.f32 %v11618, 0.0
    %v11749 = vmax.f32 %v10268, 0.0
    %v11750 = vmax.f32 %v11620, 0.0
    %v11751 = vmax.f32 %v10271, 0.0
    %v11752 = vmax.f32 %v11623, 0.0
    %v11753 = vmax.f32 %v10273, 0.0
    %v11754 = vmax.f32 %v11625, 0.0
    %v11755 = vpack.c.bf16 %v11629, %v11627
    %v11756 = vpack.c.bf16 %v11630, %v11628
    %v11757 = vpack.c.bf16 %v11633, %v11631
    %v11758 = vpack.c.bf16 %v11634, %v11632
    %v11759 = vpack.c.bf16 %v11637, %v11635
    %v11760 = vpack.c.bf16 %v11638, %v11636
    %v11761 = vpack.c.bf16 %v11641, %v11639
    %v11762 = vpack.c.bf16 %v11642, %v11640
    %v11763 = vpack.c.bf16 %v11645, %v11643
    %v11764 = vpack.c.bf16 %v11646, %v11644
    %v11765 = vpack.c.bf16 %v11649, %v11647
    %v11766 = vpack.c.bf16 %v11650, %v11648
    %v11767 = vpack.c.bf16 %v11653, %v11651
    %v11768 = vpack.c.bf16 %v11654, %v11652
    %v11769 = vpack.c.bf16 %v11657, %v11655
    %v11770 = vpack.c.bf16 %v11658, %v11656
    %v11771 = vpack.c.bf16 %v11661, %v11659
    %v11772 = vpack.c.bf16 %v11662, %v11660
    %v11773 = vpack.c.bf16 %v11665, %v11663
    %v11774 = vpack.c.bf16 %v11666, %v11664
    %v11775 = vpack.c.bf16 %v11669, %v11667
    %v11776 = vpack.c.bf16 %v11670, %v11668
    %v11777 = vpack.c.bf16 %v11673, %v11671
    %v11778 = vpack.c.bf16 %v11674, %v11672
    %v11779 = vpack.c.bf16 %v11677, %v11675
    %v11780 = vpack.c.bf16 %v11678, %v11676
    %v11781 = vpack.c.bf16 %v11681, %v11679
    %v11782 = vpack.c.bf16 %v11682, %v11680
    %v11783 = vpack.c.bf16 %v11685, %v11683
    %v11784 = vpack.c.bf16 %v11686, %v11684
    %v11785 = vpack.c.bf16 %v11689, %v11687
    %v11786 = vpack.c.bf16 %v11690, %v11688
    %v11787 = vpack.c.bf16 %v11693, %v11691
    %v11788 = vpack.c.bf16 %v11694, %v11692
    %v11789 = vpack.c.bf16 %v11697, %v11695
    %v11790 = vpack.c.bf16 %v11698, %v11696
    %v11791 = vpack.c.bf16 %v11701, %v11699
    %v11792 = vpack.c.bf16 %v11702, %v11700
    %v11793 = vpack.c.bf16 %v11705, %v11703
    %v11794 = vpack.c.bf16 %v11706, %v11704
    %v11795 = vpack.c.bf16 %v11709, %v11707
    %v11796 = vpack.c.bf16 %v11710, %v11708
    %v11797 = vpack.c.bf16 %v11713, %v11711
    %v11798 = vpack.c.bf16 %v11714, %v11712
    %v11799 = vpack.c.bf16 %v11717, %v11715
    %v11800 = vpack.c.bf16 %v11718, %v11716
    %v11801 = vpack.c.bf16 %v11721, %v11719
    %v11802 = vpack.c.bf16 %v11722, %v11720
    %v11803 = vpack.c.bf16 %v11725, %v11723
    %v11804 = vpack.c.bf16 %v11726, %v11724
    %v11805 = vpack.c.bf16 %v11729, %v11727
    %v11806 = vpack.c.bf16 %v11730, %v11728
    %v11807 = vpack.c.bf16 %v11733, %v11731
    %v11808 = vpack.c.bf16 %v11734, %v11732
    %v11809 = vpack.c.bf16 %v11737, %v11735
    %v11810 = vpack.c.bf16 %v11738, %v11736
    %v11811 = vpack.c.bf16 %v11741, %v11739
    %v11812 = vpack.c.bf16 %v11742, %v11740
    %v11813 = vpack.c.bf16 %v11745, %v11743
    %v11814 = vpack.c.bf16 %v11746, %v11744
    %v11815 = vpack.c.bf16 %v11749, %v11747
    %v11816 = vpack.c.bf16 %v11750, %v11748
    %v11817 = vpack.c.bf16 %v11753, %v11751
    %v11818 = vpack.c.bf16 %v11754, %v11752
    %v11819 = vld [vmem:[#allocation16] sm:$0xff]
    %v11820 = vld [vmem:[#allocation16 + $0x8] sm:$0xff]
    %v11821 = vld [vmem:[#allocation16 + $0x10] sm:$0xff]
    %v11822 = vld [vmem:[#allocation16 + $0x18] sm:$0xff]
    %v11823 = vld [vmem:[#allocation16 + $0x20] sm:$0xff]
    %v11824 = vld [vmem:[#allocation16 + $0x28] sm:$0xff]
    %v11825 = vld [vmem:[#allocation16 + $0x30] sm:$0xff]
    %v11826 = vld [vmem:[#allocation16 + $0x38] sm:$0xff]
    %v11827 = vld [vmem:[#allocation16 + $0x40] sm:$0xff]
    %v11828 = vld [vmem:[#allocation16 + $0x48] sm:$0xff]
    %v11829 = vld [vmem:[#allocation16 + $0x50] sm:$0xff]
    %v11830 = vld [vmem:[#allocation16 + $0x58] sm:$0xff]
    %v11831 = vld [vmem:[#allocation16 + $0x60] sm:$0xff]
    %v11832 = vld [vmem:[#allocation16 + $0x68] sm:$0xff]
    %v11833 = vld [vmem:[#allocation16 + $0x70] sm:$0xff]
    %v11834 = vld [vmem:[#allocation16 + $0x78] sm:$0xff]
    %v11835 = vld [vmem:[#allocation17] sm:$0xff]
    %v11836 = vld [vmem:[#allocation17 + $0x8] sm:$0xff]
    %v11837 = vld [vmem:[#allocation17 + $0x10] sm:$0xff]
    %v11838 = vld [vmem:[#allocation17 + $0x18] sm:$0xff]
    %v11839 = vld [vmem:[#allocation17 + $0x20] sm:$0xff]
    %v11840 = vld [vmem:[#allocation17 + $0x28] sm:$0xff]
    %v11841 = vld [vmem:[#allocation17 + $0x30] sm:$0xff]
    %v11842 = vld [vmem:[#allocation17 + $0x38] sm:$0xff]
    %11844 = vset.pattern.permute.xlu0 0
    %11845 = vperm.xlu0 %11844, %v11835
    %v11846 = vpop.permute.xlu0 %11845
    %11849 = vset.pattern.permute.xlu0 0
    %11850 = vperm.xlu0 %11849, %v11836
    %v11851 = vpop.permute.xlu0 %11850
    %11854 = vset.pattern.permute.xlu0 0
    %11855 = vperm.xlu0 %11854, %v11837
    %v11856 = vpop.permute.xlu0 %11855
    %11859 = vset.pattern.permute.xlu0 0
    %11860 = vperm.xlu0 %11859, %v11838
    %v11861 = vpop.permute.xlu0 %11860
    %11864 = vset.pattern.permute.xlu0 0
    %11865 = vperm.xlu0 %11864, %v11839
    %v11866 = vpop.permute.xlu0 %11865
    %11869 = vset.pattern.permute.xlu0 0
    %11870 = vperm.xlu0 %11869, %v11840
    %v11871 = vpop.permute.xlu0 %11870
    %11874 = vset.pattern.permute.xlu0 0
    %11875 = vperm.xlu0 %11874, %v11841
    %v11876 = vpop.permute.xlu0 %11875
    %11879 = vset.pattern.permute.xlu0 0
    %11880 = vperm.xlu0 %11879, %v11842
    %v11881 = vpop.permute.xlu0 %11880
    %v11899 = vunpack.c.l.b16 %v11819
    %v11900 = vunpack.c.h.b16 %v11819
    %v11901 = vunpack.c.l.b16 %v11820
    %v11902 = vunpack.c.h.b16 %v11820
    %v11903 = vunpack.c.l.b16 %v11821
    %v11904 = vunpack.c.h.b16 %v11821
    %v11905 = vunpack.c.l.b16 %v11822
    %v11906 = vunpack.c.h.b16 %v11822
    %v11907 = vunpack.c.l.b16 %v11823
    %v11908 = vunpack.c.h.b16 %v11823
    %v11909 = vunpack.c.l.b16 %v11824
    %v11910 = vunpack.c.h.b16 %v11824
    %v11911 = vunpack.c.l.b16 %v11825
    %v11912 = vunpack.c.h.b16 %v11825
    %v11913 = vunpack.c.l.b16 %v11826
    %v11914 = vunpack.c.h.b16 %v11826
    %v11915 = vunpack.c.l.b16 %v11827
    %v11916 = vunpack.c.h.b16 %v11827
    %v11917 = vunpack.c.l.b16 %v11828
    %v11918 = vunpack.c.h.b16 %v11828
    %v11919 = vunpack.c.l.b16 %v11829
    %v11920 = vunpack.c.h.b16 %v11829
    %v11921 = vunpack.c.l.b16 %v11830
    %v11922 = vunpack.c.h.b16 %v11830
    %v11923 = vunpack.c.l.b16 %v11831
    %v11924 = vunpack.c.h.b16 %v11831
    %v11925 = vunpack.c.l.b16 %v11832
    %v11926 = vunpack.c.h.b16 %v11832
    %v11927 = vunpack.c.l.b16 %v11833
    %v11928 = vunpack.c.h.b16 %v11833
    %v11929 = vunpack.c.l.b16 %v11834
    %v11930 = vunpack.c.h.b16 %v11834
    %v11931 = vpack.c.b16 %v11903, %v11899
    %v11932 = vpack.c.b16 %v11904, %v11900
    %v11933 = vpack.c.b16 %v11905, %v11901
    %v11934 = vpack.c.b16 %v11906, %v11902
    %v11935 = vpack.c.b16 %v11911, %v11907
    %v11936 = vpack.c.b16 %v11912, %v11908
    %v11937 = vpack.c.b16 %v11913, %v11909
    %v11938 = vpack.c.b16 %v11914, %v11910
    %v11939 = vpack.c.b16 %v11919, %v11915
    %v11940 = vpack.c.b16 %v11920, %v11916
    %v11941 = vpack.c.b16 %v11921, %v11917
    %v11942 = vpack.c.b16 %v11922, %v11918
    %v11943 = vpack.c.b16 %v11927, %v11923
    %v11944 = vpack.c.b16 %v11928, %v11924
    %v11945 = vpack.c.b16 %v11929, %v11925
    %v11946 = vpack.c.b16 %v11930, %v11926
    %11963 = vmatpush.bf16.msra.mxu0 %v11769
    %11964 = vmatpush.bf16.msra.mxu0 %v11767
    %11965 = vmatpush.bf16.msra.mxu0 %v11765
    %11966 = vmatpush.bf16.msra.mxu0 %v11763
    %11967 = vmatpush.bf16.msra.mxu0 %v11761
    %11968 = vmatpush.bf16.msra.mxu0 %v11759
    %11969 = vmatpush.bf16.msra.mxu0 %v11757
    %11970 = vmatpush.bf16.msra.mxu0 %v11755
    %11971 = vmatmul.bf16.gmra.mxu0 %v11931
    %v11972 = vpop.f32.mrf.mxu0
    %v11973 = vadd.f32 %v11846, %v11972
    %v11974 = vpop.f32.mrf.mxu0
    %v11975 = vadd.f32 %v11851, %v11974
    %11976 = vmatmul.bf16.gmra.mxu0 %v11935
    %v11977 = vpop.f32.mrf.mxu0
    %v11978 = vadd.f32 %v11856, %v11977
    %v11979 = vpop.f32.mrf.mxu0
    %v11980 = vadd.f32 %v11861, %v11979
    %11981 = vmatmul.bf16.gmra.mxu0 %v11939
    %v11982 = vpop.f32.mrf.mxu0
    %v11983 = vadd.f32 %v11866, %v11982
    %v11984 = vpop.f32.mrf.mxu0
    %v11985 = vadd.f32 %v11871, %v11984
    %11986 = vmatmul.bf16.gmra.mxu0 %v11943
    %v11987 = vpop.f32.mrf.mxu0
    %v11988 = vadd.f32 %v11876, %v11987
    %v11989 = vpop.f32.mrf.mxu0
    %v11990 = vadd.f32 %v11881, %v11989
    %11991 = vdwg.mxu0
    %11992 = vmatpush.bf16.msra.mxu0 %v11785
    %11993 = vmatpush.bf16.msra.mxu0 %v11783
    %11994 = vmatpush.bf16.msra.mxu0 %v11781
    %11995 = vmatpush.bf16.msra.mxu0 %v11779
    %11996 = vmatpush.bf16.msra.mxu0 %v11777
    %11997 = vmatpush.bf16.msra.mxu0 %v11775
    %11998 = vmatpush.bf16.msra.mxu0 %v11773
    %11999 = vmatpush.bf16.msra.mxu0 %v11771
    %12000 = vmatmul.bf16.gmra.mxu0 %v11932
    %v12001 = vpop.f32.mrf.mxu0
    %v12002 = vadd.f32 %v11973, %v12001
    %v12003 = vpop.f32.mrf.mxu0
    %v12004 = vadd.f32 %v11975, %v12003
    %12005 = vmatmul.bf16.gmra.mxu0 %v11936
    %v12006 = vpop.f32.mrf.mxu0
    %v12007 = vadd.f32 %v11978, %v12006
    %v12008 = vpop.f32.mrf.mxu0
    %v12009 = vadd.f32 %v11980, %v12008
    %12010 = vmatmul.bf16.gmra.mxu0 %v11940
    %v12011 = vpop.f32.mrf.mxu0
    %v12012 = vadd.f32 %v11983, %v12011
    %v12013 = vpop.f32.mrf.mxu0
    %v12014 = vadd.f32 %v11985, %v12013
    %12015 = vmatmul.bf16.gmra.mxu0 %v11944
    %v12016 = vpop.f32.mrf.mxu0
    %v12017 = vadd.f32 %v11988, %v12016
    %v12018 = vpop.f32.mrf.mxu0
    %v12019 = vadd.f32 %v11990, %v12018
    %12020 = vdwg.mxu0
    %12021 = vmatpush.bf16.msra.mxu0 %v11801
    %12022 = vmatpush.bf16.msra.mxu0 %v11799
    %12023 = vmatpush.bf16.msra.mxu0 %v11797
    %12024 = vmatpush.bf16.msra.mxu0 %v11795
    %12025 = vmatpush.bf16.msra.mxu0 %v11793
    %12026 = vmatpush.bf16.msra.mxu0 %v11791
    %12027 = vmatpush.bf16.msra.mxu0 %v11789
    %12028 = vmatpush.bf16.msra.mxu0 %v11787
    %12029 = vmatmul.bf16.gmra.mxu0 %v11933
    %v12030 = vpop.f32.mrf.mxu0
    %v12031 = vadd.f32 %v12002, %v12030
    %v12032 = vpop.f32.mrf.mxu0
    %v12033 = vadd.f32 %v12004, %v12032
    %12034 = vmatmul.bf16.gmra.mxu0 %v11937
    %v12035 = vpop.f32.mrf.mxu0
    %v12036 = vadd.f32 %v12007, %v12035
    %v12037 = vpop.f32.mrf.mxu0
    %v12038 = vadd.f32 %v12009, %v12037
    %12039 = vmatmul.bf16.gmra.mxu0 %v11941
    %v12040 = vpop.f32.mrf.mxu0
    %v12041 = vadd.f32 %v12012, %v12040
    %v12042 = vpop.f32.mrf.mxu0
    %v12043 = vadd.f32 %v12014, %v12042
    %12044 = vmatmul.bf16.gmra.mxu0 %v11945
    %v12045 = vpop.f32.mrf.mxu0
    %v12046 = vadd.f32 %v12017, %v12045
    %v12047 = vpop.f32.mrf.mxu0
    %v12048 = vadd.f32 %v12019, %v12047
    %12049 = vdwg.mxu0
    %12050 = vmatpush.bf16.msra.mxu0 %v11817
    %12051 = vmatpush.bf16.msra.mxu0 %v11815
    %12052 = vmatpush.bf16.msra.mxu0 %v11813
    %12053 = vmatpush.bf16.msra.mxu0 %v11811
    %12054 = vmatpush.bf16.msra.mxu0 %v11809
    %12055 = vmatpush.bf16.msra.mxu0 %v11807
    %12056 = vmatpush.bf16.msra.mxu0 %v11805
    %12057 = vmatpush.bf16.msra.mxu0 %v11803
    %12058 = vmatmul.bf16.gmra.mxu0 %v11934
    %v12059 = vpop.f32.mrf.mxu0
    %v12060 = vadd.f32 %v12031, %v12059
    %v12061 = vpop.f32.mrf.mxu0
    %v12062 = vadd.f32 %v12033, %v12061
    %12063 = vmatmul.bf16.gmra.mxu0 %v11938
    %v12064 = vpop.f32.mrf.mxu0
    %v12065 = vadd.f32 %v12036, %v12064
    %v12066 = vpop.f32.mrf.mxu0
    %v12067 = vadd.f32 %v12038, %v12066
    %12068 = vmatmul.bf16.gmra.mxu0 %v11942
    %v12069 = vpop.f32.mrf.mxu0
    %v12070 = vadd.f32 %v12041, %v12069
    %v12071 = vpop.f32.mrf.mxu0
    %v12072 = vadd.f32 %v12043, %v12071
    %12073 = vmatmul.bf16.gmra.mxu0 %v11946
    %v12074 = vpop.f32.mrf.mxu0
    %v12075 = vadd.f32 %v12046, %v12074
    %v12076 = vpop.f32.mrf.mxu0
    %v12077 = vadd.f32 %v12048, %v12076
    %12078 = vdwg.mxu0
    %12079 = vmatpush.bf16.msra.mxu0 %v11770
    %12080 = vmatpush.bf16.msra.mxu0 %v11768
    %12081 = vmatpush.bf16.msra.mxu0 %v11766
    %12082 = vmatpush.bf16.msra.mxu0 %v11764
    %12083 = vmatpush.bf16.msra.mxu0 %v11762
    %12084 = vmatpush.bf16.msra.mxu0 %v11760
    %12085 = vmatpush.bf16.msra.mxu0 %v11758
    %12086 = vmatpush.bf16.msra.mxu0 %v11756
    %12087 = vmatmul.bf16.gmra.mxu0 %v11931
    %v12088 = vpop.f32.mrf.mxu0
    %v12089 = vadd.f32 %v11846, %v12088
    %v12090 = vpop.f32.mrf.mxu0
    %v12091 = vadd.f32 %v11851, %v12090
    %12092 = vmatmul.bf16.gmra.mxu0 %v11935
    %v12093 = vpop.f32.mrf.mxu0
    %v12094 = vadd.f32 %v11856, %v12093
    %v12095 = vpop.f32.mrf.mxu0
    %v12096 = vadd.f32 %v11861, %v12095
    %12097 = vmatmul.bf16.gmra.mxu0 %v11939
    %v12098 = vpop.f32.mrf.mxu0
    %v12099 = vadd.f32 %v11866, %v12098
    %v12100 = vpop.f32.mrf.mxu0
    %v12101 = vadd.f32 %v11871, %v12100
    %12102 = vmatmul.bf16.gmra.mxu0 %v11943
    %v12103 = vpop.f32.mrf.mxu0
    %v12104 = vadd.f32 %v11876, %v12103
    %v12105 = vpop.f32.mrf.mxu0
    %v12106 = vadd.f32 %v11881, %v12105
    %12107 = vdwg.mxu0
    %12108 = vmatpush.bf16.msra.mxu0 %v11786
    %12109 = vmatpush.bf16.msra.mxu0 %v11784
    %12110 = vmatpush.bf16.msra.mxu0 %v11782
    %12111 = vmatpush.bf16.msra.mxu0 %v11780
    %12112 = vmatpush.bf16.msra.mxu0 %v11778
    %12113 = vmatpush.bf16.msra.mxu0 %v11776
    %12114 = vmatpush.bf16.msra.mxu0 %v11774
    %12115 = vmatpush.bf16.msra.mxu0 %v11772
    %12116 = vmatmul.bf16.gmra.mxu0 %v11932
    %v12117 = vpop.f32.mrf.mxu0
    %v12118 = vadd.f32 %v12089, %v12117
    %v12119 = vpop.f32.mrf.mxu0
    %v12120 = vadd.f32 %v12091, %v12119
    %12121 = vmatmul.bf16.gmra.mxu0 %v11936
    %v12122 = vpop.f32.mrf.mxu0
    %v12123 = vadd.f32 %v12094, %v12122
    %v12124 = vpop.f32.mrf.mxu0
    %v12125 = vadd.f32 %v12096, %v12124
    %12126 = vmatmul.bf16.gmra.mxu0 %v11940
    %v12127 = vpop.f32.mrf.mxu0
    %v12128 = vadd.f32 %v12099, %v12127
    %v12129 = vpop.f32.mrf.mxu0
    %v12130 = vadd.f32 %v12101, %v12129
    %12131 = vmatmul.bf16.gmra.mxu0 %v11944
    %v12132 = vpop.f32.mrf.mxu0
    %v12133 = vadd.f32 %v12104, %v12132
    %v12134 = vpop.f32.mrf.mxu0
    %v12135 = vadd.f32 %v12106, %v12134
    %12136 = vdwg.mxu0
    %12137 = vmatpush.bf16.msra.mxu0 %v11802
    %12138 = vmatpush.bf16.msra.mxu0 %v11800
    %12139 = vmatpush.bf16.msra.mxu0 %v11798
    %12140 = vmatpush.bf16.msra.mxu0 %v11796
    %12141 = vmatpush.bf16.msra.mxu0 %v11794
    %12142 = vmatpush.bf16.msra.mxu0 %v11792
    %12143 = vmatpush.bf16.msra.mxu0 %v11790
    %12144 = vmatpush.bf16.msra.mxu0 %v11788
    %12145 = vmatmul.bf16.gmra.mxu0 %v11933
    %v12146 = vpop.f32.mrf.mxu0
    %v12147 = vadd.f32 %v12118, %v12146
    %v12148 = vpop.f32.mrf.mxu0
    %v12149 = vadd.f32 %v12120, %v12148
    %12150 = vmatmul.bf16.gmra.mxu0 %v11937
    %v12151 = vpop.f32.mrf.mxu0
    %v12152 = vadd.f32 %v12123, %v12151
    %v12153 = vpop.f32.mrf.mxu0
    %v12154 = vadd.f32 %v12125, %v12153
    %12155 = vmatmul.bf16.gmra.mxu0 %v11941
    %v12156 = vpop.f32.mrf.mxu0
    %v12157 = vadd.f32 %v12128, %v12156
    %v12158 = vpop.f32.mrf.mxu0
    %v12159 = vadd.f32 %v12130, %v12158
    %12160 = vmatmul.bf16.gmra.mxu0 %v11945
    %v12161 = vpop.f32.mrf.mxu0
    %v12162 = vadd.f32 %v12133, %v12161
    %v12163 = vpop.f32.mrf.mxu0
    %v12164 = vadd.f32 %v12135, %v12163
    %12165 = vdwg.mxu0
    %12166 = vmatpush.bf16.msra.mxu0 %v11818
    %12167 = vmatpush.bf16.msra.mxu0 %v11816
    %12168 = vmatpush.bf16.msra.mxu0 %v11814
    %12169 = vmatpush.bf16.msra.mxu0 %v11812
    %12170 = vmatpush.bf16.msra.mxu0 %v11810
    %12171 = vmatpush.bf16.msra.mxu0 %v11808
    %12172 = vmatpush.bf16.msra.mxu0 %v11806
    %12173 = vmatpush.bf16.msra.mxu0 %v11804
    %12174 = vmatmul.bf16.gmra.mxu0 %v11934
    %v12175 = vpop.f32.mrf.mxu0
    %v12176 = vadd.f32 %v12147, %v12175
    %v12177 = vpop.f32.mrf.mxu0
    %v12178 = vadd.f32 %v12149, %v12177
    %12179 = vmatmul.bf16.gmra.mxu0 %v11938
    %v12180 = vpop.f32.mrf.mxu0
    %v12181 = vadd.f32 %v12152, %v12180
    %v12182 = vpop.f32.mrf.mxu0
    %v12183 = vadd.f32 %v12154, %v12182
    %12184 = vmatmul.bf16.gmra.mxu0 %v11942
    %v12185 = vpop.f32.mrf.mxu0
    %v12186 = vadd.f32 %v12157, %v12185
    %v12187 = vpop.f32.mrf.mxu0
    %v12188 = vadd.f32 %v12159, %v12187
    %12189 = vmatmul.bf16.gmra.mxu0 %v11946
    %v12190 = vpop.f32.mrf.mxu0
    %v12191 = vadd.f32 %v12162, %v12190
    %v12192 = vpop.f32.mrf.mxu0
    %v12193 = vadd.f32 %v12164, %v12192
    %12194 = vdwg.mxu0
    %v12195 = vmax.f32 %v12060, 0.0
    %v12196 = vmax.f32 %v12176, 0.0
    %v12197 = vmax.f32 %v12062, 0.0
    %v12198 = vmax.f32 %v12178, 0.0
    %v12199 = vmax.f32 %v12065, 0.0
    %v12200 = vmax.f32 %v12181, 0.0
    %v12201 = vmax.f32 %v12067, 0.0
    %v12202 = vmax.f32 %v12183, 0.0
    %v12203 = vmax.f32 %v12070, 0.0
    %v12204 = vmax.f32 %v12186, 0.0
    %v12205 = vmax.f32 %v12072, 0.0
    %v12206 = vmax.f32 %v12188, 0.0
    %v12207 = vmax.f32 %v12075, 0.0
    %v12208 = vmax.f32 %v12191, 0.0
    %v12209 = vmax.f32 %v12077, 0.0
    %v12210 = vmax.f32 %v12193, 0.0
    %v12211 = vpack.c.bf16 %v12196, %v12195
    %v12212 = vpack.c.bf16 %v12198, %v12197
    %v12213 = vpack.c.bf16 %v12200, %v12199
    %v12214 = vpack.c.bf16 %v12202, %v12201
    %v12215 = vpack.c.bf16 %v12204, %v12203
    %v12216 = vpack.c.bf16 %v12206, %v12205
    %v12217 = vpack.c.bf16 %v12208, %v12207
    %v12218 = vpack.c.bf16 %v12210, %v12209
    %v12219 = vunpack.c.l.bf16 %v12211
    %v12220 = vunpack.c.h.bf16 %v12211
    %v12221 = vunpack.c.l.bf16 %v12212
    %v12222 = vunpack.c.h.bf16 %v12212
    %v12223 = vunpack.c.l.bf16 %v12213
    %v12224 = vunpack.c.h.bf16 %v12213
    %v12225 = vunpack.c.l.bf16 %v12214
    %v12226 = vunpack.c.h.bf16 %v12214
    %v12227 = vunpack.c.l.bf16 %v12215
    %v12228 = vunpack.c.h.bf16 %v12215
    %v12229 = vunpack.c.l.bf16 %v12216
    %v12230 = vunpack.c.h.bf16 %v12216
    %v12231 = vunpack.c.l.bf16 %v12217
    %v12232 = vunpack.c.h.bf16 %v12217
    %v12233 = vunpack.c.l.bf16 %v12218
    %v12234 = vunpack.c.h.bf16 %v12218
    %v12235 = vld [vmem:[#allocation19] sm:$0xff]
    %v12236 = vld [vmem:[#allocation19 + $0x8] sm:$0xff]
    %v12237 = vld [vmem:[#allocation19 + $0x10] sm:$0xff]
    %v12238 = vld [vmem:[#allocation19 + $0x18] sm:$0xff]
    %v12239 = vld [vmem:[#allocation19 + $0x20] sm:$0xff]
    %v12240 = vld [vmem:[#allocation19 + $0x28] sm:$0xff]
    %v12241 = vld [vmem:[#allocation19 + $0x30] sm:$0xff]
    %v12242 = vld [vmem:[#allocation19 + $0x38] sm:$0xff]
    %12244 = vset.pattern.permute.xlu0 0
    %12245 = vperm.xlu0 %12244, %v12235
    %v12246 = vpop.permute.xlu0 %12245
    %12249 = vset.pattern.permute.xlu0 0
    %12250 = vperm.xlu0 %12249, %v12236
    %v12251 = vpop.permute.xlu0 %12250
    %12254 = vset.pattern.permute.xlu0 0
    %12255 = vperm.xlu0 %12254, %v12237
    %v12256 = vpop.permute.xlu0 %12255
    %12259 = vset.pattern.permute.xlu0 0
    %12260 = vperm.xlu0 %12259, %v12238
    %v12261 = vpop.permute.xlu0 %12260
    %12264 = vset.pattern.permute.xlu0 0
    %12265 = vperm.xlu0 %12264, %v12239
    %v12266 = vpop.permute.xlu0 %12265
    %12269 = vset.pattern.permute.xlu0 0
    %12270 = vperm.xlu0 %12269, %v12240
    %v12271 = vpop.permute.xlu0 %12270
    %12274 = vset.pattern.permute.xlu0 0
    %12275 = vperm.xlu0 %12274, %v12241
    %v12276 = vpop.permute.xlu0 %12275
    %12279 = vset.pattern.permute.xlu0 0
    %12280 = vperm.xlu0 %12279, %v12242
    %v12281 = vpop.permute.xlu0 %12280
    %v12283 = vmul.f32 %v12219, %v12246
    %v12284 = vmul.f32 %v12220, %v12246
    %v12285 = vmul.f32 %v12221, %v12251
    %v12286 = vmul.f32 %v12222, %v12251
    %v12287 = vmul.f32 %v12223, %v12256
    %v12288 = vmul.f32 %v12224, %v12256
    %v12289 = vmul.f32 %v12225, %v12261
    %v12290 = vmul.f32 %v12226, %v12261
    %v12291 = vmul.f32 %v12227, %v12266
    %v12292 = vmul.f32 %v12228, %v12266
    %v12293 = vmul.f32 %v12229, %v12271
    %v12294 = vmul.f32 %v12230, %v12271
    %v12295 = vmul.f32 %v12231, %v12276
    %v12296 = vmul.f32 %v12232, %v12276
    %v12297 = vmul.f32 %v12233, %v12281
    %v12298 = vmul.f32 %v12234, %v12281
    %v12299 = vadd.f32 %v12283, %v12285
    %v12300 = vadd.f32 %v12299, %v12287
    %v12301 = vadd.f32 %v12300, %v12289
    %v12302 = vadd.f32 %v12301, %v12291
    %v12303 = vadd.f32 %v12302, %v12293
    %v12304 = vadd.f32 %v12303, %v12295
    %v12305 = vadd.f32 %v12304, %v12297
    %v12306 = vrot.slane %v12305, 4
    %v12307 = vadd.f32 %v12305, %v12306
    %v12308 = vrot.slane %v12307, 2
    %v12309 = vadd.f32 %v12307, %v12308
    %v12310 = vrot.slane %v12309, 1
    %v12311 = vadd.f32 %v12309, %v12310
    %v12312 = vadd.f32 %v12284, %v12286
    %v12313 = vadd.f32 %v12312, %v12288
    %v12314 = vadd.f32 %v12313, %v12290
    %v12315 = vadd.f32 %v12314, %v12292
    %v12316 = vadd.f32 %v12315, %v12294
    %v12317 = vadd.f32 %v12316, %v12296
    %v12318 = vadd.f32 %v12317, %v12298
    %v12319 = vrot.slane %v12318, 4
    %v12320 = vadd.f32 %v12318, %v12319
    %v12321 = vrot.slane %v12320, 2
    %v12322 = vadd.f32 %v12320, %v12321
    %v12323 = vrot.slane %v12322, 1
    %v12324 = vadd.f32 %v12322, %v12323
    %v12325 = vld [vmem:[#allocation2] sm:$0x1]
    %12327 = vset.pattern.permute.xlu0 0
    %12328 = vperm.xlu0 %12327, %v12325
    %v12329 = vpop.permute.xlu0 %12328
    %v12331 = vperm.slane %v12329, 0
    %v12332 = vadd.f32 %v12311, %v12331
    %v12333 = vadd.f32 %v12324, %v12331
    %v12336 = vrot.slane %v12333, 7
    %vm12337 = vcmask 1040384
    %v12338 = vsel %vm12337, %v12332, %v12336
    %v12340 = vlaneseq
    %vm12341 = vcmp.ge.s32.totalorder %v12340, 0
    %vm12342 = vcmp.lt.s32.totalorder %v12340, 256
    %vm12343 = vmand %vm12341, %vm12342
    %12344 = vst.msk [vmem:[%s13] sm:$0x3] %vm12343, %v12338
    // Predicated region
    $region98: #{fwd.1} parent=1 // pred_check
      _
    $region99: #{fwd.1} parent=1 // pred_check_branch
      %12346 = sbr.rel (0) target = $region101
    $region100: #{fwd.1} parent=1 // pred_region
      _
    $region101: #{fwd.1} parent=1 // pred_fallthru
      _
    // Predicated region
    $region102: #{fwd.1} parent=1 // pred_check
      _
    $region103: #{fwd.1} parent=1 // pred_check_branch
      %12348 = sbr.rel (0) target = $region105
    $region104: #{fwd.1} parent=1 // pred_region
      _
    $region105: #{fwd.1} parent=1 // pred_fallthru
      _
    %12349 = vsyncpa [#allocation4], 1
    %12350 = vsyncpa [#allocation6], 1
    %12351 = vsyncpa [#allocation9], 1
    %12352 = vsyncpa [#allocation12], 1
    %12353 = vsyncpa [#allocation15], 1
    %12354 = vsyncpa [#allocation18], 1

</llo_original>
